<compile_context>
chip_gen: v7x
topology: tpu7x:2x2x1
jax: 0.10.0
libtpu: 0.0.40
codegen_flags: <defaults>
</compile_context>

<pallas_src>
import math
import functools

import jax
import jax.numpy as jnp
from jax import lax
from jax.experimental import pallas as pl
from jax.experimental.pallas import tpu as pltpu


# ---------------------------------------------------------------------------
# In-kernel helpers (traced into the kernel body).  Only Python scalars are
# used so nothing is lifted as a jaxpr constant.
# ---------------------------------------------------------------------------
def _layernorm(h, w, b, eps=1e-5):
    mu = jnp.mean(h, axis=-1, keepdims=True)
    xc = h - mu
    var = jnp.mean(xc * xc, axis=-1, keepdims=True)
    return xc * lax.rsqrt(var + eps) * w + b


def _gelu_tanh(u):
    c = math.sqrt(2.0 / math.pi)
    return 0.5 * u * (1.0 + jnp.tanh(c * (u + 0.044715 * u * u * u)))


# ---------------------------------------------------------------------------
# Fused ModifiedBlock kernel: one (batch, query-tile) per grid step.
# ---------------------------------------------------------------------------
def modified_block_kernel(
    # inputs
    x_ref, vis_k_ref, vis_v_ref,
    ln1w_ref, ln1b_ref, ln2w_ref, ln2b_ref, ln3w_ref, ln3b_ref,
    a_qkv_w_ref, a_qkv_b_ref, a_proj_w_ref, a_proj_b_ref,
    c_q_w_ref, c_q_b_ref, c_proj_w_ref, c_proj_b_ref,
    fc_w_ref, fc_b_ref, mproj_w_ref, mproj_b_ref,
    # output
    o_ref,
    # scratch
    k_cache, v_cache,
    *, n_head, tq, gelu_in_bf16):
    """One (b, t) grid step.

    The scratch-carried self-attention K/V cache relies on the query-tile axis
    being iterated sequentially (t = 0, 1, ...) within each batch element on a
    core: the grid (B, T//tq) is iterated row-major, B is "parallel" (whole
    batches sharded across cores) and the t axis is "arbitrary" (sequential).
    """
    t = pl.program_id(1)
    x = x_ref[0]                                   # (tq, C) f32 residual stream
    C = x.shape[-1]
    hd = C // n_head
    bf16 = jnp.bfloat16

    def split_heads(m2d):                          # (tq, C) -> (H, tq, hd); once per tile
        return m2d.reshape(tq, n_head, hd).transpose(1, 0, 2)

    def merge_heads_proj(y_hm, w_ref, b_ref):
        # (H, tq, hd) x (H, hd, C): head merge folded into a batched MXU matmul
        # plus a leading-axis VPU sum -- no XLU transpose in the epilogue.
        y = jnp.einsum('hqd,hdc->hqc', y_hm.astype(bf16), w_ref[...],
                       preferred_element_type=jnp.float32)
        return jnp.sum(y, axis=0) + b_ref[...]

    # ---------------- causal self-attention: x += attn(ln_1(x)) -------------
    h = _layernorm(x, ln1w_ref[...], ln1b_ref[...])
    qkv = jnp.dot(h.astype(bf16), a_qkv_w_ref[...],
                  preferred_element_type=jnp.float32) + a_qkv_b_ref[...]
    # 1/sqrt(hd) is already folded into the q columns of a_qkv_w / a_qkv_b.
    q = split_heads(qkv[:, :C].astype(bf16))               # (H, tq, hd)
    k = split_heads(qkv[:, C:2 * C].astype(bf16))
    v = split_heads(qkv[:, 2 * C:].astype(bf16))

    # Persist this tile's K/V (already head-major) for later query tiles of the
    # same batch element.
    k_cache[t] = k
    v_cache[t] = v

    # Diagonal KV tile (j == t), peeled: the only place the causal mask is
    # applied, consumes k/v straight from registers, and initialises the
    # online-softmax state (each row has its diagonal entry, so max is finite).
    rows = lax.broadcasted_iota(jnp.int32, (tq, tq), 0)
    cols = lax.broadcasted_iota(jnp.int32, (tq, tq), 1)
    diag_bias = (cols > rows).astype(jnp.float32) * (-1e30)        # (tq, tq)
    s = jnp.einsum('hqd,hkd->hqk', q, k, preferred_element_type=jnp.float32)
    s = s + diag_bias[None, :, :]
    m = jnp.max(s, axis=-1, keepdims=True)                         # (H, tq, 1)
    p = jnp.exp(s - m)
    l = jnp.sum(p, axis=-1, keepdims=True)
    acc = jnp.einsum('hqk,hkd->hqd', p.astype(bf16), v,
                     preferred_element_type=jnp.float32)

    # Earlier KV tiles j < t are fully unmasked: plain online-softmax updates,
    # no mask work, no per-iteration head reshapes (cache is head-major).
    def kv_step(j, carry):
        m, l, acc = carry
        k_j = k_cache[j]                                           # (H, tq, hd)
        v_j = v_cache[j]
        s = jnp.einsum('hqd,hkd->hqk', q, k_j,
                       preferred_element_type=jnp.float32)
        m_new = jnp.maximum(m, jnp.max(s, axis=-1, keepdims=True))
        alpha = jnp.exp(m - m_new)
        p = jnp.exp(s - m_new)
        l_new = alpha * l + jnp.sum(p, axis=-1, keepdims=True)
        acc_new = alpha * acc + jnp.einsum(
            'hqk,hkd->hqd', p.astype(bf16), v_j,
            preferred_element_type=jnp.float32)
        return m_new, l_new, acc_new

    m, l, acc = lax.fori_loop(0, t, kv_step, (m, l, acc))
    y = acc / l                                                    # (H, tq, hd)
    x = x + merge_heads_proj(y, a_proj_w_ref, a_proj_b_ref)

    # ---------------- cross attention: x += cross_attn(ln_2(x), vis) --------
    # Visual K/V are precomputed on the host (bf16, head-major); only the
    # (C, C) q-projection runs in-kernel.
    h = _layernorm(x, ln2w_ref[...], ln2b_ref[...])
    qx = jnp.dot(h.astype(bf16), c_q_w_ref[...],
                 preferred_element_type=jnp.float32) + c_q_b_ref[...]
    qx = split_heads(qx.astype(bf16))                              # (H, tq, hd)
    vk = vis_k_ref[0]                                              # (H, V, hd)
    vv = vis_v_ref[0]
    s = jnp.einsum('hqd,hkd->hqk', qx, vk, preferred_element_type=jnp.float32)
    s = s - jnp.max(s, axis=-1, keepdims=True)
    p = jnp.exp(s)
    p = p / jnp.sum(p, axis=-1, keepdims=True)
    y = jnp.einsum('hqk,hkd->hqd', p.astype(bf16), vv,
                   preferred_element_type=jnp.float32)
    x = x + merge_heads_proj(y, c_proj_w_ref, c_proj_b_ref)

    # ---------------- MLP: x += mlp(ln_3(x)) --------------------------------
    h = _layernorm(x, ln3w_ref[...], ln3b_ref[...])
    u = jnp.dot(h.astype(bf16), fc_w_ref[...],
                preferred_element_type=jnp.float32) + fc_b_ref[...]
    if gelu_in_bf16:
        # v6e/v7x: bf16 EUP/VPU roughly halve the tanh cost.  Keep f32 on v5e.
        u = _gelu_tanh(u.astype(jnp.bfloat16)).astype(jnp.float32)
    else:
        u = _gelu_tanh(u)
    y = jnp.dot(u.astype(bf16), mproj_w_ref[...],
                preferred_element_type=jnp.float32) + mproj_b_ref[...]
    o_ref[0] = (x + y).astype(o_ref.dtype)


# ---------------------------------------------------------------------------
# Wrapper: host-side weight prep, BlockSpecs / grid, pallas_call.
# ---------------------------------------------------------------------------
def _default_vmem_limit_bytes():
    # ~3/4 of the local generation's physical VMEM (leave headroom for the
    # compiler's internal scratch); ~48 MiB fallback if the query fails
    # (e.g. interpret mode without a TPU).
    try:
        return int(pltpu.get_tpu_info().vmem_capacity_bytes) * 3 // 4
    except Exception:
        return 48 * 1024 * 1024


def modified_block(x, vis, params, n_head, *, t_block=128,
                   vmem_limit_bytes=None, single_buffer_weights=True,
                   gelu_in_bf16=False):
    B, T, C = x.shape
    _, V, _ = vis.shape
    assert C % n_head == 0
    hd = C // n_head
    tq = min(t_block, T)
    assert T % tq == 0, "T must be divisible by the query-tile size"
    if vmem_limit_bytes is None:
        vmem_limit_bytes = _default_vmem_limit_bytes()

    (ln1w, ln1b, ln2w, ln2b, ln3w, ln3b,
     a_qkv_w, a_qkv_b, a_proj_w, a_proj_b,
     c_qkv_w, c_qkv_b, c_proj_w, c_proj_b,
     fc_w, fc_b, mp_w, mp_b) = params
    bf16, f32 = jnp.bfloat16, jnp.float32
    scale = 1.0 / math.sqrt(hd)

    # Fold 1/sqrt(hd) into the q columns of the fused attention projections.
    a_qkv_w_s = jnp.concatenate([a_qkv_w[:, :C] * scale, a_qkv_w[:, C:]], axis=1)
    a_qkv_b_s = jnp.concatenate([a_qkv_b[:, :C] * scale, a_qkv_b[:, C:]], axis=1)
    c_q_w = c_qkv_w[:, :C] * scale          # only the q slice of cross c_attn
    c_q_b = c_qkv_b[:, :C] * scale          # is needed inside the kernel

    # Head-major output projections so the head merge is an MXU contraction.
    a_proj_w_h = a_proj_w.reshape(n_head, hd, C)
    c_proj_w_h = c_proj_w.reshape(n_head, hd, C)

    # Cross-attention visual K/V computed once here (plain XLA matmul): removes
    # the per-batch t==0 bubble and the K/V columns of c_attn from VMEM.
    # TODO(synk): the reference `.view(B, V, 2, nh, hd)` of a (B, V, 3C) tensor
    # is shape-inconsistent in PyTorch; we take columns [C:2C) as K, [2C:3C) as V.
    vis_kv = vis @ c_qkv_w[:, C:] + c_qkv_b[:, C:]                 # (B, V, 2C)
    vis_k = vis_kv[..., :C].reshape(B, V, n_head, hd).transpose(0, 2, 1, 3).astype(bf16)
    vis_v = vis_kv[..., C:].reshape(B, V, n_head, hd).transpose(0, 2, 1, 3).astype(bf16)

    weights = [
        ln1w.astype(f32), ln1b.astype(f32),
        ln2w.astype(f32), ln2b.astype(f32),
        ln3w.astype(f32), ln3b.astype(f32),
        a_qkv_w_s.astype(bf16), a_qkv_b_s.astype(f32),
        a_proj_w_h.astype(bf16), a_proj_b.astype(f32),
        c_q_w.astype(bf16), c_q_b.astype(f32),
        c_proj_w_h.astype(bf16), c_proj_b.astype(f32),
        fc_w.astype(bf16), fc_b.astype(f32),
        mp_w.astype(bf16), mp_b.astype(f32),
    ]

    kernel = functools.partial(modified_block_kernel, n_head=n_head, tq=tq,
                               gelu_in_bf16=gelu_in_bf16)
    grid = (B, T // tq)

    def build_and_run(single_buffer):
        def const_spec(shape):
            nd = len(shape)
            idx = lambda b, t, _nd=nd: (0,) * _nd
            if single_buffer:
                # Constant-index (replicated) weights: single-buffer so resident
                # weight VMEM is not doubled by the default pipeline (v7x).
                return pl.BlockSpec(shape, idx, pipeline_mode=pl.Buffered(1))
            return pl.BlockSpec(shape, idx)

        in_specs = [
            pl.BlockSpec((1, tq, C), lambda b, t: (b, t, 0)),             # x tile
            pl.BlockSpec((1, n_head, V, hd), lambda b, t: (b, 0, 0, 0)),  # vis K
            pl.BlockSpec((1, n_head, V, hd), lambda b, t: (b, 0, 0, 0)),  # vis V
        ] + [const_spec(w.shape) for w in weights]
        out_spec = pl.BlockSpec((1, tq, C), lambda b, t: (b, t, 0))

        fn = pl.pallas_call(
            kernel,
            out_shape=jax.ShapeDtypeStruct((B, T, C), x.dtype),
            grid_spec=pltpu.PrefetchScalarGridSpec(
                num_scalar_prefetch=0,
                grid=grid,
                in_specs=in_specs,
                out_specs=out_spec,
                scratch_shapes=[
                    # head-major self-attention K/V caches, one slot per q tile
                    pltpu.VMEM((T // tq, n_head, tq, hd), bf16),
                    pltpu.VMEM((T // tq, n_head, tq, hd), bf16),
                ]),
            compiler_params=pltpu.CompilerParams(
                # B "parallel" (megacore-shardable); the t axis must stay
                # "arbitrary": the scratch K/V cache needs sequential t per b.
                dimension_semantics=("parallel", "arbitrary"),
                vmem_limit_bytes=vmem_limit_bytes),
        )
        return fn(x, vis_k, vis_v, *weights)

    if single_buffer_weights:
        try:
            return build_and_run(True)
        except Exception:
            # pipeline_mode / pl.Buffered(1) unsupported in this jax build:
            # fall back to default double-buffered weights.
            pass
    return build_and_run(False)


# ---------------------------------------------------------------------------
# Pure-JAX f32 reference (same math, batched) for correctness checking.
# ---------------------------------------------------------------------------
def modified_block_reference(x, vis, params, n_head):
    (ln1w, ln1b, ln2w, ln2b, ln3w, ln3b,
     a_qkv_w, a_qkv_b, a_proj_w, a_proj_b,
     c_qkv_w, c_qkv_b, c_proj_w, c_proj_b,
     fc_w, fc_b, mp_w, mp_b) = params
    B, T, C = x.shape
    V = vis.shape[1]
    hd = C // n_head

    def ln(h, w, b):
        mu = h.mean(-1, keepdims=True)
        var = ((h - mu) ** 2).mean(-1, keepdims=True)
        return (h - mu) / jnp.sqrt(var + 1e-5) * w[0] + b[0]

    def split_heads(t, L):
        return t.reshape(B, L, n_head, hd).transpose(0, 2, 1, 3)

    # self attention
    h = ln(x, ln1w, ln1b)
    qkv = h @ a_qkv_w + a_qkv_b[0]
    q, k, v = jnp.split(qkv, 3, axis=-1)
    qh, kh, vh = split_heads(q, T), split_heads(k, T), split_heads(v, T)
    att = (qh @ kh.transpose(0, 1, 3, 2)) / math.sqrt(hd)
    mask = jnp.tril(jnp.ones((T, T), dtype=bool))
    att = jnp.where(mask, att, -jnp.inf)
    att = jax.nn.softmax(att, axis=-1)
    y = (att @ vh).transpose(0, 2, 1, 3).reshape(B, T, C)
    x = x + (y @ a_proj_w + a_proj_b[0])

    # cross attention
    h = ln(x, ln2w, ln2b)
    q = (h @ c_qkv_w + c_qkv_b[0])[:, :, :C]
    visp = vis @ c_qkv_w + c_qkv_b[0]
    k, v = visp[:, :, C:2 * C], visp[:, :, 2 * C:]
    qh, kh, vh = split_heads(q, T), split_heads(k, V), split_heads(v, V)
    att = jax.nn.softmax((qh @ kh.transpose(0, 1, 3, 2)) / math.sqrt(hd), axis=-1)
    y = (att @ vh).transpose(0, 2, 1, 3).reshape(B, T, C)
    x = x + (y @ c_proj_w + c_proj_b[0])

    # MLP
    h = ln(x, ln3w, ln3b)
    u = h @ fc_w + fc_b[0]
    u = 0.5 * u * (1.0 + jnp.tanh(math.sqrt(2.0 / math.pi) * (u + 0.044715 * u ** 3)))
    return x + (u @ mp_w + mp_b[0])


# ---------------------------------------------------------------------------
if __name__ == "__main__":
    B, T, V, C, N_HEAD = 2, 8, 8, 32, 4   # cfg: n_embd=32, n_head=4, block_size>=T

    key = jax.random.PRNGKey(0)
    ks = jax.random.split(key, 16)

    def w(k, shape, scale=0.02):
        return (scale * jax.random.normal(k, shape)).astype(jnp.float32)

    x = jax.random.normal(ks[0], (B, T, C), dtype=jnp.float32)
    vis = jax.random.normal(ks[1], (B, V, C), dtype=jnp.float32)

    params = [
        jnp.ones((1, C), jnp.float32), jnp.zeros((1, C), jnp.float32),   # ln_1
        jnp.ones((1, C), jnp.float32), jnp.zeros((1, C), jnp.float32),   # ln_2
        jnp.ones((1, C), jnp.float32), jnp.zeros((1, C), jnp.float32),   # ln_3
        w(ks[2], (C, 3 * C)), w(ks[3], (1, 3 * C)),                      # attn.c_attn
        w(ks[4], (C, C)),     w(ks[5], (1, C)),                          # attn.c_proj
        w(ks[6], (C, 3 * C)), w(ks[7], (1, 3 * C)),                      # cross.c_attn
        w(ks[8], (C, C)),     w(ks[9], (1, C)),                          # cross.c_proj
        w(ks[10], (C, 4 * C)), w(ks[11], (1, 4 * C)),                    # mlp.c_fc
        w(ks[12], (4 * C, C)), w(ks[13], (1, C)),                        # mlp.c_proj
    ]

    out = modified_block(x, vis, params, N_HEAD)
    out = jax.block_until_ready(out)

    ref = modified_block_reference(x, vis, params, N_HEAD)
    assert out.shape == (B, T, C)
    err = jnp.max(jnp.abs(out - ref))
    # bf16 matmuls vs an all-f32 reference -> loose tolerance
    assert jnp.allclose(out, ref, atol=2e-2, rtol=2e-2), f"max abs err {err}"

    print("KERNEL_OK")
</pallas_src>

<mosaic_0001>
module attributes {stable_mosaic.version = 11 : i64} {
  func.func @modified_block_kernel(%arg0: i32, %arg1: i32, %arg2: memref<1x8x32xf32, #tpu.memory_space<vmem>>, %arg3: memref<1x4x8x8xbf16, #tpu.memory_space<vmem>>, %arg4: memref<1x4x8x8xbf16, #tpu.memory_space<vmem>>, %arg5: memref<1x32xf32, #tpu.memory_space<vmem>>, %arg6: memref<1x32xf32, #tpu.memory_space<vmem>>, %arg7: memref<1x32xf32, #tpu.memory_space<vmem>>, %arg8: memref<1x32xf32, #tpu.memory_space<vmem>>, %arg9: memref<1x32xf32, #tpu.memory_space<vmem>>, %arg10: memref<1x32xf32, #tpu.memory_space<vmem>>, %arg11: memref<32x96xbf16, #tpu.memory_space<vmem>>, %arg12: memref<1x96xf32, #tpu.memory_space<vmem>>, %arg13: memref<4x8x32xbf16, #tpu.memory_space<vmem>>, %arg14: memref<1x32xf32, #tpu.memory_space<vmem>>, %arg15: memref<32x32xbf16, #tpu.memory_space<vmem>>, %arg16: memref<1x32xf32, #tpu.memory_space<vmem>>, %arg17: memref<4x8x32xbf16, #tpu.memory_space<vmem>>, %arg18: memref<1x32xf32, #tpu.memory_space<vmem>>, %arg19: memref<32x128xbf16, #tpu.memory_space<vmem>>, %arg20: memref<1x128xf32, #tpu.memory_space<vmem>>, %arg21: memref<128x32xbf16, #tpu.memory_space<vmem>>, %arg22: memref<1x32xf32, #tpu.memory_space<vmem>>, %arg23: memref<1x8x32xf32, #tpu.memory_space<vmem>>, %arg24: memref<1x4x8x8xbf16, #tpu.memory_space<vmem>>, %arg25: memref<1x4x8x8xbf16, #tpu.memory_space<vmem>>) attributes {dimension_semantics = [#tpu.dimension_semantics<parallel>, #tpu.dimension_semantics<arbitrary>], iteration_bounds = array<i64: 2, 1>, scalar_prefetch = 0 : i64, scratch_operands = 2 : i64, tpu.core_type = #tpu.core_type<tc>, window_params = [{transform_indices = @transform_0, window_bounds = array<i64: 1, 8, 32>}, {transform_indices = @transform_1, window_bounds = array<i64: 1, 4, 8, 8>}, {transform_indices = @transform_2, window_bounds = array<i64: 1, 4, 8, 8>}, {pipeline_mode = #tpu.pipeline_mode<synchronous>, transform_indices = @transform_3, window_bounds = array<i64: 1, 32>}, {pipeline_mode = #tpu.pipeline_mode<synchronous>, transform_indices = @transform_4, window_bounds = array<i64: 1, 32>}, {pipeline_mode = #tpu.pipeline_mode<synchronous>, transform_indices = @transform_5, window_bounds = array<i64: 1, 32>}, {pipeline_mode = #tpu.pipeline_mode<synchronous>, transform_indices = @transform_6, window_bounds = array<i64: 1, 32>}, {pipeline_mode = #tpu.pipeline_mode<synchronous>, transform_indices = @transform_7, window_bounds = array<i64: 1, 32>}, {pipeline_mode = #tpu.pipeline_mode<synchronous>, transform_indices = @transform_8, window_bounds = array<i64: 1, 32>}, {pipeline_mode = #tpu.pipeline_mode<synchronous>, transform_indices = @transform_9, window_bounds = array<i64: 32, 96>}, {pipeline_mode = #tpu.pipeline_mode<synchronous>, transform_indices = @transform_10, window_bounds = array<i64: 1, 96>}, {pipeline_mode = #tpu.pipeline_mode<synchronous>, transform_indices = @transform_11, window_bounds = array<i64: 4, 8, 32>}, {pipeline_mode = #tpu.pipeline_mode<synchronous>, transform_indices = @transform_12, window_bounds = array<i64: 1, 32>}, {pipeline_mode = #tpu.pipeline_mode<synchronous>, transform_indices = @transform_13, window_bounds = array<i64: 32, 32>}, {pipeline_mode = #tpu.pipeline_mode<synchronous>, transform_indices = @transform_14, window_bounds = array<i64: 1, 32>}, {pipeline_mode = #tpu.pipeline_mode<synchronous>, transform_indices = @transform_15, window_bounds = array<i64: 4, 8, 32>}, {pipeline_mode = #tpu.pipeline_mode<synchronous>, transform_indices = @transform_16, window_bounds = array<i64: 1, 32>}, {pipeline_mode = #tpu.pipeline_mode<synchronous>, transform_indices = @transform_17, window_bounds = array<i64: 32, 128>}, {pipeline_mode = #tpu.pipeline_mode<synchronous>, transform_indices = @transform_18, window_bounds = array<i64: 1, 128>}, {pipeline_mode = #tpu.pipeline_mode<synchronous>, transform_indices = @transform_19, window_bounds = array<i64: 128, 32>}, {pipeline_mode = #tpu.pipeline_mode<synchronous>, transform_indices = @transform_20, window_bounds = array<i64: 1, 32>}, {transform_indices = @transform_21, window_bounds = array<i64: 1, 8, 32>}]} {
    %c0 = arith.constant 0 : index
    %c0_0 = arith.constant 0 : index
    %c0_1 = arith.constant 0 : index
    %0 = vector.load %arg2[%c0, %c0_0, %c0_1] : memref<1x8x32xf32, #tpu.memory_space<vmem>>, vector<1x8x32xf32>
    %1 = vector.shape_cast %0 : vector<1x8x32xf32> to vector<8x32xf32>
    %c0_2 = arith.constant 0 : index
    %c0_3 = arith.constant 0 : index
    %2 = vector.load %arg5[%c0_2, %c0_3] : memref<1x32xf32, #tpu.memory_space<vmem>>, vector<1x32xf32>
    %c0_4 = arith.constant 0 : index
    %c0_5 = arith.constant 0 : index
    %3 = vector.load %arg6[%c0_4, %c0_5] : memref<1x32xf32, #tpu.memory_space<vmem>>, vector<1x32xf32>
    %cst = arith.constant dense<0.000000e+00> : vector<8xf32>
    %4 = vector.multi_reduction <add>, %1, %cst [1] : vector<8x32xf32> to vector<8xf32>
    %5 = vector.shape_cast %4 : vector<8xf32> to vector<8x1xf32>
    %cst_6 = arith.constant 3.200000e+01 : f32
    %6 = vector.broadcast %cst_6 : f32 to vector<8x1xf32>
    %7 = arith.divf %5, %6 : vector<8x1xf32>
    %8 = vector.broadcast %7 : vector<8x1xf32> to vector<8x32xf32>
    %9 = arith.subf %1, %8 : vector<8x32xf32>
    %10 = arith.mulf %9, %9 : vector<8x32xf32>
    %cst_7 = arith.constant dense<0.000000e+00> : vector<8xf32>
    %11 = vector.multi_reduction <add>, %10, %cst_7 [1] : vector<8x32xf32> to vector<8xf32>
    %12 = vector.shape_cast %11 : vector<8xf32> to vector<8x1xf32>
    %cst_8 = arith.constant 3.200000e+01 : f32
    %13 = vector.broadcast %cst_8 : f32 to vector<8x1xf32>
    %14 = arith.divf %12, %13 : vector<8x1xf32>
    %cst_9 = arith.constant 9.99999974E-6 : f32
    %15 = vector.broadcast %cst_9 : f32 to vector<8x1xf32>
    %16 = arith.addf %14, %15 : vector<8x1xf32>
    %17 = math.rsqrt %16 : vector<8x1xf32>
    %18 = vector.broadcast %17 : vector<8x1xf32> to vector<8x32xf32>
    %19 = arith.mulf %9, %18 : vector<8x32xf32>
    %20 = vector.broadcast %2 : vector<1x32xf32> to vector<8x32xf32>
    %21 = arith.mulf %19, %20 : vector<8x32xf32>
    %22 = vector.broadcast %3 : vector<1x32xf32> to vector<8x32xf32>
    %23 = arith.addf %21, %22 : vector<8x32xf32>
    %24 = arith.truncf %23 : vector<8x32xf32> to vector<8x32xbf16>
    %c0_10 = arith.constant 0 : index
    %c0_11 = arith.constant 0 : index
    %25 = vector.load %arg11[%c0_10, %c0_11] : memref<32x96xbf16, #tpu.memory_space<vmem>>, vector<32x96xbf16>
    %cst_12 = arith.constant dense<0.000000e+00> : vector<8x96xf32>
    %26 = tpu.matmul %24, %25, %cst_12 {dimension_numbers = #tpu.dot_dimension_numbers<[1], [0], [0], [1], [0, 0, 1, 1], [], []>} : vector<8x32xbf16>, vector<32x96xbf16>, vector<8x96xf32> -> vector<8x96xf32>
    %c0_13 = arith.constant 0 : index
    %c0_14 = arith.constant 0 : index
    %27 = vector.load %arg12[%c0_13, %c0_14] : memref<1x96xf32, #tpu.memory_space<vmem>>, vector<1x96xf32>
    %28 = vector.broadcast %27 : vector<1x96xf32> to vector<8x96xf32>
    %29 = arith.addf %26, %28 : vector<8x96xf32>
    %30 = vector.extract_strided_slice %29 {offsets = [0, 0], sizes = [8, 32], strides = [1, 1]} : vector<8x96xf32> to vector<8x32xf32>
    %31 = arith.truncf %30 : vector<8x32xf32> to vector<8x32xbf16>
    %32 = vector.shape_cast %31 : vector<8x32xbf16> to vector<8x4x8xbf16>
    %33 = tpu.transpose %32, [1, 0, 2] : vector<8x4x8xbf16> -> vector<4x8x8xbf16>
    %34 = vector.extract_strided_slice %29 {offsets = [0, 32], sizes = [8, 32], strides = [1, 1]} : vector<8x96xf32> to vector<8x32xf32>
    %35 = arith.truncf %34 : vector<8x32xf32> to vector<8x32xbf16>
    %36 = vector.shape_cast %35 : vector<8x32xbf16> to vector<8x4x8xbf16>
    %37 = tpu.transpose %36, [1, 0, 2] : vector<8x4x8xbf16> -> vector<4x8x8xbf16>
    %38 = vector.extract_strided_slice %29 {offsets = [0, 64], sizes = [8, 32], strides = [1, 1]} : vector<8x96xf32> to vector<8x32xf32>
    %39 = arith.truncf %38 : vector<8x32xf32> to vector<8x32xbf16>
    %40 = vector.shape_cast %39 : vector<8x32xbf16> to vector<8x4x8xbf16>
    %41 = tpu.transpose %40, [1, 0, 2] : vector<8x4x8xbf16> -> vector<4x8x8xbf16>
    %42 = arith.index_cast %arg1 : i32 to index
    %c0_15 = arith.constant 0 : index
    %c0_16 = arith.constant 0 : index
    %c0_17 = arith.constant 0 : index
    %43 = vector.load %arg24[%42, %c0_15, %c0_16, %c0_17] : memref<1x4x8x8xbf16, #tpu.memory_space<vmem>>, vector<1x4x8x8xbf16>
    %44 = vector.shape_cast %43 : vector<1x4x8x8xbf16> to vector<4x8x8xbf16>
    %45 = vector.shape_cast %37 : vector<4x8x8xbf16> to vector<1x4x8x8xbf16>
    tpu.vector_store %arg24[%42, %c0_15, %c0_16, %c0_17], %45 {strides = array<i32>} : memref<1x4x8x8xbf16, #tpu.memory_space<vmem>>, vector<1x4x8x8xbf16>,
    %46 = arith.index_cast %arg1 : i32 to index
    %c0_18 = arith.constant 0 : index
    %c0_19 = arith.constant 0 : index
    %c0_20 = arith.constant 0 : index
    %47 = vector.load %arg25[%46, %c0_18, %c0_19, %c0_20] : memref<1x4x8x8xbf16, #tpu.memory_space<vmem>>, vector<1x4x8x8xbf16>
    %48 = vector.shape_cast %47 : vector<1x4x8x8xbf16> to vector<4x8x8xbf16>
    %49 = vector.shape_cast %41 : vector<4x8x8xbf16> to vector<1x4x8x8xbf16>
    tpu.vector_store %arg25[%46, %c0_18, %c0_19, %c0_20], %49 {strides = array<i32>} : memref<1x4x8x8xbf16, #tpu.memory_space<vmem>>, vector<1x4x8x8xbf16>,
    %50 = tpu.iota {dimensions = array<i32: 0>} : vector<8x8xi32>
    %51 = tpu.iota {dimensions = array<i32: 1>} : vector<8x8xi32>
    %52 = arith.cmpi sgt, %51, %50 : vector<8x8xi32>
    %53 = arith.extui %52 : vector<8x8xi1> to vector<8x8xi32>
    %54 = arith.sitofp %53 : vector<8x8xi32> to vector<8x8xf32>
    %cst_21 = arith.constant -1.000000e+30 : f32
    %55 = vector.broadcast %cst_21 : f32 to vector<8x8xf32>
    %56 = arith.mulf %54, %55 : vector<8x8xf32>
    "tpu.trace_start"() <{level = 10 : i32, message = "hqd,hkd->hqk"}> : () -> ()
    %cst_22 = arith.constant dense<0.000000e+00> : vector<4x8x8xf32>
    %57 = tpu.matmul %33, %37, %cst_22 {dimension_numbers = #tpu.dot_dimension_numbers<[2], [2], [1], [1], [0, 0, 0, 1, 1, 1], [0], [0]>} : vector<4x8x8xbf16>, vector<4x8x8xbf16>, vector<4x8x8xf32> -> vector<4x8x8xf32>
    "tpu.trace_stop"() : () -> ()
    %58 = vector.shape_cast %56 : vector<8x8xf32> to vector<1x8x8xf32>
    %59 = vector.broadcast %58 : vector<1x8x8xf32> to vector<4x8x8xf32>
    %60 = arith.addf %57, %59 : vector<4x8x8xf32>
    %cst_23 = arith.constant dense<0xFF800000> : vector<4x8xf32>
    %61 = vector.multi_reduction <maximumf>, %60, %cst_23 [2] : vector<4x8x8xf32> to vector<4x8xf32>
    %62 = vector.shape_cast %61 : vector<4x8xf32> to vector<4x8x1xf32>
    %63 = vector.broadcast %62 : vector<4x8x1xf32> to vector<4x8x8xf32>
    %64 = arith.subf %60, %63 : vector<4x8x8xf32>
    %65 = math.exp %64 : vector<4x8x8xf32>
    %cst_24 = arith.constant dense<0.000000e+00> : vector<4x8xf32>
    %66 = vector.multi_reduction <add>, %65, %cst_24 [2] : vector<4x8x8xf32> to vector<4x8xf32>
    %67 = vector.shape_cast %66 : vector<4x8xf32> to vector<4x8x1xf32>
    %68 = arith.truncf %65 : vector<4x8x8xf32> to vector<4x8x8xbf16>
    "tpu.trace_start"() <{level = 10 : i32, message = "hqk,hkd->hqd"}> : () -> ()
    %cst_25 = arith.constant dense<0.000000e+00> : vector<4x8x8xf32>
    %69 = tpu.matmul %68, %41, %cst_25 {dimension_numbers = #tpu.dot_dimension_numbers<[2], [1], [1], [2], [0, 0, 0, 1, 1, 2], [0], [0]>} : vector<4x8x8xbf16>, vector<4x8x8xbf16>, vector<4x8x8xf32> -> vector<4x8x8xf32>
    %c0_i32 = arith.constant 0 : i32
    "tpu.trace_stop"() : () -> ()
    %70 = arith.subi %arg1, %c0_i32 : i32
    %71 = arith.addi %c0_i32, %70 : i32
    %c1_i32 = arith.constant 1 : i32
    %72:3 = scf.for %arg26 = %c0_i32 to %71 step %c1_i32 iter_args(%arg27 = %62, %arg28 = %67, %arg29 = %69) -> (vector<4x8x1xf32>, vector<4x8x1xf32>, vector<4x8x8xf32>)  : i32 {
      %189 = arith.index_cast %arg26 : i32 to index
      %c0_92 = arith.constant 0 : index
      %c0_93 = arith.constant 0 : index
      %c0_94 = arith.constant 0 : index
      %190 = vector.load %arg24[%189, %c0_92, %c0_93, %c0_94] : memref<1x4x8x8xbf16, #tpu.memory_space<vmem>>, vector<1x4x8x8xbf16>
      %191 = vector.shape_cast %190 : vector<1x4x8x8xbf16> to vector<4x8x8xbf16>
      %192 = arith.index_cast %arg26 : i32 to index
      %c0_95 = arith.constant 0 : index
      %c0_96 = arith.constant 0 : index
      %c0_97 = arith.constant 0 : index
      %193 = vector.load %arg25[%192, %c0_95, %c0_96, %c0_97] : memref<1x4x8x8xbf16, #tpu.memory_space<vmem>>, vector<1x4x8x8xbf16>
      %194 = vector.shape_cast %193 : vector<1x4x8x8xbf16> to vector<4x8x8xbf16>
      "tpu.trace_start"() <{level = 10 : i32, message = "hqd,hkd->hqk"}> : () -> ()
      %cst_98 = arith.constant dense<0.000000e+00> : vector<4x8x8xf32>
      %195 = tpu.matmul %33, %191, %cst_98 {dimension_numbers = #tpu.dot_dimension_numbers<[2], [2], [1], [1], [0, 0, 0, 1, 1, 1], [0], [0]>} : vector<4x8x8xbf16>, vector<4x8x8xbf16>, vector<4x8x8xf32> -> vector<4x8x8xf32>
      "tpu.trace_stop"() : () -> ()
      %cst_99 = arith.constant dense<0xFF800000> : vector<4x8xf32>
      %196 = vector.multi_reduction <maximumf>, %195, %cst_99 [2] : vector<4x8x8xf32> to vector<4x8xf32>
      %197 = vector.shape_cast %196 : vector<4x8xf32> to vector<4x8x1xf32>
      %198 = arith.maximumf %arg27, %197 : vector<4x8x1xf32>
      %199 = arith.subf %arg27, %198 : vector<4x8x1xf32>
      %200 = math.exp %199 : vector<4x8x1xf32>
      %201 = vector.broadcast %198 : vector<4x8x1xf32> to vector<4x8x8xf32>
      %202 = arith.subf %195, %201 : vector<4x8x8xf32>
      %203 = math.exp %202 : vector<4x8x8xf32>
      %204 = arith.mulf %200, %arg28 : vector<4x8x1xf32>
      %cst_100 = arith.constant dense<0.000000e+00> : vector<4x8xf32>
      %205 = vector.multi_reduction <add>, %203, %cst_100 [2] : vector<4x8x8xf32> to vector<4x8xf32>
      %206 = vector.shape_cast %205 : vector<4x8xf32> to vector<4x8x1xf32>
      %207 = arith.addf %204, %206 : vector<4x8x1xf32>
      %208 = vector.broadcast %200 : vector<4x8x1xf32> to vector<4x8x8xf32>
      %209 = arith.mulf %208, %arg29 : vector<4x8x8xf32>
      %210 = arith.truncf %203 : vector<4x8x8xf32> to vector<4x8x8xbf16>
      "tpu.trace_start"() <{level = 10 : i32, message = "hqk,hkd->hqd"}> : () -> ()
      %cst_101 = arith.constant dense<0.000000e+00> : vector<4x8x8xf32>
      %211 = tpu.matmul %210, %194, %cst_101 {dimension_numbers = #tpu.dot_dimension_numbers<[2], [1], [1], [2], [0, 0, 0, 1, 1, 2], [0], [0]>} : vector<4x8x8xbf16>, vector<4x8x8xbf16>, vector<4x8x8xf32> -> vector<4x8x8xf32>
      "tpu.trace_stop"() : () -> ()
      %212 = arith.addf %209, %211 : vector<4x8x8xf32>
      scf.yield %198, %207, %212 : vector<4x8x1xf32>, vector<4x8x1xf32>, vector<4x8x8xf32>
    }
    %73 = vector.broadcast %72#1 : vector<4x8x1xf32> to vector<4x8x8xf32>
    %74 = arith.divf %72#2, %73 : vector<4x8x8xf32>
    %75 = arith.truncf %74 : vector<4x8x8xf32> to vector<4x8x8xbf16>
    %c0_26 = arith.constant 0 : index
    %c0_27 = arith.constant 0 : index
    %c0_28 = arith.constant 0 : index
    %76 = vector.load %arg13[%c0_26, %c0_27, %c0_28] : memref<4x8x32xbf16, #tpu.memory_space<vmem>>, vector<4x8x32xbf16>
    "tpu.trace_start"() <{level = 10 : i32, message = "hqd,hdc->hqc"}> : () -> ()
    %cst_29 = arith.constant dense<0.000000e+00> : vector<4x8x32xf32>
    %77 = tpu.matmul %75, %76, %cst_29 {dimension_numbers = #tpu.dot_dimension_numbers<[2], [1], [1], [2], [0, 0, 0, 1, 1, 2], [0], [0]>} : vector<4x8x8xbf16>, vector<4x8x32xbf16>, vector<4x8x32xf32> -> vector<4x8x32xf32>
    "tpu.trace_stop"() : () -> ()
    %cst_30 = arith.constant dense<0.000000e+00> : vector<8x32xf32>
    %78 = vector.multi_reduction <add>, %77, %cst_30 [0] : vector<4x8x32xf32> to vector<8x32xf32>
    %c0_31 = arith.constant 0 : index
    %c0_32 = arith.constant 0 : index
    %79 = vector.load %arg14[%c0_31, %c0_32] : memref<1x32xf32, #tpu.memory_space<vmem>>, vector<1x32xf32>
    %80 = vector.broadcast %79 : vector<1x32xf32> to vector<8x32xf32>
    %81 = arith.addf %78, %80 : vector<8x32xf32>
    %82 = arith.addf %1, %81 : vector<8x32xf32>
    %c0_33 = arith.constant 0 : index
    %c0_34 = arith.constant 0 : index
    %83 = vector.load %arg7[%c0_33, %c0_34] : memref<1x32xf32, #tpu.memory_space<vmem>>, vector<1x32xf32>
    %c0_35 = arith.constant 0 : index
    %c0_36 = arith.constant 0 : index
    %84 = vector.load %arg8[%c0_35, %c0_36] : memref<1x32xf32, #tpu.memory_space<vmem>>, vector<1x32xf32>
    %cst_37 = arith.constant dense<0.000000e+00> : vector<8xf32>
    %85 = vector.multi_reduction <add>, %82, %cst_37 [1] : vector<8x32xf32> to vector<8xf32>
    %86 = vector.shape_cast %85 : vector<8xf32> to vector<8x1xf32>
    %cst_38 = arith.constant 3.200000e+01 : f32
    %87 = vector.broadcast %cst_38 : f32 to vector<8x1xf32>
    %88 = arith.divf %86, %87 : vector<8x1xf32>
    %89 = vector.broadcast %88 : vector<8x1xf32> to vector<8x32xf32>
    %90 = arith.subf %82, %89 : vector<8x32xf32>
    %91 = arith.mulf %90, %90 : vector<8x32xf32>
    %cst_39 = arith.constant dense<0.000000e+00> : vector<8xf32>
    %92 = vector.multi_reduction <add>, %91, %cst_39 [1] : vector<8x32xf32> to vector<8xf32>
    %93 = vector.shape_cast %92 : vector<8xf32> to vector<8x1xf32>
    %cst_40 = arith.constant 3.200000e+01 : f32
    %94 = vector.broadcast %cst_40 : f32 to vector<8x1xf32>
    %95 = arith.divf %93, %94 : vector<8x1xf32>
    %cst_41 = arith.constant 9.99999974E-6 : f32
    %96 = vector.broadcast %cst_41 : f32 to vector<8x1xf32>
    %97 = arith.addf %95, %96 : vector<8x1xf32>
    %98 = math.rsqrt %97 : vector<8x1xf32>
    %99 = vector.broadcast %98 : vector<8x1xf32> to vector<8x32xf32>
    %100 = arith.mulf %90, %99 : vector<8x32xf32>
    %101 = vector.broadcast %83 : vector<1x32xf32> to vector<8x32xf32>
    %102 = arith.mulf %100, %101 : vector<8x32xf32>
    %103 = vector.broadcast %84 : vector<1x32xf32> to vector<8x32xf32>
    %104 = arith.addf %102, %103 : vector<8x32xf32>
    %105 = arith.truncf %104 : vector<8x32xf32> to vector<8x32xbf16>
    %c0_42 = arith.constant 0 : index
    %c0_43 = arith.constant 0 : index
    %106 = vector.load %arg15[%c0_42, %c0_43] : memref<32x32xbf16, #tpu.memory_space<vmem>>, vector<32x32xbf16>
    %cst_44 = arith.constant dense<0.000000e+00> : vector<8x32xf32>
    %107 = tpu.matmul %105, %106, %cst_44 {dimension_numbers = #tpu.dot_dimension_numbers<[1], [0], [0], [1], [0, 0, 1, 1], [], []>} : vector<8x32xbf16>, vector<32x32xbf16>, vector<8x32xf32> -> vector<8x32xf32>
    %c0_45 = arith.constant 0 : index
    %c0_46 = arith.constant 0 : index
    %108 = vector.load %arg16[%c0_45, %c0_46] : memref<1x32xf32, #tpu.memory_space<vmem>>, vector<1x32xf32>
    %109 = vector.broadcast %108 : vector<1x32xf32> to vector<8x32xf32>
    %110 = arith.addf %107, %109 : vector<8x32xf32>
    %111 = arith.truncf %110 : vector<8x32xf32> to vector<8x32xbf16>
    %112 = vector.shape_cast %111 : vector<8x32xbf16> to vector<8x4x8xbf16>
    %113 = tpu.transpose %112, [1, 0, 2] : vector<8x4x8xbf16> -> vector<4x8x8xbf16>
    %c0_47 = arith.constant 0 : index
    %c0_48 = arith.constant 0 : index
    %c0_49 = arith.constant 0 : index
    %c0_50 = arith.constant 0 : index
    %114 = vector.load %arg3[%c0_47, %c0_48, %c0_49, %c0_50] : memref<1x4x8x8xbf16, #tpu.memory_space<vmem>>, vector<1x4x8x8xbf16>
    %115 = vector.shape_cast %114 : vector<1x4x8x8xbf16> to vector<4x8x8xbf16>
    %c0_51 = arith.constant 0 : index
    %c0_52 = arith.constant 0 : index
    %c0_53 = arith.constant 0 : index
    %c0_54 = arith.constant 0 : index
    %116 = vector.load %arg4[%c0_51, %c0_52, %c0_53, %c0_54] : memref<1x4x8x8xbf16, #tpu.memory_space<vmem>>, vector<1x4x8x8xbf16>
    %117 = vector.shape_cast %116 : vector<1x4x8x8xbf16> to vector<4x8x8xbf16>
    "tpu.trace_start"() <{level = 10 : i32, message = "hqd,hkd->hqk"}> : () -> ()
    %cst_55 = arith.constant dense<0.000000e+00> : vector<4x8x8xf32>
    %118 = tpu.matmul %113, %115, %cst_55 {dimension_numbers = #tpu.dot_dimension_numbers<[2], [2], [1], [1], [0, 0, 0, 1, 1, 1], [0], [0]>} : vector<4x8x8xbf16>, vector<4x8x8xbf16>, vector<4x8x8xf32> -> vector<4x8x8xf32>
    "tpu.trace_stop"() : () -> ()
    %cst_56 = arith.constant dense<0xFF800000> : vector<4x8xf32>
    %119 = vector.multi_reduction <maximumf>, %118, %cst_56 [2] : vector<4x8x8xf32> to vector<4x8xf32>
    %120 = vector.shape_cast %119 : vector<4x8xf32> to vector<4x8x1xf32>
    %121 = vector.broadcast %120 : vector<4x8x1xf32> to vector<4x8x8xf32>
    %122 = arith.subf %118, %121 : vector<4x8x8xf32>
    %123 = math.exp %122 : vector<4x8x8xf32>
    %cst_57 = arith.constant dense<0.000000e+00> : vector<4x8xf32>
    %124 = vector.multi_reduction <add>, %123, %cst_57 [2] : vector<4x8x8xf32> to vector<4x8xf32>
    %125 = vector.shape_cast %124 : vector<4x8xf32> to vector<4x8x1xf32>
    %126 = vector.broadcast %125 : vector<4x8x1xf32> to vector<4x8x8xf32>
    %127 = arith.divf %123, %126 : vector<4x8x8xf32>
    %128 = arith.truncf %127 : vector<4x8x8xf32> to vector<4x8x8xbf16>
    "tpu.trace_start"() <{level = 10 : i32, message = "hqk,hkd->hqd"}> : () -> ()
    %cst_58 = arith.constant dense<0.000000e+00> : vector<4x8x8xf32>
    %129 = tpu.matmul %128, %117, %cst_58 {dimension_numbers = #tpu.dot_dimension_numbers<[2], [1], [1], [2], [0, 0, 0, 1, 1, 2], [0], [0]>} : vector<4x8x8xbf16>, vector<4x8x8xbf16>, vector<4x8x8xf32> -> vector<4x8x8xf32>
    "tpu.trace_stop"() : () -> ()
    %130 = arith.truncf %129 : vector<4x8x8xf32> to vector<4x8x8xbf16>
    %c0_59 = arith.constant 0 : index
    %c0_60 = arith.constant 0 : index
    %c0_61 = arith.constant 0 : index
    %131 = vector.load %arg17[%c0_59, %c0_60, %c0_61] : memref<4x8x32xbf16, #tpu.memory_space<vmem>>, vector<4x8x32xbf16>
    "tpu.trace_start"() <{level = 10 : i32, message = "hqd,hdc->hqc"}> : () -> ()
    %cst_62 = arith.constant dense<0.000000e+00> : vector<4x8x32xf32>
    %132 = tpu.matmul %130, %131, %cst_62 {dimension_numbers = #tpu.dot_dimension_numbers<[2], [1], [1], [2], [0, 0, 0, 1, 1, 2], [0], [0]>} : vector<4x8x8xbf16>, vector<4x8x32xbf16>, vector<4x8x32xf32> -> vector<4x8x32xf32>
    "tpu.trace_stop"() : () -> ()
    %cst_63 = arith.constant dense<0.000000e+00> : vector<8x32xf32>
    %133 = vector.multi_reduction <add>, %132, %cst_63 [0] : vector<4x8x32xf32> to vector<8x32xf32>
    %c0_64 = arith.constant 0 : index
    %c0_65 = arith.constant 0 : index
    %134 = vector.load %arg18[%c0_64, %c0_65] : memref<1x32xf32, #tpu.memory_space<vmem>>, vector<1x32xf32>
    %135 = vector.broadcast %134 : vector<1x32xf32> to vector<8x32xf32>
    %136 = arith.addf %133, %135 : vector<8x32xf32>
    %137 = arith.addf %82, %136 : vector<8x32xf32>
    %c0_66 = arith.constant 0 : index
    %c0_67 = arith.constant 0 : index
    %138 = vector.load %arg9[%c0_66, %c0_67] : memref<1x32xf32, #tpu.memory_space<vmem>>, vector<1x32xf32>
    %c0_68 = arith.constant 0 : index
    %c0_69 = arith.constant 0 : index
    %139 = vector.load %arg10[%c0_68, %c0_69] : memref<1x32xf32, #tpu.memory_space<vmem>>, vector<1x32xf32>
    %cst_70 = arith.constant dense<0.000000e+00> : vector<8xf32>
    %140 = vector.multi_reduction <add>, %137, %cst_70 [1] : vector<8x32xf32> to vector<8xf32>
    %141 = vector.shape_cast %140 : vector<8xf32> to vector<8x1xf32>
    %cst_71 = arith.constant 3.200000e+01 : f32
    %142 = vector.broadcast %cst_71 : f32 to vector<8x1xf32>
    %143 = arith.divf %141, %142 : vector<8x1xf32>
    %144 = vector.broadcast %143 : vector<8x1xf32> to vector<8x32xf32>
    %145 = arith.subf %137, %144 : vector<8x32xf32>
    %146 = arith.mulf %145, %145 : vector<8x32xf32>
    %cst_72 = arith.constant dense<0.000000e+00> : vector<8xf32>
    %147 = vector.multi_reduction <add>, %146, %cst_72 [1] : vector<8x32xf32> to vector<8xf32>
    %148 = vector.shape_cast %147 : vector<8xf32> to vector<8x1xf32>
    %cst_73 = arith.constant 3.200000e+01 : f32
    %149 = vector.broadcast %cst_73 : f32 to vector<8x1xf32>
    %150 = arith.divf %148, %149 : vector<8x1xf32>
    %cst_74 = arith.constant 9.99999974E-6 : f32
    %151 = vector.broadcast %cst_74 : f32 to vector<8x1xf32>
    %152 = arith.addf %150, %151 : vector<8x1xf32>
    %153 = math.rsqrt %152 : vector<8x1xf32>
    %154 = vector.broadcast %153 : vector<8x1xf32> to vector<8x32xf32>
    %155 = arith.mulf %145, %154 : vector<8x32xf32>
    %156 = vector.broadcast %138 : vector<1x32xf32> to vector<8x32xf32>
    %157 = arith.mulf %155, %156 : vector<8x32xf32>
    %158 = vector.broadcast %139 : vector<1x32xf32> to vector<8x32xf32>
    %159 = arith.addf %157, %158 : vector<8x32xf32>
    %160 = arith.truncf %159 : vector<8x32xf32> to vector<8x32xbf16>
    %c0_75 = arith.constant 0 : index
    %c0_76 = arith.constant 0 : index
    %161 = vector.load %arg19[%c0_75, %c0_76] : memref<32x128xbf16, #tpu.memory_space<vmem>>, vector<32x128xbf16>
    %cst_77 = arith.constant dense<0.000000e+00> : vector<8x128xf32>
    %162 = tpu.matmul %160, %161, %cst_77 {dimension_numbers = #tpu.dot_dimension_numbers<[1], [0], [0], [1], [0, 0, 1, 1], [], []>} : vector<8x32xbf16>, vector<32x128xbf16>, vector<8x128xf32> -> vector<8x128xf32>
    %c0_78 = arith.constant 0 : index
    %c0_79 = arith.constant 0 : index
    %163 = vector.load %arg20[%c0_78, %c0_79] : memref<1x128xf32, #tpu.memory_space<vmem>>, vector<1x128xf32>
    %164 = vector.broadcast %163 : vector<1x128xf32> to vector<8x128xf32>
    %165 = arith.addf %162, %164 : vector<8x128xf32>
    %cst_80 = arith.constant 5.000000e-01 : f32
    %166 = vector.broadcast %cst_80 : f32 to vector<8x128xf32>
    %167 = arith.mulf %166, %165 : vector<8x128xf32>
    %cst_81 = arith.constant 4.471500e-02 : f32
    %168 = vector.broadcast %cst_81 : f32 to vector<8x128xf32>
    %169 = arith.mulf %168, %165 : vector<8x128xf32>
    %170 = arith.mulf %169, %165 : vector<8x128xf32>
    %171 = arith.mulf %170, %165 : vector<8x128xf32>
    %172 = arith.addf %165, %171 : vector<8x128xf32>
    %cst_82 = arith.constant 0.797884583 : f32
    %173 = vector.broadcast %cst_82 : f32 to vector<8x128xf32>
    %174 = arith.mulf %173, %172 : vector<8x128xf32>
    %175 = math.tanh %174 : vector<8x128xf32>
    %cst_83 = arith.constant 1.000000e+00 : f32
    %176 = vector.broadcast %cst_83 : f32 to vector<8x128xf32>
    %177 = arith.addf %176, %175 : vector<8x128xf32>
    %178 = arith.mulf %167, %177 : vector<8x128xf32>
    %179 = arith.truncf %178 : vector<8x128xf32> to vector<8x128xbf16>
    %c0_84 = arith.constant 0 : index
    %c0_85 = arith.constant 0 : index
    %180 = vector.load %arg21[%c0_84, %c0_85] : memref<128x32xbf16, #tpu.memory_space<vmem>>, vector<128x32xbf16>
    %cst_86 = arith.constant dense<0.000000e+00> : vector<8x32xf32>
    %181 = tpu.matmul %179, %180, %cst_86 {dimension_numbers = #tpu.dot_dimension_numbers<[1], [0], [0], [1], [0, 0, 1, 1], [], []>} : vector<8x128xbf16>, vector<128x32xbf16>, vector<8x32xf32> -> vector<8x32xf32>
    %c0_87 = arith.constant 0 : index
    %c0_88 = arith.constant 0 : index
    %182 = vector.load %arg22[%c0_87, %c0_88] : memref<1x32xf32, #tpu.memory_space<vmem>>, vector<1x32xf32>
    %183 = vector.broadcast %182 : vector<1x32xf32> to vector<8x32xf32>
    %184 = arith.addf %181, %183 : vector<8x32xf32>
    %185 = arith.addf %137, %184 : vector<8x32xf32>
    %c0_89 = arith.constant 0 : index
    %c0_90 = arith.constant 0 : index
    %c0_91 = arith.constant 0 : index
    %186 = vector.load %arg23[%c0_89, %c0_90, %c0_91] : memref<1x8x32xf32, #tpu.memory_space<vmem>>, vector<1x8x32xf32>
    %187 = vector.shape_cast %186 : vector<1x8x32xf32> to vector<8x32xf32>
    %188 = vector.shape_cast %185 : vector<8x32xf32> to vector<1x8x32xf32>
    tpu.vector_store %arg23[%c0_89, %c0_90, %c0_91], %188 {strides = array<i32>} : memref<1x8x32xf32, #tpu.memory_space<vmem>>, vector<1x8x32xf32>,
    return
  }
  func.func @transform_0(%arg0: i32, %arg1: i32) -> (i32, i32, i32) {
    %c0_i32 = arith.constant 0 : i32
    %c0_i32_0 = arith.constant 0 : i32
    return %arg0, %arg1, %c0_i32 : i32, i32, i32
  }
  func.func @transform_1(%arg0: i32, %arg1: i32) -> (i32, i32, i32, i32) {
    %c0_i32 = arith.constant 0 : i32
    %c0_i32_0 = arith.constant 0 : i32
    %c0_i32_1 = arith.constant 0 : i32
    %c0_i32_2 = arith.constant 0 : i32
    return %arg0, %c0_i32, %c0_i32_0, %c0_i32_1 : i32, i32, i32, i32
  }
  func.func @transform_2(%arg0: i32, %arg1: i32) -> (i32, i32, i32, i32) {
    %c0_i32 = arith.constant 0 : i32
    %c0_i32_0 = arith.constant 0 : i32
    %c0_i32_1 = arith.constant 0 : i32
    %c0_i32_2 = arith.constant 0 : i32
    return %arg0, %c0_i32, %c0_i32_0, %c0_i32_1 : i32, i32, i32, i32
  }
  func.func @transform_3(%arg0: i32, %arg1: i32) -> (i32, i32) {
    %c0_i32 = arith.constant 0 : i32
    %c0_i32_0 = arith.constant 0 : i32
    %c0_i32_1 = arith.constant 0 : i32
    return %c0_i32, %c0_i32_0 : i32, i32
  }
  func.func @transform_4(%arg0: i32, %arg1: i32) -> (i32, i32) {
    %c0_i32 = arith.constant 0 : i32
    %c0_i32_0 = arith.constant 0 : i32
    %c0_i32_1 = arith.constant 0 : i32
    return %c0_i32, %c0_i32_0 : i32, i32
  }
  func.func @transform_5(%arg0: i32, %arg1: i32) -> (i32, i32) {
    %c0_i32 = arith.constant 0 : i32
    %c0_i32_0 = arith.constant 0 : i32
    %c0_i32_1 = arith.constant 0 : i32
    return %c0_i32, %c0_i32_0 : i32, i32
  }
  func.func @transform_6(%arg0: i32, %arg1: i32) -> (i32, i32) {
    %c0_i32 = arith.constant 0 : i32
    %c0_i32_0 = arith.constant 0 : i32
    %c0_i32_1 = arith.constant 0 : i32
    return %c0_i32, %c0_i32_0 : i32, i32
  }
  func.func @transform_7(%arg0: i32, %arg1: i32) -> (i32, i32) {
    %c0_i32 = arith.constant 0 : i32
    %c0_i32_0 = arith.constant 0 : i32
    %c0_i32_1 = arith.constant 0 : i32
    return %c0_i32, %c0_i32_0 : i32, i32
  }
  func.func @transform_8(%arg0: i32, %arg1: i32) -> (i32, i32) {
    %c0_i32 = arith.constant 0 : i32
    %c0_i32_0 = arith.constant 0 : i32
    %c0_i32_1 = arith.constant 0 : i32
    return %c0_i32, %c0_i32_0 : i32, i32
  }
  func.func @transform_9(%arg0: i32, %arg1: i32) -> (i32, i32) {
    %c0_i32 = arith.constant 0 : i32
    %c0_i32_0 = arith.constant 0 : i32
    %c0_i32_1 = arith.constant 0 : i32
    return %c0_i32, %c0_i32_0 : i32, i32
  }
  func.func @transform_10(%arg0: i32, %arg1: i32) -> (i32, i32) {
    %c0_i32 = arith.constant 0 : i32
    %c0_i32_0 = arith.constant 0 : i32
    %c0_i32_1 = arith.constant 0 : i32
    return %c0_i32, %c0_i32_0 : i32, i32
  }
  func.func @transform_11(%arg0: i32, %arg1: i32) -> (i32, i32, i32) {
    %c0_i32 = arith.constant 0 : i32
    %c0_i32_0 = arith.constant 0 : i32
    %c0_i32_1 = arith.constant 0 : i32
    %c0_i32_2 = arith.constant 0 : i32
    return %c0_i32, %c0_i32_0, %c0_i32_1 : i32, i32, i32
  }
  func.func @transform_12(%arg0: i32, %arg1: i32) -> (i32, i32) {
    %c0_i32 = arith.constant 0 : i32
    %c0_i32_0 = arith.constant 0 : i32
    %c0_i32_1 = arith.constant 0 : i32
    return %c0_i32, %c0_i32_0 : i32, i32
  }
  func.func @transform_13(%arg0: i32, %arg1: i32) -> (i32, i32) {
    %c0_i32 = arith.constant 0 : i32
    %c0_i32_0 = arith.constant 0 : i32
    %c0_i32_1 = arith.constant 0 : i32
    return %c0_i32, %c0_i32_0 : i32, i32
  }
  func.func @transform_14(%arg0: i32, %arg1: i32) -> (i32, i32) {
    %c0_i32 = arith.constant 0 : i32
    %c0_i32_0 = arith.constant 0 : i32
    %c0_i32_1 = arith.constant 0 : i32
    return %c0_i32, %c0_i32_0 : i32, i32
  }
  func.func @transform_15(%arg0: i32, %arg1: i32) -> (i32, i32, i32) {
    %c0_i32 = arith.constant 0 : i32
    %c0_i32_0 = arith.constant 0 : i32
    %c0_i32_1 = arith.constant 0 : i32
    %c0_i32_2 = arith.constant 0 : i32
    return %c0_i32, %c0_i32_0, %c0_i32_1 : i32, i32, i32
  }
  func.func @transform_16(%arg0: i32, %arg1: i32) -> (i32, i32) {
    %c0_i32 = arith.constant 0 : i32
    %c0_i32_0 = arith.constant 0 : i32
    %c0_i32_1 = arith.constant 0 : i32
    return %c0_i32, %c0_i32_0 : i32, i32
  }
  func.func @transform_17(%arg0: i32, %arg1: i32) -> (i32, i32) {
    %c0_i32 = arith.constant 0 : i32
    %c0_i32_0 = arith.constant 0 : i32
    %c0_i32_1 = arith.constant 0 : i32
    return %c0_i32, %c0_i32_0 : i32, i32
  }
  func.func @transform_18(%arg0: i32, %arg1: i32) -> (i32, i32) {
    %c0_i32 = arith.constant 0 : i32
    %c0_i32_0 = arith.constant 0 : i32
    %c0_i32_1 = arith.constant 0 : i32
    return %c0_i32, %c0_i32_0 : i32, i32
  }
  func.func @transform_19(%arg0: i32, %arg1: i32) -> (i32, i32) {
    %c0_i32 = arith.constant 0 : i32
    %c0_i32_0 = arith.constant 0 : i32
    %c0_i32_1 = arith.constant 0 : i32
    return %c0_i32, %c0_i32_0 : i32, i32
  }
  func.func @transform_20(%arg0: i32, %arg1: i32) -> (i32, i32) {
    %c0_i32 = arith.constant 0 : i32
    %c0_i32_0 = arith.constant 0 : i32
    %c0_i32_1 = arith.constant 0 : i32
    return %c0_i32, %c0_i32_0 : i32, i32
  }
  func.func @transform_21(%arg0: i32, %arg1: i32) -> (i32, i32, i32) {
    %c0_i32 = arith.constant 0 : i32
    %c0_i32_0 = arith.constant 0 : i32
    return %arg0, %arg1, %c0_i32 : i32, i32, i32
  }
}

module attributes {stable_mosaic.version = 11 : i64} {
  func.func @modified_block_kernel(%arg0: i32, %arg1: i32, %arg2: memref<1x8x32xf32, #tpu.memory_space<vmem>>, %arg3: memref<1x4x8x8xbf16, #tpu.memory_space<vmem>>, %arg4: memref<1x4x8x8xbf16, #tpu.memory_space<vmem>>, %arg5: memref<1x32xf32, #tpu.memory_space<vmem>>, %arg6: memref<1x32xf32, #tpu.memory_space<vmem>>, %arg7: memref<1x32xf32, #tpu.memory_space<vmem>>, %arg8: memref<1x32xf32, #tpu.memory_space<vmem>>, %arg9: memref<1x32xf32, #tpu.memory_space<vmem>>, %arg10: memref<1x32xf32, #tpu.memory_space<vmem>>, %arg11: memref<32x96xbf16, #tpu.memory_space<vmem>>, %arg12: memref<1x96xf32, #tpu.memory_space<vmem>>, %arg13: memref<4x8x32xbf16, #tpu.memory_space<vmem>>, %arg14: memref<1x32xf32, #tpu.memory_space<vmem>>, %arg15: memref<32x32xbf16, #tpu.memory_space<vmem>>, %arg16: memref<1x32xf32, #tpu.memory_space<vmem>>, %arg17: memref<4x8x32xbf16, #tpu.memory_space<vmem>>, %arg18: memref<1x32xf32, #tpu.memory_space<vmem>>, %arg19: memref<32x128xbf16, #tpu.memory_space<vmem>>, %arg20: memref<1x128xf32, #tpu.memory_space<vmem>>, %arg21: memref<128x32xbf16, #tpu.memory_space<vmem>>, %arg22: memref<1x32xf32, #tpu.memory_space<vmem>>, %arg23: memref<1x8x32xf32, #tpu.memory_space<vmem>>, %arg24: memref<1x4x8x8xbf16, #tpu.memory_space<vmem>>, %arg25: memref<1x4x8x8xbf16, #tpu.memory_space<vmem>>) attributes {dimension_semantics = [#tpu.dimension_semantics<parallel>, #tpu.dimension_semantics<arbitrary>], iteration_bounds = array<i64: 2, 1>, scalar_prefetch = 0 : i64, scratch_operands = 2 : i64, tpu.core_type = #tpu.core_type<tc>, window_params = [{transform_indices = @transform_0, window_bounds = array<i64: 1, 8, 32>}, {transform_indices = @transform_1, window_bounds = array<i64: 1, 4, 8, 8>}, {transform_indices = @transform_2, window_bounds = array<i64: 1, 4, 8, 8>}, {pipeline_mode = #tpu.pipeline_mode<synchronous>, transform_indices = @transform_3, window_bounds = array<i64: 1, 32>}, {pipeline_mode = #tpu.pipeline_mode<synchronous>, transform_indices = @transform_4, window_bounds = array<i64: 1, 32>}, {pipeline_mode = #tpu.pipeline_mode<synchronous>, transform_indices = @transform_5, window_bounds = array<i64: 1, 32>}, {pipeline_mode = #tpu.pipeline_mode<synchronous>, transform_indices = @transform_6, window_bounds = array<i64: 1, 32>}, {pipeline_mode = #tpu.pipeline_mode<synchronous>, transform_indices = @transform_7, window_bounds = array<i64: 1, 32>}, {pipeline_mode = #tpu.pipeline_mode<synchronous>, transform_indices = @transform_8, window_bounds = array<i64: 1, 32>}, {pipeline_mode = #tpu.pipeline_mode<synchronous>, transform_indices = @transform_9, window_bounds = array<i64: 32, 96>}, {pipeline_mode = #tpu.pipeline_mode<synchronous>, transform_indices = @transform_10, window_bounds = array<i64: 1, 96>}, {pipeline_mode = #tpu.pipeline_mode<synchronous>, transform_indices = @transform_11, window_bounds = array<i64: 4, 8, 32>}, {pipeline_mode = #tpu.pipeline_mode<synchronous>, transform_indices = @transform_12, window_bounds = array<i64: 1, 32>}, {pipeline_mode = #tpu.pipeline_mode<synchronous>, transform_indices = @transform_13, window_bounds = array<i64: 32, 32>}, {pipeline_mode = #tpu.pipeline_mode<synchronous>, transform_indices = @transform_14, window_bounds = array<i64: 1, 32>}, {pipeline_mode = #tpu.pipeline_mode<synchronous>, transform_indices = @transform_15, window_bounds = array<i64: 4, 8, 32>}, {pipeline_mode = #tpu.pipeline_mode<synchronous>, transform_indices = @transform_16, window_bounds = array<i64: 1, 32>}, {pipeline_mode = #tpu.pipeline_mode<synchronous>, transform_indices = @transform_17, window_bounds = array<i64: 32, 128>}, {pipeline_mode = #tpu.pipeline_mode<synchronous>, transform_indices = @transform_18, window_bounds = array<i64: 1, 128>}, {pipeline_mode = #tpu.pipeline_mode<synchronous>, transform_indices = @transform_19, window_bounds = array<i64: 128, 32>}, {pipeline_mode = #tpu.pipeline_mode<synchronous>, transform_indices = @transform_20, window_bounds = array<i64: 1, 32>}, {transform_indices = @transform_21, window_bounds = array<i64: 1, 8, 32>}]} {
    %c0 = arith.constant 0 : index
    %c0_0 = arith.constant 0 : index
    %c0_1 = arith.constant 0 : index
    %0 = vector.load %arg2[%c0, %c0_0, %c0_1] : memref<1x8x32xf32, #tpu.memory_space<vmem>>, vector<1x8x32xf32>
    %1 = vector.shape_cast %0 : vector<1x8x32xf32> to vector<8x32xf32>
    %c0_2 = arith.constant 0 : index
    %c0_3 = arith.constant 0 : index
    %2 = vector.load %arg5[%c0_2, %c0_3] : memref<1x32xf32, #tpu.memory_space<vmem>>, vector<1x32xf32>
    %c0_4 = arith.constant 0 : index
    %c0_5 = arith.constant 0 : index
    %3 = vector.load %arg6[%c0_4, %c0_5] : memref<1x32xf32, #tpu.memory_space<vmem>>, vector<1x32xf32>
    %cst = arith.constant dense<0.000000e+00> : vector<8xf32>
    %4 = vector.multi_reduction <add>, %1, %cst [1] : vector<8x32xf32> to vector<8xf32>
    %5 = vector.shape_cast %4 : vector<8xf32> to vector<8x1xf32>
    %cst_6 = arith.constant 3.200000e+01 : f32
    %6 = vector.broadcast %cst_6 : f32 to vector<8x1xf32>
    %7 = arith.divf %5, %6 : vector<8x1xf32>
    %8 = vector.broadcast %7 : vector<8x1xf32> to vector<8x32xf32>
    %9 = arith.subf %1, %8 : vector<8x32xf32>
    %10 = arith.mulf %9, %9 : vector<8x32xf32>
    %cst_7 = arith.constant dense<0.000000e+00> : vector<8xf32>
    %11 = vector.multi_reduction <add>, %10, %cst_7 [1] : vector<8x32xf32> to vector<8xf32>
    %12 = vector.shape_cast %11 : vector<8xf32> to vector<8x1xf32>
    %cst_8 = arith.constant 3.200000e+01 : f32
    %13 = vector.broadcast %cst_8 : f32 to vector<8x1xf32>
    %14 = arith.divf %12, %13 : vector<8x1xf32>
    %cst_9 = arith.constant 9.99999974E-6 : f32
    %15 = vector.broadcast %cst_9 : f32 to vector<8x1xf32>
    %16 = arith.addf %14, %15 : vector<8x1xf32>
    %17 = math.rsqrt %16 : vector<8x1xf32>
    %18 = vector.broadcast %17 : vector<8x1xf32> to vector<8x32xf32>
    %19 = arith.mulf %9, %18 : vector<8x32xf32>
    %20 = vector.broadcast %2 : vector<1x32xf32> to vector<8x32xf32>
    %21 = arith.mulf %19, %20 : vector<8x32xf32>
    %22 = vector.broadcast %3 : vector<1x32xf32> to vector<8x32xf32>
    %23 = arith.addf %21, %22 : vector<8x32xf32>
    %24 = arith.truncf %23 : vector<8x32xf32> to vector<8x32xbf16>
    %c0_10 = arith.constant 0 : index
    %c0_11 = arith.constant 0 : index
    %25 = vector.load %arg11[%c0_10, %c0_11] : memref<32x96xbf16, #tpu.memory_space<vmem>>, vector<32x96xbf16>
    %cst_12 = arith.constant dense<0.000000e+00> : vector<8x96xf32>
    %26 = tpu.matmul %24, %25, %cst_12 {dimension_numbers = #tpu.dot_dimension_numbers<[1], [0], [0], [1], [0, 0, 1, 1], [], []>} : vector<8x32xbf16>, vector<32x96xbf16>, vector<8x96xf32> -> vector<8x96xf32>
    %c0_13 = arith.constant 0 : index
    %c0_14 = arith.constant 0 : index
    %27 = vector.load %arg12[%c0_13, %c0_14] : memref<1x96xf32, #tpu.memory_space<vmem>>, vector<1x96xf32>
    %28 = vector.broadcast %27 : vector<1x96xf32> to vector<8x96xf32>
    %29 = arith.addf %26, %28 : vector<8x96xf32>
    %30 = vector.extract_strided_slice %29 {offsets = [0, 0], sizes = [8, 32], strides = [1, 1]} : vector<8x96xf32> to vector<8x32xf32>
    %31 = arith.truncf %30 : vector<8x32xf32> to vector<8x32xbf16>
    %32 = vector.shape_cast %31 : vector<8x32xbf16> to vector<8x4x8xbf16>
    %33 = tpu.transpose %32, [1, 0, 2] : vector<8x4x8xbf16> -> vector<4x8x8xbf16>
    %34 = vector.extract_strided_slice %29 {offsets = [0, 32], sizes = [8, 32], strides = [1, 1]} : vector<8x96xf32> to vector<8x32xf32>
    %35 = arith.truncf %34 : vector<8x32xf32> to vector<8x32xbf16>
    %36 = vector.shape_cast %35 : vector<8x32xbf16> to vector<8x4x8xbf16>
    %37 = tpu.transpose %36, [1, 0, 2] : vector<8x4x8xbf16> -> vector<4x8x8xbf16>
    %38 = vector.extract_strided_slice %29 {offsets = [0, 64], sizes = [8, 32], strides = [1, 1]} : vector<8x96xf32> to vector<8x32xf32>
    %39 = arith.truncf %38 : vector<8x32xf32> to vector<8x32xbf16>
    %40 = vector.shape_cast %39 : vector<8x32xbf16> to vector<8x4x8xbf16>
    %41 = tpu.transpose %40, [1, 0, 2] : vector<8x4x8xbf16> -> vector<4x8x8xbf16>
    %42 = arith.index_cast %arg1 : i32 to index
    %c0_15 = arith.constant 0 : index
    %c0_16 = arith.constant 0 : index
    %c0_17 = arith.constant 0 : index
    %43 = vector.load %arg24[%42, %c0_15, %c0_16, %c0_17] : memref<1x4x8x8xbf16, #tpu.memory_space<vmem>>, vector<1x4x8x8xbf16>
    %44 = vector.shape_cast %43 : vector<1x4x8x8xbf16> to vector<4x8x8xbf16>
    %45 = vector.shape_cast %37 : vector<4x8x8xbf16> to vector<1x4x8x8xbf16>
    tpu.vector_store %arg24[%42, %c0_15, %c0_16, %c0_17], %45 {strides = array<i32>} : memref<1x4x8x8xbf16, #tpu.memory_space<vmem>>, vector<1x4x8x8xbf16>,
    %46 = arith.index_cast %arg1 : i32 to index
    %c0_18 = arith.constant 0 : index
    %c0_19 = arith.constant 0 : index
    %c0_20 = arith.constant 0 : index
    %47 = vector.load %arg25[%46, %c0_18, %c0_19, %c0_20] : memref<1x4x8x8xbf16, #tpu.memory_space<vmem>>, vector<1x4x8x8xbf16>
    %48 = vector.shape_cast %47 : vector<1x4x8x8xbf16> to vector<4x8x8xbf16>
    %49 = vector.shape_cast %41 : vector<4x8x8xbf16> to vector<1x4x8x8xbf16>
    tpu.vector_store %arg25[%46, %c0_18, %c0_19, %c0_20], %49 {strides = array<i32>} : memref<1x4x8x8xbf16, #tpu.memory_space<vmem>>, vector<1x4x8x8xbf16>,
    %50 = tpu.iota {dimensions = array<i32: 0>} : vector<8x8xi32>
    %51 = tpu.iota {dimensions = array<i32: 1>} : vector<8x8xi32>
    %52 = arith.cmpi sgt, %51, %50 : vector<8x8xi32>
    %53 = arith.extui %52 : vector<8x8xi1> to vector<8x8xi32>
    %54 = arith.sitofp %53 : vector<8x8xi32> to vector<8x8xf32>
    %cst_21 = arith.constant -1.000000e+30 : f32
    %55 = vector.broadcast %cst_21 : f32 to vector<8x8xf32>
    %56 = arith.mulf %54, %55 : vector<8x8xf32>
    "tpu.trace_start"() <{level = 10 : i32, message = "hqd,hkd->hqk"}> : () -> ()
    %cst_22 = arith.constant dense<0.000000e+00> : vector<4x8x8xf32>
    %57 = tpu.matmul %33, %37, %cst_22 {dimension_numbers = #tpu.dot_dimension_numbers<[2], [2], [1], [1], [0, 0, 0, 1, 1, 1], [0], [0]>} : vector<4x8x8xbf16>, vector<4x8x8xbf16>, vector<4x8x8xf32> -> vector<4x8x8xf32>
    "tpu.trace_stop"() : () -> ()
    %58 = vector.shape_cast %56 : vector<8x8xf32> to vector<1x8x8xf32>
    %59 = vector.broadcast %58 : vector<1x8x8xf32> to vector<4x8x8xf32>
    %60 = arith.addf %57, %59 : vector<4x8x8xf32>
    %cst_23 = arith.constant dense<0xFF800000> : vector<4x8xf32>
    %61 = vector.multi_reduction <maximumf>, %60, %cst_23 [2] : vector<4x8x8xf32> to vector<4x8xf32>
    %62 = vector.shape_cast %61 : vector<4x8xf32> to vector<4x8x1xf32>
    %63 = vector.broadcast %62 : vector<4x8x1xf32> to vector<4x8x8xf32>
    %64 = arith.subf %60, %63 : vector<4x8x8xf32>
    %65 = math.exp %64 : vector<4x8x8xf32>
    %cst_24 = arith.constant dense<0.000000e+00> : vector<4x8xf32>
    %66 = vector.multi_reduction <add>, %65, %cst_24 [2] : vector<4x8x8xf32> to vector<4x8xf32>
    %67 = vector.shape_cast %66 : vector<4x8xf32> to vector<4x8x1xf32>
    %68 = arith.truncf %65 : vector<4x8x8xf32> to vector<4x8x8xbf16>
    "tpu.trace_start"() <{level = 10 : i32, message = "hqk,hkd->hqd"}> : () -> ()
    %cst_25 = arith.constant dense<0.000000e+00> : vector<4x8x8xf32>
    %69 = tpu.matmul %68, %41, %cst_25 {dimension_numbers = #tpu.dot_dimension_numbers<[2], [1], [1], [2], [0, 0, 0, 1, 1, 2], [0], [0]>} : vector<4x8x8xbf16>, vector<4x8x8xbf16>, vector<4x8x8xf32> -> vector<4x8x8xf32>
    %c0_i32 = arith.constant 0 : i32
    "tpu.trace_stop"() : () -> ()
    %70 = arith.subi %arg1, %c0_i32 : i32
    %71 = arith.addi %c0_i32, %70 : i32
    %c1_i32 = arith.constant 1 : i32
    %72:3 = scf.for %arg26 = %c0_i32 to %71 step %c1_i32 iter_args(%arg27 = %62, %arg28 = %67, %arg29 = %69) -> (vector<4x8x1xf32>, vector<4x8x1xf32>, vector<4x8x8xf32>)  : i32 {
      %189 = arith.index_cast %arg26 : i32 to index
      %c0_92 = arith.constant 0 : index
      %c0_93 = arith.constant 0 : index
      %c0_94 = arith.constant 0 : index
      %190 = vector.load %arg24[%189, %c0_92, %c0_93, %c0_94] : memref<1x4x8x8xbf16, #tpu.memory_space<vmem>>, vector<1x4x8x8xbf16>
      %191 = vector.shape_cast %190 : vector<1x4x8x8xbf16> to vector<4x8x8xbf16>
      %192 = arith.index_cast %arg26 : i32 to index
      %c0_95 = arith.constant 0 : index
      %c0_96 = arith.constant 0 : index
      %c0_97 = arith.constant 0 : index
      %193 = vector.load %arg25[%192, %c0_95, %c0_96, %c0_97] : memref<1x4x8x8xbf16, #tpu.memory_space<vmem>>, vector<1x4x8x8xbf16>
      %194 = vector.shape_cast %193 : vector<1x4x8x8xbf16> to vector<4x8x8xbf16>
      "tpu.trace_start"() <{level = 10 : i32, message = "hqd,hkd->hqk"}> : () -> ()
      %cst_98 = arith.constant dense<0.000000e+00> : vector<4x8x8xf32>
      %195 = tpu.matmul %33, %191, %cst_98 {dimension_numbers = #tpu.dot_dimension_numbers<[2], [2], [1], [1], [0, 0, 0, 1, 1, 1], [0], [0]>} : vector<4x8x8xbf16>, vector<4x8x8xbf16>, vector<4x8x8xf32> -> vector<4x8x8xf32>
      "tpu.trace_stop"() : () -> ()
      %cst_99 = arith.constant dense<0xFF800000> : vector<4x8xf32>
      %196 = vector.multi_reduction <maximumf>, %195, %cst_99 [2] : vector<4x8x8xf32> to vector<4x8xf32>
      %197 = vector.shape_cast %196 : vector<4x8xf32> to vector<4x8x1xf32>
      %198 = arith.maximumf %arg27, %197 : vector<4x8x1xf32>
      %199 = arith.subf %arg27, %198 : vector<4x8x1xf32>
      %200 = math.exp %199 : vector<4x8x1xf32>
      %201 = vector.broadcast %198 : vector<4x8x1xf32> to vector<4x8x8xf32>
      %202 = arith.subf %195, %201 : vector<4x8x8xf32>
      %203 = math.exp %202 : vector<4x8x8xf32>
      %204 = arith.mulf %200, %arg28 : vector<4x8x1xf32>
      %cst_100 = arith.constant dense<0.000000e+00> : vector<4x8xf32>
      %205 = vector.multi_reduction <add>, %203, %cst_100 [2] : vector<4x8x8xf32> to vector<4x8xf32>
      %206 = vector.shape_cast %205 : vector<4x8xf32> to vector<4x8x1xf32>
      %207 = arith.addf %204, %206 : vector<4x8x1xf32>
      %208 = vector.broadcast %200 : vector<4x8x1xf32> to vector<4x8x8xf32>
      %209 = arith.mulf %208, %arg29 : vector<4x8x8xf32>
      %210 = arith.truncf %203 : vector<4x8x8xf32> to vector<4x8x8xbf16>
      "tpu.trace_start"() <{level = 10 : i32, message = "hqk,hkd->hqd"}> : () -> ()
      %cst_101 = arith.constant dense<0.000000e+00> : vector<4x8x8xf32>
      %211 = tpu.matmul %210, %194, %cst_101 {dimension_numbers = #tpu.dot_dimension_numbers<[2], [1], [1], [2], [0, 0, 0, 1, 1, 2], [0], [0]>} : vector<4x8x8xbf16>, vector<4x8x8xbf16>, vector<4x8x8xf32> -> vector<4x8x8xf32>
      "tpu.trace_stop"() : () -> ()
      %212 = arith.addf %209, %211 : vector<4x8x8xf32>
      scf.yield %198, %207, %212 : vector<4x8x1xf32>, vector<4x8x1xf32>, vector<4x8x8xf32>
    }
    %73 = vector.broadcast %72#1 : vector<4x8x1xf32> to vector<4x8x8xf32>
    %74 = arith.divf %72#2, %73 : vector<4x8x8xf32>
    %75 = arith.truncf %74 : vector<4x8x8xf32> to vector<4x8x8xbf16>
    %c0_26 = arith.constant 0 : index
    %c0_27 = arith.constant 0 : index
    %c0_28 = arith.constant 0 : index
    %76 = vector.load %arg13[%c0_26, %c0_27, %c0_28] : memref<4x8x32xbf16, #tpu.memory_space<vmem>>, vector<4x8x32xbf16>
    "tpu.trace_start"() <{level = 10 : i32, message = "hqd,hdc->hqc"}> : () -> ()
    %cst_29 = arith.constant dense<0.000000e+00> : vector<4x8x32xf32>
    %77 = tpu.matmul %75, %76, %cst_29 {dimension_numbers = #tpu.dot_dimension_numbers<[2], [1], [1], [2], [0, 0, 0, 1, 1, 2], [0], [0]>} : vector<4x8x8xbf16>, vector<4x8x32xbf16>, vector<4x8x32xf32> -> vector<4x8x32xf32>
    "tpu.trace_stop"() : () -> ()
    %cst_30 = arith.constant dense<0.000000e+00> : vector<8x32xf32>
    %78 = vector.multi_reduction <add>, %77, %cst_30 [0] : vector<4x8x32xf32> to vector<8x32xf32>
    %c0_31 = arith.constant 0 : index
    %c0_32 = arith.constant 0 : index
    %79 = vector.load %arg14[%c0_31, %c0_32] : memref<1x32xf32, #tpu.memory_space<vmem>>, vector<1x32xf32>
    %80 = vector.broadcast %79 : vector<1x32xf32> to vector<8x32xf32>
    %81 = arith.addf %78, %80 : vector<8x32xf32>
    %82 = arith.addf %1, %81 : vector<8x32xf32>
    %c0_33 = arith.constant 0 : index
    %c0_34 = arith.constant 0 : index
    %83 = vector.load %arg7[%c0_33, %c0_34] : memref<1x32xf32, #tpu.memory_space<vmem>>, vector<1x32xf32>
    %c0_35 = arith.constant 0 : index
    %c0_36 = arith.constant 0 : index
    %84 = vector.load %arg8[%c0_35, %c0_36] : memref<1x32xf32, #tpu.memory_space<vmem>>, vector<1x32xf32>
    %cst_37 = arith.constant dense<0.000000e+00> : vector<8xf32>
    %85 = vector.multi_reduction <add>, %82, %cst_37 [1] : vector<8x32xf32> to vector<8xf32>
    %86 = vector.shape_cast %85 : vector<8xf32> to vector<8x1xf32>
    %cst_38 = arith.constant 3.200000e+01 : f32
    %87 = vector.broadcast %cst_38 : f32 to vector<8x1xf32>
    %88 = arith.divf %86, %87 : vector<8x1xf32>
    %89 = vector.broadcast %88 : vector<8x1xf32> to vector<8x32xf32>
    %90 = arith.subf %82, %89 : vector<8x32xf32>
    %91 = arith.mulf %90, %90 : vector<8x32xf32>
    %cst_39 = arith.constant dense<0.000000e+00> : vector<8xf32>
    %92 = vector.multi_reduction <add>, %91, %cst_39 [1] : vector<8x32xf32> to vector<8xf32>
    %93 = vector.shape_cast %92 : vector<8xf32> to vector<8x1xf32>
    %cst_40 = arith.constant 3.200000e+01 : f32
    %94 = vector.broadcast %cst_40 : f32 to vector<8x1xf32>
    %95 = arith.divf %93, %94 : vector<8x1xf32>
    %cst_41 = arith.constant 9.99999974E-6 : f32
    %96 = vector.broadcast %cst_41 : f32 to vector<8x1xf32>
    %97 = arith.addf %95, %96 : vector<8x1xf32>
    %98 = math.rsqrt %97 : vector<8x1xf32>
    %99 = vector.broadcast %98 : vector<8x1xf32> to vector<8x32xf32>
    %100 = arith.mulf %90, %99 : vector<8x32xf32>
    %101 = vector.broadcast %83 : vector<1x32xf32> to vector<8x32xf32>
    %102 = arith.mulf %100, %101 : vector<8x32xf32>
    %103 = vector.broadcast %84 : vector<1x32xf32> to vector<8x32xf32>
    %104 = arith.addf %102, %103 : vector<8x32xf32>
    %105 = arith.truncf %104 : vector<8x32xf32> to vector<8x32xbf16>
    %c0_42 = arith.constant 0 : index
    %c0_43 = arith.constant 0 : index
    %106 = vector.load %arg15[%c0_42, %c0_43] : memref<32x32xbf16, #tpu.memory_space<vmem>>, vector<32x32xbf16>
    %cst_44 = arith.constant dense<0.000000e+00> : vector<8x32xf32>
    %107 = tpu.matmul %105, %106, %cst_44 {dimension_numbers = #tpu.dot_dimension_numbers<[1], [0], [0], [1], [0, 0, 1, 1], [], []>} : vector<8x32xbf16>, vector<32x32xbf16>, vector<8x32xf32> -> vector<8x32xf32>
    %c0_45 = arith.constant 0 : index
    %c0_46 = arith.constant 0 : index
    %108 = vector.load %arg16[%c0_45, %c0_46] : memref<1x32xf32, #tpu.memory_space<vmem>>, vector<1x32xf32>
    %109 = vector.broadcast %108 : vector<1x32xf32> to vector<8x32xf32>
    %110 = arith.addf %107, %109 : vector<8x32xf32>
    %111 = arith.truncf %110 : vector<8x32xf32> to vector<8x32xbf16>
    %112 = vector.shape_cast %111 : vector<8x32xbf16> to vector<8x4x8xbf16>
    %113 = tpu.transpose %112, [1, 0, 2] : vector<8x4x8xbf16> -> vector<4x8x8xbf16>
    %c0_47 = arith.constant 0 : index
    %c0_48 = arith.constant 0 : index
    %c0_49 = arith.constant 0 : index
    %c0_50 = arith.constant 0 : index
    %114 = vector.load %arg3[%c0_47, %c0_48, %c0_49, %c0_50] : memref<1x4x8x8xbf16, #tpu.memory_space<vmem>>, vector<1x4x8x8xbf16>
    %115 = vector.shape_cast %114 : vector<1x4x8x8xbf16> to vector<4x8x8xbf16>
    %c0_51 = arith.constant 0 : index
    %c0_52 = arith.constant 0 : index
    %c0_53 = arith.constant 0 : index
    %c0_54 = arith.constant 0 : index
    %116 = vector.load %arg4[%c0_51, %c0_52, %c0_53, %c0_54] : memref<1x4x8x8xbf16, #tpu.memory_space<vmem>>, vector<1x4x8x8xbf16>
    %117 = vector.shape_cast %116 : vector<1x4x8x8xbf16> to vector<4x8x8xbf16>
    "tpu.trace_start"() <{level = 10 : i32, message = "hqd,hkd->hqk"}> : () -> ()
    %cst_55 = arith.constant dense<0.000000e+00> : vector<4x8x8xf32>
    %118 = tpu.matmul %113, %115, %cst_55 {dimension_numbers = #tpu.dot_dimension_numbers<[2], [2], [1], [1], [0, 0, 0, 1, 1, 1], [0], [0]>} : vector<4x8x8xbf16>, vector<4x8x8xbf16>, vector<4x8x8xf32> -> vector<4x8x8xf32>
    "tpu.trace_stop"() : () -> ()
    %cst_56 = arith.constant dense<0xFF800000> : vector<4x8xf32>
    %119 = vector.multi_reduction <maximumf>, %118, %cst_56 [2] : vector<4x8x8xf32> to vector<4x8xf32>
    %120 = vector.shape_cast %119 : vector<4x8xf32> to vector<4x8x1xf32>
    %121 = vector.broadcast %120 : vector<4x8x1xf32> to vector<4x8x8xf32>
    %122 = arith.subf %118, %121 : vector<4x8x8xf32>
    %123 = math.exp %122 : vector<4x8x8xf32>
    %cst_57 = arith.constant dense<0.000000e+00> : vector<4x8xf32>
    %124 = vector.multi_reduction <add>, %123, %cst_57 [2] : vector<4x8x8xf32> to vector<4x8xf32>
    %125 = vector.shape_cast %124 : vector<4x8xf32> to vector<4x8x1xf32>
    %126 = vector.broadcast %125 : vector<4x8x1xf32> to vector<4x8x8xf32>
    %127 = arith.divf %123, %126 : vector<4x8x8xf32>
    %128 = arith.truncf %127 : vector<4x8x8xf32> to vector<4x8x8xbf16>
    "tpu.trace_start"() <{level = 10 : i32, message = "hqk,hkd->hqd"}> : () -> ()
    %cst_58 = arith.constant dense<0.000000e+00> : vector<4x8x8xf32>
    %129 = tpu.matmul %128, %117, %cst_58 {dimension_numbers = #tpu.dot_dimension_numbers<[2], [1], [1], [2], [0, 0, 0, 1, 1, 2], [0], [0]>} : vector<4x8x8xbf16>, vector<4x8x8xbf16>, vector<4x8x8xf32> -> vector<4x8x8xf32>
    "tpu.trace_stop"() : () -> ()
    %130 = arith.truncf %129 : vector<4x8x8xf32> to vector<4x8x8xbf16>
    %c0_59 = arith.constant 0 : index
    %c0_60 = arith.constant 0 : index
    %c0_61 = arith.constant 0 : index
    %131 = vector.load %arg17[%c0_59, %c0_60, %c0_61] : memref<4x8x32xbf16, #tpu.memory_space<vmem>>, vector<4x8x32xbf16>
    "tpu.trace_start"() <{level = 10 : i32, message = "hqd,hdc->hqc"}> : () -> ()
    %cst_62 = arith.constant dense<0.000000e+00> : vector<4x8x32xf32>
    %132 = tpu.matmul %130, %131, %cst_62 {dimension_numbers = #tpu.dot_dimension_numbers<[2], [1], [1], [2], [0, 0, 0, 1, 1, 2], [0], [0]>} : vector<4x8x8xbf16>, vector<4x8x32xbf16>, vector<4x8x32xf32> -> vector<4x8x32xf32>
    "tpu.trace_stop"() : () -> ()
    %cst_63 = arith.constant dense<0.000000e+00> : vector<8x32xf32>
    %133 = vector.multi_reduction <add>, %132, %cst_63 [0] : vector<4x8x32xf32> to vector<8x32xf32>
    %c0_64 = arith.constant 0 : index
    %c0_65 = arith.constant 0 : index
    %134 = vector.load %arg18[%c0_64, %c0_65] : memref<1x32xf32, #tpu.memory_space<vmem>>, vector<1x32xf32>
    %135 = vector.broadcast %134 : vector<1x32xf32> to vector<8x32xf32>
    %136 = arith.addf %133, %135 : vector<8x32xf32>
    %137 = arith.addf %82, %136 : vector<8x32xf32>
    %c0_66 = arith.constant 0 : index
    %c0_67 = arith.constant 0 : index
    %138 = vector.load %arg9[%c0_66, %c0_67] : memref<1x32xf32, #tpu.memory_space<vmem>>, vector<1x32xf32>
    %c0_68 = arith.constant 0 : index
    %c0_69 = arith.constant 0 : index
    %139 = vector.load %arg10[%c0_68, %c0_69] : memref<1x32xf32, #tpu.memory_space<vmem>>, vector<1x32xf32>
    %cst_70 = arith.constant dense<0.000000e+00> : vector<8xf32>
    %140 = vector.multi_reduction <add>, %137, %cst_70 [1] : vector<8x32xf32> to vector<8xf32>
    %141 = vector.shape_cast %140 : vector<8xf32> to vector<8x1xf32>
    %cst_71 = arith.constant 3.200000e+01 : f32
    %142 = vector.broadcast %cst_71 : f32 to vector<8x1xf32>
    %143 = arith.divf %141, %142 : vector<8x1xf32>
    %144 = vector.broadcast %143 : vector<8x1xf32> to vector<8x32xf32>
    %145 = arith.subf %137, %144 : vector<8x32xf32>
    %146 = arith.mulf %145, %145 : vector<8x32xf32>
    %cst_72 = arith.constant dense<0.000000e+00> : vector<8xf32>
    %147 = vector.multi_reduction <add>, %146, %cst_72 [1] : vector<8x32xf32> to vector<8xf32>
    %148 = vector.shape_cast %147 : vector<8xf32> to vector<8x1xf32>
    %cst_73 = arith.constant 3.200000e+01 : f32
    %149 = vector.broadcast %cst_73 : f32 to vector<8x1xf32>
    %150 = arith.divf %148, %149 : vector<8x1xf32>
    %cst_74 = arith.constant 9.99999974E-6 : f32
    %151 = vector.broadcast %cst_74 : f32 to vector<8x1xf32>
    %152 = arith.addf %150, %151 : vector<8x1xf32>
    %153 = math.rsqrt %152 : vector<8x1xf32>
    %154 = vector.broadcast %153 : vector<8x1xf32> to vector<8x32xf32>
    %155 = arith.mulf %145, %154 : vector<8x32xf32>
    %156 = vector.broadcast %138 : vector<1x32xf32> to vector<8x32xf32>
    %157 = arith.mulf %155, %156 : vector<8x32xf32>
    %158 = vector.broadcast %139 : vector<1x32xf32> to vector<8x32xf32>
    %159 = arith.addf %157, %158 : vector<8x32xf32>
    %160 = arith.truncf %159 : vector<8x32xf32> to vector<8x32xbf16>
    %c0_75 = arith.constant 0 : index
    %c0_76 = arith.constant 0 : index
    %161 = vector.load %arg19[%c0_75, %c0_76] : memref<32x128xbf16, #tpu.memory_space<vmem>>, vector<32x128xbf16>
    %cst_77 = arith.constant dense<0.000000e+00> : vector<8x128xf32>
    %162 = tpu.matmul %160, %161, %cst_77 {dimension_numbers = #tpu.dot_dimension_numbers<[1], [0], [0], [1], [0, 0, 1, 1], [], []>} : vector<8x32xbf16>, vector<32x128xbf16>, vector<8x128xf32> -> vector<8x128xf32>
    %c0_78 = arith.constant 0 : index
    %c0_79 = arith.constant 0 : index
    %163 = vector.load %arg20[%c0_78, %c0_79] : memref<1x128xf32, #tpu.memory_space<vmem>>, vector<1x128xf32>
    %164 = vector.broadcast %163 : vector<1x128xf32> to vector<8x128xf32>
    %165 = arith.addf %162, %164 : vector<8x128xf32>
    %cst_80 = arith.constant 5.000000e-01 : f32
    %166 = vector.broadcast %cst_80 : f32 to vector<8x128xf32>
    %167 = arith.mulf %166, %165 : vector<8x128xf32>
    %cst_81 = arith.constant 4.471500e-02 : f32
    %168 = vector.broadcast %cst_81 : f32 to vector<8x128xf32>
    %169 = arith.mulf %168, %165 : vector<8x128xf32>
    %170 = arith.mulf %169, %165 : vector<8x128xf32>
    %171 = arith.mulf %170, %165 : vector<8x128xf32>
    %172 = arith.addf %165, %171 : vector<8x128xf32>
    %cst_82 = arith.constant 0.797884583 : f32
    %173 = vector.broadcast %cst_82 : f32 to vector<8x128xf32>
    %174 = arith.mulf %173, %172 : vector<8x128xf32>
    %175 = math.tanh %174 : vector<8x128xf32>
    %cst_83 = arith.constant 1.000000e+00 : f32
    %176 = vector.broadcast %cst_83 : f32 to vector<8x128xf32>
    %177 = arith.addf %176, %175 : vector<8x128xf32>
    %178 = arith.mulf %167, %177 : vector<8x128xf32>
    %179 = arith.truncf %178 : vector<8x128xf32> to vector<8x128xbf16>
    %c0_84 = arith.constant 0 : index
    %c0_85 = arith.constant 0 : index
    %180 = vector.load %arg21[%c0_84, %c0_85] : memref<128x32xbf16, #tpu.memory_space<vmem>>, vector<128x32xbf16>
    %cst_86 = arith.constant dense<0.000000e+00> : vector<8x32xf32>
    %181 = tpu.matmul %179, %180, %cst_86 {dimension_numbers = #tpu.dot_dimension_numbers<[1], [0], [0], [1], [0, 0, 1, 1], [], []>} : vector<8x128xbf16>, vector<128x32xbf16>, vector<8x32xf32> -> vector<8x32xf32>
    %c0_87 = arith.constant 0 : index
    %c0_88 = arith.constant 0 : index
    %182 = vector.load %arg22[%c0_87, %c0_88] : memref<1x32xf32, #tpu.memory_space<vmem>>, vector<1x32xf32>
    %183 = vector.broadcast %182 : vector<1x32xf32> to vector<8x32xf32>
    %184 = arith.addf %181, %183 : vector<8x32xf32>
    %185 = arith.addf %137, %184 : vector<8x32xf32>
    %c0_89 = arith.constant 0 : index
    %c0_90 = arith.constant 0 : index
    %c0_91 = arith.constant 0 : index
    %186 = vector.load %arg23[%c0_89, %c0_90, %c0_91] : memref<1x8x32xf32, #tpu.memory_space<vmem>>, vector<1x8x32xf32>
    %187 = vector.shape_cast %186 : vector<1x8x32xf32> to vector<8x32xf32>
    %188 = vector.shape_cast %185 : vector<8x32xf32> to vector<1x8x32xf32>
    tpu.vector_store %arg23[%c0_89, %c0_90, %c0_91], %188 {strides = array<i32>} : memref<1x8x32xf32, #tpu.memory_space<vmem>>, vector<1x8x32xf32>,
    return
  }
  func.func @transform_0(%arg0: i32, %arg1: i32) -> (i32, i32, i32) {
    %c0_i32 = arith.constant 0 : i32
    %c0_i32_0 = arith.constant 0 : i32
    return %arg0, %arg1, %c0_i32 : i32, i32, i32
  }
  func.func @transform_1(%arg0: i32, %arg1: i32) -> (i32, i32, i32, i32) {
    %c0_i32 = arith.constant 0 : i32
    %c0_i32_0 = arith.constant 0 : i32
    %c0_i32_1 = arith.constant 0 : i32
    %c0_i32_2 = arith.constant 0 : i32
    return %arg0, %c0_i32, %c0_i32_0, %c0_i32_1 : i32, i32, i32, i32
  }
  func.func @transform_2(%arg0: i32, %arg1: i32) -> (i32, i32, i32, i32) {
    %c0_i32 = arith.constant 0 : i32
    %c0_i32_0 = arith.constant 0 : i32
    %c0_i32_1 = arith.constant 0 : i32
    %c0_i32_2 = arith.constant 0 : i32
    return %arg0, %c0_i32, %c0_i32_0, %c0_i32_1 : i32, i32, i32, i32
  }
  func.func @transform_3(%arg0: i32, %arg1: i32) -> (i32, i32) {
    %c0_i32 = arith.constant 0 : i32
    %c0_i32_0 = arith.constant 0 : i32
    %c0_i32_1 = arith.constant 0 : i32
    return %c0_i32, %c0_i32_0 : i32, i32
  }
  func.func @transform_4(%arg0: i32, %arg1: i32) -> (i32, i32) {
    %c0_i32 = arith.constant 0 : i32
    %c0_i32_0 = arith.constant 0 : i32
    %c0_i32_1 = arith.constant 0 : i32
    return %c0_i32, %c0_i32_0 : i32, i32
  }
  func.func @transform_5(%arg0: i32, %arg1: i32) -> (i32, i32) {
    %c0_i32 = arith.constant 0 : i32
    %c0_i32_0 = arith.constant 0 : i32
    %c0_i32_1 = arith.constant 0 : i32
    return %c0_i32, %c0_i32_0 : i32, i32
  }
  func.func @transform_6(%arg0: i32, %arg1: i32) -> (i32, i32) {
    %c0_i32 = arith.constant 0 : i32
    %c0_i32_0 = arith.constant 0 : i32
    %c0_i32_1 = arith.constant 0 : i32
    return %c0_i32, %c0_i32_0 : i32, i32
  }
  func.func @transform_7(%arg0: i32, %arg1: i32) -> (i32, i32) {
    %c0_i32 = arith.constant 0 : i32
    %c0_i32_0 = arith.constant 0 : i32
    %c0_i32_1 = arith.constant 0 : i32
    return %c0_i32, %c0_i32_0 : i32, i32
  }
  func.func @transform_8(%arg0: i32, %arg1: i32) -> (i32, i32) {
    %c0_i32 = arith.constant 0 : i32
    %c0_i32_0 = arith.constant 0 : i32
    %c0_i32_1 = arith.constant 0 : i32
    return %c0_i32, %c0_i32_0 : i32, i32
  }
  func.func @transform_9(%arg0: i32, %arg1: i32) -> (i32, i32) {
    %c0_i32 = arith.constant 0 : i32
    %c0_i32_0 = arith.constant 0 : i32
    %c0_i32_1 = arith.constant 0 : i32
    return %c0_i32, %c0_i32_0 : i32, i32
  }
  func.func @transform_10(%arg0: i32, %arg1: i32) -> (i32, i32) {
    %c0_i32 = arith.constant 0 : i32
    %c0_i32_0 = arith.constant 0 : i32
    %c0_i32_1 = arith.constant 0 : i32
    return %c0_i32, %c0_i32_0 : i32, i32
  }
  func.func @transform_11(%arg0: i32, %arg1: i32) -> (i32, i32, i32) {
    %c0_i32 = arith.constant 0 : i32
    %c0_i32_0 = arith.constant 0 : i32
    %c0_i32_1 = arith.constant 0 : i32
    %c0_i32_2 = arith.constant 0 : i32
    return %c0_i32, %c0_i32_0, %c0_i32_1 : i32, i32, i32
  }
  func.func @transform_12(%arg0: i32, %arg1: i32) -> (i32, i32) {
    %c0_i32 = arith.constant 0 : i32
    %c0_i32_0 = arith.constant 0 : i32
    %c0_i32_1 = arith.constant 0 : i32
    return %c0_i32, %c0_i32_0 : i32, i32
  }
  func.func @transform_13(%arg0: i32, %arg1: i32) -> (i32, i32) {
    %c0_i32 = arith.constant 0 : i32
    %c0_i32_0 = arith.constant 0 : i32
    %c0_i32_1 = arith.constant 0 : i32
    return %c0_i32, %c0_i32_0 : i32, i32
  }
  func.func @transform_14(%arg0: i32, %arg1: i32) -> (i32, i32) {
    %c0_i32 = arith.constant 0 : i32
    %c0_i32_0 = arith.constant 0 : i32
    %c0_i32_1 = arith.constant 0 : i32
    return %c0_i32, %c0_i32_0 : i32, i32
  }
  func.func @transform_15(%arg0: i32, %arg1: i32) -> (i32, i32, i32) {
    %c0_i32 = arith.constant 0 : i32
    %c0_i32_0 = arith.constant 0 : i32
    %c0_i32_1 = arith.constant 0 : i32
    %c0_i32_2 = arith.constant 0 : i32
    return %c0_i32, %c0_i32_0, %c0_i32_1 : i32, i32, i32
  }
  func.func @transform_16(%arg0: i32, %arg1: i32) -> (i32, i32) {
    %c0_i32 = arith.constant 0 : i32
    %c0_i32_0 = arith.constant 0 : i32
    %c0_i32_1 = arith.constant 0 : i32
    return %c0_i32, %c0_i32_0 : i32, i32
  }
  func.func @transform_17(%arg0: i32, %arg1: i32) -> (i32, i32) {
    %c0_i32 = arith.constant 0 : i32
    %c0_i32_0 = arith.constant 0 : i32
    %c0_i32_1 = arith.constant 0 : i32
    return %c0_i32, %c0_i32_0 : i32, i32
  }
  func.func @transform_18(%arg0: i32, %arg1: i32) -> (i32, i32) {
    %c0_i32 = arith.constant 0 : i32
    %c0_i32_0 = arith.constant 0 : i32
    %c0_i32_1 = arith.constant 0 : i32
    return %c0_i32, %c0_i32_0 : i32, i32
  }
  func.func @transform_19(%arg0: i32, %arg1: i32) -> (i32, i32) {
    %c0_i32 = arith.constant 0 : i32
    %c0_i32_0 = arith.constant 0 : i32
    %c0_i32_1 = arith.constant 0 : i32
    return %c0_i32, %c0_i32_0 : i32, i32
  }
  func.func @transform_20(%arg0: i32, %arg1: i32) -> (i32, i32) {
    %c0_i32 = arith.constant 0 : i32
    %c0_i32_0 = arith.constant 0 : i32
    %c0_i32_1 = arith.constant 0 : i32
    return %c0_i32, %c0_i32_0 : i32, i32
  }
  func.func @transform_21(%arg0: i32, %arg1: i32) -> (i32, i32, i32) {
    %c0_i32 = arith.constant 0 : i32
    %c0_i32_0 = arith.constant 0 : i32
    return %arg0, %arg1, %c0_i32 : i32, i32, i32
  }
}

</mosaic_0001>

<llo_original>
// kernel: tpu_custom_call.1
$region0: #{tpu_custom_call.1}
  #allocation0 [shape = 'u32[]', space=smem, size = 0x4, offset = 0x4, fixed_abs, tag = 'smem constant byte address 0x4 - core index']
  #allocation1 [shape = 'u32[144,128]{1,0:T(1,128)}', space=vmem, size = 0x12000, scoped, tag = 'internal scratch']
  #allocation2 [shape = 'bf16[1,4,8,8]{3,2,1,0:T(8,128)(2,1)}', space=vmem, size = 0x2000, scoped, tag = 'scratch operand']
  #allocation3 [shape = 'bf16[1,4,8,8]{3,2,1,0:T(8,128)(2,1)}', space=vmem, size = 0x2000, scoped, tag = 'scratch operand']
  %s0 = inlined_call_operand.vmem [shape: f32[2,8,32], index: 0, kind: input, shape index: {}]
  %s1 = inlined_call_operand.vmem [shape: bf16[2,4,8,8], index: 1, kind: input, shape index: {}]
  %s2 = inlined_call_operand.vmem [shape: bf16[2,4,8,8], index: 2, kind: input, shape index: {}]
  %s3 = inlined_call_operand.hbm [shape: f32[1,32], index: 3, kind: input, shape index: {}]
  %s4 = inlined_call_operand.hbm [shape: f32[1,32], index: 4, kind: input, shape index: {}]
  %s5 = inlined_call_operand.hbm [shape: f32[1,32], index: 5, kind: input, shape index: {}]
  %s6 = inlined_call_operand.hbm [shape: f32[1,32], index: 6, kind: input, shape index: {}]
  %s7 = inlined_call_operand.hbm [shape: f32[1,32], index: 7, kind: input, shape index: {}]
  %s8 = inlined_call_operand.hbm [shape: f32[1,32], index: 8, kind: input, shape index: {}]
  %s9 = inlined_call_operand.vmem [shape: bf16[32,96], index: 9, kind: input, shape index: {}]
  %s10 = inlined_call_operand.hbm [shape: f32[1,96], index: 10, kind: input, shape index: {}]
  %s11 = inlined_call_operand.hbm [shape: bf16[4,8,32], index: 11, kind: input, shape index: {}]
  %s12 = inlined_call_operand.hbm [shape: f32[1,32], index: 12, kind: input, shape index: {}]
  %s13 = inlined_call_operand.vmem [shape: bf16[32,32], index: 13, kind: input, shape index: {}]
  %s14 = inlined_call_operand.hbm [shape: f32[1,32], index: 14, kind: input, shape index: {}]
  %s15 = inlined_call_operand.hbm [shape: bf16[4,8,32], index: 15, kind: input, shape index: {}]
  %s16 = inlined_call_operand.hbm [shape: f32[1,32], index: 16, kind: input, shape index: {}]
  %s17 = inlined_call_operand.vmem [shape: bf16[32,128], index: 17, kind: input, shape index: {}]
  %s18 = inlined_call_operand.vmem [shape: f32[1,128], index: 18, kind: input, shape index: {}]
  %s19 = inlined_call_operand.vmem [shape: bf16[128,32], index: 19, kind: input, shape index: {}]
  %s20 = inlined_call_operand.vmem [shape: f32[1,32], index: 20, kind: input, shape index: {}]
  %s21 = inlined_call_operand.hbm [shape: f32[2,8,32], index: 21, kind: output, shape index: {}]
  %s22 = sld [smem:[#allocation0]]
  $region172: #{tpu_custom_call.1} parent=0
    _
  %s24 = ssub.s32 1, %s22
  %s25 = scalar_select 0, %s24, %s22
  $region1: #{tpu_custom_call.1} parent=0
    #allocation4 [shape = 'u8[512]{0}', space=vmem, size = 0x400, scoped, tag = 'input window, operand 3, single buffered']
    #allocation5 [shape = 's32[2]{0}', space=sflag, size = 0x8, scoped, tag = 'scoped memory for tpu_custom_call.1']
    #allocation6 [shape = 's32[2]{0}', space=sflag, size = 0x8, scoped, tag = 'scoped memory for tpu_custom_call.1']
    #allocation7 [shape = 'u8[512]{0}', space=vmem, size = 0x400, scoped, tag = 'input window, operand 4, single buffered']
    #allocation8 [shape = 's32[1]{0}', space=sflag, size = 0x4, scoped, tag = 'scoped memory for tpu_custom_call.1']
    #allocation9 [shape = 'u8[512]{0}', space=vmem, size = 0x400, scoped, tag = 'input window, operand 5, single buffered']
    #allocation10 [shape = 'u8[512]{0}', space=vmem, size = 0x400, scoped, tag = 'input window, operand 6, single buffered']
    #allocation11 [shape = 's32[1]{0}', space=sflag, size = 0x4, scoped, tag = 'scoped memory for tpu_custom_call.1']
    #allocation12 [shape = 'u8[512]{0}', space=vmem, size = 0x400, scoped, tag = 'input window, operand 7, single buffered']
    #allocation13 [shape = 'u8[512]{0}', space=vmem, size = 0x400, scoped, tag = 'input window, operand 8, single buffered']
    #allocation14 [shape = 's32[1]{0}', space=sflag, size = 0x4, scoped, tag = 'scoped memory for tpu_custom_call.1']
    #allocation15 [shape = 'u8[512]{0}', space=vmem, size = 0x400, scoped, tag = 'input window, operand 10, single buffered']
    #allocation16 [shape = 'u8[8192]{0}', space=vmem, size = 0x2000, scoped, tag = 'input window, operand 11, single buffered']
    #allocation17 [shape = 's32[1]{0}', space=sflag, size = 0x4, scoped, tag = 'scoped memory for tpu_custom_call.1']
    #allocation18 [shape = 'u8[512]{0}', space=vmem, size = 0x400, scoped, tag = 'input window, operand 12, single buffered']
    #allocation19 [shape = 'u8[512]{0}', space=vmem, size = 0x400, scoped, tag = 'input window, operand 14, single buffered']
    #allocation20 [shape = 's32[1]{0}', space=sflag, size = 0x4, scoped, tag = 'scoped memory for tpu_custom_call.1']
    #allocation21 [shape = 'u8[8192]{0}', space=vmem, size = 0x2000, scoped, tag = 'input window, operand 15, single buffered']
    #allocation22 [shape = 'u8[512]{0}', space=vmem, size = 0x400, scoped, tag = 'input window, operand 16, single buffered']
    #allocation23 [shape = 's32[1]{0}', space=sflag, size = 0x4, scoped, tag = 'scoped memory for tpu_custom_call.1']
    #allocation24 [shape = 'u8[8192]{0}', space=vmem, size = 0x2000, scoped, tag = 'output window, operand 0']
    %26 = vsyncpa [#allocation5], 0
    %27 = vsyncpa [#allocation8], 0
    %28 = vsyncpa [#allocation11], 0
    %29 = vsyncpa [#allocation14], 0
    %30 = vsyncpa [#allocation17], 0
    %31 = vsyncpa [#allocation20], 0
    %32 = vsyncpa [#allocation23], 0
    %33 = vsyncpa [#allocation6], 0
    %s34 = scalar_lea.sflag [#allocation6], 1
    %35 = vsyncpa %s34, 0
    loop: start=0, step=1, limit=4
    $region2: #{tpu_custom_call.1} parent=1 // loop_pre_header
      _
    $region3: #{tpu_custom_call.1} parent=1 // loop_header
      %s37 = sphi 0, %s41
      %p38 = scmp.ge.s32.totalorder %s37, 4
      %s44 = sphi 0, %s56
      %s45 = sphi 0, %s52
      %s46 = sphi 0, %s44
      %s47 = sphi 0, %s45
      %s48 = sphi 0, %s46
      %s49 = sphi 0, %s47
      %s61 = sphi 0, %s63
      %s64 = sphi 0, %s61
      %s65 = sphi 0, %s64
      %s81 = sphi 0, %s65
      %s87 = sphi 0, %s89
      %s90 = sphi 0, %s87
      %s91 = sphi 0, %s90
      %s107 = sphi 0, %s91
      %s113 = sphi 0, %s115
      %s116 = sphi 0, %s113
      %s117 = sphi 0, %s116
      %s133 = sphi 0, %s117
      %s137 = sphi 0, %s137
      %s139 = sphi 0, %s137
      %s140 = sphi 0, %s139
      %s154 = sphi 0, %s140
      %s158 = sphi 0, %s158
      %s160 = sphi 0, %s158
      %s161 = sphi 0, %s160
      %s175 = sphi 0, %s161
      %s179 = sphi 0, %s179
      %s181 = sphi 0, %s179
      %s182 = sphi 0, %s181
      %s196 = sphi 0, %s182
      %s200 = sphi 0, %s200
      %s202 = sphi 0, %s200
      %s203 = sphi 0, %s202
      %s217 = sphi 0, %s203
      %s221 = sphi 0, %s221
      %s223 = sphi 0, %s221
      %s224 = sphi 0, %s223
      %s238 = sphi 0, %s224
      %s242 = sphi 0, %s242
      %s244 = sphi 0, %s242
      %s245 = sphi 0, %s244
      %s259 = sphi 0, %s245
      %s263 = sphi 0, %s263
      %s265 = sphi 0, %s263
      %s266 = sphi 0, %s265
      %s280 = sphi 0, %s266
      %s284 = sphi 0, %s284
      %s286 = sphi 0, %s284
      %s287 = sphi 0, %s286
      %s301 = sphi 0, %s287
      %s305 = sphi 0, %s305
      %s307 = sphi 0, %s305
      %s308 = sphi 0, %s307
      %s322 = sphi 0, %s308
      %s326 = sphi 0, %s326
      %s328 = sphi 0, %s326
      %s329 = sphi 0, %s328
      %s343 = sphi 0, %s329
      %s347 = sphi 0, %s347
      %s349 = sphi 0, %s347
      %s350 = sphi 0, %s349
      %s364 = sphi 0, %s350
      %s368 = sphi 0, %s368
      %s370 = sphi 0, %s368
      %s371 = sphi 0, %s370
      %s385 = sphi 0, %s371
      %s389 = sphi 0, %s389
      %s391 = sphi 0, %s389
      %s392 = sphi 0, %s391
      %s406 = sphi 0, %s392
      %s410 = sphi 0, %s410
      %s412 = sphi 0, %s410
      %s413 = sphi 0, %s412
      %s427 = sphi 0, %s413
      %s431 = sphi 0, %s431
      %s433 = sphi 0, %s431
      %s434 = sphi 0, %s433
      %s448 = sphi 0, %s434
      %s452 = sphi 0, %s452
      %s454 = sphi 0, %s452
      %s455 = sphi 0, %s454
      %s469 = sphi 0, %s455
      %s473 = sphi 0, %s473
      %s475 = sphi 0, %s473
      %s476 = sphi 0, %s475
      %s490 = sphi 0, %s476
      %s494 = sphi 0, %s494
      %s496 = sphi 0, %s494
      %s497 = sphi 0, %s496
      %s511 = sphi 0, %s497
      %s519 = sphi 0, %s521
      %s522 = sphi 0, %s519
      %s523 = sphi 0, %s522
      %s539 = sphi 0, %s523
    $region4: #{tpu_custom_call.1} parent=1 // loop_header_branch
      %40 = sbr.rel (%p38) target = $region8
    $region5: #{tpu_custom_call.1} parent=1 // loop_body
      %s42 = ssub.s32 %s37, 1
      %s43 = ssub.s32 %s37, 2
      %s50 = sadd.s32 1, %s45
      %p51 = scmp.ge.s32.totalorder %s50, 1
      %s52 = scalar_select %p51, 0, %s50
      %s53 = sadd.s32 1, %s44
      %s54 = scalar_select %p51, %s53, %s44
      %p55 = scmp.ge.s32.totalorder %s54, 2
      %s56 = scalar_select %p55, 0, %s54
      %s57 = ssub.s32 %s44, %s56
      %s58 = ssub.s32 %s45, %s52
      %s59 = sor.u32 %s57, %s58
      %p60 = scmp.eq.s32.totalorder %s59, 0
      %s62 = sadd.s32 %s61, 1
      %s63 = scalar_select %p60, %s61, %s62
      %p66 = pneg %p60
      %p67 = scmp.eq.s32.totalorder %s37, 1
      %p68 = por %p66, %p67
      %p69 = scmp.ne.s32.totalorder %s61, %s64
      %p70 = scmp.eq.s32.totalorder %s37, 0
      %p71 = por %p69, %p70
      %p72 = scmp.ne.s32.totalorder %s61, %s64
      %p73 = scmp.eq.s32.totalorder %s42, 1
      %p74 = por %p72, %p73
      %p75 = scmp.ne.s32.totalorder %s64, %s65
      %p76 = scmp.eq.s32.totalorder %s42, 0
      %p77 = por %p75, %p76
      %p78 = scmp.ne.s32.totalorder %s64, %s65
      %p79 = scmp.eq.s32.totalorder %s43, 1
      %p80 = por %p78, %p79
      %p82 = scmp.ne.s32.totalorder %s65, %s81
      %p83 = scmp.eq.s32.totalorder %s43, 0
      %p84 = por %p82, %p83
      %s85 = ssub.s32 %s44, %s56
      %p86 = scmp.eq.s32.totalorder %s85, 0
      %s88 = sadd.s32 %s87, 1
      %s89 = scalar_select %p86, %s87, %s88
      %p92 = pneg %p86
      %p93 = scmp.eq.s32.totalorder %s37, 1
      %p94 = por %p92, %p93
      %p95 = scmp.ne.s32.totalorder %s87, %s90
      %p96 = scmp.eq.s32.totalorder %s37, 0
      %p97 = por %p95, %p96
      %p98 = scmp.ne.s32.totalorder %s87, %s90
      %p99 = scmp.eq.s32.totalorder %s42, 1
      %p100 = por %p98, %p99
      %p101 = scmp.ne.s32.totalorder %s90, %s91
      %p102 = scmp.eq.s32.totalorder %s42, 0
      %p103 = por %p101, %p102
      %p104 = scmp.ne.s32.totalorder %s90, %s91
      %p105 = scmp.eq.s32.totalorder %s43, 1
      %p106 = por %p104, %p105
      %p108 = scmp.ne.s32.totalorder %s91, %s107
      %p109 = scmp.eq.s32.totalorder %s43, 0
      %p110 = por %p108, %p109
      %s111 = ssub.s32 %s44, %s56
      %p112 = scmp.eq.s32.totalorder %s111, 0
      %s114 = sadd.s32 %s113, 1
      %s115 = scalar_select %p112, %s113, %s114
      %p118 = pneg %p112
      %p119 = scmp.eq.s32.totalorder %s37, 1
      %p120 = por %p118, %p119
      %p121 = scmp.ne.s32.totalorder %s113, %s116
      %p122 = scmp.eq.s32.totalorder %s37, 0
      %p123 = por %p121, %p122
      %p124 = scmp.ne.s32.totalorder %s113, %s116
      %p125 = scmp.eq.s32.totalorder %s42, 1
      %p126 = por %p124, %p125
      %p127 = scmp.ne.s32.totalorder %s116, %s117
      %p128 = scmp.eq.s32.totalorder %s42, 0
      %p129 = por %p127, %p128
      %p130 = scmp.ne.s32.totalorder %s116, %s117
      %p131 = scmp.eq.s32.totalorder %s43, 1
      %p132 = por %p130, %p131
      %p134 = scmp.ne.s32.totalorder %s117, %s133
      %p135 = scmp.eq.s32.totalorder %s43, 0
      %p136 = por %p134, %p135
      %s138 = sadd.s32 %s137, 1
      %p141 = scmp.eq.s32.totalorder %s37, 1
      %p142 = scmp.ne.s32.totalorder %s137, %s139
      %p143 = scmp.eq.s32.totalorder %s37, 0
      %p144 = por %p142, %p143
      %p145 = scmp.ne.s32.totalorder %s137, %s139
      %p146 = scmp.eq.s32.totalorder %s42, 1
      %p147 = por %p145, %p146
      %p148 = scmp.ne.s32.totalorder %s139, %s140
      %p149 = scmp.eq.s32.totalorder %s42, 0
      %p150 = por %p148, %p149
      %p151 = scmp.ne.s32.totalorder %s139, %s140
      %p152 = scmp.eq.s32.totalorder %s43, 1
      %p153 = por %p151, %p152
      %p155 = scmp.ne.s32.totalorder %s140, %s154
      %p156 = scmp.eq.s32.totalorder %s43, 0
      %p157 = por %p155, %p156
      %s159 = sadd.s32 %s158, 1
      %p162 = scmp.eq.s32.totalorder %s37, 1
      %p163 = scmp.ne.s32.totalorder %s158, %s160
      %p164 = scmp.eq.s32.totalorder %s37, 0
      %p165 = por %p163, %p164
      %p166 = scmp.ne.s32.totalorder %s158, %s160
      %p167 = scmp.eq.s32.totalorder %s42, 1
      %p168 = por %p166, %p167
      %p169 = scmp.ne.s32.totalorder %s160, %s161
      %p170 = scmp.eq.s32.totalorder %s42, 0
      %p171 = por %p169, %p170
      %p172 = scmp.ne.s32.totalorder %s160, %s161
      %p173 = scmp.eq.s32.totalorder %s43, 1
      %p174 = por %p172, %p173
      %p176 = scmp.ne.s32.totalorder %s161, %s175
      %p177 = scmp.eq.s32.totalorder %s43, 0
      %p178 = por %p176, %p177
      %s180 = sadd.s32 %s179, 1
      %p183 = scmp.eq.s32.totalorder %s37, 1
      %p184 = scmp.ne.s32.totalorder %s179, %s181
      %p185 = scmp.eq.s32.totalorder %s37, 0
      %p186 = por %p184, %p185
      %p187 = scmp.ne.s32.totalorder %s179, %s181
      %p188 = scmp.eq.s32.totalorder %s42, 1
      %p189 = por %p187, %p188
      %p190 = scmp.ne.s32.totalorder %s181, %s182
      %p191 = scmp.eq.s32.totalorder %s42, 0
      %p192 = por %p190, %p191
      %p193 = scmp.ne.s32.totalorder %s181, %s182
      %p194 = scmp.eq.s32.totalorder %s43, 1
      %p195 = por %p193, %p194
      %p197 = scmp.ne.s32.totalorder %s182, %s196
      %p198 = scmp.eq.s32.totalorder %s43, 0
      %p199 = por %p197, %p198
      %s201 = sadd.s32 %s200, 1
      %p204 = scmp.eq.s32.totalorder %s37, 1
      %p205 = scmp.ne.s32.totalorder %s200, %s202
      %p206 = scmp.eq.s32.totalorder %s37, 0
      %p207 = por %p205, %p206
      %p208 = scmp.ne.s32.totalorder %s200, %s202
      %p209 = scmp.eq.s32.totalorder %s42, 1
      %p210 = por %p208, %p209
      %p211 = scmp.ne.s32.totalorder %s202, %s203
      %p212 = scmp.eq.s32.totalorder %s42, 0
      %p213 = por %p211, %p212
      %p214 = scmp.ne.s32.totalorder %s202, %s203
      %p215 = scmp.eq.s32.totalorder %s43, 1
      %p216 = por %p214, %p215
      %p218 = scmp.ne.s32.totalorder %s203, %s217
      %p219 = scmp.eq.s32.totalorder %s43, 0
      %p220 = por %p218, %p219
      %s222 = sadd.s32 %s221, 1
      %p225 = scmp.eq.s32.totalorder %s37, 1
      %p226 = scmp.ne.s32.totalorder %s221, %s223
      %p227 = scmp.eq.s32.totalorder %s37, 0
      %p228 = por %p226, %p227
      %p229 = scmp.ne.s32.totalorder %s221, %s223
      %p230 = scmp.eq.s32.totalorder %s42, 1
      %p231 = por %p229, %p230
      %p232 = scmp.ne.s32.totalorder %s223, %s224
      %p233 = scmp.eq.s32.totalorder %s42, 0
      %p234 = por %p232, %p233
      %p235 = scmp.ne.s32.totalorder %s223, %s224
      %p236 = scmp.eq.s32.totalorder %s43, 1
      %p237 = por %p235, %p236
      %p239 = scmp.ne.s32.totalorder %s224, %s238
      %p240 = scmp.eq.s32.totalorder %s43, 0
      %p241 = por %p239, %p240
      %s243 = sadd.s32 %s242, 1
      %p246 = scmp.eq.s32.totalorder %s37, 1
      %p247 = scmp.ne.s32.totalorder %s242, %s244
      %p248 = scmp.eq.s32.totalorder %s37, 0
      %p249 = por %p247, %p248
      %p250 = scmp.ne.s32.totalorder %s242, %s244
      %p251 = scmp.eq.s32.totalorder %s42, 1
      %p252 = por %p250, %p251
      %p253 = scmp.ne.s32.totalorder %s244, %s245
      %p254 = scmp.eq.s32.totalorder %s42, 0
      %p255 = por %p253, %p254
      %p256 = scmp.ne.s32.totalorder %s244, %s245
      %p257 = scmp.eq.s32.totalorder %s43, 1
      %p258 = por %p256, %p257
      %p260 = scmp.ne.s32.totalorder %s245, %s259
      %p261 = scmp.eq.s32.totalorder %s43, 0
      %p262 = por %p260, %p261
      %s264 = sadd.s32 %s263, 1
      %p267 = scmp.eq.s32.totalorder %s37, 1
      %p268 = scmp.ne.s32.totalorder %s263, %s265
      %p269 = scmp.eq.s32.totalorder %s37, 0
      %p270 = por %p268, %p269
      %p271 = scmp.ne.s32.totalorder %s263, %s265
      %p272 = scmp.eq.s32.totalorder %s42, 1
      %p273 = por %p271, %p272
      %p274 = scmp.ne.s32.totalorder %s265, %s266
      %p275 = scmp.eq.s32.totalorder %s42, 0
      %p276 = por %p274, %p275
      %p277 = scmp.ne.s32.totalorder %s265, %s266
      %p278 = scmp.eq.s32.totalorder %s43, 1
      %p279 = por %p277, %p278
      %p281 = scmp.ne.s32.totalorder %s266, %s280
      %p282 = scmp.eq.s32.totalorder %s43, 0
      %p283 = por %p281, %p282
      %s285 = sadd.s32 %s284, 1
      %p288 = scmp.eq.s32.totalorder %s37, 1
      %p289 = scmp.ne.s32.totalorder %s284, %s286
      %p290 = scmp.eq.s32.totalorder %s37, 0
      %p291 = por %p289, %p290
      %p292 = scmp.ne.s32.totalorder %s284, %s286
      %p293 = scmp.eq.s32.totalorder %s42, 1
      %p294 = por %p292, %p293
      %p295 = scmp.ne.s32.totalorder %s286, %s287
      %p296 = scmp.eq.s32.totalorder %s42, 0
      %p297 = por %p295, %p296
      %p298 = scmp.ne.s32.totalorder %s286, %s287
      %p299 = scmp.eq.s32.totalorder %s43, 1
      %p300 = por %p298, %p299
      %p302 = scmp.ne.s32.totalorder %s287, %s301
      %p303 = scmp.eq.s32.totalorder %s43, 0
      %p304 = por %p302, %p303
      %s306 = sadd.s32 %s305, 1
      %p309 = scmp.eq.s32.totalorder %s37, 1
      %p310 = scmp.ne.s32.totalorder %s305, %s307
      %p311 = scmp.eq.s32.totalorder %s37, 0
      %p312 = por %p310, %p311
      %p313 = scmp.ne.s32.totalorder %s305, %s307
      %p314 = scmp.eq.s32.totalorder %s42, 1
      %p315 = por %p313, %p314
      %p316 = scmp.ne.s32.totalorder %s307, %s308
      %p317 = scmp.eq.s32.totalorder %s42, 0
      %p318 = por %p316, %p317
      %p319 = scmp.ne.s32.totalorder %s307, %s308
      %p320 = scmp.eq.s32.totalorder %s43, 1
      %p321 = por %p319, %p320
      %p323 = scmp.ne.s32.totalorder %s308, %s322
      %p324 = scmp.eq.s32.totalorder %s43, 0
      %p325 = por %p323, %p324
      %s327 = sadd.s32 %s326, 1
      %p330 = scmp.eq.s32.totalorder %s37, 1
      %p331 = scmp.ne.s32.totalorder %s326, %s328
      %p332 = scmp.eq.s32.totalorder %s37, 0
      %p333 = por %p331, %p332
      %p334 = scmp.ne.s32.totalorder %s326, %s328
      %p335 = scmp.eq.s32.totalorder %s42, 1
      %p336 = por %p334, %p335
      %p337 = scmp.ne.s32.totalorder %s328, %s329
      %p338 = scmp.eq.s32.totalorder %s42, 0
      %p339 = por %p337, %p338
      %p340 = scmp.ne.s32.totalorder %s328, %s329
      %p341 = scmp.eq.s32.totalorder %s43, 1
      %p342 = por %p340, %p341
      %p344 = scmp.ne.s32.totalorder %s329, %s343
      %p345 = scmp.eq.s32.totalorder %s43, 0
      %p346 = por %p344, %p345
      %s348 = sadd.s32 %s347, 1
      %p351 = scmp.eq.s32.totalorder %s37, 1
      %p352 = scmp.ne.s32.totalorder %s347, %s349
      %p353 = scmp.eq.s32.totalorder %s37, 0
      %p354 = por %p352, %p353
      %p355 = scmp.ne.s32.totalorder %s347, %s349
      %p356 = scmp.eq.s32.totalorder %s42, 1
      %p357 = por %p355, %p356
      %p358 = scmp.ne.s32.totalorder %s349, %s350
      %p359 = scmp.eq.s32.totalorder %s42, 0
      %p360 = por %p358, %p359
      %p361 = scmp.ne.s32.totalorder %s349, %s350
      %p362 = scmp.eq.s32.totalorder %s43, 1
      %p363 = por %p361, %p362
      %p365 = scmp.ne.s32.totalorder %s350, %s364
      %p366 = scmp.eq.s32.totalorder %s43, 0
      %p367 = por %p365, %p366
      %s369 = sadd.s32 %s368, 1
      %p372 = scmp.eq.s32.totalorder %s37, 1
      %p373 = scmp.ne.s32.totalorder %s368, %s370
      %p374 = scmp.eq.s32.totalorder %s37, 0
      %p375 = por %p373, %p374
      %p376 = scmp.ne.s32.totalorder %s368, %s370
      %p377 = scmp.eq.s32.totalorder %s42, 1
      %p378 = por %p376, %p377
      %p379 = scmp.ne.s32.totalorder %s370, %s371
      %p380 = scmp.eq.s32.totalorder %s42, 0
      %p381 = por %p379, %p380
      %p382 = scmp.ne.s32.totalorder %s370, %s371
      %p383 = scmp.eq.s32.totalorder %s43, 1
      %p384 = por %p382, %p383
      %p386 = scmp.ne.s32.totalorder %s371, %s385
      %p387 = scmp.eq.s32.totalorder %s43, 0
      %p388 = por %p386, %p387
      %s390 = sadd.s32 %s389, 1
      %p393 = scmp.eq.s32.totalorder %s37, 1
      %p394 = scmp.ne.s32.totalorder %s389, %s391
      %p395 = scmp.eq.s32.totalorder %s37, 0
      %p396 = por %p394, %p395
      %p397 = scmp.ne.s32.totalorder %s389, %s391
      %p398 = scmp.eq.s32.totalorder %s42, 1
      %p399 = por %p397, %p398
      %p400 = scmp.ne.s32.totalorder %s391, %s392
      %p401 = scmp.eq.s32.totalorder %s42, 0
      %p402 = por %p400, %p401
      %p403 = scmp.ne.s32.totalorder %s391, %s392
      %p404 = scmp.eq.s32.totalorder %s43, 1
      %p405 = por %p403, %p404
      %p407 = scmp.ne.s32.totalorder %s392, %s406
      %p408 = scmp.eq.s32.totalorder %s43, 0
      %p409 = por %p407, %p408
      %s411 = sadd.s32 %s410, 1
      %p414 = scmp.eq.s32.totalorder %s37, 1
      %p415 = scmp.ne.s32.totalorder %s410, %s412
      %p416 = scmp.eq.s32.totalorder %s37, 0
      %p417 = por %p415, %p416
      %p418 = scmp.ne.s32.totalorder %s410, %s412
      %p419 = scmp.eq.s32.totalorder %s42, 1
      %p420 = por %p418, %p419
      %p421 = scmp.ne.s32.totalorder %s412, %s413
      %p422 = scmp.eq.s32.totalorder %s42, 0
      %p423 = por %p421, %p422
      %p424 = scmp.ne.s32.totalorder %s412, %s413
      %p425 = scmp.eq.s32.totalorder %s43, 1
      %p426 = por %p424, %p425
      %p428 = scmp.ne.s32.totalorder %s413, %s427
      %p429 = scmp.eq.s32.totalorder %s43, 0
      %p430 = por %p428, %p429
      %s432 = sadd.s32 %s431, 1
      %p435 = scmp.eq.s32.totalorder %s37, 1
      %p436 = scmp.ne.s32.totalorder %s431, %s433
      %p437 = scmp.eq.s32.totalorder %s37, 0
      %p438 = por %p436, %p437
      %p439 = scmp.ne.s32.totalorder %s431, %s433
      %p440 = scmp.eq.s32.totalorder %s42, 1
      %p441 = por %p439, %p440
      %p442 = scmp.ne.s32.totalorder %s433, %s434
      %p443 = scmp.eq.s32.totalorder %s42, 0
      %p444 = por %p442, %p443
      %p445 = scmp.ne.s32.totalorder %s433, %s434
      %p446 = scmp.eq.s32.totalorder %s43, 1
      %p447 = por %p445, %p446
      %p449 = scmp.ne.s32.totalorder %s434, %s448
      %p450 = scmp.eq.s32.totalorder %s43, 0
      %p451 = por %p449, %p450
      %s453 = sadd.s32 %s452, 1
      %p456 = scmp.eq.s32.totalorder %s37, 1
      %p457 = scmp.ne.s32.totalorder %s452, %s454
      %p458 = scmp.eq.s32.totalorder %s37, 0
      %p459 = por %p457, %p458
      %p460 = scmp.ne.s32.totalorder %s452, %s454
      %p461 = scmp.eq.s32.totalorder %s42, 1
      %p462 = por %p460, %p461
      %p463 = scmp.ne.s32.totalorder %s454, %s455
      %p464 = scmp.eq.s32.totalorder %s42, 0
      %p465 = por %p463, %p464
      %p466 = scmp.ne.s32.totalorder %s454, %s455
      %p467 = scmp.eq.s32.totalorder %s43, 1
      %p468 = por %p466, %p467
      %p470 = scmp.ne.s32.totalorder %s455, %s469
      %p471 = scmp.eq.s32.totalorder %s43, 0
      %p472 = por %p470, %p471
      %s474 = sadd.s32 %s473, 1
      %p477 = scmp.eq.s32.totalorder %s37, 1
      %p478 = scmp.ne.s32.totalorder %s473, %s475
      %p479 = scmp.eq.s32.totalorder %s37, 0
      %p480 = por %p478, %p479
      %p481 = scmp.ne.s32.totalorder %s473, %s475
      %p482 = scmp.eq.s32.totalorder %s42, 1
      %p483 = por %p481, %p482
      %p484 = scmp.ne.s32.totalorder %s475, %s476
      %p485 = scmp.eq.s32.totalorder %s42, 0
      %p486 = por %p484, %p485
      %p487 = scmp.ne.s32.totalorder %s475, %s476
      %p488 = scmp.eq.s32.totalorder %s43, 1
      %p489 = por %p487, %p488
      %p491 = scmp.ne.s32.totalorder %s476, %s490
      %p492 = scmp.eq.s32.totalorder %s43, 0
      %p493 = por %p491, %p492
      %s495 = sadd.s32 %s494, 1
      %p498 = scmp.eq.s32.totalorder %s37, 1
      %p499 = scmp.ne.s32.totalorder %s494, %s496
      %p500 = scmp.eq.s32.totalorder %s37, 0
      %p501 = por %p499, %p500
      %p502 = scmp.ne.s32.totalorder %s494, %s496
      %p503 = scmp.eq.s32.totalorder %s42, 1
      %p504 = por %p502, %p503
      %p505 = scmp.ne.s32.totalorder %s496, %s497
      %p506 = scmp.eq.s32.totalorder %s42, 0
      %p507 = por %p505, %p506
      %p508 = scmp.ne.s32.totalorder %s496, %s497
      %p509 = scmp.eq.s32.totalorder %s43, 1
      %p510 = por %p508, %p509
      %p512 = scmp.ne.s32.totalorder %s497, %s511
      %p513 = scmp.eq.s32.totalorder %s43, 0
      %p514 = por %p512, %p513
      %s515 = ssub.s32 %s44, %s56
      %s516 = ssub.s32 %s45, %s52
      %s517 = sor.u32 %s515, %s516
      %p518 = scmp.eq.s32.totalorder %s517, 0
      %s520 = sadd.s32 %s519, 1
      %s521 = scalar_select %p518, %s519, %s520
      %p524 = pneg %p518
      %p525 = scmp.eq.s32.totalorder %s37, 1
      %p526 = por %p524, %p525
      %p527 = scmp.ne.s32.totalorder %s519, %s522
      %p528 = scmp.eq.s32.totalorder %s37, 0
      %p529 = por %p527, %p528
      %p530 = scmp.ne.s32.totalorder %s519, %s522
      %p531 = scmp.eq.s32.totalorder %s42, 1
      %p532 = por %p530, %p531
      %p533 = scmp.ne.s32.totalorder %s522, %s523
      %p534 = scmp.eq.s32.totalorder %s42, 0
      %p535 = por %p533, %p534
      %p536 = scmp.ne.s32.totalorder %s522, %s523
      %p537 = scmp.eq.s32.totalorder %s43, 1
      %p538 = por %p536, %p537
      %p540 = scmp.ne.s32.totalorder %s523, %s539
      %p541 = scmp.eq.s32.totalorder %s43, 0
      %p542 = por %p540, %p541
      %p543 = scmp.le.s32.totalorder 1, %s37
      %p544 = scmp.lt.s32.totalorder %s37, 3
      %p545 = pnand %p543, %p544
      %p546 = pneg %p545
      // Predicated region
      $region9: #{tpu_custom_call.1} parent=5 // pred_check
        _
      $region10: #{tpu_custom_call.1} parent=5 // pred_check_branch
        %548 = sbr.rel (%p545) target = $region12
      $region11: #{tpu_custom_call.1} parent=5 // pred_region
        %s549 = ssub.s32 %s37, 1
        // Predicated region
        $region13: #{tpu_custom_call.1} parent=11 // pred_check
          %p550 = pneg %p150
        $region14: #{tpu_custom_call.1} parent=11 // pred_check_branch
          %552 = sbr.rel (%p550) target = $region16
        $region15: #{tpu_custom_call.1} parent=11 // pred_region
          %s554 = ssub.s32 16, 16
          %555 = vsyncadd [#allocation5], %s554
          %s557 = sshll.u32 [#allocation4], 4
          %s558 = int_to_ptr.vmem [resolvable:$true] %s557
          %560 = dma.hbm_to_vmem [thread:$0]  %s3, 16, %s558, [#allocation5]
        $region16: #{tpu_custom_call.1} parent=11 // pred_fallthru
          _
        // Predicated region
        $region17: #{tpu_custom_call.1} parent=11 // pred_check
          %p561 = pneg %p171
        $region18: #{tpu_custom_call.1} parent=11 // pred_check_branch
          %563 = sbr.rel (%p561) target = $region20
        $region19: #{tpu_custom_call.1} parent=11 // pred_region
          %s565 = ssub.s32 16, 16
          %566 = vsyncadd [#allocation8], %s565
          %s568 = sshll.u32 [#allocation7], 4
          %s569 = int_to_ptr.vmem [resolvable:$true] %s568
          %571 = dma.hbm_to_vmem [thread:$0]  %s4, 16, %s569, [#allocation8]
        $region20: #{tpu_custom_call.1} parent=11 // pred_fallthru
          _
        // Predicated region
        $region21: #{tpu_custom_call.1} parent=11 // pred_check
          %p572 = pneg %p192
        $region22: #{tpu_custom_call.1} parent=11 // pred_check_branch
          %574 = sbr.rel (%p572) target = $region24
        $region23: #{tpu_custom_call.1} parent=11 // pred_region
          %s576 = ssub.s32 16, 16
          %577 = vsyncadd [#allocation8], %s576
          %s579 = sshll.u32 [#allocation9], 4
          %s580 = int_to_ptr.vmem [resolvable:$true] %s579
          %582 = dma.hbm_to_vmem [thread:$0]  %s5, 16, %s580, [#allocation8]
        $region24: #{tpu_custom_call.1} parent=11 // pred_fallthru
          _
        // Predicated region
        $region25: #{tpu_custom_call.1} parent=11 // pred_check
          %p583 = pneg %p213
        $region26: #{tpu_custom_call.1} parent=11 // pred_check_branch
          %585 = sbr.rel (%p583) target = $region28
        $region27: #{tpu_custom_call.1} parent=11 // pred_region
          %s587 = ssub.s32 16, 16
          %588 = vsyncadd [#allocation11], %s587
          %s590 = sshll.u32 [#allocation10], 4
          %s591 = int_to_ptr.vmem [resolvable:$true] %s590
          %593 = dma.hbm_to_vmem [thread:$0]  %s6, 16, %s591, [#allocation11]
        $region28: #{tpu_custom_call.1} parent=11 // pred_fallthru
          _
        // Predicated region
        $region29: #{tpu_custom_call.1} parent=11 // pred_check
          %p594 = pneg %p234
        $region30: #{tpu_custom_call.1} parent=11 // pred_check_branch
          %596 = sbr.rel (%p594) target = $region32
        $region31: #{tpu_custom_call.1} parent=11 // pred_region
          %s598 = ssub.s32 16, 16
          %599 = vsyncadd [#allocation11], %s598
          %s601 = sshll.u32 [#allocation12], 4
          %s602 = int_to_ptr.vmem [resolvable:$true] %s601
          %604 = dma.hbm_to_vmem [thread:$0]  %s7, 16, %s602, [#allocation11]
        $region32: #{tpu_custom_call.1} parent=11 // pred_fallthru
          _
        // Predicated region
        $region33: #{tpu_custom_call.1} parent=11 // pred_check
          %p605 = pneg %p255
        $region34: #{tpu_custom_call.1} parent=11 // pred_check_branch
          %607 = sbr.rel (%p605) target = $region36
        $region35: #{tpu_custom_call.1} parent=11 // pred_region
          %s609 = ssub.s32 16, 16
          %610 = vsyncadd [#allocation14], %s609
          %s612 = sshll.u32 [#allocation13], 4
          %s613 = int_to_ptr.vmem [resolvable:$true] %s612
          %615 = dma.hbm_to_vmem [thread:$0]  %s8, 16, %s613, [#allocation14]
        $region36: #{tpu_custom_call.1} parent=11 // pred_fallthru
          _
        // Predicated region
        $region37: #{tpu_custom_call.1} parent=11 // pred_check
          %p616 = pneg %p276
        $region38: #{tpu_custom_call.1} parent=11 // pred_check_branch
          %618 = sbr.rel (%p616) target = $region40
        $region39: #{tpu_custom_call.1} parent=11 // pred_region
          _
        $region40: #{tpu_custom_call.1} parent=11 // pred_fallthru
          _
        // Predicated region
        $region41: #{tpu_custom_call.1} parent=11 // pred_check
          %p619 = pneg %p297
        $region42: #{tpu_custom_call.1} parent=11 // pred_check_branch
          %621 = sbr.rel (%p619) target = $region44
        $region43: #{tpu_custom_call.1} parent=11 // pred_region
          %s623 = ssub.s32 16, 16
          %624 = vsyncadd [#allocation14], %s623
          %s626 = sshll.u32 [#allocation15], 4
          %s627 = int_to_ptr.vmem [resolvable:$true] %s626
          %629 = dma.hbm_to_vmem [thread:$0]  %s10, 16, %s627, [#allocation14]
        $region44: #{tpu_custom_call.1} parent=11 // pred_fallthru
          _
        // Predicated region
        $region45: #{tpu_custom_call.1} parent=11 // pred_check
          %p630 = pneg %p318
        $region46: #{tpu_custom_call.1} parent=11 // pred_check_branch
          %632 = sbr.rel (%p630) target = $region48
        $region47: #{tpu_custom_call.1} parent=11 // pred_region
          %s634 = ssub.s32 256, 256
          %635 = vsyncadd [#allocation17], %s634
          %s636 = sshll.u32 [#allocation16], 4
          %s637 = int_to_ptr.vmem [resolvable:$true] %s636
          %642 = dma.hbm_to_vmem [thread:$0]  %s11, 256, %s637, [#allocation17], 64, 64, 4
        $region48: #{tpu_custom_call.1} parent=11 // pred_fallthru
          _
        // Predicated region
        $region49: #{tpu_custom_call.1} parent=11 // pred_check
          %p643 = pneg %p339
        $region50: #{tpu_custom_call.1} parent=11 // pred_check_branch
          %645 = sbr.rel (%p643) target = $region52
        $region51: #{tpu_custom_call.1} parent=11 // pred_region
          %s647 = ssub.s32 16, 16
          %648 = vsyncadd [#allocation17], %s647
          %s650 = sshll.u32 [#allocation18], 4
          %s651 = int_to_ptr.vmem [resolvable:$true] %s650
          %653 = dma.hbm_to_vmem [thread:$0]  %s12, 16, %s651, [#allocation17]
        $region52: #{tpu_custom_call.1} parent=11 // pred_fallthru
          _
        // Predicated region
        $region53: #{tpu_custom_call.1} parent=11 // pred_check
          %p654 = pneg %p360
        $region54: #{tpu_custom_call.1} parent=11 // pred_check_branch
          %656 = sbr.rel (%p654) target = $region56
        $region55: #{tpu_custom_call.1} parent=11 // pred_region
          _
        $region56: #{tpu_custom_call.1} parent=11 // pred_fallthru
          _
        // Predicated region
        $region57: #{tpu_custom_call.1} parent=11 // pred_check
          %p657 = pneg %p381
        $region58: #{tpu_custom_call.1} parent=11 // pred_check_branch
          %659 = sbr.rel (%p657) target = $region60
        $region59: #{tpu_custom_call.1} parent=11 // pred_region
          %s661 = ssub.s32 16, 16
          %662 = vsyncadd [#allocation20], %s661
          %s664 = sshll.u32 [#allocation19], 4
          %s665 = int_to_ptr.vmem [resolvable:$true] %s664
          %667 = dma.hbm_to_vmem [thread:$0]  %s14, 16, %s665, [#allocation20]
        $region60: #{tpu_custom_call.1} parent=11 // pred_fallthru
          _
        // Predicated region
        $region61: #{tpu_custom_call.1} parent=11 // pred_check
          %p668 = pneg %p402
        $region62: #{tpu_custom_call.1} parent=11 // pred_check_branch
          %670 = sbr.rel (%p668) target = $region64
        $region63: #{tpu_custom_call.1} parent=11 // pred_region
          %s672 = ssub.s32 256, 256
          %673 = vsyncadd [#allocation20], %s672
          %s674 = sshll.u32 [#allocation21], 4
          %s675 = int_to_ptr.vmem [resolvable:$true] %s674
          %680 = dma.hbm_to_vmem [thread:$0]  %s15, 256, %s675, [#allocation20], 64, 64, 4
        $region64: #{tpu_custom_call.1} parent=11 // pred_fallthru
          _
        // Predicated region
        $region65: #{tpu_custom_call.1} parent=11 // pred_check
          %p681 = pneg %p423
        $region66: #{tpu_custom_call.1} parent=11 // pred_check_branch
          %683 = sbr.rel (%p681) target = $region68
        $region67: #{tpu_custom_call.1} parent=11 // pred_region
          %s685 = ssub.s32 16, 16
          %686 = vsyncadd [#allocation23], %s685
          %s688 = sshll.u32 [#allocation22], 4
          %s689 = int_to_ptr.vmem [resolvable:$true] %s688
          %691 = dma.hbm_to_vmem [thread:$0]  %s16, 16, %s689, [#allocation23]
        $region68: #{tpu_custom_call.1} parent=11 // pred_fallthru
          _
        // Predicated region
        $region69: #{tpu_custom_call.1} parent=11 // pred_check
          %p692 = pneg %p444
        $region70: #{tpu_custom_call.1} parent=11 // pred_check_branch
          %694 = sbr.rel (%p692) target = $region72
        $region71: #{tpu_custom_call.1} parent=11 // pred_region
          _
        $region72: #{tpu_custom_call.1} parent=11 // pred_fallthru
          _
        // Predicated region
        $region73: #{tpu_custom_call.1} parent=11 // pred_check
          %p695 = pneg %p465
        $region74: #{tpu_custom_call.1} parent=11 // pred_check_branch
          %697 = sbr.rel (%p695) target = $region76
        $region75: #{tpu_custom_call.1} parent=11 // pred_region
          _
        $region76: #{tpu_custom_call.1} parent=11 // pred_fallthru
          _
        // Predicated region
        $region77: #{tpu_custom_call.1} parent=11 // pred_check
          %p698 = pneg %p486
        $region78: #{tpu_custom_call.1} parent=11 // pred_check_branch
          %700 = sbr.rel (%p698) target = $region80
        $region79: #{tpu_custom_call.1} parent=11 // pred_region
          _
        $region80: #{tpu_custom_call.1} parent=11 // pred_fallthru
          _
        // Predicated region
        $region81: #{tpu_custom_call.1} parent=11 // pred_check
          %p701 = pneg %p507
        $region82: #{tpu_custom_call.1} parent=11 // pred_check_branch
          %703 = sbr.rel (%p701) target = $region84
        $region83: #{tpu_custom_call.1} parent=11 // pred_region
          _
        $region84: #{tpu_custom_call.1} parent=11 // pred_fallthru
          _
      $region12: #{tpu_custom_call.1} parent=5 // pred_fallthru
        _
      %p704 = scmp.lt.s32.totalorder %s37, 2
      // Predicated region
      $region85: #{tpu_custom_call.1} parent=5 // pred_check
        %p705 = pneg %p704
      $region86: #{tpu_custom_call.1} parent=5 // pred_check_branch
        %707 = sbr.rel (%p705) target = $region88
      $region87: #{tpu_custom_call.1} parent=5 // pred_region
        // Predicated region
        $region89: #{tpu_custom_call.1} parent=87 // pred_check
          %p708 = pneg %p71
        $region90: #{tpu_custom_call.1} parent=87 // pred_check_branch
          %710 = sbr.rel (%p708) target = $region92
        $region91: #{tpu_custom_call.1} parent=87 // pred_region
          %p711 = scmp.lt.s32.totalorder %s44, 1
          %s712 = scalar_select %p711, %s44, 1
          %p713 = scmp.lt.s32.totalorder %s45, 0
          %s714 = scalar_select %p713, %s45, 0
          %s715 = sadd.s32 %s714, %s712
          %s716 = smul.addr %s715, 8
          %s717 = scalar_lea.vmem %s0, %s716
        $region92: #{tpu_custom_call.1} parent=87 // pred_fallthru
          _
        // Predicated region
        $region93: #{tpu_custom_call.1} parent=87 // pred_check
          %p718 = pneg %p97
        $region94: #{tpu_custom_call.1} parent=87 // pred_check_branch
          %720 = sbr.rel (%p718) target = $region96
        $region95: #{tpu_custom_call.1} parent=87 // pred_region
          %p721 = scmp.lt.s32.totalorder %s44, 1
          %s722 = scalar_select %p721, %s44, 1
          %s723 = smul.addr %s722, 4
          %s724 = smul.addr %s723, 4
          %s725 = scalar_lea.vmem %s1, %s724
        $region96: #{tpu_custom_call.1} parent=87 // pred_fallthru
          _
        // Predicated region
        $region97: #{tpu_custom_call.1} parent=87 // pred_check
          %p726 = pneg %p123
        $region98: #{tpu_custom_call.1} parent=87 // pred_check_branch
          %728 = sbr.rel (%p726) target = $region100
        $region99: #{tpu_custom_call.1} parent=87 // pred_region
          %p729 = scmp.lt.s32.totalorder %s44, 1
          %s730 = scalar_select %p729, %s44, 1
          %s731 = smul.addr %s730, 4
          %s732 = smul.addr %s731, 4
          %s733 = scalar_lea.vmem %s2, %s732
        $region100: #{tpu_custom_call.1} parent=87 // pred_fallthru
          _
      $region88: #{tpu_custom_call.1} parent=5 // pred_fallthru
        _
      %p734 = scmp.le.s32.totalorder 1, %s37
      %p735 = scmp.lt.s32.totalorder %s37, 3
      %p736 = pnand %p734, %p735
      %p737 = pneg %p736
      // Predicated region
      $region101: #{tpu_custom_call.1} parent=5 // pred_check
        _
      $region102: #{tpu_custom_call.1} parent=5 // pred_check_branch
        %739 = sbr.rel (%p736) target = $region104
      $region103: #{tpu_custom_call.1} parent=5 // pred_region
        %s740 = ssub.s32 %s37, 1
        // Predicated region
        $region105: #{tpu_custom_call.1} parent=103 // pred_check
          %p741 = pneg %p150
        $region106: #{tpu_custom_call.1} parent=103 // pred_check_branch
          %743 = sbr.rel (%p741) target = $region108
        $region107: #{tpu_custom_call.1} parent=103 // pred_region
          %744 = dma.done [#allocation5], 16
        $region108: #{tpu_custom_call.1} parent=103 // pred_fallthru
          _
        // Predicated region
        $region109: #{tpu_custom_call.1} parent=103 // pred_check
          %p745 = pneg %p171
        $region110: #{tpu_custom_call.1} parent=103 // pred_check_branch
          %747 = sbr.rel (%p745) target = $region112
        $region111: #{tpu_custom_call.1} parent=103 // pred_region
          %748 = dma.done [#allocation8], 16
        $region112: #{tpu_custom_call.1} parent=103 // pred_fallthru
          _
        // Predicated region
        $region113: #{tpu_custom_call.1} parent=103 // pred_check
          %p749 = pneg %p192
        $region114: #{tpu_custom_call.1} parent=103 // pred_check_branch
          %751 = sbr.rel (%p749) target = $region116
        $region115: #{tpu_custom_call.1} parent=103 // pred_region
          %752 = dma.done [#allocation8], 16
        $region116: #{tpu_custom_call.1} parent=103 // pred_fallthru
          _
        // Predicated region
        $region117: #{tpu_custom_call.1} parent=103 // pred_check
          %p753 = pneg %p213
        $region118: #{tpu_custom_call.1} parent=103 // pred_check_branch
          %755 = sbr.rel (%p753) target = $region120
        $region119: #{tpu_custom_call.1} parent=103 // pred_region
          %756 = dma.done [#allocation11], 16
        $region120: #{tpu_custom_call.1} parent=103 // pred_fallthru
          _
        // Predicated region
        $region121: #{tpu_custom_call.1} parent=103 // pred_check
          %p757 = pneg %p234
        $region122: #{tpu_custom_call.1} parent=103 // pred_check_branch
          %759 = sbr.rel (%p757) target = $region124
        $region123: #{tpu_custom_call.1} parent=103 // pred_region
          %760 = dma.done [#allocation11], 16
        $region124: #{tpu_custom_call.1} parent=103 // pred_fallthru
          _
        // Predicated region
        $region125: #{tpu_custom_call.1} parent=103 // pred_check
          %p761 = pneg %p255
        $region126: #{tpu_custom_call.1} parent=103 // pred_check_branch
          %763 = sbr.rel (%p761) target = $region128
        $region127: #{tpu_custom_call.1} parent=103 // pred_region
          %764 = dma.done [#allocation14], 16
        $region128: #{tpu_custom_call.1} parent=103 // pred_fallthru
          _
        // Predicated region
        $region129: #{tpu_custom_call.1} parent=103 // pred_check
          %p765 = pneg %p297
        $region130: #{tpu_custom_call.1} parent=103 // pred_check_branch
          %767 = sbr.rel (%p765) target = $region132
        $region131: #{tpu_custom_call.1} parent=103 // pred_region
          %768 = dma.done [#allocation14], 16
        $region132: #{tpu_custom_call.1} parent=103 // pred_fallthru
          _
        // Predicated region
        $region133: #{tpu_custom_call.1} parent=103 // pred_check
          %p769 = pneg %p318
        $region134: #{tpu_custom_call.1} parent=103 // pred_check_branch
          %771 = sbr.rel (%p769) target = $region136
        $region135: #{tpu_custom_call.1} parent=103 // pred_region
          %772 = dma.done [#allocation17], 256
        $region136: #{tpu_custom_call.1} parent=103 // pred_fallthru
          _
        // Predicated region
        $region137: #{tpu_custom_call.1} parent=103 // pred_check
          %p773 = pneg %p339
        $region138: #{tpu_custom_call.1} parent=103 // pred_check_branch
          %775 = sbr.rel (%p773) target = $region140
        $region139: #{tpu_custom_call.1} parent=103 // pred_region
          %776 = dma.done [#allocation17], 16
        $region140: #{tpu_custom_call.1} parent=103 // pred_fallthru
          _
        // Predicated region
        $region141: #{tpu_custom_call.1} parent=103 // pred_check
          %p777 = pneg %p381
        $region142: #{tpu_custom_call.1} parent=103 // pred_check_branch
          %779 = sbr.rel (%p777) target = $region144
        $region143: #{tpu_custom_call.1} parent=103 // pred_region
          %780 = dma.done [#allocation20], 16
        $region144: #{tpu_custom_call.1} parent=103 // pred_fallthru
          _
        // Predicated region
        $region145: #{tpu_custom_call.1} parent=103 // pred_check
          %p781 = pneg %p402
        $region146: #{tpu_custom_call.1} parent=103 // pred_check_branch
          %783 = sbr.rel (%p781) target = $region148
        $region147: #{tpu_custom_call.1} parent=103 // pred_region
          %784 = dma.done [#allocation20], 256
        $region148: #{tpu_custom_call.1} parent=103 // pred_fallthru
          _
        // Predicated region
        $region149: #{tpu_custom_call.1} parent=103 // pred_check
          %p785 = pneg %p423
        $region150: #{tpu_custom_call.1} parent=103 // pred_check_branch
          %787 = sbr.rel (%p785) target = $region152
        $region151: #{tpu_custom_call.1} parent=103 // pred_region
          %788 = dma.done [#allocation23], 16
        $region152: #{tpu_custom_call.1} parent=103 // pred_fallthru
          _
        %p789 = scmp.lt.s32.totalorder %s46, 1
        %s790 = scalar_select %p789, %s46, 1
        %p791 = scmp.lt.s32.totalorder %s47, 0
        %s792 = scalar_select %p791, %s47, 0
        %s793 = sadd.s32 %s792, %s790
        %s794 = smul.addr %s793, 8
        %s795 = scalar_lea.vmem %s0, %s794
        %p796 = pneg %p77
        %p797 = pneg %p74
        %p798 = scmp.lt.s32.totalorder %s46, 1
        %s799 = scalar_select %p798, %s46, 1
        %s800 = smul.addr %s799, 4
        %s801 = smul.addr %s800, 4
        %s802 = scalar_lea.vmem %s1, %s801
        %p803 = pneg %p103
        %p804 = pneg %p100
        %p805 = scmp.lt.s32.totalorder %s46, 1
        %s806 = scalar_select %p805, %s46, 1
        %s807 = smul.addr %s806, 4
        %s808 = smul.addr %s807, 4
        %s809 = scalar_lea.vmem %s2, %s808
        %p810 = pneg %p129
        %p811 = pneg %p126
        %p812 = pneg %p150
        %p813 = pneg %p147
        %p814 = pneg %p171
        %p815 = pneg %p168
        %p816 = pneg %p192
        %p817 = pneg %p189
        %p818 = pneg %p213
        %p819 = pneg %p210
        %p820 = pneg %p234
        %p821 = pneg %p231
        %p822 = pneg %p255
        %p823 = pneg %p252
        %p824 = pneg %p276
        %p825 = pneg %p273
        %p826 = pneg %p297
        %p827 = pneg %p294
        %p828 = pneg %p318
        %p829 = pneg %p315
        %p830 = pneg %p339
        %p831 = pneg %p336
        %p832 = pneg %p360
        %p833 = pneg %p357
        %p834 = pneg %p381
        %p835 = pneg %p378
        %p836 = pneg %p402
        %p837 = pneg %p399
        %p838 = pneg %p423
        %p839 = pneg %p420
        %p840 = pneg %p444
        %p841 = pneg %p441
        %p842 = pneg %p465
        %p843 = pneg %p462
        %p844 = pneg %p486
        %p845 = pneg %p483
        %p846 = pneg %p507
        %p847 = pneg %p504
        %p848 = pneg %p535
        %p849 = pneg %p532
        %s850 = sand.u32 %s522, 1
        %s851 = scalar_lea.sflag [#allocation6], %s850
        %s852 = sand.u32 %s522, 1
        %s853 = smul.addr %s852, 8
        %s854 = scalar_lea.vmem [#allocation24], %s853
        %p855 = scmp.lt.s32.totalorder %s46, 1
        %s856 = scalar_select %p855, %s46, 1
        %p857 = scmp.lt.s32.totalorder %s47, 0
        %s858 = scalar_select %p857, %s47, 0
        %s859 = sadd.s32 %s858, %s856
        %s860 = smul.addr %s859, 8
        %s861 = scalar_lea.vmem %s0, %s860
        %p862 = scmp.lt.s32.totalorder %s46, 1
        %s863 = scalar_select %p862, %s46, 1
        %s864 = smul.addr %s863, 4
        %s865 = smul.addr %s864, 4
        %s866 = scalar_lea.vmem %s1, %s865
        %p867 = scmp.lt.s32.totalorder %s46, 1
        %s868 = scalar_select %p867, %s46, 1
        %s869 = smul.addr %s868, 4
        %s870 = smul.addr %s869, 4
        %s871 = scalar_lea.vmem %s2, %s870
        %v873 = vld [vmem:[%s861] sm:$0xff]
        %v874 = vld [vmem:[#allocation4] sm:$0x1]
        %v875 = vld [vmem:[#allocation7] sm:$0x1]
        %vm876 = vcmask 261120
        %v877 = vsel %vm876, %v873, 0.0
        %878 = vadd.xlane.f32.xlu0 %v877
        %v879 = vpop.xlane.xlu0 %878
        %v880 = vrcp.pop 32.0
        %v881 = vmul.f32 %v879, %v880
        %v882 = vsub.f32 %v873, %v881
        %v883 = vmul.f32 %v882, %v882
        %v884 = vsel %vm876, %v883, 0.0
        %885 = vadd.xlane.f32.xlu0 %v884
        %v886 = vpop.xlane.xlu0 %885
        %v887 = vmul.f32 %v886, %v880
        %v888 = vadd.f32 %v887, 1e-05
        %v889 = vrsqrt.pop %v888
        %v890 = vmul.f32 %v882, %v889
        %v892 = vlaneseq
        %v893 = vshrl.u32 %v892, 7
        %v894 = vsub.s32 0, %v893
        %v895 = vrot.slane %v874, %v894
        %v897 = vmul.f32 %v890, %v895
        %v899 = vlaneseq
        %v900 = vshrl.u32 %v899, 7
        %v901 = vsub.s32 0, %v900
        %v902 = vrot.slane %v875, %v901
        %v904 = vadd.f32 %v897, %v902
        %v905 = vpack.c.bf16 %v904, %v904
        %v906 = vld [vmem:[%s9] sm:$0xf]
        %v907 = vld [vmem:[%s9 + $0x4] sm:$0xf]
        %v908 = vld [vmem:[%s9 + $0x8] sm:$0xf]
        %v909 = vld [vmem:[%s9 + $0xc] sm:$0xf]
        %v910 = vld [vmem:[#allocation15] sm:$0x1]
        %v912 = vlaneseq
        %v913 = vshrl.u32 %v912, 7
        %v914 = vsub.s32 0, %v913
        %v915 = vrot.slane %v910, %v914
        %v921 = vunpack.c.l.b16 %v906
        %v922 = vunpack.c.l.b16 %v907
        %v923 = vunpack.c.l.b16 %v908
        %v924 = vunpack.c.l.b16 %v909
        %v925 = vpack.c.b16 %v922, %v921
        %v926 = vpack.c.b16 %v924, %v923
        %v930 = vsel %vm876, %v905, 0
        %932 = vmatprep.subr.bf16.mxu0 0
        %933 = vmatpush1.bf16.msra.mxu0 %v925
        %934 = vmatprep.subr.bf16.mxu0 0
        %935 = vmatpush1.bf16.msra.mxu0 %v926
        %936 = vmatprep.subr.bf16.mxu0 0
        %937 = vmatpush1.bf16.msra.mxu0 0
        %938 = vmatprep.subr.bf16.mxu0 0
        %939 = vmatpush1.bf16.msra.mxu0 0
        %940 = vmatprep.subr.bf16.mxu0 0
        %941 = vmatpush1.bf16.msra.mxu0 0
        %942 = vmatprep.subr.bf16.mxu0 0
        %943 = vmatpush1.bf16.msra.mxu0 0
        %944 = vmatprep.subr.bf16.mxu0 0
        %945 = vmatpush1.bf16.msra.mxu0 0
        %946 = vmatprep.subr.bf16.mxu0 0
        %947 = vmatpush1.bf16.msra.mxu0 0
        %948 = vmatprep.subr.bf16.mxu0 0
        %949 = vmatpush1.bf16.msra.mxu0 0
        %950 = vmatprep.subr.bf16.mxu0 0
        %951 = vmatpush1.bf16.msra.mxu0 0
        %952 = vmatprep.subr.bf16.mxu0 0
        %953 = vmatpush1.bf16.msra.mxu0 0
        %954 = vmatprep.subr.bf16.mxu0 0
        %955 = vmatpush1.bf16.msra.mxu0 0
        %956 = vmatprep.subr.bf16.mxu0 0
        %957 = vmatpush1.bf16.msra.mxu0 0
        %958 = vmatprep.subr.bf16.mxu0 0
        %959 = vmatpush1.bf16.msra.mxu0 0
        %960 = vmatprep.subr.bf16.mxu0 0
        %961 = vmatpush1.bf16.msra.mxu0 0
        %962 = vmatprep.subr.bf16.mxu0 0
        %963 = vmatpush1.bf16.msra.mxu0 0
        %964 = vmatprep.mubr.bf16.mxu0 0
        %965 = vmatmul.mubr.bf16.gmra.mrb[0].mxu0 %v930
        %v966 = vpop.f32.mrb[0].mxu0
        %v967 = vadd.f32 %v915, %v966
        %v968 = vpop.f32.mrb[0].mxu0
        %v969 = vpop.f32.mrb[0].mxu0
        %v970 = vpop.f32.mrb[0].mxu0
        %971 = vdwg.mxu0
        %v972 = vpack.c.bf16 %v967, %v967
        %974 = vrot.lane.b32.xlu0 %v972, 120
        %v975 = vpop.permute.xlu0 %974
        %976 = vrot.lane.b32.xlu0 %v972, 112
        %v977 = vpop.permute.xlu0 %976
        %978 = vrot.lane.b32.xlu0 %v972, 104
        %v979 = vpop.permute.xlu0 %978
        %v981 = vunpack.c.l.s4 1983009808
        %v982 = vunpack.c.0.s8 %v981
        %v983 = vlaneseq
        %v984 = vshrl.u32 %v983, 7
        %v985 = vsub.s32 %v982, %v984
        %v986 = vrot.slane %v972, %v985
        %v989 = vunpack.c.l.s4 1983009808
        %v990 = vunpack.c.0.s8 %v989
        %v991 = vlaneseq
        %v992 = vshrl.u32 %v991, 7
        %v993 = vsub.s32 %v990, %v992
        %v994 = vrot.slane %v977, %v993
        %v995 = vcombine.low %v986, %v994
        %v996 = vcombine.high %v986, %v994
        %v998 = vunpack.c.l.s4 1934713408
        %v999 = vunpack.c.0.s8 %v998
        %v1000 = vlaneseq
        %v1001 = vshrl.u32 %v1000, 7
        %v1002 = vsub.s32 %v999, %v1001
        %v1003 = vrot.slane %v995, %v1002
        %v1005 = vunpack.c.l.s4 1934713408
        %v1006 = vunpack.c.0.s8 %v1005
        %v1007 = vlaneseq
        %v1008 = vshrl.u32 %v1007, 7
        %v1009 = vsub.s32 %v1006, %v1008
        %v1010 = vrot.slane %v996, %v1009
        %v1011 = vcombine.high %v1003, 0
        %v1012 = vcombine.high %v1010, 0
        %v1015 = vunpack.c.l.s4 1983009808
        %v1016 = vunpack.c.0.s8 %v1015
        %v1017 = vlaneseq
        %v1018 = vshrl.u32 %v1017, 7
        %v1019 = vsub.s32 %v1016, %v1018
        %v1020 = vrot.slane %v975, %v1019
        %v1023 = vunpack.c.l.s4 1983009808
        %v1024 = vunpack.c.0.s8 %v1023
        %v1025 = vlaneseq
        %v1026 = vshrl.u32 %v1025, 7
        %v1027 = vsub.s32 %v1024, %v1026
        %v1028 = vrot.slane %v979, %v1027
        %v1029 = vcombine.low %v1020, %v1028
        %v1030 = vcombine.high %v1020, %v1028
        %v1032 = vunpack.c.l.s4 1934713408
        %v1033 = vunpack.c.0.s8 %v1032
        %v1034 = vlaneseq
        %v1035 = vshrl.u32 %v1034, 7
        %v1036 = vsub.s32 %v1033, %v1035
        %v1037 = vrot.slane %v1029, %v1036
        %v1039 = vunpack.c.l.s4 1934713408
        %v1040 = vunpack.c.0.s8 %v1039
        %v1041 = vlaneseq
        %v1042 = vshrl.u32 %v1041, 7
        %v1043 = vsub.s32 %v1040, %v1042
        %v1044 = vrot.slane %v1030, %v1043
        %v1045 = vcombine.high %v1037, 0
        %v1046 = vcombine.high %v1044, 0
        %v1049 = vpack.i.b16 %v1037, %v1003
        %v1051 = vshrl.u32 %v1003, 16
        %v1052 = vshrl.u32 %v1037, 16
        %v1053 = vpack.i.b16 %v1052, %v1051
        %v1057 = vpack.i.b16 %v1045, %v1011
        %v1059 = vshrl.u32 %v1011, 16
        %v1060 = vshrl.u32 %v1045, 16
        %v1061 = vpack.i.b16 %v1060, %v1059
        %v1065 = vpack.i.b16 %v1044, %v1010
        %v1067 = vshrl.u32 %v1010, 16
        %v1068 = vshrl.u32 %v1044, 16
        %v1069 = vpack.i.b16 %v1068, %v1067
        %v1073 = vpack.i.b16 %v1046, %v1012
        %v1075 = vshrl.u32 %v1012, 16
        %v1076 = vshrl.u32 %v1046, 16
        %v1077 = vpack.i.b16 %v1076, %v1075
        %v1079 = vcombine.low %v1049, %v1065
        %v1081 = vunpack.c.l.s4 1983009808
        %v1082 = vunpack.c.0.s8 %v1081
        %v1083 = vlaneseq
        %v1084 = vshrl.u32 %v1083, 7
        %v1085 = vsub.s32 %v1082, %v1084
        %v1086 = vrot.slane %v1079, %v1085
        %v1087 = vcombine.low %v1057, %v1073
        %v1089 = vunpack.c.l.s4 1983009808
        %v1090 = vunpack.c.0.s8 %v1089
        %v1091 = vlaneseq
        %v1092 = vshrl.u32 %v1091, 7
        %v1093 = vsub.s32 %v1090, %v1092
        %v1094 = vrot.slane %v1087, %v1093
        %v1095 = vcombine.low %v1086, %v1094
        %v1097 = vunpack.c.l.s4 1934713408
        %v1098 = vunpack.c.0.s8 %v1097
        %v1099 = vlaneseq
        %v1100 = vshrl.u32 %v1099, 7
        %v1101 = vsub.s32 %v1098, %v1100
        %v1102 = vrot.slane %v1095, %v1101
        %v1103 = vcombine.high %v1102, 0
        %v1104 = vcombine.low %v1053, %v1069
        %v1106 = vunpack.c.l.s4 1983009808
        %v1107 = vunpack.c.0.s8 %v1106
        %v1108 = vlaneseq
        %v1109 = vshrl.u32 %v1108, 7
        %v1110 = vsub.s32 %v1107, %v1109
        %v1111 = vrot.slane %v1104, %v1110
        %v1112 = vcombine.low %v1061, %v1077
        %v1114 = vunpack.c.l.s4 1983009808
        %v1115 = vunpack.c.0.s8 %v1114
        %v1116 = vlaneseq
        %v1117 = vshrl.u32 %v1116, 7
        %v1118 = vsub.s32 %v1115, %v1117
        %v1119 = vrot.slane %v1112, %v1118
        %v1120 = vcombine.low %v1111, %v1119
        %v1122 = vunpack.c.l.s4 1934713408
        %v1123 = vunpack.c.0.s8 %v1122
        %v1124 = vlaneseq
        %v1125 = vshrl.u32 %v1124, 7
        %v1126 = vsub.s32 %v1123, %v1125
        %v1127 = vrot.slane %v1120, %v1126
        %v1128 = vcombine.high %v1127, 0
        %v1131 = vpack.i.b16 %v1127, %v1102
        %v1132 = vshrl.u32 %v1102, 16
        %v1133 = vshrl.u32 %v1127, 16
        %v1134 = vpack.i.b16 %v1133, %v1132
        %v1137 = vpack.i.b16 %v1128, %v1103
        %v1138 = vshrl.u32 %v1103, 16
        %v1139 = vshrl.u32 %v1128, 16
        %v1140 = vpack.i.b16 %v1139, %v1138
        %1141 = vrot.lane.b32.xlu0 %v972, 96
        %v1142 = vpop.permute.xlu0 %1141
        %1143 = vrot.lane.b32.xlu0 %v975, 96
        %v1144 = vpop.permute.xlu0 %1143
        %1145 = vrot.lane.b32.xlu0 %v977, 96
        %v1146 = vpop.permute.xlu0 %1145
        %1147 = vrot.lane.b32.xlu0 %v979, 96
        %v1148 = vpop.permute.xlu0 %1147
        %v1151 = vunpack.c.l.s4 1983009808
        %v1152 = vunpack.c.0.s8 %v1151
        %v1153 = vlaneseq
        %v1154 = vshrl.u32 %v1153, 7
        %v1155 = vsub.s32 %v1152, %v1154
        %v1156 = vrot.slane %v1142, %v1155
        %v1159 = vunpack.c.l.s4 1983009808
        %v1160 = vunpack.c.0.s8 %v1159
        %v1161 = vlaneseq
        %v1162 = vshrl.u32 %v1161, 7
        %v1163 = vsub.s32 %v1160, %v1162
        %v1164 = vrot.slane %v1146, %v1163
        %v1165 = vcombine.low %v1156, %v1164
        %v1166 = vcombine.high %v1156, %v1164
        %v1168 = vunpack.c.l.s4 1934713408
        %v1169 = vunpack.c.0.s8 %v1168
        %v1170 = vlaneseq
        %v1171 = vshrl.u32 %v1170, 7
        %v1172 = vsub.s32 %v1169, %v1171
        %v1173 = vrot.slane %v1165, %v1172
        %v1175 = vunpack.c.l.s4 1934713408
        %v1176 = vunpack.c.0.s8 %v1175
        %v1177 = vlaneseq
        %v1178 = vshrl.u32 %v1177, 7
        %v1179 = vsub.s32 %v1176, %v1178
        %v1180 = vrot.slane %v1166, %v1179
        %v1181 = vcombine.high %v1173, 0
        %v1182 = vcombine.high %v1180, 0
        %v1185 = vunpack.c.l.s4 1983009808
        %v1186 = vunpack.c.0.s8 %v1185
        %v1187 = vlaneseq
        %v1188 = vshrl.u32 %v1187, 7
        %v1189 = vsub.s32 %v1186, %v1188
        %v1190 = vrot.slane %v1144, %v1189
        %v1193 = vunpack.c.l.s4 1983009808
        %v1194 = vunpack.c.0.s8 %v1193
        %v1195 = vlaneseq
        %v1196 = vshrl.u32 %v1195, 7
        %v1197 = vsub.s32 %v1194, %v1196
        %v1198 = vrot.slane %v1148, %v1197
        %v1199 = vcombine.low %v1190, %v1198
        %v1200 = vcombine.high %v1190, %v1198
        %v1202 = vunpack.c.l.s4 1934713408
        %v1203 = vunpack.c.0.s8 %v1202
        %v1204 = vlaneseq
        %v1205 = vshrl.u32 %v1204, 7
        %v1206 = vsub.s32 %v1203, %v1205
        %v1207 = vrot.slane %v1199, %v1206
        %v1209 = vunpack.c.l.s4 1934713408
        %v1210 = vunpack.c.0.s8 %v1209
        %v1211 = vlaneseq
        %v1212 = vshrl.u32 %v1211, 7
        %v1213 = vsub.s32 %v1210, %v1212
        %v1214 = vrot.slane %v1200, %v1213
        %v1215 = vcombine.high %v1207, 0
        %v1216 = vcombine.high %v1214, 0
        %v1219 = vpack.i.b16 %v1207, %v1173
        %v1221 = vshrl.u32 %v1173, 16
        %v1222 = vshrl.u32 %v1207, 16
        %v1223 = vpack.i.b16 %v1222, %v1221
        %v1227 = vpack.i.b16 %v1215, %v1181
        %v1229 = vshrl.u32 %v1181, 16
        %v1230 = vshrl.u32 %v1215, 16
        %v1231 = vpack.i.b16 %v1230, %v1229
        %v1235 = vpack.i.b16 %v1214, %v1180
        %v1237 = vshrl.u32 %v1180, 16
        %v1238 = vshrl.u32 %v1214, 16
        %v1239 = vpack.i.b16 %v1238, %v1237
        %v1243 = vpack.i.b16 %v1216, %v1182
        %v1245 = vshrl.u32 %v1182, 16
        %v1246 = vshrl.u32 %v1216, 16
        %v1247 = vpack.i.b16 %v1246, %v1245
        %v1249 = vcombine.low %v1219, %v1235
        %v1251 = vunpack.c.l.s4 1983009808
        %v1252 = vunpack.c.0.s8 %v1251
        %v1253 = vlaneseq
        %v1254 = vshrl.u32 %v1253, 7
        %v1255 = vsub.s32 %v1252, %v1254
        %v1256 = vrot.slane %v1249, %v1255
        %v1257 = vcombine.low %v1227, %v1243
        %v1259 = vunpack.c.l.s4 1983009808
        %v1260 = vunpack.c.0.s8 %v1259
        %v1261 = vlaneseq
        %v1262 = vshrl.u32 %v1261, 7
        %v1263 = vsub.s32 %v1260, %v1262
        %v1264 = vrot.slane %v1257, %v1263
        %v1265 = vcombine.low %v1256, %v1264
        %v1267 = vunpack.c.l.s4 1934713408
        %v1268 = vunpack.c.0.s8 %v1267
        %v1269 = vlaneseq
        %v1270 = vshrl.u32 %v1269, 7
        %v1271 = vsub.s32 %v1268, %v1270
        %v1272 = vrot.slane %v1265, %v1271
        %v1273 = vcombine.high %v1272, 0
        %v1274 = vcombine.low %v1223, %v1239
        %v1276 = vunpack.c.l.s4 1983009808
        %v1277 = vunpack.c.0.s8 %v1276
        %v1278 = vlaneseq
        %v1279 = vshrl.u32 %v1278, 7
        %v1280 = vsub.s32 %v1277, %v1279
        %v1281 = vrot.slane %v1274, %v1280
        %v1282 = vcombine.low %v1231, %v1247
        %v1284 = vunpack.c.l.s4 1983009808
        %v1285 = vunpack.c.0.s8 %v1284
        %v1286 = vlaneseq
        %v1287 = vshrl.u32 %v1286, 7
        %v1288 = vsub.s32 %v1285, %v1287
        %v1289 = vrot.slane %v1282, %v1288
        %v1290 = vcombine.low %v1281, %v1289
        %v1292 = vunpack.c.l.s4 1934713408
        %v1293 = vunpack.c.0.s8 %v1292
        %v1294 = vlaneseq
        %v1295 = vshrl.u32 %v1294, 7
        %v1296 = vsub.s32 %v1293, %v1295
        %v1297 = vrot.slane %v1290, %v1296
        %v1298 = vcombine.high %v1297, 0
        %v1301 = vpack.i.b16 %v1297, %v1272
        %v1303 = vshrl.u32 %v1272, 16
        %v1304 = vshrl.u32 %v1297, 16
        %v1305 = vpack.i.b16 %v1304, %v1303
        %v1309 = vpack.i.b16 %v1298, %v1273
        %v1311 = vshrl.u32 %v1273, 16
        %v1312 = vshrl.u32 %v1298, 16
        %v1313 = vpack.i.b16 %v1312, %v1311
        %1315 = vrot.lane.b32.xlu0 %v972, 64
        %v1316 = vpop.permute.xlu0 %1315
        %1317 = vrot.lane.b32.xlu0 %v975, 64
        %v1318 = vpop.permute.xlu0 %1317
        %1319 = vrot.lane.b32.xlu0 %v977, 64
        %v1320 = vpop.permute.xlu0 %1319
        %1321 = vrot.lane.b32.xlu0 %v979, 64
        %v1322 = vpop.permute.xlu0 %1321
        %v1325 = vunpack.c.l.s4 1983009808
        %v1326 = vunpack.c.0.s8 %v1325
        %v1327 = vlaneseq
        %v1328 = vshrl.u32 %v1327, 7
        %v1329 = vsub.s32 %v1326, %v1328
        %v1330 = vrot.slane %v1316, %v1329
        %v1333 = vunpack.c.l.s4 1983009808
        %v1334 = vunpack.c.0.s8 %v1333
        %v1335 = vlaneseq
        %v1336 = vshrl.u32 %v1335, 7
        %v1337 = vsub.s32 %v1334, %v1336
        %v1338 = vrot.slane %v1320, %v1337
        %v1339 = vcombine.low %v1330, %v1338
        %v1340 = vcombine.high %v1330, %v1338
        %v1342 = vunpack.c.l.s4 1934713408
        %v1343 = vunpack.c.0.s8 %v1342
        %v1344 = vlaneseq
        %v1345 = vshrl.u32 %v1344, 7
        %v1346 = vsub.s32 %v1343, %v1345
        %v1347 = vrot.slane %v1339, %v1346
        %v1349 = vunpack.c.l.s4 1934713408
        %v1350 = vunpack.c.0.s8 %v1349
        %v1351 = vlaneseq
        %v1352 = vshrl.u32 %v1351, 7
        %v1353 = vsub.s32 %v1350, %v1352
        %v1354 = vrot.slane %v1340, %v1353
        %v1355 = vcombine.high %v1347, 0
        %v1356 = vcombine.high %v1354, 0
        %v1359 = vunpack.c.l.s4 1983009808
        %v1360 = vunpack.c.0.s8 %v1359
        %v1361 = vlaneseq
        %v1362 = vshrl.u32 %v1361, 7
        %v1363 = vsub.s32 %v1360, %v1362
        %v1364 = vrot.slane %v1318, %v1363
        %v1367 = vunpack.c.l.s4 1983009808
        %v1368 = vunpack.c.0.s8 %v1367
        %v1369 = vlaneseq
        %v1370 = vshrl.u32 %v1369, 7
        %v1371 = vsub.s32 %v1368, %v1370
        %v1372 = vrot.slane %v1322, %v1371
        %v1373 = vcombine.low %v1364, %v1372
        %v1374 = vcombine.high %v1364, %v1372
        %v1376 = vunpack.c.l.s4 1934713408
        %v1377 = vunpack.c.0.s8 %v1376
        %v1378 = vlaneseq
        %v1379 = vshrl.u32 %v1378, 7
        %v1380 = vsub.s32 %v1377, %v1379
        %v1381 = vrot.slane %v1373, %v1380
        %v1383 = vunpack.c.l.s4 1934713408
        %v1384 = vunpack.c.0.s8 %v1383
        %v1385 = vlaneseq
        %v1386 = vshrl.u32 %v1385, 7
        %v1387 = vsub.s32 %v1384, %v1386
        %v1388 = vrot.slane %v1374, %v1387
        %v1389 = vcombine.high %v1381, 0
        %v1390 = vcombine.high %v1388, 0
        %v1393 = vpack.i.b16 %v1381, %v1347
        %v1395 = vshrl.u32 %v1347, 16
        %v1396 = vshrl.u32 %v1381, 16
        %v1397 = vpack.i.b16 %v1396, %v1395
        %v1401 = vpack.i.b16 %v1389, %v1355
        %v1403 = vshrl.u32 %v1355, 16
        %v1404 = vshrl.u32 %v1389, 16
        %v1405 = vpack.i.b16 %v1404, %v1403
        %v1409 = vpack.i.b16 %v1388, %v1354
        %v1411 = vshrl.u32 %v1354, 16
        %v1412 = vshrl.u32 %v1388, 16
        %v1413 = vpack.i.b16 %v1412, %v1411
        %v1417 = vpack.i.b16 %v1390, %v1356
        %v1419 = vshrl.u32 %v1356, 16
        %v1420 = vshrl.u32 %v1390, 16
        %v1421 = vpack.i.b16 %v1420, %v1419
        %v1423 = vcombine.low %v1393, %v1409
        %v1425 = vunpack.c.l.s4 1983009808
        %v1426 = vunpack.c.0.s8 %v1425
        %v1427 = vlaneseq
        %v1428 = vshrl.u32 %v1427, 7
        %v1429 = vsub.s32 %v1426, %v1428
        %v1430 = vrot.slane %v1423, %v1429
        %v1431 = vcombine.low %v1401, %v1417
        %v1433 = vunpack.c.l.s4 1983009808
        %v1434 = vunpack.c.0.s8 %v1433
        %v1435 = vlaneseq
        %v1436 = vshrl.u32 %v1435, 7
        %v1437 = vsub.s32 %v1434, %v1436
        %v1438 = vrot.slane %v1431, %v1437
        %v1439 = vcombine.low %v1430, %v1438
        %v1441 = vunpack.c.l.s4 1934713408
        %v1442 = vunpack.c.0.s8 %v1441
        %v1443 = vlaneseq
        %v1444 = vshrl.u32 %v1443, 7
        %v1445 = vsub.s32 %v1442, %v1444
        %v1446 = vrot.slane %v1439, %v1445
        %v1447 = vcombine.high %v1446, 0
        %v1448 = vcombine.low %v1397, %v1413
        %v1450 = vunpack.c.l.s4 1983009808
        %v1451 = vunpack.c.0.s8 %v1450
        %v1452 = vlaneseq
        %v1453 = vshrl.u32 %v1452, 7
        %v1454 = vsub.s32 %v1451, %v1453
        %v1455 = vrot.slane %v1448, %v1454
        %v1456 = vcombine.low %v1405, %v1421
        %v1458 = vunpack.c.l.s4 1983009808
        %v1459 = vunpack.c.0.s8 %v1458
        %v1460 = vlaneseq
        %v1461 = vshrl.u32 %v1460, 7
        %v1462 = vsub.s32 %v1459, %v1461
        %v1463 = vrot.slane %v1456, %v1462
        %v1464 = vcombine.low %v1455, %v1463
        %v1466 = vunpack.c.l.s4 1934713408
        %v1467 = vunpack.c.0.s8 %v1466
        %v1468 = vlaneseq
        %v1469 = vshrl.u32 %v1468, 7
        %v1470 = vsub.s32 %v1467, %v1469
        %v1471 = vrot.slane %v1464, %v1470
        %v1472 = vcombine.high %v1471, 0
        %v1475 = vpack.i.b16 %v1471, %v1446
        %v1477 = vshrl.u32 %v1446, 16
        %v1478 = vshrl.u32 %v1471, 16
        %v1479 = vpack.i.b16 %v1478, %v1477
        %v1483 = vpack.i.b16 %v1472, %v1447
        %v1485 = vshrl.u32 %v1447, 16
        %v1486 = vshrl.u32 %v1472, 16
        %v1487 = vpack.i.b16 %v1486, %v1485
        %s1489 = smul.u32 %s47, 4
        %s1490 = smul.addr %s1489, 4
        %s1491 = scalar_lea.vmem [#allocation2], %s1490
        %vm1492 = vcmask 60416
        %1493 = vst.msk [vmem:[%s1491] sm:$0xf] %vm1492, %v1301
        %1494 = vst.msk [vmem:[%s1491 + $0x4] sm:$0xf] %vm1492, %v1305
        %1495 = vst.msk [vmem:[%s1491 + $0x8] sm:$0xf] %vm1492, %v1309
        %1496 = vst.msk [vmem:[%s1491 + $0xc] sm:$0xf] %vm1492, %v1313
        %s1497 = smul.addr %s1489, 4
        %s1498 = scalar_lea.vmem [#allocation3], %s1497
        %1499 = vst.msk [vmem:[%s1498] sm:$0xf] %vm1492, %v1475
        %1500 = vst.msk [vmem:[%s1498 + $0x4] sm:$0xf] %vm1492, %v1479
        %1501 = vst.msk [vmem:[%s1498 + $0x8] sm:$0xf] %vm1492, %v1483
        %1502 = vst.msk [vmem:[%s1498 + $0xc] sm:$0xf] %vm1492, %v1487
        %v1503 = vlaneseq
        %v1504 = vshrl.u32 %v1503, 7
        %v1505 = vlaneseq
        %v1506 = vand.u32 %v1505, 127
        %vm1507 = vcmp.gt.s32.totalorder %v1506, %v1504
        %v1508 = vsel %vm1507, 1, 0
        %v1509 = vcvt.s32.f32 %v1508
        %v1510 = vmul.f32 %v1509, -1e+30
        %vm1511 = vcmask 64512
        %v1513 = vsel %vm1511, %v1131, 0
        %v1516 = vsel %vm1511, %v1301, 0
        %1518 = vmatprep.subr.bf16.mxu0 0
        %1519 = vmatpush1.bf16.xpose.msra.mxu0 %v1516
        %1520 = vmatprep.subr.bf16.mxu0 0
        %1521 = vmatpush1.bf16.xpose.msra.mxu0 0
        %1522 = vmatprep.subr.bf16.mxu0 0
        %1523 = vmatpush1.bf16.xpose.msra.mxu0 0
        %1524 = vmatprep.subr.bf16.mxu0 0
        %1525 = vmatpush1.bf16.xpose.msra.mxu0 0
        %1526 = vmatprep.subr.bf16.mxu0 0
        %1527 = vmatpush1.bf16.xpose.msra.mxu0 0
        %1528 = vmatprep.subr.bf16.mxu0 0
        %1529 = vmatpush1.bf16.xpose.msra.mxu0 0
        %1530 = vmatprep.subr.bf16.mxu0 0
        %1531 = vmatpush1.bf16.xpose.msra.mxu0 0
        %1532 = vmatprep.subr.bf16.mxu0 0
        %1533 = vmatpush1.bf16.xpose.msra.mxu0 0
        %1534 = vmatprep.subr.bf16.mxu0 0
        %1535 = vmatpush1.bf16.xpose.msra.mxu0 0
        %1536 = vmatprep.subr.bf16.mxu0 0
        %1537 = vmatpush1.bf16.xpose.msra.mxu0 0
        %1538 = vmatprep.subr.bf16.mxu0 0
        %1539 = vmatpush1.bf16.xpose.msra.mxu0 0
        %1540 = vmatprep.subr.bf16.mxu0 0
        %1541 = vmatpush1.bf16.xpose.msra.mxu0 0
        %1542 = vmatprep.subr.bf16.mxu0 0
        %1543 = vmatpush1.bf16.xpose.msra.mxu0 0
        %1544 = vmatprep.subr.bf16.mxu0 0
        %1545 = vmatpush1.bf16.xpose.msra.mxu0 0
        %1546 = vmatprep.subr.bf16.mxu0 0
        %1547 = vmatpush1.bf16.xpose.msra.mxu0 0
        %1548 = vmatprep.subr.bf16.mxu0 0
        %1549 = vmatpush1.bf16.xpose.msra.mxu0 0
        %1550 = vmatprep.mubr.bf16.mxu0 0
        %1551 = vmatmul.mubr.bf16.gmra.mrb[0].mxu0 %v1513
        %v1552 = vpop.f32.mrb[0].mxu0
        %v1553 = vadd.f32 %v1510, %v1552
        %v1554 = vpop.f32.mrb[0].mxu0
        %v1555 = vpop.f32.mrb[0].mxu0
        %v1556 = vpop.f32.mrb[0].mxu0
        %1557 = vdwg.mxu0
        %v1559 = vsel %vm1511, %v1134, 0
        %v1562 = vsel %vm1511, %v1305, 0
        %1564 = vmatprep.subr.bf16.mxu0 0
        %1565 = vmatpush1.bf16.xpose.msra.mxu0 %v1562
        %1566 = vmatprep.subr.bf16.mxu0 0
        %1567 = vmatpush1.bf16.xpose.msra.mxu0 0
        %1568 = vmatprep.subr.bf16.mxu0 0
        %1569 = vmatpush1.bf16.xpose.msra.mxu0 0
        %1570 = vmatprep.subr.bf16.mxu0 0
        %1571 = vmatpush1.bf16.xpose.msra.mxu0 0
        %1572 = vmatprep.subr.bf16.mxu0 0
        %1573 = vmatpush1.bf16.xpose.msra.mxu0 0
        %1574 = vmatprep.subr.bf16.mxu0 0
        %1575 = vmatpush1.bf16.xpose.msra.mxu0 0
        %1576 = vmatprep.subr.bf16.mxu0 0
        %1577 = vmatpush1.bf16.xpose.msra.mxu0 0
        %1578 = vmatprep.subr.bf16.mxu0 0
        %1579 = vmatpush1.bf16.xpose.msra.mxu0 0
        %1580 = vmatprep.subr.bf16.mxu0 0
        %1581 = vmatpush1.bf16.xpose.msra.mxu0 0
        %1582 = vmatprep.subr.bf16.mxu0 0
        %1583 = vmatpush1.bf16.xpose.msra.mxu0 0
        %1584 = vmatprep.subr.bf16.mxu0 0
        %1585 = vmatpush1.bf16.xpose.msra.mxu0 0
        %1586 = vmatprep.subr.bf16.mxu0 0
        %1587 = vmatpush1.bf16.xpose.msra.mxu0 0
        %1588 = vmatprep.subr.bf16.mxu0 0
        %1589 = vmatpush1.bf16.xpose.msra.mxu0 0
        %1590 = vmatprep.subr.bf16.mxu0 0
        %1591 = vmatpush1.bf16.xpose.msra.mxu0 0
        %1592 = vmatprep.subr.bf16.mxu0 0
        %1593 = vmatpush1.bf16.xpose.msra.mxu0 0
        %1594 = vmatprep.subr.bf16.mxu0 0
        %1595 = vmatpush1.bf16.xpose.msra.mxu0 0
        %1596 = vmatprep.mubr.bf16.mxu0 0
        %1597 = vmatmul.mubr.bf16.gmra.mrb[0].mxu0 %v1559
        %v1598 = vpop.f32.mrb[0].mxu0
        %v1599 = vadd.f32 %v1510, %v1598
        %v1600 = vpop.f32.mrb[0].mxu0
        %v1601 = vpop.f32.mrb[0].mxu0
        %v1602 = vpop.f32.mrb[0].mxu0
        %1603 = vdwg.mxu0
        %v1605 = vsel %vm1511, %v1137, 0
        %v1608 = vsel %vm1511, %v1309, 0
        %1610 = vmatprep.subr.bf16.mxu0 0
        %1611 = vmatpush1.bf16.xpose.msra.mxu0 %v1608
        %1612 = vmatprep.subr.bf16.mxu0 0
        %1613 = vmatpush1.bf16.xpose.msra.mxu0 0
        %1614 = vmatprep.subr.bf16.mxu0 0
        %1615 = vmatpush1.bf16.xpose.msra.mxu0 0
        %1616 = vmatprep.subr.bf16.mxu0 0
        %1617 = vmatpush1.bf16.xpose.msra.mxu0 0
        %1618 = vmatprep.subr.bf16.mxu0 0
        %1619 = vmatpush1.bf16.xpose.msra.mxu0 0
        %1620 = vmatprep.subr.bf16.mxu0 0
        %1621 = vmatpush1.bf16.xpose.msra.mxu0 0
        %1622 = vmatprep.subr.bf16.mxu0 0
        %1623 = vmatpush1.bf16.xpose.msra.mxu0 0
        %1624 = vmatprep.subr.bf16.mxu0 0
        %1625 = vmatpush1.bf16.xpose.msra.mxu0 0
        %1626 = vmatprep.subr.bf16.mxu0 0
        %1627 = vmatpush1.bf16.xpose.msra.mxu0 0
        %1628 = vmatprep.subr.bf16.mxu0 0
        %1629 = vmatpush1.bf16.xpose.msra.mxu0 0
        %1630 = vmatprep.subr.bf16.mxu0 0
        %1631 = vmatpush1.bf16.xpose.msra.mxu0 0
        %1632 = vmatprep.subr.bf16.mxu0 0
        %1633 = vmatpush1.bf16.xpose.msra.mxu0 0
        %1634 = vmatprep.subr.bf16.mxu0 0
        %1635 = vmatpush1.bf16.xpose.msra.mxu0 0
        %1636 = vmatprep.subr.bf16.mxu0 0
        %1637 = vmatpush1.bf16.xpose.msra.mxu0 0
        %1638 = vmatprep.subr.bf16.mxu0 0
        %1639 = vmatpush1.bf16.xpose.msra.mxu0 0
        %1640 = vmatprep.subr.bf16.mxu0 0
        %1641 = vmatpush1.bf16.xpose.msra.mxu0 0
        %1642 = vmatprep.mubr.bf16.mxu0 0
        %1643 = vmatmul.mubr.bf16.gmra.mrb[0].mxu0 %v1605
        %v1644 = vpop.f32.mrb[0].mxu0
        %v1645 = vadd.f32 %v1510, %v1644
        %v1646 = vpop.f32.mrb[0].mxu0
        %v1647 = vpop.f32.mrb[0].mxu0
        %v1648 = vpop.f32.mrb[0].mxu0
        %1649 = vdwg.mxu0
        %v1651 = vsel %vm1511, %v1140, 0
        %v1654 = vsel %vm1511, %v1313, 0
        %1656 = vmatprep.subr.bf16.mxu0 0
        %1657 = vmatpush1.bf16.xpose.msra.mxu0 %v1654
        %1658 = vmatprep.subr.bf16.mxu0 0
        %1659 = vmatpush1.bf16.xpose.msra.mxu0 0
        %1660 = vmatprep.subr.bf16.mxu0 0
        %1661 = vmatpush1.bf16.xpose.msra.mxu0 0
        %1662 = vmatprep.subr.bf16.mxu0 0
        %1663 = vmatpush1.bf16.xpose.msra.mxu0 0
        %1664 = vmatprep.subr.bf16.mxu0 0
        %1665 = vmatpush1.bf16.xpose.msra.mxu0 0
        %1666 = vmatprep.subr.bf16.mxu0 0
        %1667 = vmatpush1.bf16.xpose.msra.mxu0 0
        %1668 = vmatprep.subr.bf16.mxu0 0
        %1669 = vmatpush1.bf16.xpose.msra.mxu0 0
        %1670 = vmatprep.subr.bf16.mxu0 0
        %1671 = vmatpush1.bf16.xpose.msra.mxu0 0
        %1672 = vmatprep.subr.bf16.mxu0 0
        %1673 = vmatpush1.bf16.xpose.msra.mxu0 0
        %1674 = vmatprep.subr.bf16.mxu0 0
        %1675 = vmatpush1.bf16.xpose.msra.mxu0 0
        %1676 = vmatprep.subr.bf16.mxu0 0
        %1677 = vmatpush1.bf16.xpose.msra.mxu0 0
        %1678 = vmatprep.subr.bf16.mxu0 0
        %1679 = vmatpush1.bf16.xpose.msra.mxu0 0
        %1680 = vmatprep.subr.bf16.mxu0 0
        %1681 = vmatpush1.bf16.xpose.msra.mxu0 0
        %1682 = vmatprep.subr.bf16.mxu0 0
        %1683 = vmatpush1.bf16.xpose.msra.mxu0 0
        %1684 = vmatprep.subr.bf16.mxu0 0
        %1685 = vmatpush1.bf16.xpose.msra.mxu0 0
        %1686 = vmatprep.subr.bf16.mxu0 0
        %1687 = vmatpush1.bf16.xpose.msra.mxu0 0
        %1688 = vmatprep.mubr.bf16.mxu0 0
        %1689 = vmatmul.mubr.bf16.gmra.mrb[0].mxu0 %v1651
        %v1690 = vpop.f32.mrb[0].mxu0
        %v1691 = vadd.f32 %v1510, %v1690
        %v1692 = vpop.f32.mrb[0].mxu0
        %v1693 = vpop.f32.mrb[0].mxu0
        %v1694 = vpop.f32.mrb[0].mxu0
        %1695 = vdwg.mxu0
        %v1696 = vsel %vm1511, %v1553, -inf
        %1697 = vmax.xlane.f32.xlu0 %v1696
        %v1698 = vpop.xlane.xlu0 %1697
        %v1699 = vsel %vm1511, %v1599, -inf
        %1700 = vmax.xlane.f32.xlu0 %v1699
        %v1701 = vpop.xlane.xlu0 %1700
        %v1702 = vsel %vm1511, %v1645, -inf
        %1703 = vmax.xlane.f32.xlu0 %v1702
        %v1704 = vpop.xlane.xlu0 %1703
        %v1705 = vsel %vm1511, %v1691, -inf
        %1706 = vmax.xlane.f32.xlu0 %v1705
        %v1707 = vpop.xlane.xlu0 %1706
        %v1708 = vsub.f32 %v1553, %v1698
        %v1709 = vsub.f32 %v1599, %v1701
        %v1710 = vsub.f32 %v1645, %v1704
        %v1711 = vsub.f32 %v1691, %v1707
        %v1712 = vmul.f32 %v1708, 1.442695
        %v1713 = vpow.pop %v1712
        %v1714 = vmul.f32 %v1709, 1.442695
        %v1715 = vpow.pop %v1714
        %v1716 = vmul.f32 %v1710, 1.442695
        %v1717 = vpow.pop %v1716
        %v1718 = vmul.f32 %v1711, 1.442695
        %v1719 = vpow.pop %v1718
        %v1720 = vsel %vm1511, %v1713, 0.0
        %1721 = vadd.xlane.f32.xlu0 %v1720
        %v1722 = vpop.xlane.xlu0 %1721
        %v1723 = vsel %vm1511, %v1715, 0.0
        %1724 = vadd.xlane.f32.xlu0 %v1723
        %v1725 = vpop.xlane.xlu0 %1724
        %v1726 = vsel %vm1511, %v1717, 0.0
        %1727 = vadd.xlane.f32.xlu0 %v1726
        %v1728 = vpop.xlane.xlu0 %1727
        %v1729 = vsel %vm1511, %v1719, 0.0
        %1730 = vadd.xlane.f32.xlu0 %v1729
        %v1731 = vpop.xlane.xlu0 %1730
        %v1732 = vpack.c.bf16 %v1713, %v1713
        %v1733 = vpack.c.bf16 %v1715, %v1715
        %v1734 = vpack.c.bf16 %v1717, %v1717
        %v1735 = vpack.c.bf16 %v1719, %v1719
        %v1737 = vsel %vm1511, %v1732, 0
        %vm1739 = vcmask 1043456
        %v1741 = vsel %vm1739, %v1475, 0
        %1743 = vmatprep.subr.bf16.mxu0 0
        %1744 = vmatpush1.bf16.msra.mxu0 %v1741
        %1745 = vmatprep.subr.bf16.mxu0 0
        %1746 = vmatpush1.bf16.msra.mxu0 0
        %1747 = vmatprep.subr.bf16.mxu0 0
        %1748 = vmatpush1.bf16.msra.mxu0 0
        %1749 = vmatprep.subr.bf16.mxu0 0
        %1750 = vmatpush1.bf16.msra.mxu0 0
        %1751 = vmatprep.subr.bf16.mxu0 0
        %1752 = vmatpush1.bf16.msra.mxu0 0
        %1753 = vmatprep.subr.bf16.mxu0 0
        %1754 = vmatpush1.bf16.msra.mxu0 0
        %1755 = vmatprep.subr.bf16.mxu0 0
        %1756 = vmatpush1.bf16.msra.mxu0 0
        %1757 = vmatprep.subr.bf16.mxu0 0
        %1758 = vmatpush1.bf16.msra.mxu0 0
        %1759 = vmatprep.subr.bf16.mxu0 0
        %1760 = vmatpush1.bf16.msra.mxu0 0
        %1761 = vmatprep.subr.bf16.mxu0 0
        %1762 = vmatpush1.bf16.msra.mxu0 0
        %1763 = vmatprep.subr.bf16.mxu0 0
        %1764 = vmatpush1.bf16.msra.mxu0 0
        %1765 = vmatprep.subr.bf16.mxu0 0
        %1766 = vmatpush1.bf16.msra.mxu0 0
        %1767 = vmatprep.subr.bf16.mxu0 0
        %1768 = vmatpush1.bf16.msra.mxu0 0
        %1769 = vmatprep.subr.bf16.mxu0 0
        %1770 = vmatpush1.bf16.msra.mxu0 0
        %1771 = vmatprep.subr.bf16.mxu0 0
        %1772 = vmatpush1.bf16.msra.mxu0 0
        %1773 = vmatprep.subr.bf16.mxu0 0
        %1774 = vmatpush1.bf16.msra.mxu0 0
        %1775 = vmatprep.mubr.bf16.mxu0 0
        %1776 = vmatmul.mubr.bf16.gmra.mrb[0].mxu0 %v1737
        %v1777 = vpop.f32.mrb[0].mxu0
        %v1778 = vadd.f32 0.0, %v1777
        %v1779 = vpop.f32.mrb[0].mxu0
        %v1780 = vpop.f32.mrb[0].mxu0
        %v1781 = vpop.f32.mrb[0].mxu0
        %1782 = vdwg.mxu0
        %v1784 = vsel %vm1511, %v1733, 0
        %v1787 = vsel %vm1739, %v1479, 0
        %1789 = vmatprep.subr.bf16.mxu0 0
        %1790 = vmatpush1.bf16.msra.mxu0 %v1787
        %1791 = vmatprep.subr.bf16.mxu0 0
        %1792 = vmatpush1.bf16.msra.mxu0 0
        %1793 = vmatprep.subr.bf16.mxu0 0
        %1794 = vmatpush1.bf16.msra.mxu0 0
        %1795 = vmatprep.subr.bf16.mxu0 0
        %1796 = vmatpush1.bf16.msra.mxu0 0
        %1797 = vmatprep.subr.bf16.mxu0 0
        %1798 = vmatpush1.bf16.msra.mxu0 0
        %1799 = vmatprep.subr.bf16.mxu0 0
        %1800 = vmatpush1.bf16.msra.mxu0 0
        %1801 = vmatprep.subr.bf16.mxu0 0
        %1802 = vmatpush1.bf16.msra.mxu0 0
        %1803 = vmatprep.subr.bf16.mxu0 0
        %1804 = vmatpush1.bf16.msra.mxu0 0
        %1805 = vmatprep.subr.bf16.mxu0 0
        %1806 = vmatpush1.bf16.msra.mxu0 0
        %1807 = vmatprep.subr.bf16.mxu0 0
        %1808 = vmatpush1.bf16.msra.mxu0 0
        %1809 = vmatprep.subr.bf16.mxu0 0
        %1810 = vmatpush1.bf16.msra.mxu0 0
        %1811 = vmatprep.subr.bf16.mxu0 0
        %1812 = vmatpush1.bf16.msra.mxu0 0
        %1813 = vmatprep.subr.bf16.mxu0 0
        %1814 = vmatpush1.bf16.msra.mxu0 0
        %1815 = vmatprep.subr.bf16.mxu0 0
        %1816 = vmatpush1.bf16.msra.mxu0 0
        %1817 = vmatprep.subr.bf16.mxu0 0
        %1818 = vmatpush1.bf16.msra.mxu0 0
        %1819 = vmatprep.subr.bf16.mxu0 0
        %1820 = vmatpush1.bf16.msra.mxu0 0
        %1821 = vmatprep.mubr.bf16.mxu0 0
        %1822 = vmatmul.mubr.bf16.gmra.mrb[0].mxu0 %v1784
        %v1823 = vpop.f32.mrb[0].mxu0
        %v1824 = vadd.f32 0.0, %v1823
        %v1825 = vpop.f32.mrb[0].mxu0
        %v1826 = vpop.f32.mrb[0].mxu0
        %v1827 = vpop.f32.mrb[0].mxu0
        %1828 = vdwg.mxu0
        %v1830 = vsel %vm1511, %v1734, 0
        %v1833 = vsel %vm1739, %v1483, 0
        %1835 = vmatprep.subr.bf16.mxu0 0
        %1836 = vmatpush1.bf16.msra.mxu0 %v1833
        %1837 = vmatprep.subr.bf16.mxu0 0
        %1838 = vmatpush1.bf16.msra.mxu0 0
        %1839 = vmatprep.subr.bf16.mxu0 0
        %1840 = vmatpush1.bf16.msra.mxu0 0
        %1841 = vmatprep.subr.bf16.mxu0 0
        %1842 = vmatpush1.bf16.msra.mxu0 0
        %1843 = vmatprep.subr.bf16.mxu0 0
        %1844 = vmatpush1.bf16.msra.mxu0 0
        %1845 = vmatprep.subr.bf16.mxu0 0
        %1846 = vmatpush1.bf16.msra.mxu0 0
        %1847 = vmatprep.subr.bf16.mxu0 0
        %1848 = vmatpush1.bf16.msra.mxu0 0
        %1849 = vmatprep.subr.bf16.mxu0 0
        %1850 = vmatpush1.bf16.msra.mxu0 0
        %1851 = vmatprep.subr.bf16.mxu0 0
        %1852 = vmatpush1.bf16.msra.mxu0 0
        %1853 = vmatprep.subr.bf16.mxu0 0
        %1854 = vmatpush1.bf16.msra.mxu0 0
        %1855 = vmatprep.subr.bf16.mxu0 0
        %1856 = vmatpush1.bf16.msra.mxu0 0
        %1857 = vmatprep.subr.bf16.mxu0 0
        %1858 = vmatpush1.bf16.msra.mxu0 0
        %1859 = vmatprep.subr.bf16.mxu0 0
        %1860 = vmatpush1.bf16.msra.mxu0 0
        %1861 = vmatprep.subr.bf16.mxu0 0
        %1862 = vmatpush1.bf16.msra.mxu0 0
        %1863 = vmatprep.subr.bf16.mxu0 0
        %1864 = vmatpush1.bf16.msra.mxu0 0
        %1865 = vmatprep.subr.bf16.mxu0 0
        %1866 = vmatpush1.bf16.msra.mxu0 0
        %1867 = vmatprep.mubr.bf16.mxu0 0
        %1868 = vmatmul.mubr.bf16.gmra.mrb[0].mxu0 %v1830
        %v1869 = vpop.f32.mrb[0].mxu0
        %v1870 = vadd.f32 0.0, %v1869
        %v1871 = vpop.f32.mrb[0].mxu0
        %v1872 = vpop.f32.mrb[0].mxu0
        %v1873 = vpop.f32.mrb[0].mxu0
        %1874 = vdwg.mxu0
        %v1876 = vsel %vm1511, %v1735, 0
        %v1879 = vsel %vm1739, %v1487, 0
        %1881 = vmatprep.subr.bf16.mxu0 0
        %1882 = vmatpush1.bf16.msra.mxu0 %v1879
        %1883 = vmatprep.subr.bf16.mxu0 0
        %1884 = vmatpush1.bf16.msra.mxu0 0
        %1885 = vmatprep.subr.bf16.mxu0 0
        %1886 = vmatpush1.bf16.msra.mxu0 0
        %1887 = vmatprep.subr.bf16.mxu0 0
        %1888 = vmatpush1.bf16.msra.mxu0 0
        %1889 = vmatprep.subr.bf16.mxu0 0
        %1890 = vmatpush1.bf16.msra.mxu0 0
        %1891 = vmatprep.subr.bf16.mxu0 0
        %1892 = vmatpush1.bf16.msra.mxu0 0
        %1893 = vmatprep.subr.bf16.mxu0 0
        %1894 = vmatpush1.bf16.msra.mxu0 0
        %1895 = vmatprep.subr.bf16.mxu0 0
        %1896 = vmatpush1.bf16.msra.mxu0 0
        %1897 = vmatprep.subr.bf16.mxu0 0
        %1898 = vmatpush1.bf16.msra.mxu0 0
        %1899 = vmatprep.subr.bf16.mxu0 0
        %1900 = vmatpush1.bf16.msra.mxu0 0
        %1901 = vmatprep.subr.bf16.mxu0 0
        %1902 = vmatpush1.bf16.msra.mxu0 0
        %1903 = vmatprep.subr.bf16.mxu0 0
        %1904 = vmatpush1.bf16.msra.mxu0 0
        %1905 = vmatprep.subr.bf16.mxu0 0
        %1906 = vmatpush1.bf16.msra.mxu0 0
        %1907 = vmatprep.subr.bf16.mxu0 0
        %1908 = vmatpush1.bf16.msra.mxu0 0
        %1909 = vmatprep.subr.bf16.mxu0 0
        %1910 = vmatpush1.bf16.msra.mxu0 0
        %1911 = vmatprep.subr.bf16.mxu0 0
        %1912 = vmatpush1.bf16.msra.mxu0 0
        %1913 = vmatprep.mubr.bf16.mxu0 0
        %1914 = vmatmul.mubr.bf16.gmra.mrb[0].mxu0 %v1876
        %v1915 = vpop.f32.mrb[0].mxu0
        %v1916 = vadd.f32 0.0, %v1915
        %v1917 = vpop.f32.mrb[0].mxu0
        %v1918 = vpop.f32.mrb[0].mxu0
        %v1919 = vpop.f32.mrb[0].mxu0
        %1920 = vdwg.mxu0
        // While loop
        $region153: #{tpu_custom_call.1} parent=103 // loop_pre_header
          _
        $region154: #{tpu_custom_call.1} parent=103 // loop_header
          %s1922 = sphi 0, %s1924
          %p1923 = scmp.ge.s32.totalorder %s1922, %s47
          %v1927 = vphi %v1698, %v2136
          %v1928 = vphi %v1701, %v2137
          %v1929 = vphi %v1704, %v2138
          %v1930 = vphi %v1707, %v2139
          %v1931 = vphi %v1722, %v2180
          %v1932 = vphi %v1725, %v2181
          %v1933 = vphi %v1728, %v2182
          %v1934 = vphi %v1731, %v2183
          %v1935 = vphi %v1778, %v2376
          %v1936 = vphi %v1824, %v2377
          %v1937 = vphi %v1870, %v2378
          %v1938 = vphi %v1916, %v2379
        $region155: #{tpu_custom_call.1} parent=103 // loop_header_branch
          %1926 = sbr.rel (%p1923) target = $region159
        $region156: #{tpu_custom_call.1} parent=103 // loop_body
          %s1939 = smul.u32 %s1922, 4
          %s1940 = smul.addr %s1939, 4
          %s1941 = scalar_lea.vmem [#allocation2], %s1940
          %v1942 = vld [vmem:[%s1941] sm:$0xf]
          %v1943 = vld [vmem:[%s1941 + $0x4] sm:$0xf]
          %v1944 = vld [vmem:[%s1941 + $0x8] sm:$0xf]
          %v1945 = vld [vmem:[%s1941 + $0xc] sm:$0xf]
          %s1946 = smul.addr %s1939, 4
          %s1947 = scalar_lea.vmem [#allocation3], %s1946
          %v1948 = vld [vmem:[%s1947] sm:$0xf]
          %v1949 = vld [vmem:[%s1947 + $0x4] sm:$0xf]
          %v1950 = vld [vmem:[%s1947 + $0x8] sm:$0xf]
          %v1951 = vld [vmem:[%s1947 + $0xc] sm:$0xf]
          %v1953 = vsel %vm1511, %v1942, 0
          %1955 = vmatprep.subr.bf16.mxu0 0
          %1956 = vmatpush1.bf16.xpose.msra.mxu0 %v1953
          %1957 = vmatprep.subr.bf16.mxu0 0
          %1958 = vmatpush1.bf16.xpose.msra.mxu0 0
          %1959 = vmatprep.subr.bf16.mxu0 0
          %1960 = vmatpush1.bf16.xpose.msra.mxu0 0
          %1961 = vmatprep.subr.bf16.mxu0 0
          %1962 = vmatpush1.bf16.xpose.msra.mxu0 0
          %1963 = vmatprep.subr.bf16.mxu0 0
          %1964 = vmatpush1.bf16.xpose.msra.mxu0 0
          %1965 = vmatprep.subr.bf16.mxu0 0
          %1966 = vmatpush1.bf16.xpose.msra.mxu0 0
          %1967 = vmatprep.subr.bf16.mxu0 0
          %1968 = vmatpush1.bf16.xpose.msra.mxu0 0
          %1969 = vmatprep.subr.bf16.mxu0 0
          %1970 = vmatpush1.bf16.xpose.msra.mxu0 0
          %1971 = vmatprep.subr.bf16.mxu0 0
          %1972 = vmatpush1.bf16.xpose.msra.mxu0 0
          %1973 = vmatprep.subr.bf16.mxu0 0
          %1974 = vmatpush1.bf16.xpose.msra.mxu0 0
          %1975 = vmatprep.subr.bf16.mxu0 0
          %1976 = vmatpush1.bf16.xpose.msra.mxu0 0
          %1977 = vmatprep.subr.bf16.mxu0 0
          %1978 = vmatpush1.bf16.xpose.msra.mxu0 0
          %1979 = vmatprep.subr.bf16.mxu0 0
          %1980 = vmatpush1.bf16.xpose.msra.mxu0 0
          %1981 = vmatprep.subr.bf16.mxu0 0
          %1982 = vmatpush1.bf16.xpose.msra.mxu0 0
          %1983 = vmatprep.subr.bf16.mxu0 0
          %1984 = vmatpush1.bf16.xpose.msra.mxu0 0
          %1985 = vmatprep.subr.bf16.mxu0 0
          %1986 = vmatpush1.bf16.xpose.msra.mxu0 0
          %1987 = vmatprep.mubr.bf16.mxu0 0
          %1988 = vmatmul.mubr.bf16.gmra.mrb[0].mxu0 %v1513
          %v1989 = vpop.f32.mrb[0].mxu0
          %v1990 = vadd.f32 0.0, %v1989
          %v1991 = vpop.f32.mrb[0].mxu0
          %v1992 = vpop.f32.mrb[0].mxu0
          %v1993 = vpop.f32.mrb[0].mxu0
          %1994 = vdwg.mxu0
          %v1996 = vsel %vm1511, %v1943, 0
          %1998 = vmatprep.subr.bf16.mxu0 0
          %1999 = vmatpush1.bf16.xpose.msra.mxu0 %v1996
          %2000 = vmatprep.subr.bf16.mxu0 0
          %2001 = vmatpush1.bf16.xpose.msra.mxu0 0
          %2002 = vmatprep.subr.bf16.mxu0 0
          %2003 = vmatpush1.bf16.xpose.msra.mxu0 0
          %2004 = vmatprep.subr.bf16.mxu0 0
          %2005 = vmatpush1.bf16.xpose.msra.mxu0 0
          %2006 = vmatprep.subr.bf16.mxu0 0
          %2007 = vmatpush1.bf16.xpose.msra.mxu0 0
          %2008 = vmatprep.subr.bf16.mxu0 0
          %2009 = vmatpush1.bf16.xpose.msra.mxu0 0
          %2010 = vmatprep.subr.bf16.mxu0 0
          %2011 = vmatpush1.bf16.xpose.msra.mxu0 0
          %2012 = vmatprep.subr.bf16.mxu0 0
          %2013 = vmatpush1.bf16.xpose.msra.mxu0 0
          %2014 = vmatprep.subr.bf16.mxu0 0
          %2015 = vmatpush1.bf16.xpose.msra.mxu0 0
          %2016 = vmatprep.subr.bf16.mxu0 0
          %2017 = vmatpush1.bf16.xpose.msra.mxu0 0
          %2018 = vmatprep.subr.bf16.mxu0 0
          %2019 = vmatpush1.bf16.xpose.msra.mxu0 0
          %2020 = vmatprep.subr.bf16.mxu0 0
          %2021 = vmatpush1.bf16.xpose.msra.mxu0 0
          %2022 = vmatprep.subr.bf16.mxu0 0
          %2023 = vmatpush1.bf16.xpose.msra.mxu0 0
          %2024 = vmatprep.subr.bf16.mxu0 0
          %2025 = vmatpush1.bf16.xpose.msra.mxu0 0
          %2026 = vmatprep.subr.bf16.mxu0 0
          %2027 = vmatpush1.bf16.xpose.msra.mxu0 0
          %2028 = vmatprep.subr.bf16.mxu0 0
          %2029 = vmatpush1.bf16.xpose.msra.mxu0 0
          %2030 = vmatprep.mubr.bf16.mxu0 0
          %2031 = vmatmul.mubr.bf16.gmra.mrb[0].mxu0 %v1559
          %v2032 = vpop.f32.mrb[0].mxu0
          %v2033 = vadd.f32 0.0, %v2032
          %v2034 = vpop.f32.mrb[0].mxu0
          %v2035 = vpop.f32.mrb[0].mxu0
          %v2036 = vpop.f32.mrb[0].mxu0
          %2037 = vdwg.mxu0
          %v2039 = vsel %vm1511, %v1944, 0
          %2041 = vmatprep.subr.bf16.mxu0 0
          %2042 = vmatpush1.bf16.xpose.msra.mxu0 %v2039
          %2043 = vmatprep.subr.bf16.mxu0 0
          %2044 = vmatpush1.bf16.xpose.msra.mxu0 0
          %2045 = vmatprep.subr.bf16.mxu0 0
          %2046 = vmatpush1.bf16.xpose.msra.mxu0 0
          %2047 = vmatprep.subr.bf16.mxu0 0
          %2048 = vmatpush1.bf16.xpose.msra.mxu0 0
          %2049 = vmatprep.subr.bf16.mxu0 0
          %2050 = vmatpush1.bf16.xpose.msra.mxu0 0
          %2051 = vmatprep.subr.bf16.mxu0 0
          %2052 = vmatpush1.bf16.xpose.msra.mxu0 0
          %2053 = vmatprep.subr.bf16.mxu0 0
          %2054 = vmatpush1.bf16.xpose.msra.mxu0 0
          %2055 = vmatprep.subr.bf16.mxu0 0
          %2056 = vmatpush1.bf16.xpose.msra.mxu0 0
          %2057 = vmatprep.subr.bf16.mxu0 0
          %2058 = vmatpush1.bf16.xpose.msra.mxu0 0
          %2059 = vmatprep.subr.bf16.mxu0 0
          %2060 = vmatpush1.bf16.xpose.msra.mxu0 0
          %2061 = vmatprep.subr.bf16.mxu0 0
          %2062 = vmatpush1.bf16.xpose.msra.mxu0 0
          %2063 = vmatprep.subr.bf16.mxu0 0
          %2064 = vmatpush1.bf16.xpose.msra.mxu0 0
          %2065 = vmatprep.subr.bf16.mxu0 0
          %2066 = vmatpush1.bf16.xpose.msra.mxu0 0
          %2067 = vmatprep.subr.bf16.mxu0 0
          %2068 = vmatpush1.bf16.xpose.msra.mxu0 0
          %2069 = vmatprep.subr.bf16.mxu0 0
          %2070 = vmatpush1.bf16.xpose.msra.mxu0 0
          %2071 = vmatprep.subr.bf16.mxu0 0
          %2072 = vmatpush1.bf16.xpose.msra.mxu0 0
          %2073 = vmatprep.mubr.bf16.mxu0 0
          %2074 = vmatmul.mubr.bf16.gmra.mrb[0].mxu0 %v1605
          %v2075 = vpop.f32.mrb[0].mxu0
          %v2076 = vadd.f32 0.0, %v2075
          %v2077 = vpop.f32.mrb[0].mxu0
          %v2078 = vpop.f32.mrb[0].mxu0
          %v2079 = vpop.f32.mrb[0].mxu0
          %2080 = vdwg.mxu0
          %v2082 = vsel %vm1511, %v1945, 0
          %2084 = vmatprep.subr.bf16.mxu0 0
          %2085 = vmatpush1.bf16.xpose.msra.mxu0 %v2082
          %2086 = vmatprep.subr.bf16.mxu0 0
          %2087 = vmatpush1.bf16.xpose.msra.mxu0 0
          %2088 = vmatprep.subr.bf16.mxu0 0
          %2089 = vmatpush1.bf16.xpose.msra.mxu0 0
          %2090 = vmatprep.subr.bf16.mxu0 0
          %2091 = vmatpush1.bf16.xpose.msra.mxu0 0
          %2092 = vmatprep.subr.bf16.mxu0 0
          %2093 = vmatpush1.bf16.xpose.msra.mxu0 0
          %2094 = vmatprep.subr.bf16.mxu0 0
          %2095 = vmatpush1.bf16.xpose.msra.mxu0 0
          %2096 = vmatprep.subr.bf16.mxu0 0
          %2097 = vmatpush1.bf16.xpose.msra.mxu0 0
          %2098 = vmatprep.subr.bf16.mxu0 0
          %2099 = vmatpush1.bf16.xpose.msra.mxu0 0
          %2100 = vmatprep.subr.bf16.mxu0 0
          %2101 = vmatpush1.bf16.xpose.msra.mxu0 0
          %2102 = vmatprep.subr.bf16.mxu0 0
          %2103 = vmatpush1.bf16.xpose.msra.mxu0 0
          %2104 = vmatprep.subr.bf16.mxu0 0
          %2105 = vmatpush1.bf16.xpose.msra.mxu0 0
          %2106 = vmatprep.subr.bf16.mxu0 0
          %2107 = vmatpush1.bf16.xpose.msra.mxu0 0
          %2108 = vmatprep.subr.bf16.mxu0 0
          %2109 = vmatpush1.bf16.xpose.msra.mxu0 0
          %2110 = vmatprep.subr.bf16.mxu0 0
          %2111 = vmatpush1.bf16.xpose.msra.mxu0 0
          %2112 = vmatprep.subr.bf16.mxu0 0
          %2113 = vmatpush1.bf16.xpose.msra.mxu0 0
          %2114 = vmatprep.subr.bf16.mxu0 0
          %2115 = vmatpush1.bf16.xpose.msra.mxu0 0
          %2116 = vmatprep.mubr.bf16.mxu0 0
          %2117 = vmatmul.mubr.bf16.gmra.mrb[0].mxu0 %v1651
          %v2118 = vpop.f32.mrb[0].mxu0
          %v2119 = vadd.f32 0.0, %v2118
          %v2120 = vpop.f32.mrb[0].mxu0
          %v2121 = vpop.f32.mrb[0].mxu0
          %v2122 = vpop.f32.mrb[0].mxu0
          %2123 = vdwg.mxu0
          %v2124 = vsel %vm1511, %v1990, -inf
          %2125 = vmax.xlane.f32.xlu0 %v2124
          %v2126 = vpop.xlane.xlu0 %2125
          %v2127 = vsel %vm1511, %v2033, -inf
          %2128 = vmax.xlane.f32.xlu0 %v2127
          %v2129 = vpop.xlane.xlu0 %2128
          %v2130 = vsel %vm1511, %v2076, -inf
          %2131 = vmax.xlane.f32.xlu0 %v2130
          %v2132 = vpop.xlane.xlu0 %2131
          %v2133 = vsel %vm1511, %v2119, -inf
          %2134 = vmax.xlane.f32.xlu0 %v2133
          %v2135 = vpop.xlane.xlu0 %2134
          %v2136 = vmax.f32 %v1927, %v2126
          %v2137 = vmax.f32 %v1928, %v2129
          %v2138 = vmax.f32 %v1929, %v2132
          %v2139 = vmax.f32 %v1930, %v2135
          %v2140 = vsub.f32 %v1927, %v2136
          %v2141 = vsub.f32 %v1928, %v2137
          %v2142 = vsub.f32 %v1929, %v2138
          %v2143 = vsub.f32 %v1930, %v2139
          %v2144 = vmul.f32 %v2140, 1.442695
          %v2145 = vpow.pop %v2144
          %v2146 = vmul.f32 %v2141, 1.442695
          %v2147 = vpow.pop %v2146
          %v2148 = vmul.f32 %v2142, 1.442695
          %v2149 = vpow.pop %v2148
          %v2150 = vmul.f32 %v2143, 1.442695
          %v2151 = vpow.pop %v2150
          %v2152 = vsub.f32 %v1990, %v2136
          %v2153 = vsub.f32 %v2033, %v2137
          %v2154 = vsub.f32 %v2076, %v2138
          %v2155 = vsub.f32 %v2119, %v2139
          %v2156 = vmul.f32 %v2152, 1.442695
          %v2157 = vpow.pop %v2156
          %v2158 = vmul.f32 %v2153, 1.442695
          %v2159 = vpow.pop %v2158
          %v2160 = vmul.f32 %v2154, 1.442695
          %v2161 = vpow.pop %v2160
          %v2162 = vmul.f32 %v2155, 1.442695
          %v2163 = vpow.pop %v2162
          %v2164 = vmul.f32 %v2145, %v1931
          %v2165 = vmul.f32 %v2147, %v1932
          %v2166 = vmul.f32 %v2149, %v1933
          %v2167 = vmul.f32 %v2151, %v1934
          %v2168 = vsel %vm1511, %v2157, 0.0
          %2169 = vadd.xlane.f32.xlu0 %v2168
          %v2170 = vpop.xlane.xlu0 %2169
          %v2171 = vsel %vm1511, %v2159, 0.0
          %2172 = vadd.xlane.f32.xlu0 %v2171
          %v2173 = vpop.xlane.xlu0 %2172
          %v2174 = vsel %vm1511, %v2161, 0.0
          %2175 = vadd.xlane.f32.xlu0 %v2174
          %v2176 = vpop.xlane.xlu0 %2175
          %v2177 = vsel %vm1511, %v2163, 0.0
          %2178 = vadd.xlane.f32.xlu0 %v2177
          %v2179 = vpop.xlane.xlu0 %2178
          %v2180 = vadd.f32 %v2164, %v2170
          %v2181 = vadd.f32 %v2165, %v2173
          %v2182 = vadd.f32 %v2166, %v2176
          %v2183 = vadd.f32 %v2167, %v2179
          %v2184 = vmul.f32 %v2145, %v1935
          %v2185 = vmul.f32 %v2147, %v1936
          %v2186 = vmul.f32 %v2149, %v1937
          %v2187 = vmul.f32 %v2151, %v1938
          %v2188 = vpack.c.bf16 %v2157, %v2157
          %v2189 = vpack.c.bf16 %v2159, %v2159
          %v2190 = vpack.c.bf16 %v2161, %v2161
          %v2191 = vpack.c.bf16 %v2163, %v2163
          %v2193 = vsel %vm1511, %v2188, 0
          %v2196 = vsel %vm1739, %v1948, 0
          %2198 = vmatprep.subr.bf16.mxu0 0
          %2199 = vmatpush1.bf16.msra.mxu0 %v2196
          %2200 = vmatprep.subr.bf16.mxu0 0
          %2201 = vmatpush1.bf16.msra.mxu0 0
          %2202 = vmatprep.subr.bf16.mxu0 0
          %2203 = vmatpush1.bf16.msra.mxu0 0
          %2204 = vmatprep.subr.bf16.mxu0 0
          %2205 = vmatpush1.bf16.msra.mxu0 0
          %2206 = vmatprep.subr.bf16.mxu0 0
          %2207 = vmatpush1.bf16.msra.mxu0 0
          %2208 = vmatprep.subr.bf16.mxu0 0
          %2209 = vmatpush1.bf16.msra.mxu0 0
          %2210 = vmatprep.subr.bf16.mxu0 0
          %2211 = vmatpush1.bf16.msra.mxu0 0
          %2212 = vmatprep.subr.bf16.mxu0 0
          %2213 = vmatpush1.bf16.msra.mxu0 0
          %2214 = vmatprep.subr.bf16.mxu0 0
          %2215 = vmatpush1.bf16.msra.mxu0 0
          %2216 = vmatprep.subr.bf16.mxu0 0
          %2217 = vmatpush1.bf16.msra.mxu0 0
          %2218 = vmatprep.subr.bf16.mxu0 0
          %2219 = vmatpush1.bf16.msra.mxu0 0
          %2220 = vmatprep.subr.bf16.mxu0 0
          %2221 = vmatpush1.bf16.msra.mxu0 0
          %2222 = vmatprep.subr.bf16.mxu0 0
          %2223 = vmatpush1.bf16.msra.mxu0 0
          %2224 = vmatprep.subr.bf16.mxu0 0
          %2225 = vmatpush1.bf16.msra.mxu0 0
          %2226 = vmatprep.subr.bf16.mxu0 0
          %2227 = vmatpush1.bf16.msra.mxu0 0
          %2228 = vmatprep.subr.bf16.mxu0 0
          %2229 = vmatpush1.bf16.msra.mxu0 0
          %2230 = vmatprep.mubr.bf16.mxu0 0
          %2231 = vmatmul.mubr.bf16.gmra.mrb[0].mxu0 %v2193
          %v2232 = vpop.f32.mrb[0].mxu0
          %v2233 = vadd.f32 0.0, %v2232
          %v2234 = vpop.f32.mrb[0].mxu0
          %v2235 = vpop.f32.mrb[0].mxu0
          %v2236 = vpop.f32.mrb[0].mxu0
          %2237 = vdwg.mxu0
          %v2239 = vsel %vm1511, %v2189, 0
          %v2242 = vsel %vm1739, %v1949, 0
          %2244 = vmatprep.subr.bf16.mxu0 0
          %2245 = vmatpush1.bf16.msra.mxu0 %v2242
          %2246 = vmatprep.subr.bf16.mxu0 0
          %2247 = vmatpush1.bf16.msra.mxu0 0
          %2248 = vmatprep.subr.bf16.mxu0 0
          %2249 = vmatpush1.bf16.msra.mxu0 0
          %2250 = vmatprep.subr.bf16.mxu0 0
          %2251 = vmatpush1.bf16.msra.mxu0 0
          %2252 = vmatprep.subr.bf16.mxu0 0
          %2253 = vmatpush1.bf16.msra.mxu0 0
          %2254 = vmatprep.subr.bf16.mxu0 0
          %2255 = vmatpush1.bf16.msra.mxu0 0
          %2256 = vmatprep.subr.bf16.mxu0 0
          %2257 = vmatpush1.bf16.msra.mxu0 0
          %2258 = vmatprep.subr.bf16.mxu0 0
          %2259 = vmatpush1.bf16.msra.mxu0 0
          %2260 = vmatprep.subr.bf16.mxu0 0
          %2261 = vmatpush1.bf16.msra.mxu0 0
          %2262 = vmatprep.subr.bf16.mxu0 0
          %2263 = vmatpush1.bf16.msra.mxu0 0
          %2264 = vmatprep.subr.bf16.mxu0 0
          %2265 = vmatpush1.bf16.msra.mxu0 0
          %2266 = vmatprep.subr.bf16.mxu0 0
          %2267 = vmatpush1.bf16.msra.mxu0 0
          %2268 = vmatprep.subr.bf16.mxu0 0
          %2269 = vmatpush1.bf16.msra.mxu0 0
          %2270 = vmatprep.subr.bf16.mxu0 0
          %2271 = vmatpush1.bf16.msra.mxu0 0
          %2272 = vmatprep.subr.bf16.mxu0 0
          %2273 = vmatpush1.bf16.msra.mxu0 0
          %2274 = vmatprep.subr.bf16.mxu0 0
          %2275 = vmatpush1.bf16.msra.mxu0 0
          %2276 = vmatprep.mubr.bf16.mxu0 0
          %2277 = vmatmul.mubr.bf16.gmra.mrb[0].mxu0 %v2239
          %v2278 = vpop.f32.mrb[0].mxu0
          %v2279 = vadd.f32 0.0, %v2278
          %v2280 = vpop.f32.mrb[0].mxu0
          %v2281 = vpop.f32.mrb[0].mxu0
          %v2282 = vpop.f32.mrb[0].mxu0
          %2283 = vdwg.mxu0
          %v2285 = vsel %vm1511, %v2190, 0
          %v2288 = vsel %vm1739, %v1950, 0
          %2290 = vmatprep.subr.bf16.mxu0 0
          %2291 = vmatpush1.bf16.msra.mxu0 %v2288
          %2292 = vmatprep.subr.bf16.mxu0 0
          %2293 = vmatpush1.bf16.msra.mxu0 0
          %2294 = vmatprep.subr.bf16.mxu0 0
          %2295 = vmatpush1.bf16.msra.mxu0 0
          %2296 = vmatprep.subr.bf16.mxu0 0
          %2297 = vmatpush1.bf16.msra.mxu0 0
          %2298 = vmatprep.subr.bf16.mxu0 0
          %2299 = vmatpush1.bf16.msra.mxu0 0
          %2300 = vmatprep.subr.bf16.mxu0 0
          %2301 = vmatpush1.bf16.msra.mxu0 0
          %2302 = vmatprep.subr.bf16.mxu0 0
          %2303 = vmatpush1.bf16.msra.mxu0 0
          %2304 = vmatprep.subr.bf16.mxu0 0
          %2305 = vmatpush1.bf16.msra.mxu0 0
          %2306 = vmatprep.subr.bf16.mxu0 0
          %2307 = vmatpush1.bf16.msra.mxu0 0
          %2308 = vmatprep.subr.bf16.mxu0 0
          %2309 = vmatpush1.bf16.msra.mxu0 0
          %2310 = vmatprep.subr.bf16.mxu0 0
          %2311 = vmatpush1.bf16.msra.mxu0 0
          %2312 = vmatprep.subr.bf16.mxu0 0
          %2313 = vmatpush1.bf16.msra.mxu0 0
          %2314 = vmatprep.subr.bf16.mxu0 0
          %2315 = vmatpush1.bf16.msra.mxu0 0
          %2316 = vmatprep.subr.bf16.mxu0 0
          %2317 = vmatpush1.bf16.msra.mxu0 0
          %2318 = vmatprep.subr.bf16.mxu0 0
          %2319 = vmatpush1.bf16.msra.mxu0 0
          %2320 = vmatprep.subr.bf16.mxu0 0
          %2321 = vmatpush1.bf16.msra.mxu0 0
          %2322 = vmatprep.mubr.bf16.mxu0 0
          %2323 = vmatmul.mubr.bf16.gmra.mrb[0].mxu0 %v2285
          %v2324 = vpop.f32.mrb[0].mxu0
          %v2325 = vadd.f32 0.0, %v2324
          %v2326 = vpop.f32.mrb[0].mxu0
          %v2327 = vpop.f32.mrb[0].mxu0
          %v2328 = vpop.f32.mrb[0].mxu0
          %2329 = vdwg.mxu0
          %v2331 = vsel %vm1511, %v2191, 0
          %v2334 = vsel %vm1739, %v1951, 0
          %2336 = vmatprep.subr.bf16.mxu0 0
          %2337 = vmatpush1.bf16.msra.mxu0 %v2334
          %2338 = vmatprep.subr.bf16.mxu0 0
          %2339 = vmatpush1.bf16.msra.mxu0 0
          %2340 = vmatprep.subr.bf16.mxu0 0
          %2341 = vmatpush1.bf16.msra.mxu0 0
          %2342 = vmatprep.subr.bf16.mxu0 0
          %2343 = vmatpush1.bf16.msra.mxu0 0
          %2344 = vmatprep.subr.bf16.mxu0 0
          %2345 = vmatpush1.bf16.msra.mxu0 0
          %2346 = vmatprep.subr.bf16.mxu0 0
          %2347 = vmatpush1.bf16.msra.mxu0 0
          %2348 = vmatprep.subr.bf16.mxu0 0
          %2349 = vmatpush1.bf16.msra.mxu0 0
          %2350 = vmatprep.subr.bf16.mxu0 0
          %2351 = vmatpush1.bf16.msra.mxu0 0
          %2352 = vmatprep.subr.bf16.mxu0 0
          %2353 = vmatpush1.bf16.msra.mxu0 0
          %2354 = vmatprep.subr.bf16.mxu0 0
          %2355 = vmatpush1.bf16.msra.mxu0 0
          %2356 = vmatprep.subr.bf16.mxu0 0
          %2357 = vmatpush1.bf16.msra.mxu0 0
          %2358 = vmatprep.subr.bf16.mxu0 0
          %2359 = vmatpush1.bf16.msra.mxu0 0
          %2360 = vmatprep.subr.bf16.mxu0 0
          %2361 = vmatpush1.bf16.msra.mxu0 0
          %2362 = vmatprep.subr.bf16.mxu0 0
          %2363 = vmatpush1.bf16.msra.mxu0 0
          %2364 = vmatprep.subr.bf16.mxu0 0
          %2365 = vmatpush1.bf16.msra.mxu0 0
          %2366 = vmatprep.subr.bf16.mxu0 0
          %2367 = vmatpush1.bf16.msra.mxu0 0
          %2368 = vmatprep.mubr.bf16.mxu0 0
          %2369 = vmatmul.mubr.bf16.gmra.mrb[0].mxu0 %v2331
          %v2370 = vpop.f32.mrb[0].mxu0
          %v2371 = vadd.f32 0.0, %v2370
          %v2372 = vpop.f32.mrb[0].mxu0
          %v2373 = vpop.f32.mrb[0].mxu0
          %v2374 = vpop.f32.mrb[0].mxu0
          %2375 = vdwg.mxu0
          %v2376 = vadd.f32 %v2184, %v2233
          %v2377 = vadd.f32 %v2185, %v2279
          %v2378 = vadd.f32 %v2186, %v2325
          %v2379 = vadd.f32 %v2187, %v2371
        $region157: #{tpu_custom_call.1} parent=103 // loop_footer
          %s1924 = sadd.s32 %s1922, 1
        $region158: #{tpu_custom_call.1} parent=103 // loop_footer_branch
          %1921 = sbr.rel target = $region154
        $region159: #{tpu_custom_call.1} parent=103 // loop_exit
          _
        %v2380 = vrcp.pop %v1931
        %v2381 = vmul.f32 %v1935, %v2380
        %v2382 = vrcp.pop %v1932
        %v2383 = vmul.f32 %v1936, %v2382
        %v2384 = vrcp.pop %v1933
        %v2385 = vmul.f32 %v1937, %v2384
        %v2386 = vrcp.pop %v1934
        %v2387 = vmul.f32 %v1938, %v2386
        %v2388 = vpack.c.bf16 %v2381, %v2381
        %v2389 = vpack.c.bf16 %v2383, %v2383
        %v2390 = vpack.c.bf16 %v2385, %v2385
        %v2391 = vpack.c.bf16 %v2387, %v2387
        %v2392 = vld [vmem:[#allocation16] sm:$0xf]
        %v2393 = vld [vmem:[#allocation16 + $0x4] sm:$0xf]
        %v2394 = vld [vmem:[#allocation16 + $0x8] sm:$0xf]
        %v2395 = vld [vmem:[#allocation16 + $0xc] sm:$0xf]
        %v2397 = vsel %vm1511, %v2388, 0
        %v2400 = vsel %vm1739, %v2392, 0
        %2402 = vmatprep.subr.bf16.mxu0 0
        %2403 = vmatpush1.bf16.msra.mxu0 %v2400
        %2404 = vmatprep.subr.bf16.mxu0 0
        %2405 = vmatpush1.bf16.msra.mxu0 0
        %2406 = vmatprep.subr.bf16.mxu0 0
        %2407 = vmatpush1.bf16.msra.mxu0 0
        %2408 = vmatprep.subr.bf16.mxu0 0
        %2409 = vmatpush1.bf16.msra.mxu0 0
        %2410 = vmatprep.subr.bf16.mxu0 0
        %2411 = vmatpush1.bf16.msra.mxu0 0
        %2412 = vmatprep.subr.bf16.mxu0 0
        %2413 = vmatpush1.bf16.msra.mxu0 0
        %2414 = vmatprep.subr.bf16.mxu0 0
        %2415 = vmatpush1.bf16.msra.mxu0 0
        %2416 = vmatprep.subr.bf16.mxu0 0
        %2417 = vmatpush1.bf16.msra.mxu0 0
        %2418 = vmatprep.subr.bf16.mxu0 0
        %2419 = vmatpush1.bf16.msra.mxu0 0
        %2420 = vmatprep.subr.bf16.mxu0 0
        %2421 = vmatpush1.bf16.msra.mxu0 0
        %2422 = vmatprep.subr.bf16.mxu0 0
        %2423 = vmatpush1.bf16.msra.mxu0 0
        %2424 = vmatprep.subr.bf16.mxu0 0
        %2425 = vmatpush1.bf16.msra.mxu0 0
        %2426 = vmatprep.subr.bf16.mxu0 0
        %2427 = vmatpush1.bf16.msra.mxu0 0
        %2428 = vmatprep.subr.bf16.mxu0 0
        %2429 = vmatpush1.bf16.msra.mxu0 0
        %2430 = vmatprep.subr.bf16.mxu0 0
        %2431 = vmatpush1.bf16.msra.mxu0 0
        %2432 = vmatprep.subr.bf16.mxu0 0
        %2433 = vmatpush1.bf16.msra.mxu0 0
        %2434 = vmatprep.mubr.bf16.mxu0 0
        %2435 = vmatmul.mubr.bf16.gmra.mrb[0].mxu0 %v2397
        %v2436 = vpop.f32.mrb[0].mxu0
        %v2437 = vadd.f32 0.0, %v2436
        %v2438 = vpop.f32.mrb[0].mxu0
        %v2439 = vpop.f32.mrb[0].mxu0
        %v2440 = vpop.f32.mrb[0].mxu0
        %2441 = vdwg.mxu0
        %v2443 = vsel %vm1511, %v2389, 0
        %v2446 = vsel %vm1739, %v2393, 0
        %2448 = vmatprep.subr.bf16.mxu0 0
        %2449 = vmatpush1.bf16.msra.mxu0 %v2446
        %2450 = vmatprep.subr.bf16.mxu0 0
        %2451 = vmatpush1.bf16.msra.mxu0 0
        %2452 = vmatprep.subr.bf16.mxu0 0
        %2453 = vmatpush1.bf16.msra.mxu0 0
        %2454 = vmatprep.subr.bf16.mxu0 0
        %2455 = vmatpush1.bf16.msra.mxu0 0
        %2456 = vmatprep.subr.bf16.mxu0 0
        %2457 = vmatpush1.bf16.msra.mxu0 0
        %2458 = vmatprep.subr.bf16.mxu0 0
        %2459 = vmatpush1.bf16.msra.mxu0 0
        %2460 = vmatprep.subr.bf16.mxu0 0
        %2461 = vmatpush1.bf16.msra.mxu0 0
        %2462 = vmatprep.subr.bf16.mxu0 0
        %2463 = vmatpush1.bf16.msra.mxu0 0
        %2464 = vmatprep.subr.bf16.mxu0 0
        %2465 = vmatpush1.bf16.msra.mxu0 0
        %2466 = vmatprep.subr.bf16.mxu0 0
        %2467 = vmatpush1.bf16.msra.mxu0 0
        %2468 = vmatprep.subr.bf16.mxu0 0
        %2469 = vmatpush1.bf16.msra.mxu0 0
        %2470 = vmatprep.subr.bf16.mxu0 0
        %2471 = vmatpush1.bf16.msra.mxu0 0
        %2472 = vmatprep.subr.bf16.mxu0 0
        %2473 = vmatpush1.bf16.msra.mxu0 0
        %2474 = vmatprep.subr.bf16.mxu0 0
        %2475 = vmatpush1.bf16.msra.mxu0 0
        %2476 = vmatprep.subr.bf16.mxu0 0
        %2477 = vmatpush1.bf16.msra.mxu0 0
        %2478 = vmatprep.subr.bf16.mxu0 0
        %2479 = vmatpush1.bf16.msra.mxu0 0
        %2480 = vmatprep.mubr.bf16.mxu0 0
        %2481 = vmatmul.mubr.bf16.gmra.mrb[0].mxu0 %v2443
        %v2482 = vpop.f32.mrb[0].mxu0
        %v2483 = vadd.f32 0.0, %v2482
        %v2484 = vpop.f32.mrb[0].mxu0
        %v2485 = vpop.f32.mrb[0].mxu0
        %v2486 = vpop.f32.mrb[0].mxu0
        %2487 = vdwg.mxu0
        %v2489 = vsel %vm1511, %v2390, 0
        %v2492 = vsel %vm1739, %v2394, 0
        %2494 = vmatprep.subr.bf16.mxu0 0
        %2495 = vmatpush1.bf16.msra.mxu0 %v2492
        %2496 = vmatprep.subr.bf16.mxu0 0
        %2497 = vmatpush1.bf16.msra.mxu0 0
        %2498 = vmatprep.subr.bf16.mxu0 0
        %2499 = vmatpush1.bf16.msra.mxu0 0
        %2500 = vmatprep.subr.bf16.mxu0 0
        %2501 = vmatpush1.bf16.msra.mxu0 0
        %2502 = vmatprep.subr.bf16.mxu0 0
        %2503 = vmatpush1.bf16.msra.mxu0 0
        %2504 = vmatprep.subr.bf16.mxu0 0
        %2505 = vmatpush1.bf16.msra.mxu0 0
        %2506 = vmatprep.subr.bf16.mxu0 0
        %2507 = vmatpush1.bf16.msra.mxu0 0
        %2508 = vmatprep.subr.bf16.mxu0 0
        %2509 = vmatpush1.bf16.msra.mxu0 0
        %2510 = vmatprep.subr.bf16.mxu0 0
        %2511 = vmatpush1.bf16.msra.mxu0 0
        %2512 = vmatprep.subr.bf16.mxu0 0
        %2513 = vmatpush1.bf16.msra.mxu0 0
        %2514 = vmatprep.subr.bf16.mxu0 0
        %2515 = vmatpush1.bf16.msra.mxu0 0
        %2516 = vmatprep.subr.bf16.mxu0 0
        %2517 = vmatpush1.bf16.msra.mxu0 0
        %2518 = vmatprep.subr.bf16.mxu0 0
        %2519 = vmatpush1.bf16.msra.mxu0 0
        %2520 = vmatprep.subr.bf16.mxu0 0
        %2521 = vmatpush1.bf16.msra.mxu0 0
        %2522 = vmatprep.subr.bf16.mxu0 0
        %2523 = vmatpush1.bf16.msra.mxu0 0
        %2524 = vmatprep.subr.bf16.mxu0 0
        %2525 = vmatpush1.bf16.msra.mxu0 0
        %2526 = vmatprep.mubr.bf16.mxu0 0
        %2527 = vmatmul.mubr.bf16.gmra.mrb[0].mxu0 %v2489
        %v2528 = vpop.f32.mrb[0].mxu0
        %v2529 = vadd.f32 0.0, %v2528
        %v2530 = vpop.f32.mrb[0].mxu0
        %v2531 = vpop.f32.mrb[0].mxu0
        %v2532 = vpop.f32.mrb[0].mxu0
        %2533 = vdwg.mxu0
        %v2535 = vsel %vm1511, %v2391, 0
        %v2538 = vsel %vm1739, %v2395, 0
        %2540 = vmatprep.subr.bf16.mxu0 0
        %2541 = vmatpush1.bf16.msra.mxu0 %v2538
        %2542 = vmatprep.subr.bf16.mxu0 0
        %2543 = vmatpush1.bf16.msra.mxu0 0
        %2544 = vmatprep.subr.bf16.mxu0 0
        %2545 = vmatpush1.bf16.msra.mxu0 0
        %2546 = vmatprep.subr.bf16.mxu0 0
        %2547 = vmatpush1.bf16.msra.mxu0 0
        %2548 = vmatprep.subr.bf16.mxu0 0
        %2549 = vmatpush1.bf16.msra.mxu0 0
        %2550 = vmatprep.subr.bf16.mxu0 0
        %2551 = vmatpush1.bf16.msra.mxu0 0
        %2552 = vmatprep.subr.bf16.mxu0 0
        %2553 = vmatpush1.bf16.msra.mxu0 0
        %2554 = vmatprep.subr.bf16.mxu0 0
        %2555 = vmatpush1.bf16.msra.mxu0 0
        %2556 = vmatprep.subr.bf16.mxu0 0
        %2557 = vmatpush1.bf16.msra.mxu0 0
        %2558 = vmatprep.subr.bf16.mxu0 0
        %2559 = vmatpush1.bf16.msra.mxu0 0
        %2560 = vmatprep.subr.bf16.mxu0 0
        %2561 = vmatpush1.bf16.msra.mxu0 0
        %2562 = vmatprep.subr.bf16.mxu0 0
        %2563 = vmatpush1.bf16.msra.mxu0 0
        %2564 = vmatprep.subr.bf16.mxu0 0
        %2565 = vmatpush1.bf16.msra.mxu0 0
        %2566 = vmatprep.subr.bf16.mxu0 0
        %2567 = vmatpush1.bf16.msra.mxu0 0
        %2568 = vmatprep.subr.bf16.mxu0 0
        %2569 = vmatpush1.bf16.msra.mxu0 0
        %2570 = vmatprep.subr.bf16.mxu0 0
        %2571 = vmatpush1.bf16.msra.mxu0 0
        %2572 = vmatprep.mubr.bf16.mxu0 0
        %2573 = vmatmul.mubr.bf16.gmra.mrb[0].mxu0 %v2535
        %v2574 = vpop.f32.mrb[0].mxu0
        %v2575 = vadd.f32 0.0, %v2574
        %v2576 = vpop.f32.mrb[0].mxu0
        %v2577 = vpop.f32.mrb[0].mxu0
        %v2578 = vpop.f32.mrb[0].mxu0
        %2579 = vdwg.mxu0
        %v2580 = vsel %vm876, %v2437, 0.0
        %v2581 = vsel %vm876, %v2483, 0.0
        %v2582 = vadd.f32 %v2580, %v2581
        %v2583 = vsel %vm876, %v2529, 0.0
        %v2584 = vadd.f32 %v2582, %v2583
        %v2585 = vsel %vm876, %v2575, 0.0
        %v2586 = vadd.f32 %v2584, %v2585
        %v2587 = vld [vmem:[#allocation18] sm:$0x1]
        %v2589 = vlaneseq
        %v2590 = vshrl.u32 %v2589, 7
        %v2591 = vsub.s32 0, %v2590
        %v2592 = vrot.slane %v2587, %v2591
        %v2594 = vadd.f32 %v2586, %v2592
        %v2595 = vadd.f32 %v873, %v2594
        %v2596 = vld [vmem:[#allocation9] sm:$0x1]
        %v2597 = vld [vmem:[#allocation10] sm:$0x1]
        %v2598 = vsel %vm876, %v2595, 0.0
        %2599 = vadd.xlane.f32.xlu0 %v2598
        %v2600 = vpop.xlane.xlu0 %2599
        %v2601 = vmul.f32 %v2600, %v880
        %v2602 = vsub.f32 %v2595, %v2601
        %v2603 = vmul.f32 %v2602, %v2602
        %v2604 = vsel %vm876, %v2603, 0.0
        %2605 = vadd.xlane.f32.xlu0 %v2604
        %v2606 = vpop.xlane.xlu0 %2605
        %v2607 = vmul.f32 %v2606, %v880
        %v2608 = vadd.f32 %v2607, 1e-05
        %v2609 = vrsqrt.pop %v2608
        %v2610 = vmul.f32 %v2602, %v2609
        %v2612 = vlaneseq
        %v2613 = vshrl.u32 %v2612, 7
        %v2614 = vsub.s32 0, %v2613
        %v2615 = vrot.slane %v2596, %v2614
        %v2617 = vmul.f32 %v2610, %v2615
        %v2619 = vlaneseq
        %v2620 = vshrl.u32 %v2619, 7
        %v2621 = vsub.s32 0, %v2620
        %v2622 = vrot.slane %v2597, %v2621
        %v2624 = vadd.f32 %v2617, %v2622
        %v2625 = vpack.c.bf16 %v2624, %v2624
        %v2626 = vld [vmem:[%s13] sm:$0xf]
        %v2627 = vld [vmem:[%s13 + $0x4] sm:$0xf]
        %v2628 = vld [vmem:[%s13 + $0x8] sm:$0xf]
        %v2629 = vld [vmem:[%s13 + $0xc] sm:$0xf]
        %v2630 = vld [vmem:[#allocation19] sm:$0x1]
        %v2632 = vlaneseq
        %v2633 = vshrl.u32 %v2632, 7
        %v2634 = vsub.s32 0, %v2633
        %v2635 = vrot.slane %v2630, %v2634
        %v2641 = vunpack.c.l.b16 %v2626
        %v2642 = vunpack.c.l.b16 %v2627
        %v2643 = vunpack.c.l.b16 %v2628
        %v2644 = vunpack.c.l.b16 %v2629
        %v2645 = vpack.c.b16 %v2642, %v2641
        %v2646 = vpack.c.b16 %v2644, %v2643
        %v2650 = vsel %vm876, %v2625, 0
        %2652 = vmatprep.subr.bf16.mxu0 0
        %2653 = vmatpush1.bf16.msra.mxu0 %v2645
        %2654 = vmatprep.subr.bf16.mxu0 0
        %2655 = vmatpush1.bf16.msra.mxu0 %v2646
        %2656 = vmatprep.subr.bf16.mxu0 0
        %2657 = vmatpush1.bf16.msra.mxu0 0
        %2658 = vmatprep.subr.bf16.mxu0 0
        %2659 = vmatpush1.bf16.msra.mxu0 0
        %2660 = vmatprep.subr.bf16.mxu0 0
        %2661 = vmatpush1.bf16.msra.mxu0 0
        %2662 = vmatprep.subr.bf16.mxu0 0
        %2663 = vmatpush1.bf16.msra.mxu0 0
        %2664 = vmatprep.subr.bf16.mxu0 0
        %2665 = vmatpush1.bf16.msra.mxu0 0
        %2666 = vmatprep.subr.bf16.mxu0 0
        %2667 = vmatpush1.bf16.msra.mxu0 0
        %2668 = vmatprep.subr.bf16.mxu0 0
        %2669 = vmatpush1.bf16.msra.mxu0 0
        %2670 = vmatprep.subr.bf16.mxu0 0
        %2671 = vmatpush1.bf16.msra.mxu0 0
        %2672 = vmatprep.subr.bf16.mxu0 0
        %2673 = vmatpush1.bf16.msra.mxu0 0
        %2674 = vmatprep.subr.bf16.mxu0 0
        %2675 = vmatpush1.bf16.msra.mxu0 0
        %2676 = vmatprep.subr.bf16.mxu0 0
        %2677 = vmatpush1.bf16.msra.mxu0 0
        %2678 = vmatprep.subr.bf16.mxu0 0
        %2679 = vmatpush1.bf16.msra.mxu0 0
        %2680 = vmatprep.subr.bf16.mxu0 0
        %2681 = vmatpush1.bf16.msra.mxu0 0
        %2682 = vmatprep.subr.bf16.mxu0 0
        %2683 = vmatpush1.bf16.msra.mxu0 0
        %2684 = vmatprep.mubr.bf16.mxu0 0
        %2685 = vmatmul.mubr.bf16.gmra.mrb[0].mxu0 %v2650
        %v2686 = vpop.f32.mrb[0].mxu0
        %v2687 = vadd.f32 %v2635, %v2686
        %v2688 = vpop.f32.mrb[0].mxu0
        %v2689 = vpop.f32.mrb[0].mxu0
        %v2690 = vpop.f32.mrb[0].mxu0
        %2691 = vdwg.mxu0
        %v2692 = vpack.c.bf16 %v2687, %v2687
        %2694 = vrot.lane.b32.xlu0 %v2692, 120
        %v2695 = vpop.permute.xlu0 %2694
        %2696 = vrot.lane.b32.xlu0 %v2692, 112
        %v2697 = vpop.permute.xlu0 %2696
        %2698 = vrot.lane.b32.xlu0 %v2692, 104
        %v2699 = vpop.permute.xlu0 %2698
        %v2701 = vunpack.c.l.s4 1983009808
        %v2702 = vunpack.c.0.s8 %v2701
        %v2703 = vlaneseq
        %v2704 = vshrl.u32 %v2703, 7
        %v2705 = vsub.s32 %v2702, %v2704
        %v2706 = vrot.slane %v2692, %v2705
        %v2709 = vunpack.c.l.s4 1983009808
        %v2710 = vunpack.c.0.s8 %v2709
        %v2711 = vlaneseq
        %v2712 = vshrl.u32 %v2711, 7
        %v2713 = vsub.s32 %v2710, %v2712
        %v2714 = vrot.slane %v2697, %v2713
        %v2715 = vcombine.low %v2706, %v2714
        %v2716 = vcombine.high %v2706, %v2714
        %v2718 = vunpack.c.l.s4 1934713408
        %v2719 = vunpack.c.0.s8 %v2718
        %v2720 = vlaneseq
        %v2721 = vshrl.u32 %v2720, 7
        %v2722 = vsub.s32 %v2719, %v2721
        %v2723 = vrot.slane %v2715, %v2722
        %v2725 = vunpack.c.l.s4 1934713408
        %v2726 = vunpack.c.0.s8 %v2725
        %v2727 = vlaneseq
        %v2728 = vshrl.u32 %v2727, 7
        %v2729 = vsub.s32 %v2726, %v2728
        %v2730 = vrot.slane %v2716, %v2729
        %v2731 = vcombine.high %v2723, 0
        %v2732 = vcombine.high %v2730, 0
        %v2735 = vunpack.c.l.s4 1983009808
        %v2736 = vunpack.c.0.s8 %v2735
        %v2737 = vlaneseq
        %v2738 = vshrl.u32 %v2737, 7
        %v2739 = vsub.s32 %v2736, %v2738
        %v2740 = vrot.slane %v2695, %v2739
        %v2743 = vunpack.c.l.s4 1983009808
        %v2744 = vunpack.c.0.s8 %v2743
        %v2745 = vlaneseq
        %v2746 = vshrl.u32 %v2745, 7
        %v2747 = vsub.s32 %v2744, %v2746
        %v2748 = vrot.slane %v2699, %v2747
        %v2749 = vcombine.low %v2740, %v2748
        %v2750 = vcombine.high %v2740, %v2748
        %v2752 = vunpack.c.l.s4 1934713408
        %v2753 = vunpack.c.0.s8 %v2752
        %v2754 = vlaneseq
        %v2755 = vshrl.u32 %v2754, 7
        %v2756 = vsub.s32 %v2753, %v2755
        %v2757 = vrot.slane %v2749, %v2756
        %v2759 = vunpack.c.l.s4 1934713408
        %v2760 = vunpack.c.0.s8 %v2759
        %v2761 = vlaneseq
        %v2762 = vshrl.u32 %v2761, 7
        %v2763 = vsub.s32 %v2760, %v2762
        %v2764 = vrot.slane %v2750, %v2763
        %v2765 = vcombine.high %v2757, 0
        %v2766 = vcombine.high %v2764, 0
        %v2769 = vpack.i.b16 %v2757, %v2723
        %v2771 = vshrl.u32 %v2723, 16
        %v2772 = vshrl.u32 %v2757, 16
        %v2773 = vpack.i.b16 %v2772, %v2771
        %v2777 = vpack.i.b16 %v2765, %v2731
        %v2779 = vshrl.u32 %v2731, 16
        %v2780 = vshrl.u32 %v2765, 16
        %v2781 = vpack.i.b16 %v2780, %v2779
        %v2785 = vpack.i.b16 %v2764, %v2730
        %v2787 = vshrl.u32 %v2730, 16
        %v2788 = vshrl.u32 %v2764, 16
        %v2789 = vpack.i.b16 %v2788, %v2787
        %v2793 = vpack.i.b16 %v2766, %v2732
        %v2795 = vshrl.u32 %v2732, 16
        %v2796 = vshrl.u32 %v2766, 16
        %v2797 = vpack.i.b16 %v2796, %v2795
        %v2799 = vcombine.low %v2769, %v2785
        %v2801 = vunpack.c.l.s4 1983009808
        %v2802 = vunpack.c.0.s8 %v2801
        %v2803 = vlaneseq
        %v2804 = vshrl.u32 %v2803, 7
        %v2805 = vsub.s32 %v2802, %v2804
        %v2806 = vrot.slane %v2799, %v2805
        %v2807 = vcombine.low %v2777, %v2793
        %v2809 = vunpack.c.l.s4 1983009808
        %v2810 = vunpack.c.0.s8 %v2809
        %v2811 = vlaneseq
        %v2812 = vshrl.u32 %v2811, 7
        %v2813 = vsub.s32 %v2810, %v2812
        %v2814 = vrot.slane %v2807, %v2813
        %v2815 = vcombine.low %v2806, %v2814
        %v2817 = vunpack.c.l.s4 1934713408
        %v2818 = vunpack.c.0.s8 %v2817
        %v2819 = vlaneseq
        %v2820 = vshrl.u32 %v2819, 7
        %v2821 = vsub.s32 %v2818, %v2820
        %v2822 = vrot.slane %v2815, %v2821
        %v2823 = vcombine.high %v2822, 0
        %v2824 = vcombine.low %v2773, %v2789
        %v2826 = vunpack.c.l.s4 1983009808
        %v2827 = vunpack.c.0.s8 %v2826
        %v2828 = vlaneseq
        %v2829 = vshrl.u32 %v2828, 7
        %v2830 = vsub.s32 %v2827, %v2829
        %v2831 = vrot.slane %v2824, %v2830
        %v2832 = vcombine.low %v2781, %v2797
        %v2834 = vunpack.c.l.s4 1983009808
        %v2835 = vunpack.c.0.s8 %v2834
        %v2836 = vlaneseq
        %v2837 = vshrl.u32 %v2836, 7
        %v2838 = vsub.s32 %v2835, %v2837
        %v2839 = vrot.slane %v2832, %v2838
        %v2840 = vcombine.low %v2831, %v2839
        %v2842 = vunpack.c.l.s4 1934713408
        %v2843 = vunpack.c.0.s8 %v2842
        %v2844 = vlaneseq
        %v2845 = vshrl.u32 %v2844, 7
        %v2846 = vsub.s32 %v2843, %v2845
        %v2847 = vrot.slane %v2840, %v2846
        %v2848 = vcombine.high %v2847, 0
        %v2851 = vpack.i.b16 %v2847, %v2822
        %v2852 = vshrl.u32 %v2822, 16
        %v2853 = vshrl.u32 %v2847, 16
        %v2854 = vpack.i.b16 %v2853, %v2852
        %v2857 = vpack.i.b16 %v2848, %v2823
        %v2858 = vshrl.u32 %v2823, 16
        %v2859 = vshrl.u32 %v2848, 16
        %v2860 = vpack.i.b16 %v2859, %v2858
        %v2861 = vld [vmem:[%s866] sm:$0xf]
        %v2862 = vld [vmem:[%s866 + $0x4] sm:$0xf]
        %v2863 = vld [vmem:[%s866 + $0x8] sm:$0xf]
        %v2864 = vld [vmem:[%s866 + $0xc] sm:$0xf]
        %v2865 = vld [vmem:[%s871] sm:$0xf]
        %v2866 = vld [vmem:[%s871 + $0x4] sm:$0xf]
        %v2867 = vld [vmem:[%s871 + $0x8] sm:$0xf]
        %v2868 = vld [vmem:[%s871 + $0xc] sm:$0xf]
        %v2870 = vsel %vm1511, %v2851, 0
        %v2873 = vsel %vm1511, %v2861, 0
        %2875 = vmatprep.subr.bf16.mxu0 0
        %2876 = vmatpush1.bf16.xpose.msra.mxu0 %v2873
        %2877 = vmatprep.subr.bf16.mxu0 0
        %2878 = vmatpush1.bf16.xpose.msra.mxu0 0
        %2879 = vmatprep.subr.bf16.mxu0 0
        %2880 = vmatpush1.bf16.xpose.msra.mxu0 0
        %2881 = vmatprep.subr.bf16.mxu0 0
        %2882 = vmatpush1.bf16.xpose.msra.mxu0 0
        %2883 = vmatprep.subr.bf16.mxu0 0
        %2884 = vmatpush1.bf16.xpose.msra.mxu0 0
        %2885 = vmatprep.subr.bf16.mxu0 0
        %2886 = vmatpush1.bf16.xpose.msra.mxu0 0
        %2887 = vmatprep.subr.bf16.mxu0 0
        %2888 = vmatpush1.bf16.xpose.msra.mxu0 0
        %2889 = vmatprep.subr.bf16.mxu0 0
        %2890 = vmatpush1.bf16.xpose.msra.mxu0 0
        %2891 = vmatprep.subr.bf16.mxu0 0
        %2892 = vmatpush1.bf16.xpose.msra.mxu0 0
        %2893 = vmatprep.subr.bf16.mxu0 0
        %2894 = vmatpush1.bf16.xpose.msra.mxu0 0
        %2895 = vmatprep.subr.bf16.mxu0 0
        %2896 = vmatpush1.bf16.xpose.msra.mxu0 0
        %2897 = vmatprep.subr.bf16.mxu0 0
        %2898 = vmatpush1.bf16.xpose.msra.mxu0 0
        %2899 = vmatprep.subr.bf16.mxu0 0
        %2900 = vmatpush1.bf16.xpose.msra.mxu0 0
        %2901 = vmatprep.subr.bf16.mxu0 0
        %2902 = vmatpush1.bf16.xpose.msra.mxu0 0
        %2903 = vmatprep.subr.bf16.mxu0 0
        %2904 = vmatpush1.bf16.xpose.msra.mxu0 0
        %2905 = vmatprep.subr.bf16.mxu0 0
        %2906 = vmatpush1.bf16.xpose.msra.mxu0 0
        %2907 = vmatprep.mubr.bf16.mxu0 0
        %2908 = vmatmul.mubr.bf16.gmra.mrb[0].mxu0 %v2870
        %v2909 = vpop.f32.mrb[0].mxu0
        %v2910 = vadd.f32 0.0, %v2909
        %v2911 = vpop.f32.mrb[0].mxu0
        %v2912 = vpop.f32.mrb[0].mxu0
        %v2913 = vpop.f32.mrb[0].mxu0
        %2914 = vdwg.mxu0
        %v2916 = vsel %vm1511, %v2854, 0
        %v2919 = vsel %vm1511, %v2862, 0
        %2921 = vmatprep.subr.bf16.mxu0 0
        %2922 = vmatpush1.bf16.xpose.msra.mxu0 %v2919
        %2923 = vmatprep.subr.bf16.mxu0 0
        %2924 = vmatpush1.bf16.xpose.msra.mxu0 0
        %2925 = vmatprep.subr.bf16.mxu0 0
        %2926 = vmatpush1.bf16.xpose.msra.mxu0 0
        %2927 = vmatprep.subr.bf16.mxu0 0
        %2928 = vmatpush1.bf16.xpose.msra.mxu0 0
        %2929 = vmatprep.subr.bf16.mxu0 0
        %2930 = vmatpush1.bf16.xpose.msra.mxu0 0
        %2931 = vmatprep.subr.bf16.mxu0 0
        %2932 = vmatpush1.bf16.xpose.msra.mxu0 0
        %2933 = vmatprep.subr.bf16.mxu0 0
        %2934 = vmatpush1.bf16.xpose.msra.mxu0 0
        %2935 = vmatprep.subr.bf16.mxu0 0
        %2936 = vmatpush1.bf16.xpose.msra.mxu0 0
        %2937 = vmatprep.subr.bf16.mxu0 0
        %2938 = vmatpush1.bf16.xpose.msra.mxu0 0
        %2939 = vmatprep.subr.bf16.mxu0 0
        %2940 = vmatpush1.bf16.xpose.msra.mxu0 0
        %2941 = vmatprep.subr.bf16.mxu0 0
        %2942 = vmatpush1.bf16.xpose.msra.mxu0 0
        %2943 = vmatprep.subr.bf16.mxu0 0
        %2944 = vmatpush1.bf16.xpose.msra.mxu0 0
        %2945 = vmatprep.subr.bf16.mxu0 0
        %2946 = vmatpush1.bf16.xpose.msra.mxu0 0
        %2947 = vmatprep.subr.bf16.mxu0 0
        %2948 = vmatpush1.bf16.xpose.msra.mxu0 0
        %2949 = vmatprep.subr.bf16.mxu0 0
        %2950 = vmatpush1.bf16.xpose.msra.mxu0 0
        %2951 = vmatprep.subr.bf16.mxu0 0
        %2952 = vmatpush1.bf16.xpose.msra.mxu0 0
        %2953 = vmatprep.mubr.bf16.mxu0 0
        %2954 = vmatmul.mubr.bf16.gmra.mrb[0].mxu0 %v2916
        %v2955 = vpop.f32.mrb[0].mxu0
        %v2956 = vadd.f32 0.0, %v2955
        %v2957 = vpop.f32.mrb[0].mxu0
        %v2958 = vpop.f32.mrb[0].mxu0
        %v2959 = vpop.f32.mrb[0].mxu0
        %2960 = vdwg.mxu0
        %v2962 = vsel %vm1511, %v2857, 0
        %v2965 = vsel %vm1511, %v2863, 0
        %2967 = vmatprep.subr.bf16.mxu0 0
        %2968 = vmatpush1.bf16.xpose.msra.mxu0 %v2965
        %2969 = vmatprep.subr.bf16.mxu0 0
        %2970 = vmatpush1.bf16.xpose.msra.mxu0 0
        %2971 = vmatprep.subr.bf16.mxu0 0
        %2972 = vmatpush1.bf16.xpose.msra.mxu0 0
        %2973 = vmatprep.subr.bf16.mxu0 0
        %2974 = vmatpush1.bf16.xpose.msra.mxu0 0
        %2975 = vmatprep.subr.bf16.mxu0 0
        %2976 = vmatpush1.bf16.xpose.msra.mxu0 0
        %2977 = vmatprep.subr.bf16.mxu0 0
        %2978 = vmatpush1.bf16.xpose.msra.mxu0 0
        %2979 = vmatprep.subr.bf16.mxu0 0
        %2980 = vmatpush1.bf16.xpose.msra.mxu0 0
        %2981 = vmatprep.subr.bf16.mxu0 0
        %2982 = vmatpush1.bf16.xpose.msra.mxu0 0
        %2983 = vmatprep.subr.bf16.mxu0 0
        %2984 = vmatpush1.bf16.xpose.msra.mxu0 0
        %2985 = vmatprep.subr.bf16.mxu0 0
        %2986 = vmatpush1.bf16.xpose.msra.mxu0 0
        %2987 = vmatprep.subr.bf16.mxu0 0
        %2988 = vmatpush1.bf16.xpose.msra.mxu0 0
        %2989 = vmatprep.subr.bf16.mxu0 0
        %2990 = vmatpush1.bf16.xpose.msra.mxu0 0
        %2991 = vmatprep.subr.bf16.mxu0 0
        %2992 = vmatpush1.bf16.xpose.msra.mxu0 0
        %2993 = vmatprep.subr.bf16.mxu0 0
        %2994 = vmatpush1.bf16.xpose.msra.mxu0 0
        %2995 = vmatprep.subr.bf16.mxu0 0
        %2996 = vmatpush1.bf16.xpose.msra.mxu0 0
        %2997 = vmatprep.subr.bf16.mxu0 0
        %2998 = vmatpush1.bf16.xpose.msra.mxu0 0
        %2999 = vmatprep.mubr.bf16.mxu0 0
        %3000 = vmatmul.mubr.bf16.gmra.mrb[0].mxu0 %v2962
        %v3001 = vpop.f32.mrb[0].mxu0
        %v3002 = vadd.f32 0.0, %v3001
        %v3003 = vpop.f32.mrb[0].mxu0
        %v3004 = vpop.f32.mrb[0].mxu0
        %v3005 = vpop.f32.mrb[0].mxu0
        %3006 = vdwg.mxu0
        %v3008 = vsel %vm1511, %v2860, 0
        %v3011 = vsel %vm1511, %v2864, 0
        %3013 = vmatprep.subr.bf16.mxu0 0
        %3014 = vmatpush1.bf16.xpose.msra.mxu0 %v3011
        %3015 = vmatprep.subr.bf16.mxu0 0
        %3016 = vmatpush1.bf16.xpose.msra.mxu0 0
        %3017 = vmatprep.subr.bf16.mxu0 0
        %3018 = vmatpush1.bf16.xpose.msra.mxu0 0
        %3019 = vmatprep.subr.bf16.mxu0 0
        %3020 = vmatpush1.bf16.xpose.msra.mxu0 0
        %3021 = vmatprep.subr.bf16.mxu0 0
        %3022 = vmatpush1.bf16.xpose.msra.mxu0 0
        %3023 = vmatprep.subr.bf16.mxu0 0
        %3024 = vmatpush1.bf16.xpose.msra.mxu0 0
        %3025 = vmatprep.subr.bf16.mxu0 0
        %3026 = vmatpush1.bf16.xpose.msra.mxu0 0
        %3027 = vmatprep.subr.bf16.mxu0 0
        %3028 = vmatpush1.bf16.xpose.msra.mxu0 0
        %3029 = vmatprep.subr.bf16.mxu0 0
        %3030 = vmatpush1.bf16.xpose.msra.mxu0 0
        %3031 = vmatprep.subr.bf16.mxu0 0
        %3032 = vmatpush1.bf16.xpose.msra.mxu0 0
        %3033 = vmatprep.subr.bf16.mxu0 0
        %3034 = vmatpush1.bf16.xpose.msra.mxu0 0
        %3035 = vmatprep.subr.bf16.mxu0 0
        %3036 = vmatpush1.bf16.xpose.msra.mxu0 0
        %3037 = vmatprep.subr.bf16.mxu0 0
        %3038 = vmatpush1.bf16.xpose.msra.mxu0 0
        %3039 = vmatprep.subr.bf16.mxu0 0
        %3040 = vmatpush1.bf16.xpose.msra.mxu0 0
        %3041 = vmatprep.subr.bf16.mxu0 0
        %3042 = vmatpush1.bf16.xpose.msra.mxu0 0
        %3043 = vmatprep.subr.bf16.mxu0 0
        %3044 = vmatpush1.bf16.xpose.msra.mxu0 0
        %3045 = vmatprep.mubr.bf16.mxu0 0
        %3046 = vmatmul.mubr.bf16.gmra.mrb[0].mxu0 %v3008
        %v3047 = vpop.f32.mrb[0].mxu0
        %v3048 = vadd.f32 0.0, %v3047
        %v3049 = vpop.f32.mrb[0].mxu0
        %v3050 = vpop.f32.mrb[0].mxu0
        %v3051 = vpop.f32.mrb[0].mxu0
        %3052 = vdwg.mxu0
        %v3053 = vsel %vm1511, %v2910, -inf
        %3054 = vmax.xlane.f32.xlu0 %v3053
        %v3055 = vpop.xlane.xlu0 %3054
        %v3056 = vsel %vm1511, %v2956, -inf
        %3057 = vmax.xlane.f32.xlu0 %v3056
        %v3058 = vpop.xlane.xlu0 %3057
        %v3059 = vsel %vm1511, %v3002, -inf
        %3060 = vmax.xlane.f32.xlu0 %v3059
        %v3061 = vpop.xlane.xlu0 %3060
        %v3062 = vsel %vm1511, %v3048, -inf
        %3063 = vmax.xlane.f32.xlu0 %v3062
        %v3064 = vpop.xlane.xlu0 %3063
        %v3065 = vsub.f32 %v2910, %v3055
        %v3066 = vsub.f32 %v2956, %v3058
        %v3067 = vsub.f32 %v3002, %v3061
        %v3068 = vsub.f32 %v3048, %v3064
        %v3069 = vmul.f32 %v3065, 1.442695
        %v3070 = vpow.pop %v3069
        %v3071 = vmul.f32 %v3066, 1.442695
        %v3072 = vpow.pop %v3071
        %v3073 = vmul.f32 %v3067, 1.442695
        %v3074 = vpow.pop %v3073
        %v3075 = vmul.f32 %v3068, 1.442695
        %v3076 = vpow.pop %v3075
        %v3077 = vsel %vm1511, %v3070, 0.0
        %3078 = vadd.xlane.f32.xlu0 %v3077
        %v3079 = vpop.xlane.xlu0 %3078
        %v3080 = vsel %vm1511, %v3072, 0.0
        %3081 = vadd.xlane.f32.xlu0 %v3080
        %v3082 = vpop.xlane.xlu0 %3081
        %v3083 = vsel %vm1511, %v3074, 0.0
        %3084 = vadd.xlane.f32.xlu0 %v3083
        %v3085 = vpop.xlane.xlu0 %3084
        %v3086 = vsel %vm1511, %v3076, 0.0
        %3087 = vadd.xlane.f32.xlu0 %v3086
        %v3088 = vpop.xlane.xlu0 %3087
        %v3089 = vrcp.pop %v3079
        %v3090 = vmul.f32 %v3070, %v3089
        %v3091 = vrcp.pop %v3082
        %v3092 = vmul.f32 %v3072, %v3091
        %v3093 = vrcp.pop %v3085
        %v3094 = vmul.f32 %v3074, %v3093
        %v3095 = vrcp.pop %v3088
        %v3096 = vmul.f32 %v3076, %v3095
        %v3097 = vpack.c.bf16 %v3090, %v3090
        %v3098 = vpack.c.bf16 %v3092, %v3092
        %v3099 = vpack.c.bf16 %v3094, %v3094
        %v3100 = vpack.c.bf16 %v3096, %v3096
        %v3102 = vsel %vm1511, %v3097, 0
        %v3105 = vsel %vm1739, %v2865, 0
        %3107 = vmatprep.subr.bf16.mxu0 0
        %3108 = vmatpush1.bf16.msra.mxu0 %v3105
        %3109 = vmatprep.subr.bf16.mxu0 0
        %3110 = vmatpush1.bf16.msra.mxu0 0
        %3111 = vmatprep.subr.bf16.mxu0 0
        %3112 = vmatpush1.bf16.msra.mxu0 0
        %3113 = vmatprep.subr.bf16.mxu0 0
        %3114 = vmatpush1.bf16.msra.mxu0 0
        %3115 = vmatprep.subr.bf16.mxu0 0
        %3116 = vmatpush1.bf16.msra.mxu0 0
        %3117 = vmatprep.subr.bf16.mxu0 0
        %3118 = vmatpush1.bf16.msra.mxu0 0
        %3119 = vmatprep.subr.bf16.mxu0 0
        %3120 = vmatpush1.bf16.msra.mxu0 0
        %3121 = vmatprep.subr.bf16.mxu0 0
        %3122 = vmatpush1.bf16.msra.mxu0 0
        %3123 = vmatprep.subr.bf16.mxu0 0
        %3124 = vmatpush1.bf16.msra.mxu0 0
        %3125 = vmatprep.subr.bf16.mxu0 0
        %3126 = vmatpush1.bf16.msra.mxu0 0
        %3127 = vmatprep.subr.bf16.mxu0 0
        %3128 = vmatpush1.bf16.msra.mxu0 0
        %3129 = vmatprep.subr.bf16.mxu0 0
        %3130 = vmatpush1.bf16.msra.mxu0 0
        %3131 = vmatprep.subr.bf16.mxu0 0
        %3132 = vmatpush1.bf16.msra.mxu0 0
        %3133 = vmatprep.subr.bf16.mxu0 0
        %3134 = vmatpush1.bf16.msra.mxu0 0
        %3135 = vmatprep.subr.bf16.mxu0 0
        %3136 = vmatpush1.bf16.msra.mxu0 0
        %3137 = vmatprep.subr.bf16.mxu0 0
        %3138 = vmatpush1.bf16.msra.mxu0 0
        %3139 = vmatprep.mubr.bf16.mxu0 0
        %3140 = vmatmul.mubr.bf16.gmra.mrb[0].mxu0 %v3102
        %v3141 = vpop.f32.mrb[0].mxu0
        %v3142 = vadd.f32 0.0, %v3141
        %v3143 = vpop.f32.mrb[0].mxu0
        %v3144 = vpop.f32.mrb[0].mxu0
        %v3145 = vpop.f32.mrb[0].mxu0
        %3146 = vdwg.mxu0
        %v3148 = vsel %vm1511, %v3098, 0
        %v3151 = vsel %vm1739, %v2866, 0
        %3153 = vmatprep.subr.bf16.mxu0 0
        %3154 = vmatpush1.bf16.msra.mxu0 %v3151
        %3155 = vmatprep.subr.bf16.mxu0 0
        %3156 = vmatpush1.bf16.msra.mxu0 0
        %3157 = vmatprep.subr.bf16.mxu0 0
        %3158 = vmatpush1.bf16.msra.mxu0 0
        %3159 = vmatprep.subr.bf16.mxu0 0
        %3160 = vmatpush1.bf16.msra.mxu0 0
        %3161 = vmatprep.subr.bf16.mxu0 0
        %3162 = vmatpush1.bf16.msra.mxu0 0
        %3163 = vmatprep.subr.bf16.mxu0 0
        %3164 = vmatpush1.bf16.msra.mxu0 0
        %3165 = vmatprep.subr.bf16.mxu0 0
        %3166 = vmatpush1.bf16.msra.mxu0 0
        %3167 = vmatprep.subr.bf16.mxu0 0
        %3168 = vmatpush1.bf16.msra.mxu0 0
        %3169 = vmatprep.subr.bf16.mxu0 0
        %3170 = vmatpush1.bf16.msra.mxu0 0
        %3171 = vmatprep.subr.bf16.mxu0 0
        %3172 = vmatpush1.bf16.msra.mxu0 0
        %3173 = vmatprep.subr.bf16.mxu0 0
        %3174 = vmatpush1.bf16.msra.mxu0 0
        %3175 = vmatprep.subr.bf16.mxu0 0
        %3176 = vmatpush1.bf16.msra.mxu0 0
        %3177 = vmatprep.subr.bf16.mxu0 0
        %3178 = vmatpush1.bf16.msra.mxu0 0
        %3179 = vmatprep.subr.bf16.mxu0 0
        %3180 = vmatpush1.bf16.msra.mxu0 0
        %3181 = vmatprep.subr.bf16.mxu0 0
        %3182 = vmatpush1.bf16.msra.mxu0 0
        %3183 = vmatprep.subr.bf16.mxu0 0
        %3184 = vmatpush1.bf16.msra.mxu0 0
        %3185 = vmatprep.mubr.bf16.mxu0 0
        %3186 = vmatmul.mubr.bf16.gmra.mrb[0].mxu0 %v3148
        %v3187 = vpop.f32.mrb[0].mxu0
        %v3188 = vadd.f32 0.0, %v3187
        %v3189 = vpop.f32.mrb[0].mxu0
        %v3190 = vpop.f32.mrb[0].mxu0
        %v3191 = vpop.f32.mrb[0].mxu0
        %3192 = vdwg.mxu0
        %v3194 = vsel %vm1511, %v3099, 0
        %v3197 = vsel %vm1739, %v2867, 0
        %3199 = vmatprep.subr.bf16.mxu0 0
        %3200 = vmatpush1.bf16.msra.mxu0 %v3197
        %3201 = vmatprep.subr.bf16.mxu0 0
        %3202 = vmatpush1.bf16.msra.mxu0 0
        %3203 = vmatprep.subr.bf16.mxu0 0
        %3204 = vmatpush1.bf16.msra.mxu0 0
        %3205 = vmatprep.subr.bf16.mxu0 0
        %3206 = vmatpush1.bf16.msra.mxu0 0
        %3207 = vmatprep.subr.bf16.mxu0 0
        %3208 = vmatpush1.bf16.msra.mxu0 0
        %3209 = vmatprep.subr.bf16.mxu0 0
        %3210 = vmatpush1.bf16.msra.mxu0 0
        %3211 = vmatprep.subr.bf16.mxu0 0
        %3212 = vmatpush1.bf16.msra.mxu0 0
        %3213 = vmatprep.subr.bf16.mxu0 0
        %3214 = vmatpush1.bf16.msra.mxu0 0
        %3215 = vmatprep.subr.bf16.mxu0 0
        %3216 = vmatpush1.bf16.msra.mxu0 0
        %3217 = vmatprep.subr.bf16.mxu0 0
        %3218 = vmatpush1.bf16.msra.mxu0 0
        %3219 = vmatprep.subr.bf16.mxu0 0
        %3220 = vmatpush1.bf16.msra.mxu0 0
        %3221 = vmatprep.subr.bf16.mxu0 0
        %3222 = vmatpush1.bf16.msra.mxu0 0
        %3223 = vmatprep.subr.bf16.mxu0 0
        %3224 = vmatpush1.bf16.msra.mxu0 0
        %3225 = vmatprep.subr.bf16.mxu0 0
        %3226 = vmatpush1.bf16.msra.mxu0 0
        %3227 = vmatprep.subr.bf16.mxu0 0
        %3228 = vmatpush1.bf16.msra.mxu0 0
        %3229 = vmatprep.subr.bf16.mxu0 0
        %3230 = vmatpush1.bf16.msra.mxu0 0
        %3231 = vmatprep.mubr.bf16.mxu0 0
        %3232 = vmatmul.mubr.bf16.gmra.mrb[0].mxu0 %v3194
        %v3233 = vpop.f32.mrb[0].mxu0
        %v3234 = vadd.f32 0.0, %v3233
        %v3235 = vpop.f32.mrb[0].mxu0
        %v3236 = vpop.f32.mrb[0].mxu0
        %v3237 = vpop.f32.mrb[0].mxu0
        %3238 = vdwg.mxu0
        %v3240 = vsel %vm1511, %v3100, 0
        %v3243 = vsel %vm1739, %v2868, 0
        %3245 = vmatprep.subr.bf16.mxu0 0
        %3246 = vmatpush1.bf16.msra.mxu0 %v3243
        %3247 = vmatprep.subr.bf16.mxu0 0
        %3248 = vmatpush1.bf16.msra.mxu0 0
        %3249 = vmatprep.subr.bf16.mxu0 0
        %3250 = vmatpush1.bf16.msra.mxu0 0
        %3251 = vmatprep.subr.bf16.mxu0 0
        %3252 = vmatpush1.bf16.msra.mxu0 0
        %3253 = vmatprep.subr.bf16.mxu0 0
        %3254 = vmatpush1.bf16.msra.mxu0 0
        %3255 = vmatprep.subr.bf16.mxu0 0
        %3256 = vmatpush1.bf16.msra.mxu0 0
        %3257 = vmatprep.subr.bf16.mxu0 0
        %3258 = vmatpush1.bf16.msra.mxu0 0
        %3259 = vmatprep.subr.bf16.mxu0 0
        %3260 = vmatpush1.bf16.msra.mxu0 0
        %3261 = vmatprep.subr.bf16.mxu0 0
        %3262 = vmatpush1.bf16.msra.mxu0 0
        %3263 = vmatprep.subr.bf16.mxu0 0
        %3264 = vmatpush1.bf16.msra.mxu0 0
        %3265 = vmatprep.subr.bf16.mxu0 0
        %3266 = vmatpush1.bf16.msra.mxu0 0
        %3267 = vmatprep.subr.bf16.mxu0 0
        %3268 = vmatpush1.bf16.msra.mxu0 0
        %3269 = vmatprep.subr.bf16.mxu0 0
        %3270 = vmatpush1.bf16.msra.mxu0 0
        %3271 = vmatprep.subr.bf16.mxu0 0
        %3272 = vmatpush1.bf16.msra.mxu0 0
        %3273 = vmatprep.subr.bf16.mxu0 0
        %3274 = vmatpush1.bf16.msra.mxu0 0
        %3275 = vmatprep.subr.bf16.mxu0 0
        %3276 = vmatpush1.bf16.msra.mxu0 0
        %3277 = vmatprep.mubr.bf16.mxu0 0
        %3278 = vmatmul.mubr.bf16.gmra.mrb[0].mxu0 %v3240
        %v3279 = vpop.f32.mrb[0].mxu0
        %v3280 = vadd.f32 0.0, %v3279
        %v3281 = vpop.f32.mrb[0].mxu0
        %v3282 = vpop.f32.mrb[0].mxu0
        %v3283 = vpop.f32.mrb[0].mxu0
        %3284 = vdwg.mxu0
        %v3285 = vpack.c.bf16 %v3142, %v3142
        %v3286 = vpack.c.bf16 %v3188, %v3188
        %v3287 = vpack.c.bf16 %v3234, %v3234
        %v3288 = vpack.c.bf16 %v3280, %v3280
        %v3289 = vld [vmem:[#allocation21] sm:$0xf]
        %v3290 = vld [vmem:[#allocation21 + $0x4] sm:$0xf]
        %v3291 = vld [vmem:[#allocation21 + $0x8] sm:$0xf]
        %v3292 = vld [vmem:[#allocation21 + $0xc] sm:$0xf]
        %v3294 = vsel %vm1511, %v3285, 0
        %v3297 = vsel %vm1739, %v3289, 0
        %3299 = vmatprep.subr.bf16.mxu0 0
        %3300 = vmatpush1.bf16.msra.mxu0 %v3297
        %3301 = vmatprep.subr.bf16.mxu0 0
        %3302 = vmatpush1.bf16.msra.mxu0 0
        %3303 = vmatprep.subr.bf16.mxu0 0
        %3304 = vmatpush1.bf16.msra.mxu0 0
        %3305 = vmatprep.subr.bf16.mxu0 0
        %3306 = vmatpush1.bf16.msra.mxu0 0
        %3307 = vmatprep.subr.bf16.mxu0 0
        %3308 = vmatpush1.bf16.msra.mxu0 0
        %3309 = vmatprep.subr.bf16.mxu0 0
        %3310 = vmatpush1.bf16.msra.mxu0 0
        %3311 = vmatprep.subr.bf16.mxu0 0
        %3312 = vmatpush1.bf16.msra.mxu0 0
        %3313 = vmatprep.subr.bf16.mxu0 0
        %3314 = vmatpush1.bf16.msra.mxu0 0
        %3315 = vmatprep.subr.bf16.mxu0 0
        %3316 = vmatpush1.bf16.msra.mxu0 0
        %3317 = vmatprep.subr.bf16.mxu0 0
        %3318 = vmatpush1.bf16.msra.mxu0 0
        %3319 = vmatprep.subr.bf16.mxu0 0
        %3320 = vmatpush1.bf16.msra.mxu0 0
        %3321 = vmatprep.subr.bf16.mxu0 0
        %3322 = vmatpush1.bf16.msra.mxu0 0
        %3323 = vmatprep.subr.bf16.mxu0 0
        %3324 = vmatpush1.bf16.msra.mxu0 0
        %3325 = vmatprep.subr.bf16.mxu0 0
        %3326 = vmatpush1.bf16.msra.mxu0 0
        %3327 = vmatprep.subr.bf16.mxu0 0
        %3328 = vmatpush1.bf16.msra.mxu0 0
        %3329 = vmatprep.subr.bf16.mxu0 0
        %3330 = vmatpush1.bf16.msra.mxu0 0
        %3331 = vmatprep.mubr.bf16.mxu0 0
        %3332 = vmatmul.mubr.bf16.gmra.mrb[0].mxu0 %v3294
        %v3333 = vpop.f32.mrb[0].mxu0
        %v3334 = vadd.f32 0.0, %v3333
        %v3335 = vpop.f32.mrb[0].mxu0
        %v3336 = vpop.f32.mrb[0].mxu0
        %v3337 = vpop.f32.mrb[0].mxu0
        %3338 = vdwg.mxu0
        %v3340 = vsel %vm1511, %v3286, 0
        %v3343 = vsel %vm1739, %v3290, 0
        %3345 = vmatprep.subr.bf16.mxu0 0
        %3346 = vmatpush1.bf16.msra.mxu0 %v3343
        %3347 = vmatprep.subr.bf16.mxu0 0
        %3348 = vmatpush1.bf16.msra.mxu0 0
        %3349 = vmatprep.subr.bf16.mxu0 0
        %3350 = vmatpush1.bf16.msra.mxu0 0
        %3351 = vmatprep.subr.bf16.mxu0 0
        %3352 = vmatpush1.bf16.msra.mxu0 0
        %3353 = vmatprep.subr.bf16.mxu0 0
        %3354 = vmatpush1.bf16.msra.mxu0 0
        %3355 = vmatprep.subr.bf16.mxu0 0
        %3356 = vmatpush1.bf16.msra.mxu0 0
        %3357 = vmatprep.subr.bf16.mxu0 0
        %3358 = vmatpush1.bf16.msra.mxu0 0
        %3359 = vmatprep.subr.bf16.mxu0 0
        %3360 = vmatpush1.bf16.msra.mxu0 0
        %3361 = vmatprep.subr.bf16.mxu0 0
        %3362 = vmatpush1.bf16.msra.mxu0 0
        %3363 = vmatprep.subr.bf16.mxu0 0
        %3364 = vmatpush1.bf16.msra.mxu0 0
        %3365 = vmatprep.subr.bf16.mxu0 0
        %3366 = vmatpush1.bf16.msra.mxu0 0
        %3367 = vmatprep.subr.bf16.mxu0 0
        %3368 = vmatpush1.bf16.msra.mxu0 0
        %3369 = vmatprep.subr.bf16.mxu0 0
        %3370 = vmatpush1.bf16.msra.mxu0 0
        %3371 = vmatprep.subr.bf16.mxu0 0
        %3372 = vmatpush1.bf16.msra.mxu0 0
        %3373 = vmatprep.subr.bf16.mxu0 0
        %3374 = vmatpush1.bf16.msra.mxu0 0
        %3375 = vmatprep.subr.bf16.mxu0 0
        %3376 = vmatpush1.bf16.msra.mxu0 0
        %3377 = vmatprep.mubr.bf16.mxu0 0
        %3378 = vmatmul.mubr.bf16.gmra.mrb[0].mxu0 %v3340
        %v3379 = vpop.f32.mrb[0].mxu0
        %v3380 = vadd.f32 0.0, %v3379
        %v3381 = vpop.f32.mrb[0].mxu0
        %v3382 = vpop.f32.mrb[0].mxu0
        %v3383 = vpop.f32.mrb[0].mxu0
        %3384 = vdwg.mxu0
        %v3386 = vsel %vm1511, %v3287, 0
        %v3389 = vsel %vm1739, %v3291, 0
        %3391 = vmatprep.subr.bf16.mxu0 0
        %3392 = vmatpush1.bf16.msra.mxu0 %v3389
        %3393 = vmatprep.subr.bf16.mxu0 0
        %3394 = vmatpush1.bf16.msra.mxu0 0
        %3395 = vmatprep.subr.bf16.mxu0 0
        %3396 = vmatpush1.bf16.msra.mxu0 0
        %3397 = vmatprep.subr.bf16.mxu0 0
        %3398 = vmatpush1.bf16.msra.mxu0 0
        %3399 = vmatprep.subr.bf16.mxu0 0
        %3400 = vmatpush1.bf16.msra.mxu0 0
        %3401 = vmatprep.subr.bf16.mxu0 0
        %3402 = vmatpush1.bf16.msra.mxu0 0
        %3403 = vmatprep.subr.bf16.mxu0 0
        %3404 = vmatpush1.bf16.msra.mxu0 0
        %3405 = vmatprep.subr.bf16.mxu0 0
        %3406 = vmatpush1.bf16.msra.mxu0 0
        %3407 = vmatprep.subr.bf16.mxu0 0
        %3408 = vmatpush1.bf16.msra.mxu0 0
        %3409 = vmatprep.subr.bf16.mxu0 0
        %3410 = vmatpush1.bf16.msra.mxu0 0
        %3411 = vmatprep.subr.bf16.mxu0 0
        %3412 = vmatpush1.bf16.msra.mxu0 0
        %3413 = vmatprep.subr.bf16.mxu0 0
        %3414 = vmatpush1.bf16.msra.mxu0 0
        %3415 = vmatprep.subr.bf16.mxu0 0
        %3416 = vmatpush1.bf16.msra.mxu0 0
        %3417 = vmatprep.subr.bf16.mxu0 0
        %3418 = vmatpush1.bf16.msra.mxu0 0
        %3419 = vmatprep.subr.bf16.mxu0 0
        %3420 = vmatpush1.bf16.msra.mxu0 0
        %3421 = vmatprep.subr.bf16.mxu0 0
        %3422 = vmatpush1.bf16.msra.mxu0 0
        %3423 = vmatprep.mubr.bf16.mxu0 0
        %3424 = vmatmul.mubr.bf16.gmra.mrb[0].mxu0 %v3386
        %v3425 = vpop.f32.mrb[0].mxu0
        %v3426 = vadd.f32 0.0, %v3425
        %v3427 = vpop.f32.mrb[0].mxu0
        %v3428 = vpop.f32.mrb[0].mxu0
        %v3429 = vpop.f32.mrb[0].mxu0
        %3430 = vdwg.mxu0
        %v3432 = vsel %vm1511, %v3288, 0
        %v3435 = vsel %vm1739, %v3292, 0
        %3437 = vmatprep.subr.bf16.mxu0 0
        %3438 = vmatpush1.bf16.msra.mxu0 %v3435
        %3439 = vmatprep.subr.bf16.mxu0 0
        %3440 = vmatpush1.bf16.msra.mxu0 0
        %3441 = vmatprep.subr.bf16.mxu0 0
        %3442 = vmatpush1.bf16.msra.mxu0 0
        %3443 = vmatprep.subr.bf16.mxu0 0
        %3444 = vmatpush1.bf16.msra.mxu0 0
        %3445 = vmatprep.subr.bf16.mxu0 0
        %3446 = vmatpush1.bf16.msra.mxu0 0
        %3447 = vmatprep.subr.bf16.mxu0 0
        %3448 = vmatpush1.bf16.msra.mxu0 0
        %3449 = vmatprep.subr.bf16.mxu0 0
        %3450 = vmatpush1.bf16.msra.mxu0 0
        %3451 = vmatprep.subr.bf16.mxu0 0
        %3452 = vmatpush1.bf16.msra.mxu0 0
        %3453 = vmatprep.subr.bf16.mxu0 0
        %3454 = vmatpush1.bf16.msra.mxu0 0
        %3455 = vmatprep.subr.bf16.mxu0 0
        %3456 = vmatpush1.bf16.msra.mxu0 0
        %3457 = vmatprep.subr.bf16.mxu0 0
        %3458 = vmatpush1.bf16.msra.mxu0 0
        %3459 = vmatprep.subr.bf16.mxu0 0
        %3460 = vmatpush1.bf16.msra.mxu0 0
        %3461 = vmatprep.subr.bf16.mxu0 0
        %3462 = vmatpush1.bf16.msra.mxu0 0
        %3463 = vmatprep.subr.bf16.mxu0 0
        %3464 = vmatpush1.bf16.msra.mxu0 0
        %3465 = vmatprep.subr.bf16.mxu0 0
        %3466 = vmatpush1.bf16.msra.mxu0 0
        %3467 = vmatprep.subr.bf16.mxu0 0
        %3468 = vmatpush1.bf16.msra.mxu0 0
        %3469 = vmatprep.mubr.bf16.mxu0 0
        %3470 = vmatmul.mubr.bf16.gmra.mrb[0].mxu0 %v3432
        %v3471 = vpop.f32.mrb[0].mxu0
        %v3472 = vadd.f32 0.0, %v3471
        %v3473 = vpop.f32.mrb[0].mxu0
        %v3474 = vpop.f32.mrb[0].mxu0
        %v3475 = vpop.f32.mrb[0].mxu0
        %3476 = vdwg.mxu0
        %v3477 = vsel %vm876, %v3334, 0.0
        %v3478 = vsel %vm876, %v3380, 0.0
        %v3479 = vadd.f32 %v3477, %v3478
        %v3480 = vsel %vm876, %v3426, 0.0
        %v3481 = vadd.f32 %v3479, %v3480
        %v3482 = vsel %vm876, %v3472, 0.0
        %v3483 = vadd.f32 %v3481, %v3482
        %v3484 = vld [vmem:[#allocation22] sm:$0x1]
        %v3486 = vlaneseq
        %v3487 = vshrl.u32 %v3486, 7
        %v3488 = vsub.s32 0, %v3487
        %v3489 = vrot.slane %v3484, %v3488
        %v3491 = vadd.f32 %v3483, %v3489
        %v3492 = vadd.f32 %v2595, %v3491
        %v3493 = vld [vmem:[#allocation12] sm:$0x1]
        %v3494 = vld [vmem:[#allocation13] sm:$0x1]
        %v3495 = vsel %vm876, %v3492, 0.0
        %3496 = vadd.xlane.f32.xlu0 %v3495
        %v3497 = vpop.xlane.xlu0 %3496
        %v3498 = vmul.f32 %v3497, %v880
        %v3499 = vsub.f32 %v3492, %v3498
        %v3500 = vmul.f32 %v3499, %v3499
        %v3501 = vsel %vm876, %v3500, 0.0
        %3502 = vadd.xlane.f32.xlu0 %v3501
        %v3503 = vpop.xlane.xlu0 %3502
        %v3504 = vmul.f32 %v3503, %v880
        %v3505 = vadd.f32 %v3504, 1e-05
        %v3506 = vrsqrt.pop %v3505
        %v3507 = vmul.f32 %v3499, %v3506
        %v3509 = vlaneseq
        %v3510 = vshrl.u32 %v3509, 7
        %v3511 = vsub.s32 0, %v3510
        %v3512 = vrot.slane %v3493, %v3511
        %v3514 = vmul.f32 %v3507, %v3512
        %v3516 = vlaneseq
        %v3517 = vshrl.u32 %v3516, 7
        %v3518 = vsub.s32 0, %v3517
        %v3519 = vrot.slane %v3494, %v3518
        %v3521 = vadd.f32 %v3514, %v3519
        %v3522 = vpack.c.bf16 %v3521, %v3521
        %v3523 = vld [vmem:[%s17] sm:$0xf]
        %v3524 = vld [vmem:[%s17 + $0x4] sm:$0xf]
        %v3525 = vld [vmem:[%s17 + $0x8] sm:$0xf]
        %v3526 = vld [vmem:[%s17 + $0xc] sm:$0xf]
        %v3527 = vld [vmem:[%s18] sm:$0x1]
        %v3529 = vlaneseq
        %v3530 = vshrl.u32 %v3529, 7
        %v3531 = vsub.s32 0, %v3530
        %v3532 = vrot.slane %v3527, %v3531
        %v3538 = vunpack.c.l.b16 %v3523
        %v3539 = vunpack.c.l.b16 %v3524
        %v3540 = vunpack.c.l.b16 %v3525
        %v3541 = vunpack.c.l.b16 %v3526
        %v3542 = vpack.c.b16 %v3539, %v3538
        %v3543 = vpack.c.b16 %v3541, %v3540
        %v3547 = vsel %vm876, %v3522, 0
        %3549 = vmatprep.subr.bf16.mxu0 0
        %3550 = vmatpush1.bf16.msra.mxu0 %v3542
        %3551 = vmatprep.subr.bf16.mxu0 0
        %3552 = vmatpush1.bf16.msra.mxu0 %v3543
        %3553 = vmatprep.subr.bf16.mxu0 0
        %3554 = vmatpush1.bf16.msra.mxu0 0
        %3555 = vmatprep.subr.bf16.mxu0 0
        %3556 = vmatpush1.bf16.msra.mxu0 0
        %3557 = vmatprep.subr.bf16.mxu0 0
        %3558 = vmatpush1.bf16.msra.mxu0 0
        %3559 = vmatprep.subr.bf16.mxu0 0
        %3560 = vmatpush1.bf16.msra.mxu0 0
        %3561 = vmatprep.subr.bf16.mxu0 0
        %3562 = vmatpush1.bf16.msra.mxu0 0
        %3563 = vmatprep.subr.bf16.mxu0 0
        %3564 = vmatpush1.bf16.msra.mxu0 0
        %3565 = vmatprep.subr.bf16.mxu0 0
        %3566 = vmatpush1.bf16.msra.mxu0 0
        %3567 = vmatprep.subr.bf16.mxu0 0
        %3568 = vmatpush1.bf16.msra.mxu0 0
        %3569 = vmatprep.subr.bf16.mxu0 0
        %3570 = vmatpush1.bf16.msra.mxu0 0
        %3571 = vmatprep.subr.bf16.mxu0 0
        %3572 = vmatpush1.bf16.msra.mxu0 0
        %3573 = vmatprep.subr.bf16.mxu0 0
        %3574 = vmatpush1.bf16.msra.mxu0 0
        %3575 = vmatprep.subr.bf16.mxu0 0
        %3576 = vmatpush1.bf16.msra.mxu0 0
        %3577 = vmatprep.subr.bf16.mxu0 0
        %3578 = vmatpush1.bf16.msra.mxu0 0
        %3579 = vmatprep.subr.bf16.mxu0 0
        %3580 = vmatpush1.bf16.msra.mxu0 0
        %3581 = vmatprep.mubr.bf16.mxu0 0
        %3582 = vmatmul.mubr.bf16.gmra.mrb[0].mxu0 %v3547
        %v3583 = vpop.f32.mrb[0].mxu0
        %v3584 = vadd.f32 %v3532, %v3583
        %v3585 = vpop.f32.mrb[0].mxu0
        %v3586 = vpop.f32.mrb[0].mxu0
        %v3587 = vpop.f32.mrb[0].mxu0
        %3588 = vdwg.mxu0
        %v3589 = vmul.f32 %v3584, 0.5
        %v3590 = vmul.f32 %v3584, 0.044715
        %v3591 = vmul.f32 %v3590, %v3584
        %v3592 = vmul.f32 %v3591, %v3584
        %v3593 = vadd.f32 %v3584, %v3592
        %v3594 = vmul.f32 %v3593, 0.7978846
        %v3595 = vtanh.pop %v3594
        %v3596 = vadd.f32 %v3595, 1.0
        %v3597 = vmul.f32 %v3589, %v3596
        %v3598 = vpack.c.bf16 %v3597, %v3597
        %v3599 = vld [vmem:[%s19] sm:$0xf]
        %v3600 = vld [vmem:[%s19 + $0x4] sm:$0xf]
        %v3601 = vld [vmem:[%s19 + $0x8] sm:$0xf]
        %v3602 = vld [vmem:[%s19 + $0xc] sm:$0xf]
        %v3603 = vld [vmem:[%s19 + $0x10] sm:$0xf]
        %v3604 = vld [vmem:[%s19 + $0x14] sm:$0xf]
        %v3605 = vld [vmem:[%s19 + $0x18] sm:$0xf]
        %v3606 = vld [vmem:[%s19 + $0x1c] sm:$0xf]
        %v3607 = vld [vmem:[%s19 + $0x20] sm:$0xf]
        %v3608 = vld [vmem:[%s19 + $0x24] sm:$0xf]
        %v3609 = vld [vmem:[%s19 + $0x28] sm:$0xf]
        %v3610 = vld [vmem:[%s19 + $0x2c] sm:$0xf]
        %v3611 = vld [vmem:[%s19 + $0x30] sm:$0xf]
        %v3612 = vld [vmem:[%s19 + $0x34] sm:$0xf]
        %v3613 = vld [vmem:[%s19 + $0x38] sm:$0xf]
        %v3614 = vld [vmem:[%s19 + $0x3c] sm:$0xf]
        %v3615 = vld [vmem:[%s20] sm:$0x1]
        %v3617 = vlaneseq
        %v3618 = vshrl.u32 %v3617, 7
        %v3619 = vsub.s32 0, %v3618
        %v3620 = vrot.slane %v3615, %v3619
        %v3638 = vunpack.c.l.b16 %v3599
        %v3639 = vunpack.c.l.b16 %v3600
        %v3640 = vunpack.c.l.b16 %v3601
        %v3641 = vunpack.c.l.b16 %v3602
        %v3642 = vunpack.c.l.b16 %v3603
        %v3643 = vunpack.c.l.b16 %v3604
        %v3644 = vunpack.c.l.b16 %v3605
        %v3645 = vunpack.c.l.b16 %v3606
        %v3646 = vunpack.c.l.b16 %v3607
        %v3647 = vunpack.c.l.b16 %v3608
        %v3648 = vunpack.c.l.b16 %v3609
        %v3649 = vunpack.c.l.b16 %v3610
        %v3650 = vunpack.c.l.b16 %v3611
        %v3651 = vunpack.c.l.b16 %v3612
        %v3652 = vunpack.c.l.b16 %v3613
        %v3653 = vunpack.c.l.b16 %v3614
        %v3654 = vpack.c.b16 %v3639, %v3638
        %v3655 = vpack.c.b16 %v3641, %v3640
        %v3656 = vpack.c.b16 %v3643, %v3642
        %v3657 = vpack.c.b16 %v3645, %v3644
        %v3658 = vpack.c.b16 %v3647, %v3646
        %v3659 = vpack.c.b16 %v3649, %v3648
        %v3660 = vpack.c.b16 %v3651, %v3650
        %v3661 = vpack.c.b16 %v3653, %v3652
        %3670 = vmatprep.subr.bf16.mxu0 0
        %3671 = vmatpush1.bf16.msra.mxu0 %v3654
        %3672 = vmatprep.subr.bf16.mxu0 0
        %3673 = vmatpush1.bf16.msra.mxu0 %v3655
        %3674 = vmatprep.subr.bf16.mxu0 0
        %3675 = vmatpush1.bf16.msra.mxu0 %v3656
        %3676 = vmatprep.subr.bf16.mxu0 0
        %3677 = vmatpush1.bf16.msra.mxu0 %v3657
        %3678 = vmatprep.subr.bf16.mxu0 0
        %3679 = vmatpush1.bf16.msra.mxu0 %v3658
        %3680 = vmatprep.subr.bf16.mxu0 0
        %3681 = vmatpush1.bf16.msra.mxu0 %v3659
        %3682 = vmatprep.subr.bf16.mxu0 0
        %3683 = vmatpush1.bf16.msra.mxu0 %v3660
        %3684 = vmatprep.subr.bf16.mxu0 0
        %3685 = vmatpush1.bf16.msra.mxu0 %v3661
        %3686 = vmatprep.subr.bf16.mxu0 0
        %3687 = vmatpush1.bf16.msra.mxu0 0
        %3688 = vmatprep.subr.bf16.mxu0 0
        %3689 = vmatpush1.bf16.msra.mxu0 0
        %3690 = vmatprep.subr.bf16.mxu0 0
        %3691 = vmatpush1.bf16.msra.mxu0 0
        %3692 = vmatprep.subr.bf16.mxu0 0
        %3693 = vmatpush1.bf16.msra.mxu0 0
        %3694 = vmatprep.subr.bf16.mxu0 0
        %3695 = vmatpush1.bf16.msra.mxu0 0
        %3696 = vmatprep.subr.bf16.mxu0 0
        %3697 = vmatpush1.bf16.msra.mxu0 0
        %3698 = vmatprep.subr.bf16.mxu0 0
        %3699 = vmatpush1.bf16.msra.mxu0 0
        %3700 = vmatprep.subr.bf16.mxu0 0
        %3701 = vmatpush1.bf16.msra.mxu0 0
        %3702 = vmatprep.mubr.bf16.mxu0 0
        %3703 = vmatmul.mubr.bf16.gmra.mrb[0].mxu0 %v3598
        %v3704 = vpop.f32.mrb[0].mxu0
        %v3705 = vadd.f32 %v3620, %v3704
        %v3706 = vpop.f32.mrb[0].mxu0
        %v3707 = vpop.f32.mrb[0].mxu0
        %v3708 = vpop.f32.mrb[0].mxu0
        %3709 = vdwg.mxu0
        %v3710 = vadd.f32 %v3492, %v3705
        %3711 = vst.msk [vmem:[%s854] sm:$0xff] %vm876, %v3710
        %s3712 = sand.u32 %s522, 1
        %s3713 = scalar_lea.sflag [#allocation6], %s3712
        %s3714 = sand.u32 %s522, 1
        %s3715 = smul.addr %s3714, 8
        %s3716 = scalar_lea.vmem [#allocation24], %s3715
        // Predicated region
        $region160: #{tpu_custom_call.1} parent=103 // pred_check
          %p3717 = pneg %p532
        $region161: #{tpu_custom_call.1} parent=103 // pred_check_branch
          %3719 = sbr.rel (%p3717) target = $region163
        $region162: #{tpu_custom_call.1} parent=103 // pred_region
          %s3721 = ssub.s32 128, 128
          %3722 = vsyncadd %s3713, %s3721
          %s3723 = sadd.s32 %s47, %s46
          %s3724 = smul.addr %s3723, 128
          %s3725 = scalar_lea.hbm %s21, %s3724
          %s3727 = sshll.u32 %s3716, 4
          %s3728 = int_to_ptr.vmem [resolvable:$true] %s3727
          %3730 = dma.vmem_to_hbm [thread:$0]  %s3728, 128, %s3725, %s3713
        $region163: #{tpu_custom_call.1} parent=103 // pred_fallthru
          _
      $region104: #{tpu_custom_call.1} parent=5 // pred_fallthru
        _
      %p3731 = scmp.le.s32.totalorder 2, %s37
      // Predicated region
      $region164: #{tpu_custom_call.1} parent=5 // pred_check
        %p3732 = pneg %p3731
      $region165: #{tpu_custom_call.1} parent=5 // pred_check_branch
        %3734 = sbr.rel (%p3732) target = $region167
      $region166: #{tpu_custom_call.1} parent=5 // pred_region
        %s3735 = ssub.s32 %s37, 2
        // Predicated region
        $region168: #{tpu_custom_call.1} parent=166 // pred_check
          %p3736 = pneg %p538
        $region169: #{tpu_custom_call.1} parent=166 // pred_check_branch
          %3738 = sbr.rel (%p3736) target = $region171
        $region170: #{tpu_custom_call.1} parent=166 // pred_region
          %s3739 = sand.u32 %s523, 1
          %s3740 = scalar_lea.sflag [#allocation6], %s3739
          %s3741 = sand.u32 %s523, 1
          %s3742 = smul.addr %s3741, 8
          %s3743 = scalar_lea.vmem [#allocation24], %s3742
          %3744 = dma.done %s3740, 128
        $region171: #{tpu_custom_call.1} parent=166 // pred_fallthru
          _
      $region167: #{tpu_custom_call.1} parent=5 // pred_fallthru
        _
    $region6: #{tpu_custom_call.1} parent=1 // loop_footer
      %s41 = sadd.s32 1, %s37
    $region7: #{tpu_custom_call.1} parent=1 // loop_footer_branch
      %36 = sbr.rel target = $region3
    $region8: #{tpu_custom_call.1} parent=1 // loop_exit
      _
    %3745 = vsyncpa [#allocation5], 1
    %s3746 = scalar_lea.sflag [#allocation5], 1
    %3747 = vsyncpa %s3746, 1
    %3748 = vsyncpa [#allocation8], 1
    %3749 = vsyncpa [#allocation11], 1
    %3750 = vsyncpa [#allocation14], 1
    %3751 = vsyncpa [#allocation17], 1
    %3752 = vsyncpa [#allocation20], 1
    %3753 = vsyncpa [#allocation23], 1
    %3754 = vsyncpa [#allocation6], 1
    %s3755 = scalar_lea.sflag [#allocation6], 1
    %3756 = vsyncpa %s3755, 1

// kernel: tpu_custom_call.1
$region0: #{tpu_custom_call.1}
  #allocation0 [shape = 'u32[]', space=smem, size = 0x4, offset = 0x4, fixed_abs, tag = 'smem constant byte address 0x4 - core index']
  #allocation1 [shape = 'u32[144,128]{1,0:T(1,128)}', space=vmem, size = 0x12000, scoped, tag = 'internal scratch']
  #allocation2 [shape = 'bf16[1,4,8,8]{3,2,1,0:T(8,128)(2,1)}', space=vmem, size = 0x2000, scoped, tag = 'scratch operand']
  #allocation3 [shape = 'bf16[1,4,8,8]{3,2,1,0:T(8,128)(2,1)}', space=vmem, size = 0x2000, scoped, tag = 'scratch operand']
  %s0 = inlined_call_operand.vmem [shape: f32[2,8,32], index: 0, kind: input, shape index: {}]
  %s1 = inlined_call_operand.vmem [shape: bf16[2,4,8,8], index: 1, kind: input, shape index: {}]
  %s2 = inlined_call_operand.vmem [shape: bf16[2,4,8,8], index: 2, kind: input, shape index: {}]
  %s3 = inlined_call_operand.hbm [shape: f32[1,32], index: 3, kind: input, shape index: {}]
  %s4 = inlined_call_operand.hbm [shape: f32[1,32], index: 4, kind: input, shape index: {}]
  %s5 = inlined_call_operand.hbm [shape: f32[1,32], index: 5, kind: input, shape index: {}]
  %s6 = inlined_call_operand.hbm [shape: f32[1,32], index: 6, kind: input, shape index: {}]
  %s7 = inlined_call_operand.hbm [shape: f32[1,32], index: 7, kind: input, shape index: {}]
  %s8 = inlined_call_operand.hbm [shape: f32[1,32], index: 8, kind: input, shape index: {}]
  %s9 = inlined_call_operand.vmem [shape: bf16[32,96], index: 9, kind: input, shape index: {}]
  %s10 = inlined_call_operand.hbm [shape: f32[1,96], index: 10, kind: input, shape index: {}]
  %s11 = inlined_call_operand.hbm [shape: bf16[4,8,32], index: 11, kind: input, shape index: {}]
  %s12 = inlined_call_operand.hbm [shape: f32[1,32], index: 12, kind: input, shape index: {}]
  %s13 = inlined_call_operand.vmem [shape: bf16[32,32], index: 13, kind: input, shape index: {}]
  %s14 = inlined_call_operand.hbm [shape: f32[1,32], index: 14, kind: input, shape index: {}]
  %s15 = inlined_call_operand.hbm [shape: bf16[4,8,32], index: 15, kind: input, shape index: {}]
  %s16 = inlined_call_operand.hbm [shape: f32[1,32], index: 16, kind: input, shape index: {}]
  %s17 = inlined_call_operand.vmem [shape: bf16[32,128], index: 17, kind: input, shape index: {}]
  %s18 = inlined_call_operand.vmem [shape: f32[1,128], index: 18, kind: input, shape index: {}]
  %s19 = inlined_call_operand.vmem [shape: bf16[128,32], index: 19, kind: input, shape index: {}]
  %s20 = inlined_call_operand.vmem [shape: f32[1,32], index: 20, kind: input, shape index: {}]
  %s21 = inlined_call_operand.hbm [shape: f32[2,8,32], index: 21, kind: output, shape index: {}]
  %s22 = sld [smem:[#allocation0]]
  $region172: #{tpu_custom_call.1} parent=0
    _
  %s24 = ssub.s32 1, %s22
  %s25 = scalar_select 0, %s24, %s22
  $region1: #{tpu_custom_call.1} parent=0
    #allocation4 [shape = 'u8[512]{0}', space=vmem, size = 0x400, scoped, tag = 'input window, operand 3, single buffered']
    #allocation5 [shape = 's32[2]{0}', space=sflag, size = 0x8, scoped, tag = 'scoped memory for tpu_custom_call.1']
    #allocation6 [shape = 's32[2]{0}', space=sflag, size = 0x8, scoped, tag = 'scoped memory for tpu_custom_call.1']
    #allocation7 [shape = 'u8[512]{0}', space=vmem, size = 0x400, scoped, tag = 'input window, operand 4, single buffered']
    #allocation8 [shape = 's32[1]{0}', space=sflag, size = 0x4, scoped, tag = 'scoped memory for tpu_custom_call.1']
    #allocation9 [shape = 'u8[512]{0}', space=vmem, size = 0x400, scoped, tag = 'input window, operand 5, single buffered']
    #allocation10 [shape = 'u8[512]{0}', space=vmem, size = 0x400, scoped, tag = 'input window, operand 6, single buffered']
    #allocation11 [shape = 's32[1]{0}', space=sflag, size = 0x4, scoped, tag = 'scoped memory for tpu_custom_call.1']
    #allocation12 [shape = 'u8[512]{0}', space=vmem, size = 0x400, scoped, tag = 'input window, operand 7, single buffered']
    #allocation13 [shape = 'u8[512]{0}', space=vmem, size = 0x400, scoped, tag = 'input window, operand 8, single buffered']
    #allocation14 [shape = 's32[1]{0}', space=sflag, size = 0x4, scoped, tag = 'scoped memory for tpu_custom_call.1']
    #allocation15 [shape = 'u8[512]{0}', space=vmem, size = 0x400, scoped, tag = 'input window, operand 10, single buffered']
    #allocation16 [shape = 'u8[8192]{0}', space=vmem, size = 0x2000, scoped, tag = 'input window, operand 11, single buffered']
    #allocation17 [shape = 's32[1]{0}', space=sflag, size = 0x4, scoped, tag = 'scoped memory for tpu_custom_call.1']
    #allocation18 [shape = 'u8[512]{0}', space=vmem, size = 0x400, scoped, tag = 'input window, operand 12, single buffered']
    #allocation19 [shape = 'u8[512]{0}', space=vmem, size = 0x400, scoped, tag = 'input window, operand 14, single buffered']
    #allocation20 [shape = 's32[1]{0}', space=sflag, size = 0x4, scoped, tag = 'scoped memory for tpu_custom_call.1']
    #allocation21 [shape = 'u8[8192]{0}', space=vmem, size = 0x2000, scoped, tag = 'input window, operand 15, single buffered']
    #allocation22 [shape = 'u8[512]{0}', space=vmem, size = 0x400, scoped, tag = 'input window, operand 16, single buffered']
    #allocation23 [shape = 's32[1]{0}', space=sflag, size = 0x4, scoped, tag = 'scoped memory for tpu_custom_call.1']
    #allocation24 [shape = 'u8[8192]{0}', space=vmem, size = 0x2000, scoped, tag = 'output window, operand 0']
    %26 = vsyncpa [#allocation5], 0
    %27 = vsyncpa [#allocation8], 0
    %28 = vsyncpa [#allocation11], 0
    %29 = vsyncpa [#allocation14], 0
    %30 = vsyncpa [#allocation17], 0
    %31 = vsyncpa [#allocation20], 0
    %32 = vsyncpa [#allocation23], 0
    %33 = vsyncpa [#allocation6], 0
    %s34 = scalar_lea.sflag [#allocation6], 1
    %35 = vsyncpa %s34, 0
    loop: start=0, step=1, limit=4
    $region2: #{tpu_custom_call.1} parent=1 // loop_pre_header
      _
    $region3: #{tpu_custom_call.1} parent=1 // loop_header
      %s37 = sphi 0, %s41
      %p38 = scmp.ge.s32.totalorder %s37, 4
      %s44 = sphi 0, %s56
      %s45 = sphi 0, %s52
      %s46 = sphi 0, %s44
      %s47 = sphi 0, %s45
      %s48 = sphi 0, %s46
      %s49 = sphi 0, %s47
      %s61 = sphi 0, %s63
      %s64 = sphi 0, %s61
      %s65 = sphi 0, %s64
      %s81 = sphi 0, %s65
      %s87 = sphi 0, %s89
      %s90 = sphi 0, %s87
      %s91 = sphi 0, %s90
      %s107 = sphi 0, %s91
      %s113 = sphi 0, %s115
      %s116 = sphi 0, %s113
      %s117 = sphi 0, %s116
      %s133 = sphi 0, %s117
      %s137 = sphi 0, %s137
      %s139 = sphi 0, %s137
      %s140 = sphi 0, %s139
      %s154 = sphi 0, %s140
      %s158 = sphi 0, %s158
      %s160 = sphi 0, %s158
      %s161 = sphi 0, %s160
      %s175 = sphi 0, %s161
      %s179 = sphi 0, %s179
      %s181 = sphi 0, %s179
      %s182 = sphi 0, %s181
      %s196 = sphi 0, %s182
      %s200 = sphi 0, %s200
      %s202 = sphi 0, %s200
      %s203 = sphi 0, %s202
      %s217 = sphi 0, %s203
      %s221 = sphi 0, %s221
      %s223 = sphi 0, %s221
      %s224 = sphi 0, %s223
      %s238 = sphi 0, %s224
      %s242 = sphi 0, %s242
      %s244 = sphi 0, %s242
      %s245 = sphi 0, %s244
      %s259 = sphi 0, %s245
      %s263 = sphi 0, %s263
      %s265 = sphi 0, %s263
      %s266 = sphi 0, %s265
      %s280 = sphi 0, %s266
      %s284 = sphi 0, %s284
      %s286 = sphi 0, %s284
      %s287 = sphi 0, %s286
      %s301 = sphi 0, %s287
      %s305 = sphi 0, %s305
      %s307 = sphi 0, %s305
      %s308 = sphi 0, %s307
      %s322 = sphi 0, %s308
      %s326 = sphi 0, %s326
      %s328 = sphi 0, %s326
      %s329 = sphi 0, %s328
      %s343 = sphi 0, %s329
      %s347 = sphi 0, %s347
      %s349 = sphi 0, %s347
      %s350 = sphi 0, %s349
      %s364 = sphi 0, %s350
      %s368 = sphi 0, %s368
      %s370 = sphi 0, %s368
      %s371 = sphi 0, %s370
      %s385 = sphi 0, %s371
      %s389 = sphi 0, %s389
      %s391 = sphi 0, %s389
      %s392 = sphi 0, %s391
      %s406 = sphi 0, %s392
      %s410 = sphi 0, %s410
      %s412 = sphi 0, %s410
      %s413 = sphi 0, %s412
      %s427 = sphi 0, %s413
      %s431 = sphi 0, %s431
      %s433 = sphi 0, %s431
      %s434 = sphi 0, %s433
      %s448 = sphi 0, %s434
      %s452 = sphi 0, %s452
      %s454 = sphi 0, %s452
      %s455 = sphi 0, %s454
      %s469 = sphi 0, %s455
      %s473 = sphi 0, %s473
      %s475 = sphi 0, %s473
      %s476 = sphi 0, %s475
      %s490 = sphi 0, %s476
      %s494 = sphi 0, %s494
      %s496 = sphi 0, %s494
      %s497 = sphi 0, %s496
      %s511 = sphi 0, %s497
      %s519 = sphi 0, %s521
      %s522 = sphi 0, %s519
      %s523 = sphi 0, %s522
      %s539 = sphi 0, %s523
    $region4: #{tpu_custom_call.1} parent=1 // loop_header_branch
      %40 = sbr.rel (%p38) target = $region8
    $region5: #{tpu_custom_call.1} parent=1 // loop_body
      %s42 = ssub.s32 %s37, 1
      %s43 = ssub.s32 %s37, 2
      %s50 = sadd.s32 1, %s45
      %p51 = scmp.ge.s32.totalorder %s50, 1
      %s52 = scalar_select %p51, 0, %s50
      %s53 = sadd.s32 1, %s44
      %s54 = scalar_select %p51, %s53, %s44
      %p55 = scmp.ge.s32.totalorder %s54, 2
      %s56 = scalar_select %p55, 0, %s54
      %s57 = ssub.s32 %s44, %s56
      %s58 = ssub.s32 %s45, %s52
      %s59 = sor.u32 %s57, %s58
      %p60 = scmp.eq.s32.totalorder %s59, 0
      %s62 = sadd.s32 %s61, 1
      %s63 = scalar_select %p60, %s61, %s62
      %p66 = pneg %p60
      %p67 = scmp.eq.s32.totalorder %s37, 1
      %p68 = por %p66, %p67
      %p69 = scmp.ne.s32.totalorder %s61, %s64
      %p70 = scmp.eq.s32.totalorder %s37, 0
      %p71 = por %p69, %p70
      %p72 = scmp.ne.s32.totalorder %s61, %s64
      %p73 = scmp.eq.s32.totalorder %s42, 1
      %p74 = por %p72, %p73
      %p75 = scmp.ne.s32.totalorder %s64, %s65
      %p76 = scmp.eq.s32.totalorder %s42, 0
      %p77 = por %p75, %p76
      %p78 = scmp.ne.s32.totalorder %s64, %s65
      %p79 = scmp.eq.s32.totalorder %s43, 1
      %p80 = por %p78, %p79
      %p82 = scmp.ne.s32.totalorder %s65, %s81
      %p83 = scmp.eq.s32.totalorder %s43, 0
      %p84 = por %p82, %p83
      %s85 = ssub.s32 %s44, %s56
      %p86 = scmp.eq.s32.totalorder %s85, 0
      %s88 = sadd.s32 %s87, 1
      %s89 = scalar_select %p86, %s87, %s88
      %p92 = pneg %p86
      %p93 = scmp.eq.s32.totalorder %s37, 1
      %p94 = por %p92, %p93
      %p95 = scmp.ne.s32.totalorder %s87, %s90
      %p96 = scmp.eq.s32.totalorder %s37, 0
      %p97 = por %p95, %p96
      %p98 = scmp.ne.s32.totalorder %s87, %s90
      %p99 = scmp.eq.s32.totalorder %s42, 1
      %p100 = por %p98, %p99
      %p101 = scmp.ne.s32.totalorder %s90, %s91
      %p102 = scmp.eq.s32.totalorder %s42, 0
      %p103 = por %p101, %p102
      %p104 = scmp.ne.s32.totalorder %s90, %s91
      %p105 = scmp.eq.s32.totalorder %s43, 1
      %p106 = por %p104, %p105
      %p108 = scmp.ne.s32.totalorder %s91, %s107
      %p109 = scmp.eq.s32.totalorder %s43, 0
      %p110 = por %p108, %p109
      %s111 = ssub.s32 %s44, %s56
      %p112 = scmp.eq.s32.totalorder %s111, 0
      %s114 = sadd.s32 %s113, 1
      %s115 = scalar_select %p112, %s113, %s114
      %p118 = pneg %p112
      %p119 = scmp.eq.s32.totalorder %s37, 1
      %p120 = por %p118, %p119
      %p121 = scmp.ne.s32.totalorder %s113, %s116
      %p122 = scmp.eq.s32.totalorder %s37, 0
      %p123 = por %p121, %p122
      %p124 = scmp.ne.s32.totalorder %s113, %s116
      %p125 = scmp.eq.s32.totalorder %s42, 1
      %p126 = por %p124, %p125
      %p127 = scmp.ne.s32.totalorder %s116, %s117
      %p128 = scmp.eq.s32.totalorder %s42, 0
      %p129 = por %p127, %p128
      %p130 = scmp.ne.s32.totalorder %s116, %s117
      %p131 = scmp.eq.s32.totalorder %s43, 1
      %p132 = por %p130, %p131
      %p134 = scmp.ne.s32.totalorder %s117, %s133
      %p135 = scmp.eq.s32.totalorder %s43, 0
      %p136 = por %p134, %p135
      %s138 = sadd.s32 %s137, 1
      %p141 = scmp.eq.s32.totalorder %s37, 1
      %p142 = scmp.ne.s32.totalorder %s137, %s139
      %p143 = scmp.eq.s32.totalorder %s37, 0
      %p144 = por %p142, %p143
      %p145 = scmp.ne.s32.totalorder %s137, %s139
      %p146 = scmp.eq.s32.totalorder %s42, 1
      %p147 = por %p145, %p146
      %p148 = scmp.ne.s32.totalorder %s139, %s140
      %p149 = scmp.eq.s32.totalorder %s42, 0
      %p150 = por %p148, %p149
      %p151 = scmp.ne.s32.totalorder %s139, %s140
      %p152 = scmp.eq.s32.totalorder %s43, 1
      %p153 = por %p151, %p152
      %p155 = scmp.ne.s32.totalorder %s140, %s154
      %p156 = scmp.eq.s32.totalorder %s43, 0
      %p157 = por %p155, %p156
      %s159 = sadd.s32 %s158, 1
      %p162 = scmp.eq.s32.totalorder %s37, 1
      %p163 = scmp.ne.s32.totalorder %s158, %s160
      %p164 = scmp.eq.s32.totalorder %s37, 0
      %p165 = por %p163, %p164
      %p166 = scmp.ne.s32.totalorder %s158, %s160
      %p167 = scmp.eq.s32.totalorder %s42, 1
      %p168 = por %p166, %p167
      %p169 = scmp.ne.s32.totalorder %s160, %s161
      %p170 = scmp.eq.s32.totalorder %s42, 0
      %p171 = por %p169, %p170
      %p172 = scmp.ne.s32.totalorder %s160, %s161
      %p173 = scmp.eq.s32.totalorder %s43, 1
      %p174 = por %p172, %p173
      %p176 = scmp.ne.s32.totalorder %s161, %s175
      %p177 = scmp.eq.s32.totalorder %s43, 0
      %p178 = por %p176, %p177
      %s180 = sadd.s32 %s179, 1
      %p183 = scmp.eq.s32.totalorder %s37, 1
      %p184 = scmp.ne.s32.totalorder %s179, %s181
      %p185 = scmp.eq.s32.totalorder %s37, 0
      %p186 = por %p184, %p185
      %p187 = scmp.ne.s32.totalorder %s179, %s181
      %p188 = scmp.eq.s32.totalorder %s42, 1
      %p189 = por %p187, %p188
      %p190 = scmp.ne.s32.totalorder %s181, %s182
      %p191 = scmp.eq.s32.totalorder %s42, 0
      %p192 = por %p190, %p191
      %p193 = scmp.ne.s32.totalorder %s181, %s182
      %p194 = scmp.eq.s32.totalorder %s43, 1
      %p195 = por %p193, %p194
      %p197 = scmp.ne.s32.totalorder %s182, %s196
      %p198 = scmp.eq.s32.totalorder %s43, 0
      %p199 = por %p197, %p198
      %s201 = sadd.s32 %s200, 1
      %p204 = scmp.eq.s32.totalorder %s37, 1
      %p205 = scmp.ne.s32.totalorder %s200, %s202
      %p206 = scmp.eq.s32.totalorder %s37, 0
      %p207 = por %p205, %p206
      %p208 = scmp.ne.s32.totalorder %s200, %s202
      %p209 = scmp.eq.s32.totalorder %s42, 1
      %p210 = por %p208, %p209
      %p211 = scmp.ne.s32.totalorder %s202, %s203
      %p212 = scmp.eq.s32.totalorder %s42, 0
      %p213 = por %p211, %p212
      %p214 = scmp.ne.s32.totalorder %s202, %s203
      %p215 = scmp.eq.s32.totalorder %s43, 1
      %p216 = por %p214, %p215
      %p218 = scmp.ne.s32.totalorder %s203, %s217
      %p219 = scmp.eq.s32.totalorder %s43, 0
      %p220 = por %p218, %p219
      %s222 = sadd.s32 %s221, 1
      %p225 = scmp.eq.s32.totalorder %s37, 1
      %p226 = scmp.ne.s32.totalorder %s221, %s223
      %p227 = scmp.eq.s32.totalorder %s37, 0
      %p228 = por %p226, %p227
      %p229 = scmp.ne.s32.totalorder %s221, %s223
      %p230 = scmp.eq.s32.totalorder %s42, 1
      %p231 = por %p229, %p230
      %p232 = scmp.ne.s32.totalorder %s223, %s224
      %p233 = scmp.eq.s32.totalorder %s42, 0
      %p234 = por %p232, %p233
      %p235 = scmp.ne.s32.totalorder %s223, %s224
      %p236 = scmp.eq.s32.totalorder %s43, 1
      %p237 = por %p235, %p236
      %p239 = scmp.ne.s32.totalorder %s224, %s238
      %p240 = scmp.eq.s32.totalorder %s43, 0
      %p241 = por %p239, %p240
      %s243 = sadd.s32 %s242, 1
      %p246 = scmp.eq.s32.totalorder %s37, 1
      %p247 = scmp.ne.s32.totalorder %s242, %s244
      %p248 = scmp.eq.s32.totalorder %s37, 0
      %p249 = por %p247, %p248
      %p250 = scmp.ne.s32.totalorder %s242, %s244
      %p251 = scmp.eq.s32.totalorder %s42, 1
      %p252 = por %p250, %p251
      %p253 = scmp.ne.s32.totalorder %s244, %s245
      %p254 = scmp.eq.s32.totalorder %s42, 0
      %p255 = por %p253, %p254
      %p256 = scmp.ne.s32.totalorder %s244, %s245
      %p257 = scmp.eq.s32.totalorder %s43, 1
      %p258 = por %p256, %p257
      %p260 = scmp.ne.s32.totalorder %s245, %s259
      %p261 = scmp.eq.s32.totalorder %s43, 0
      %p262 = por %p260, %p261
      %s264 = sadd.s32 %s263, 1
      %p267 = scmp.eq.s32.totalorder %s37, 1
      %p268 = scmp.ne.s32.totalorder %s263, %s265
      %p269 = scmp.eq.s32.totalorder %s37, 0
      %p270 = por %p268, %p269
      %p271 = scmp.ne.s32.totalorder %s263, %s265
      %p272 = scmp.eq.s32.totalorder %s42, 1
      %p273 = por %p271, %p272
      %p274 = scmp.ne.s32.totalorder %s265, %s266
      %p275 = scmp.eq.s32.totalorder %s42, 0
      %p276 = por %p274, %p275
      %p277 = scmp.ne.s32.totalorder %s265, %s266
      %p278 = scmp.eq.s32.totalorder %s43, 1
      %p279 = por %p277, %p278
      %p281 = scmp.ne.s32.totalorder %s266, %s280
      %p282 = scmp.eq.s32.totalorder %s43, 0
      %p283 = por %p281, %p282
      %s285 = sadd.s32 %s284, 1
      %p288 = scmp.eq.s32.totalorder %s37, 1
      %p289 = scmp.ne.s32.totalorder %s284, %s286
      %p290 = scmp.eq.s32.totalorder %s37, 0
      %p291 = por %p289, %p290
      %p292 = scmp.ne.s32.totalorder %s284, %s286
      %p293 = scmp.eq.s32.totalorder %s42, 1
      %p294 = por %p292, %p293
      %p295 = scmp.ne.s32.totalorder %s286, %s287
      %p296 = scmp.eq.s32.totalorder %s42, 0
      %p297 = por %p295, %p296
      %p298 = scmp.ne.s32.totalorder %s286, %s287
      %p299 = scmp.eq.s32.totalorder %s43, 1
      %p300 = por %p298, %p299
      %p302 = scmp.ne.s32.totalorder %s287, %s301
      %p303 = scmp.eq.s32.totalorder %s43, 0
      %p304 = por %p302, %p303
      %s306 = sadd.s32 %s305, 1
      %p309 = scmp.eq.s32.totalorder %s37, 1
      %p310 = scmp.ne.s32.totalorder %s305, %s307
      %p311 = scmp.eq.s32.totalorder %s37, 0
      %p312 = por %p310, %p311
      %p313 = scmp.ne.s32.totalorder %s305, %s307
      %p314 = scmp.eq.s32.totalorder %s42, 1
      %p315 = por %p313, %p314
      %p316 = scmp.ne.s32.totalorder %s307, %s308
      %p317 = scmp.eq.s32.totalorder %s42, 0
      %p318 = por %p316, %p317
      %p319 = scmp.ne.s32.totalorder %s307, %s308
      %p320 = scmp.eq.s32.totalorder %s43, 1
      %p321 = por %p319, %p320
      %p323 = scmp.ne.s32.totalorder %s308, %s322
      %p324 = scmp.eq.s32.totalorder %s43, 0
      %p325 = por %p323, %p324
      %s327 = sadd.s32 %s326, 1
      %p330 = scmp.eq.s32.totalorder %s37, 1
      %p331 = scmp.ne.s32.totalorder %s326, %s328
      %p332 = scmp.eq.s32.totalorder %s37, 0
      %p333 = por %p331, %p332
      %p334 = scmp.ne.s32.totalorder %s326, %s328
      %p335 = scmp.eq.s32.totalorder %s42, 1
      %p336 = por %p334, %p335
      %p337 = scmp.ne.s32.totalorder %s328, %s329
      %p338 = scmp.eq.s32.totalorder %s42, 0
      %p339 = por %p337, %p338
      %p340 = scmp.ne.s32.totalorder %s328, %s329
      %p341 = scmp.eq.s32.totalorder %s43, 1
      %p342 = por %p340, %p341
      %p344 = scmp.ne.s32.totalorder %s329, %s343
      %p345 = scmp.eq.s32.totalorder %s43, 0
      %p346 = por %p344, %p345
      %s348 = sadd.s32 %s347, 1
      %p351 = scmp.eq.s32.totalorder %s37, 1
      %p352 = scmp.ne.s32.totalorder %s347, %s349
      %p353 = scmp.eq.s32.totalorder %s37, 0
      %p354 = por %p352, %p353
      %p355 = scmp.ne.s32.totalorder %s347, %s349
      %p356 = scmp.eq.s32.totalorder %s42, 1
      %p357 = por %p355, %p356
      %p358 = scmp.ne.s32.totalorder %s349, %s350
      %p359 = scmp.eq.s32.totalorder %s42, 0
      %p360 = por %p358, %p359
      %p361 = scmp.ne.s32.totalorder %s349, %s350
      %p362 = scmp.eq.s32.totalorder %s43, 1
      %p363 = por %p361, %p362
      %p365 = scmp.ne.s32.totalorder %s350, %s364
      %p366 = scmp.eq.s32.totalorder %s43, 0
      %p367 = por %p365, %p366
      %s369 = sadd.s32 %s368, 1
      %p372 = scmp.eq.s32.totalorder %s37, 1
      %p373 = scmp.ne.s32.totalorder %s368, %s370
      %p374 = scmp.eq.s32.totalorder %s37, 0
      %p375 = por %p373, %p374
      %p376 = scmp.ne.s32.totalorder %s368, %s370
      %p377 = scmp.eq.s32.totalorder %s42, 1
      %p378 = por %p376, %p377
      %p379 = scmp.ne.s32.totalorder %s370, %s371
      %p380 = scmp.eq.s32.totalorder %s42, 0
      %p381 = por %p379, %p380
      %p382 = scmp.ne.s32.totalorder %s370, %s371
      %p383 = scmp.eq.s32.totalorder %s43, 1
      %p384 = por %p382, %p383
      %p386 = scmp.ne.s32.totalorder %s371, %s385
      %p387 = scmp.eq.s32.totalorder %s43, 0
      %p388 = por %p386, %p387
      %s390 = sadd.s32 %s389, 1
      %p393 = scmp.eq.s32.totalorder %s37, 1
      %p394 = scmp.ne.s32.totalorder %s389, %s391
      %p395 = scmp.eq.s32.totalorder %s37, 0
      %p396 = por %p394, %p395
      %p397 = scmp.ne.s32.totalorder %s389, %s391
      %p398 = scmp.eq.s32.totalorder %s42, 1
      %p399 = por %p397, %p398
      %p400 = scmp.ne.s32.totalorder %s391, %s392
      %p401 = scmp.eq.s32.totalorder %s42, 0
      %p402 = por %p400, %p401
      %p403 = scmp.ne.s32.totalorder %s391, %s392
      %p404 = scmp.eq.s32.totalorder %s43, 1
      %p405 = por %p403, %p404
      %p407 = scmp.ne.s32.totalorder %s392, %s406
      %p408 = scmp.eq.s32.totalorder %s43, 0
      %p409 = por %p407, %p408
      %s411 = sadd.s32 %s410, 1
      %p414 = scmp.eq.s32.totalorder %s37, 1
      %p415 = scmp.ne.s32.totalorder %s410, %s412
      %p416 = scmp.eq.s32.totalorder %s37, 0
      %p417 = por %p415, %p416
      %p418 = scmp.ne.s32.totalorder %s410, %s412
      %p419 = scmp.eq.s32.totalorder %s42, 1
      %p420 = por %p418, %p419
      %p421 = scmp.ne.s32.totalorder %s412, %s413
      %p422 = scmp.eq.s32.totalorder %s42, 0
      %p423 = por %p421, %p422
      %p424 = scmp.ne.s32.totalorder %s412, %s413
      %p425 = scmp.eq.s32.totalorder %s43, 1
      %p426 = por %p424, %p425
      %p428 = scmp.ne.s32.totalorder %s413, %s427
      %p429 = scmp.eq.s32.totalorder %s43, 0
      %p430 = por %p428, %p429
      %s432 = sadd.s32 %s431, 1
      %p435 = scmp.eq.s32.totalorder %s37, 1
      %p436 = scmp.ne.s32.totalorder %s431, %s433
      %p437 = scmp.eq.s32.totalorder %s37, 0
      %p438 = por %p436, %p437
      %p439 = scmp.ne.s32.totalorder %s431, %s433
      %p440 = scmp.eq.s32.totalorder %s42, 1
      %p441 = por %p439, %p440
      %p442 = scmp.ne.s32.totalorder %s433, %s434
      %p443 = scmp.eq.s32.totalorder %s42, 0
      %p444 = por %p442, %p443
      %p445 = scmp.ne.s32.totalorder %s433, %s434
      %p446 = scmp.eq.s32.totalorder %s43, 1
      %p447 = por %p445, %p446
      %p449 = scmp.ne.s32.totalorder %s434, %s448
      %p450 = scmp.eq.s32.totalorder %s43, 0
      %p451 = por %p449, %p450
      %s453 = sadd.s32 %s452, 1
      %p456 = scmp.eq.s32.totalorder %s37, 1
      %p457 = scmp.ne.s32.totalorder %s452, %s454
      %p458 = scmp.eq.s32.totalorder %s37, 0
      %p459 = por %p457, %p458
      %p460 = scmp.ne.s32.totalorder %s452, %s454
      %p461 = scmp.eq.s32.totalorder %s42, 1
      %p462 = por %p460, %p461
      %p463 = scmp.ne.s32.totalorder %s454, %s455
      %p464 = scmp.eq.s32.totalorder %s42, 0
      %p465 = por %p463, %p464
      %p466 = scmp.ne.s32.totalorder %s454, %s455
      %p467 = scmp.eq.s32.totalorder %s43, 1
      %p468 = por %p466, %p467
      %p470 = scmp.ne.s32.totalorder %s455, %s469
      %p471 = scmp.eq.s32.totalorder %s43, 0
      %p472 = por %p470, %p471
      %s474 = sadd.s32 %s473, 1
      %p477 = scmp.eq.s32.totalorder %s37, 1
      %p478 = scmp.ne.s32.totalorder %s473, %s475
      %p479 = scmp.eq.s32.totalorder %s37, 0
      %p480 = por %p478, %p479
      %p481 = scmp.ne.s32.totalorder %s473, %s475
      %p482 = scmp.eq.s32.totalorder %s42, 1
      %p483 = por %p481, %p482
      %p484 = scmp.ne.s32.totalorder %s475, %s476
      %p485 = scmp.eq.s32.totalorder %s42, 0
      %p486 = por %p484, %p485
      %p487 = scmp.ne.s32.totalorder %s475, %s476
      %p488 = scmp.eq.s32.totalorder %s43, 1
      %p489 = por %p487, %p488
      %p491 = scmp.ne.s32.totalorder %s476, %s490
      %p492 = scmp.eq.s32.totalorder %s43, 0
      %p493 = por %p491, %p492
      %s495 = sadd.s32 %s494, 1
      %p498 = scmp.eq.s32.totalorder %s37, 1
      %p499 = scmp.ne.s32.totalorder %s494, %s496
      %p500 = scmp.eq.s32.totalorder %s37, 0
      %p501 = por %p499, %p500
      %p502 = scmp.ne.s32.totalorder %s494, %s496
      %p503 = scmp.eq.s32.totalorder %s42, 1
      %p504 = por %p502, %p503
      %p505 = scmp.ne.s32.totalorder %s496, %s497
      %p506 = scmp.eq.s32.totalorder %s42, 0
      %p507 = por %p505, %p506
      %p508 = scmp.ne.s32.totalorder %s496, %s497
      %p509 = scmp.eq.s32.totalorder %s43, 1
      %p510 = por %p508, %p509
      %p512 = scmp.ne.s32.totalorder %s497, %s511
      %p513 = scmp.eq.s32.totalorder %s43, 0
      %p514 = por %p512, %p513
      %s515 = ssub.s32 %s44, %s56
      %s516 = ssub.s32 %s45, %s52
      %s517 = sor.u32 %s515, %s516
      %p518 = scmp.eq.s32.totalorder %s517, 0
      %s520 = sadd.s32 %s519, 1
      %s521 = scalar_select %p518, %s519, %s520
      %p524 = pneg %p518
      %p525 = scmp.eq.s32.totalorder %s37, 1
      %p526 = por %p524, %p525
      %p527 = scmp.ne.s32.totalorder %s519, %s522
      %p528 = scmp.eq.s32.totalorder %s37, 0
      %p529 = por %p527, %p528
      %p530 = scmp.ne.s32.totalorder %s519, %s522
      %p531 = scmp.eq.s32.totalorder %s42, 1
      %p532 = por %p530, %p531
      %p533 = scmp.ne.s32.totalorder %s522, %s523
      %p534 = scmp.eq.s32.totalorder %s42, 0
      %p535 = por %p533, %p534
      %p536 = scmp.ne.s32.totalorder %s522, %s523
      %p537 = scmp.eq.s32.totalorder %s43, 1
      %p538 = por %p536, %p537
      %p540 = scmp.ne.s32.totalorder %s523, %s539
      %p541 = scmp.eq.s32.totalorder %s43, 0
      %p542 = por %p540, %p541
      %p543 = scmp.le.s32.totalorder 1, %s37
      %p544 = scmp.lt.s32.totalorder %s37, 3
      %p545 = pnand %p543, %p544
      %p546 = pneg %p545
      // Predicated region
      $region9: #{tpu_custom_call.1} parent=5 // pred_check
        _
      $region10: #{tpu_custom_call.1} parent=5 // pred_check_branch
        %548 = sbr.rel (%p545) target = $region12
      $region11: #{tpu_custom_call.1} parent=5 // pred_region
        %s549 = ssub.s32 %s37, 1
        // Predicated region
        $region13: #{tpu_custom_call.1} parent=11 // pred_check
          %p550 = pneg %p150
        $region14: #{tpu_custom_call.1} parent=11 // pred_check_branch
          %552 = sbr.rel (%p550) target = $region16
        $region15: #{tpu_custom_call.1} parent=11 // pred_region
          %s554 = ssub.s32 16, 16
          %555 = vsyncadd [#allocation5], %s554
          %s557 = sshll.u32 [#allocation4], 4
          %s558 = int_to_ptr.vmem [resolvable:$true] %s557
          %560 = dma.hbm_to_vmem [thread:$0]  %s3, 16, %s558, [#allocation5]
        $region16: #{tpu_custom_call.1} parent=11 // pred_fallthru
          _
        // Predicated region
        $region17: #{tpu_custom_call.1} parent=11 // pred_check
          %p561 = pneg %p171
        $region18: #{tpu_custom_call.1} parent=11 // pred_check_branch
          %563 = sbr.rel (%p561) target = $region20
        $region19: #{tpu_custom_call.1} parent=11 // pred_region
          %s565 = ssub.s32 16, 16
          %566 = vsyncadd [#allocation8], %s565
          %s568 = sshll.u32 [#allocation7], 4
          %s569 = int_to_ptr.vmem [resolvable:$true] %s568
          %571 = dma.hbm_to_vmem [thread:$0]  %s4, 16, %s569, [#allocation8]
        $region20: #{tpu_custom_call.1} parent=11 // pred_fallthru
          _
        // Predicated region
        $region21: #{tpu_custom_call.1} parent=11 // pred_check
          %p572 = pneg %p192
        $region22: #{tpu_custom_call.1} parent=11 // pred_check_branch
          %574 = sbr.rel (%p572) target = $region24
        $region23: #{tpu_custom_call.1} parent=11 // pred_region
          %s576 = ssub.s32 16, 16
          %577 = vsyncadd [#allocation8], %s576
          %s579 = sshll.u32 [#allocation9], 4
          %s580 = int_to_ptr.vmem [resolvable:$true] %s579
          %582 = dma.hbm_to_vmem [thread:$0]  %s5, 16, %s580, [#allocation8]
        $region24: #{tpu_custom_call.1} parent=11 // pred_fallthru
          _
        // Predicated region
        $region25: #{tpu_custom_call.1} parent=11 // pred_check
          %p583 = pneg %p213
        $region26: #{tpu_custom_call.1} parent=11 // pred_check_branch
          %585 = sbr.rel (%p583) target = $region28
        $region27: #{tpu_custom_call.1} parent=11 // pred_region
          %s587 = ssub.s32 16, 16
          %588 = vsyncadd [#allocation11], %s587
          %s590 = sshll.u32 [#allocation10], 4
          %s591 = int_to_ptr.vmem [resolvable:$true] %s590
          %593 = dma.hbm_to_vmem [thread:$0]  %s6, 16, %s591, [#allocation11]
        $region28: #{tpu_custom_call.1} parent=11 // pred_fallthru
          _
        // Predicated region
        $region29: #{tpu_custom_call.1} parent=11 // pred_check
          %p594 = pneg %p234
        $region30: #{tpu_custom_call.1} parent=11 // pred_check_branch
          %596 = sbr.rel (%p594) target = $region32
        $region31: #{tpu_custom_call.1} parent=11 // pred_region
          %s598 = ssub.s32 16, 16
          %599 = vsyncadd [#allocation11], %s598
          %s601 = sshll.u32 [#allocation12], 4
          %s602 = int_to_ptr.vmem [resolvable:$true] %s601
          %604 = dma.hbm_to_vmem [thread:$0]  %s7, 16, %s602, [#allocation11]
        $region32: #{tpu_custom_call.1} parent=11 // pred_fallthru
          _
        // Predicated region
        $region33: #{tpu_custom_call.1} parent=11 // pred_check
          %p605 = pneg %p255
        $region34: #{tpu_custom_call.1} parent=11 // pred_check_branch
          %607 = sbr.rel (%p605) target = $region36
        $region35: #{tpu_custom_call.1} parent=11 // pred_region
          %s609 = ssub.s32 16, 16
          %610 = vsyncadd [#allocation14], %s609
          %s612 = sshll.u32 [#allocation13], 4
          %s613 = int_to_ptr.vmem [resolvable:$true] %s612
          %615 = dma.hbm_to_vmem [thread:$0]  %s8, 16, %s613, [#allocation14]
        $region36: #{tpu_custom_call.1} parent=11 // pred_fallthru
          _
        // Predicated region
        $region37: #{tpu_custom_call.1} parent=11 // pred_check
          %p616 = pneg %p276
        $region38: #{tpu_custom_call.1} parent=11 // pred_check_branch
          %618 = sbr.rel (%p616) target = $region40
        $region39: #{tpu_custom_call.1} parent=11 // pred_region
          _
        $region40: #{tpu_custom_call.1} parent=11 // pred_fallthru
          _
        // Predicated region
        $region41: #{tpu_custom_call.1} parent=11 // pred_check
          %p619 = pneg %p297
        $region42: #{tpu_custom_call.1} parent=11 // pred_check_branch
          %621 = sbr.rel (%p619) target = $region44
        $region43: #{tpu_custom_call.1} parent=11 // pred_region
          %s623 = ssub.s32 16, 16
          %624 = vsyncadd [#allocation14], %s623
          %s626 = sshll.u32 [#allocation15], 4
          %s627 = int_to_ptr.vmem [resolvable:$true] %s626
          %629 = dma.hbm_to_vmem [thread:$0]  %s10, 16, %s627, [#allocation14]
        $region44: #{tpu_custom_call.1} parent=11 // pred_fallthru
          _
        // Predicated region
        $region45: #{tpu_custom_call.1} parent=11 // pred_check
          %p630 = pneg %p318
        $region46: #{tpu_custom_call.1} parent=11 // pred_check_branch
          %632 = sbr.rel (%p630) target = $region48
        $region47: #{tpu_custom_call.1} parent=11 // pred_region
          %s634 = ssub.s32 256, 256
          %635 = vsyncadd [#allocation17], %s634
          %s636 = sshll.u32 [#allocation16], 4
          %s637 = int_to_ptr.vmem [resolvable:$true] %s636
          %642 = dma.hbm_to_vmem [thread:$0]  %s11, 256, %s637, [#allocation17], 64, 64, 4
        $region48: #{tpu_custom_call.1} parent=11 // pred_fallthru
          _
        // Predicated region
        $region49: #{tpu_custom_call.1} parent=11 // pred_check
          %p643 = pneg %p339
        $region50: #{tpu_custom_call.1} parent=11 // pred_check_branch
          %645 = sbr.rel (%p643) target = $region52
        $region51: #{tpu_custom_call.1} parent=11 // pred_region
          %s647 = ssub.s32 16, 16
          %648 = vsyncadd [#allocation17], %s647
          %s650 = sshll.u32 [#allocation18], 4
          %s651 = int_to_ptr.vmem [resolvable:$true] %s650
          %653 = dma.hbm_to_vmem [thread:$0]  %s12, 16, %s651, [#allocation17]
        $region52: #{tpu_custom_call.1} parent=11 // pred_fallthru
          _
        // Predicated region
        $region53: #{tpu_custom_call.1} parent=11 // pred_check
          %p654 = pneg %p360
        $region54: #{tpu_custom_call.1} parent=11 // pred_check_branch
          %656 = sbr.rel (%p654) target = $region56
        $region55: #{tpu_custom_call.1} parent=11 // pred_region
          _
        $region56: #{tpu_custom_call.1} parent=11 // pred_fallthru
          _
        // Predicated region
        $region57: #{tpu_custom_call.1} parent=11 // pred_check
          %p657 = pneg %p381
        $region58: #{tpu_custom_call.1} parent=11 // pred_check_branch
          %659 = sbr.rel (%p657) target = $region60
        $region59: #{tpu_custom_call.1} parent=11 // pred_region
          %s661 = ssub.s32 16, 16
          %662 = vsyncadd [#allocation20], %s661
          %s664 = sshll.u32 [#allocation19], 4
          %s665 = int_to_ptr.vmem [resolvable:$true] %s664
          %667 = dma.hbm_to_vmem [thread:$0]  %s14, 16, %s665, [#allocation20]
        $region60: #{tpu_custom_call.1} parent=11 // pred_fallthru
          _
        // Predicated region
        $region61: #{tpu_custom_call.1} parent=11 // pred_check
          %p668 = pneg %p402
        $region62: #{tpu_custom_call.1} parent=11 // pred_check_branch
          %670 = sbr.rel (%p668) target = $region64
        $region63: #{tpu_custom_call.1} parent=11 // pred_region
          %s672 = ssub.s32 256, 256
          %673 = vsyncadd [#allocation20], %s672
          %s674 = sshll.u32 [#allocation21], 4
          %s675 = int_to_ptr.vmem [resolvable:$true] %s674
          %680 = dma.hbm_to_vmem [thread:$0]  %s15, 256, %s675, [#allocation20], 64, 64, 4
        $region64: #{tpu_custom_call.1} parent=11 // pred_fallthru
          _
        // Predicated region
        $region65: #{tpu_custom_call.1} parent=11 // pred_check
          %p681 = pneg %p423
        $region66: #{tpu_custom_call.1} parent=11 // pred_check_branch
          %683 = sbr.rel (%p681) target = $region68
        $region67: #{tpu_custom_call.1} parent=11 // pred_region
          %s685 = ssub.s32 16, 16
          %686 = vsyncadd [#allocation23], %s685
          %s688 = sshll.u32 [#allocation22], 4
          %s689 = int_to_ptr.vmem [resolvable:$true] %s688
          %691 = dma.hbm_to_vmem [thread:$0]  %s16, 16, %s689, [#allocation23]
        $region68: #{tpu_custom_call.1} parent=11 // pred_fallthru
          _
        // Predicated region
        $region69: #{tpu_custom_call.1} parent=11 // pred_check
          %p692 = pneg %p444
        $region70: #{tpu_custom_call.1} parent=11 // pred_check_branch
          %694 = sbr.rel (%p692) target = $region72
        $region71: #{tpu_custom_call.1} parent=11 // pred_region
          _
        $region72: #{tpu_custom_call.1} parent=11 // pred_fallthru
          _
        // Predicated region
        $region73: #{tpu_custom_call.1} parent=11 // pred_check
          %p695 = pneg %p465
        $region74: #{tpu_custom_call.1} parent=11 // pred_check_branch
          %697 = sbr.rel (%p695) target = $region76
        $region75: #{tpu_custom_call.1} parent=11 // pred_region
          _
        $region76: #{tpu_custom_call.1} parent=11 // pred_fallthru
          _
        // Predicated region
        $region77: #{tpu_custom_call.1} parent=11 // pred_check
          %p698 = pneg %p486
        $region78: #{tpu_custom_call.1} parent=11 // pred_check_branch
          %700 = sbr.rel (%p698) target = $region80
        $region79: #{tpu_custom_call.1} parent=11 // pred_region
          _
        $region80: #{tpu_custom_call.1} parent=11 // pred_fallthru
          _
        // Predicated region
        $region81: #{tpu_custom_call.1} parent=11 // pred_check
          %p701 = pneg %p507
        $region82: #{tpu_custom_call.1} parent=11 // pred_check_branch
          %703 = sbr.rel (%p701) target = $region84
        $region83: #{tpu_custom_call.1} parent=11 // pred_region
          _
        $region84: #{tpu_custom_call.1} parent=11 // pred_fallthru
          _
      $region12: #{tpu_custom_call.1} parent=5 // pred_fallthru
        _
      %p704 = scmp.lt.s32.totalorder %s37, 2
      // Predicated region
      $region85: #{tpu_custom_call.1} parent=5 // pred_check
        %p705 = pneg %p704
      $region86: #{tpu_custom_call.1} parent=5 // pred_check_branch
        %707 = sbr.rel (%p705) target = $region88
      $region87: #{tpu_custom_call.1} parent=5 // pred_region
        // Predicated region
        $region89: #{tpu_custom_call.1} parent=87 // pred_check
          %p708 = pneg %p71
        $region90: #{tpu_custom_call.1} parent=87 // pred_check_branch
          %710 = sbr.rel (%p708) target = $region92
        $region91: #{tpu_custom_call.1} parent=87 // pred_region
          %p711 = scmp.lt.s32.totalorder %s44, 1
          %s712 = scalar_select %p711, %s44, 1
          %p713 = scmp.lt.s32.totalorder %s45, 0
          %s714 = scalar_select %p713, %s45, 0
          %s715 = sadd.s32 %s714, %s712
          %s716 = smul.addr %s715, 8
          %s717 = scalar_lea.vmem %s0, %s716
        $region92: #{tpu_custom_call.1} parent=87 // pred_fallthru
          _
        // Predicated region
        $region93: #{tpu_custom_call.1} parent=87 // pred_check
          %p718 = pneg %p97
        $region94: #{tpu_custom_call.1} parent=87 // pred_check_branch
          %720 = sbr.rel (%p718) target = $region96
        $region95: #{tpu_custom_call.1} parent=87 // pred_region
          %p721 = scmp.lt.s32.totalorder %s44, 1
          %s722 = scalar_select %p721, %s44, 1
          %s723 = smul.addr %s722, 4
          %s724 = smul.addr %s723, 4
          %s725 = scalar_lea.vmem %s1, %s724
        $region96: #{tpu_custom_call.1} parent=87 // pred_fallthru
          _
        // Predicated region
        $region97: #{tpu_custom_call.1} parent=87 // pred_check
          %p726 = pneg %p123
        $region98: #{tpu_custom_call.1} parent=87 // pred_check_branch
          %728 = sbr.rel (%p726) target = $region100
        $region99: #{tpu_custom_call.1} parent=87 // pred_region
          %p729 = scmp.lt.s32.totalorder %s44, 1
          %s730 = scalar_select %p729, %s44, 1
          %s731 = smul.addr %s730, 4
          %s732 = smul.addr %s731, 4
          %s733 = scalar_lea.vmem %s2, %s732
        $region100: #{tpu_custom_call.1} parent=87 // pred_fallthru
          _
      $region88: #{tpu_custom_call.1} parent=5 // pred_fallthru
        _
      %p734 = scmp.le.s32.totalorder 1, %s37
      %p735 = scmp.lt.s32.totalorder %s37, 3
      %p736 = pnand %p734, %p735
      %p737 = pneg %p736
      // Predicated region
      $region101: #{tpu_custom_call.1} parent=5 // pred_check
        _
      $region102: #{tpu_custom_call.1} parent=5 // pred_check_branch
        %739 = sbr.rel (%p736) target = $region104
      $region103: #{tpu_custom_call.1} parent=5 // pred_region
        %s740 = ssub.s32 %s37, 1
        // Predicated region
        $region105: #{tpu_custom_call.1} parent=103 // pred_check
          %p741 = pneg %p150
        $region106: #{tpu_custom_call.1} parent=103 // pred_check_branch
          %743 = sbr.rel (%p741) target = $region108
        $region107: #{tpu_custom_call.1} parent=103 // pred_region
          %744 = dma.done [#allocation5], 16
        $region108: #{tpu_custom_call.1} parent=103 // pred_fallthru
          _
        // Predicated region
        $region109: #{tpu_custom_call.1} parent=103 // pred_check
          %p745 = pneg %p171
        $region110: #{tpu_custom_call.1} parent=103 // pred_check_branch
          %747 = sbr.rel (%p745) target = $region112
        $region111: #{tpu_custom_call.1} parent=103 // pred_region
          %748 = dma.done [#allocation8], 16
        $region112: #{tpu_custom_call.1} parent=103 // pred_fallthru
          _
        // Predicated region
        $region113: #{tpu_custom_call.1} parent=103 // pred_check
          %p749 = pneg %p192
        $region114: #{tpu_custom_call.1} parent=103 // pred_check_branch
          %751 = sbr.rel (%p749) target = $region116
        $region115: #{tpu_custom_call.1} parent=103 // pred_region
          %752 = dma.done [#allocation8], 16
        $region116: #{tpu_custom_call.1} parent=103 // pred_fallthru
          _
        // Predicated region
        $region117: #{tpu_custom_call.1} parent=103 // pred_check
          %p753 = pneg %p213
        $region118: #{tpu_custom_call.1} parent=103 // pred_check_branch
          %755 = sbr.rel (%p753) target = $region120
        $region119: #{tpu_custom_call.1} parent=103 // pred_region
          %756 = dma.done [#allocation11], 16
        $region120: #{tpu_custom_call.1} parent=103 // pred_fallthru
          _
        // Predicated region
        $region121: #{tpu_custom_call.1} parent=103 // pred_check
          %p757 = pneg %p234
        $region122: #{tpu_custom_call.1} parent=103 // pred_check_branch
          %759 = sbr.rel (%p757) target = $region124
        $region123: #{tpu_custom_call.1} parent=103 // pred_region
          %760 = dma.done [#allocation11], 16
        $region124: #{tpu_custom_call.1} parent=103 // pred_fallthru
          _
        // Predicated region
        $region125: #{tpu_custom_call.1} parent=103 // pred_check
          %p761 = pneg %p255
        $region126: #{tpu_custom_call.1} parent=103 // pred_check_branch
          %763 = sbr.rel (%p761) target = $region128
        $region127: #{tpu_custom_call.1} parent=103 // pred_region
          %764 = dma.done [#allocation14], 16
        $region128: #{tpu_custom_call.1} parent=103 // pred_fallthru
          _
        // Predicated region
        $region129: #{tpu_custom_call.1} parent=103 // pred_check
          %p765 = pneg %p297
        $region130: #{tpu_custom_call.1} parent=103 // pred_check_branch
          %767 = sbr.rel (%p765) target = $region132
        $region131: #{tpu_custom_call.1} parent=103 // pred_region
          %768 = dma.done [#allocation14], 16
        $region132: #{tpu_custom_call.1} parent=103 // pred_fallthru
          _
        // Predicated region
        $region133: #{tpu_custom_call.1} parent=103 // pred_check
          %p769 = pneg %p318
        $region134: #{tpu_custom_call.1} parent=103 // pred_check_branch
          %771 = sbr.rel (%p769) target = $region136
        $region135: #{tpu_custom_call.1} parent=103 // pred_region
          %772 = dma.done [#allocation17], 256
        $region136: #{tpu_custom_call.1} parent=103 // pred_fallthru
          _
        // Predicated region
        $region137: #{tpu_custom_call.1} parent=103 // pred_check
          %p773 = pneg %p339
        $region138: #{tpu_custom_call.1} parent=103 // pred_check_branch
          %775 = sbr.rel (%p773) target = $region140
        $region139: #{tpu_custom_call.1} parent=103 // pred_region
          %776 = dma.done [#allocation17], 16
        $region140: #{tpu_custom_call.1} parent=103 // pred_fallthru
          _
        // Predicated region
        $region141: #{tpu_custom_call.1} parent=103 // pred_check
          %p777 = pneg %p381
        $region142: #{tpu_custom_call.1} parent=103 // pred_check_branch
          %779 = sbr.rel (%p777) target = $region144
        $region143: #{tpu_custom_call.1} parent=103 // pred_region
          %780 = dma.done [#allocation20], 16
        $region144: #{tpu_custom_call.1} parent=103 // pred_fallthru
          _
        // Predicated region
        $region145: #{tpu_custom_call.1} parent=103 // pred_check
          %p781 = pneg %p402
        $region146: #{tpu_custom_call.1} parent=103 // pred_check_branch
          %783 = sbr.rel (%p781) target = $region148
        $region147: #{tpu_custom_call.1} parent=103 // pred_region
          %784 = dma.done [#allocation20], 256
        $region148: #{tpu_custom_call.1} parent=103 // pred_fallthru
          _
        // Predicated region
        $region149: #{tpu_custom_call.1} parent=103 // pred_check
          %p785 = pneg %p423
        $region150: #{tpu_custom_call.1} parent=103 // pred_check_branch
          %787 = sbr.rel (%p785) target = $region152
        $region151: #{tpu_custom_call.1} parent=103 // pred_region
          %788 = dma.done [#allocation23], 16
        $region152: #{tpu_custom_call.1} parent=103 // pred_fallthru
          _
        %p789 = scmp.lt.s32.totalorder %s46, 1
        %s790 = scalar_select %p789, %s46, 1
        %p791 = scmp.lt.s32.totalorder %s47, 0
        %s792 = scalar_select %p791, %s47, 0
        %s793 = sadd.s32 %s792, %s790
        %s794 = smul.addr %s793, 8
        %s795 = scalar_lea.vmem %s0, %s794
        %p796 = pneg %p77
        %p797 = pneg %p74
        %p798 = scmp.lt.s32.totalorder %s46, 1
        %s799 = scalar_select %p798, %s46, 1
        %s800 = smul.addr %s799, 4
        %s801 = smul.addr %s800, 4
        %s802 = scalar_lea.vmem %s1, %s801
        %p803 = pneg %p103
        %p804 = pneg %p100
        %p805 = scmp.lt.s32.totalorder %s46, 1
        %s806 = scalar_select %p805, %s46, 1
        %s807 = smul.addr %s806, 4
        %s808 = smul.addr %s807, 4
        %s809 = scalar_lea.vmem %s2, %s808
        %p810 = pneg %p129
        %p811 = pneg %p126
        %p812 = pneg %p150
        %p813 = pneg %p147
        %p814 = pneg %p171
        %p815 = pneg %p168
        %p816 = pneg %p192
        %p817 = pneg %p189
        %p818 = pneg %p213
        %p819 = pneg %p210
        %p820 = pneg %p234
        %p821 = pneg %p231
        %p822 = pneg %p255
        %p823 = pneg %p252
        %p824 = pneg %p276
        %p825 = pneg %p273
        %p826 = pneg %p297
        %p827 = pneg %p294
        %p828 = pneg %p318
        %p829 = pneg %p315
        %p830 = pneg %p339
        %p831 = pneg %p336
        %p832 = pneg %p360
        %p833 = pneg %p357
        %p834 = pneg %p381
        %p835 = pneg %p378
        %p836 = pneg %p402
        %p837 = pneg %p399
        %p838 = pneg %p423
        %p839 = pneg %p420
        %p840 = pneg %p444
        %p841 = pneg %p441
        %p842 = pneg %p465
        %p843 = pneg %p462
        %p844 = pneg %p486
        %p845 = pneg %p483
        %p846 = pneg %p507
        %p847 = pneg %p504
        %p848 = pneg %p535
        %p849 = pneg %p532
        %s850 = sand.u32 %s522, 1
        %s851 = scalar_lea.sflag [#allocation6], %s850
        %s852 = sand.u32 %s522, 1
        %s853 = smul.addr %s852, 8
        %s854 = scalar_lea.vmem [#allocation24], %s853
        %p855 = scmp.lt.s32.totalorder %s46, 1
        %s856 = scalar_select %p855, %s46, 1
        %p857 = scmp.lt.s32.totalorder %s47, 0
        %s858 = scalar_select %p857, %s47, 0
        %s859 = sadd.s32 %s858, %s856
        %s860 = smul.addr %s859, 8
        %s861 = scalar_lea.vmem %s0, %s860
        %p862 = scmp.lt.s32.totalorder %s46, 1
        %s863 = scalar_select %p862, %s46, 1
        %s864 = smul.addr %s863, 4
        %s865 = smul.addr %s864, 4
        %s866 = scalar_lea.vmem %s1, %s865
        %p867 = scmp.lt.s32.totalorder %s46, 1
        %s868 = scalar_select %p867, %s46, 1
        %s869 = smul.addr %s868, 4
        %s870 = smul.addr %s869, 4
        %s871 = scalar_lea.vmem %s2, %s870
        %v873 = vld [vmem:[%s861] sm:$0xff]
        %v874 = vld [vmem:[#allocation4] sm:$0x1]
        %v875 = vld [vmem:[#allocation7] sm:$0x1]
        %vm876 = vcmask 261120
        %v877 = vsel %vm876, %v873, 0.0
        %878 = vadd.xlane.f32.xlu0 %v877
        %v879 = vpop.xlane.xlu0 %878
        %v880 = vrcp.pop 32.0
        %v881 = vmul.f32 %v879, %v880
        %v882 = vsub.f32 %v873, %v881
        %v883 = vmul.f32 %v882, %v882
        %v884 = vsel %vm876, %v883, 0.0
        %885 = vadd.xlane.f32.xlu0 %v884
        %v886 = vpop.xlane.xlu0 %885
        %v887 = vmul.f32 %v886, %v880
        %v888 = vadd.f32 %v887, 1e-05
        %v889 = vrsqrt.pop %v888
        %v890 = vmul.f32 %v882, %v889
        %v892 = vlaneseq
        %v893 = vshrl.u32 %v892, 7
        %v894 = vsub.s32 0, %v893
        %v895 = vrot.slane %v874, %v894
        %v897 = vmul.f32 %v890, %v895
        %v899 = vlaneseq
        %v900 = vshrl.u32 %v899, 7
        %v901 = vsub.s32 0, %v900
        %v902 = vrot.slane %v875, %v901
        %v904 = vadd.f32 %v897, %v902
        %v905 = vpack.c.bf16 %v904, %v904
        %v906 = vld [vmem:[%s9] sm:$0xf]
        %v907 = vld [vmem:[%s9 + $0x4] sm:$0xf]
        %v908 = vld [vmem:[%s9 + $0x8] sm:$0xf]
        %v909 = vld [vmem:[%s9 + $0xc] sm:$0xf]
        %v910 = vld [vmem:[#allocation15] sm:$0x1]
        %v912 = vlaneseq
        %v913 = vshrl.u32 %v912, 7
        %v914 = vsub.s32 0, %v913
        %v915 = vrot.slane %v910, %v914
        %v921 = vunpack.c.l.b16 %v906
        %v922 = vunpack.c.l.b16 %v907
        %v923 = vunpack.c.l.b16 %v908
        %v924 = vunpack.c.l.b16 %v909
        %v925 = vpack.c.b16 %v922, %v921
        %v926 = vpack.c.b16 %v924, %v923
        %v930 = vsel %vm876, %v905, 0
        %932 = vmatprep.subr.bf16.mxu0 0
        %933 = vmatpush1.bf16.msra.mxu0 %v925
        %934 = vmatprep.subr.bf16.mxu0 0
        %935 = vmatpush1.bf16.msra.mxu0 %v926
        %936 = vmatprep.subr.bf16.mxu0 0
        %937 = vmatpush1.bf16.msra.mxu0 0
        %938 = vmatprep.subr.bf16.mxu0 0
        %939 = vmatpush1.bf16.msra.mxu0 0
        %940 = vmatprep.subr.bf16.mxu0 0
        %941 = vmatpush1.bf16.msra.mxu0 0
        %942 = vmatprep.subr.bf16.mxu0 0
        %943 = vmatpush1.bf16.msra.mxu0 0
        %944 = vmatprep.subr.bf16.mxu0 0
        %945 = vmatpush1.bf16.msra.mxu0 0
        %946 = vmatprep.subr.bf16.mxu0 0
        %947 = vmatpush1.bf16.msra.mxu0 0
        %948 = vmatprep.subr.bf16.mxu0 0
        %949 = vmatpush1.bf16.msra.mxu0 0
        %950 = vmatprep.subr.bf16.mxu0 0
        %951 = vmatpush1.bf16.msra.mxu0 0
        %952 = vmatprep.subr.bf16.mxu0 0
        %953 = vmatpush1.bf16.msra.mxu0 0
        %954 = vmatprep.subr.bf16.mxu0 0
        %955 = vmatpush1.bf16.msra.mxu0 0
        %956 = vmatprep.subr.bf16.mxu0 0
        %957 = vmatpush1.bf16.msra.mxu0 0
        %958 = vmatprep.subr.bf16.mxu0 0
        %959 = vmatpush1.bf16.msra.mxu0 0
        %960 = vmatprep.subr.bf16.mxu0 0
        %961 = vmatpush1.bf16.msra.mxu0 0
        %962 = vmatprep.subr.bf16.mxu0 0
        %963 = vmatpush1.bf16.msra.mxu0 0
        %964 = vmatprep.mubr.bf16.mxu0 0
        %965 = vmatmul.mubr.bf16.gmra.mrb[0].mxu0 %v930
        %v966 = vpop.f32.mrb[0].mxu0
        %v967 = vadd.f32 %v915, %v966
        %v968 = vpop.f32.mrb[0].mxu0
        %v969 = vpop.f32.mrb[0].mxu0
        %v970 = vpop.f32.mrb[0].mxu0
        %971 = vdwg.mxu0
        %v972 = vpack.c.bf16 %v967, %v967
        %974 = vrot.lane.b32.xlu0 %v972, 120
        %v975 = vpop.permute.xlu0 %974
        %976 = vrot.lane.b32.xlu0 %v972, 112
        %v977 = vpop.permute.xlu0 %976
        %978 = vrot.lane.b32.xlu0 %v972, 104
        %v979 = vpop.permute.xlu0 %978
        %v981 = vunpack.c.l.s4 1983009808
        %v982 = vunpack.c.0.s8 %v981
        %v983 = vlaneseq
        %v984 = vshrl.u32 %v983, 7
        %v985 = vsub.s32 %v982, %v984
        %v986 = vrot.slane %v972, %v985
        %v989 = vunpack.c.l.s4 1983009808
        %v990 = vunpack.c.0.s8 %v989
        %v991 = vlaneseq
        %v992 = vshrl.u32 %v991, 7
        %v993 = vsub.s32 %v990, %v992
        %v994 = vrot.slane %v977, %v993
        %v995 = vcombine.low %v986, %v994
        %v996 = vcombine.high %v986, %v994
        %v998 = vunpack.c.l.s4 1934713408
        %v999 = vunpack.c.0.s8 %v998
        %v1000 = vlaneseq
        %v1001 = vshrl.u32 %v1000, 7
        %v1002 = vsub.s32 %v999, %v1001
        %v1003 = vrot.slane %v995, %v1002
        %v1005 = vunpack.c.l.s4 1934713408
        %v1006 = vunpack.c.0.s8 %v1005
        %v1007 = vlaneseq
        %v1008 = vshrl.u32 %v1007, 7
        %v1009 = vsub.s32 %v1006, %v1008
        %v1010 = vrot.slane %v996, %v1009
        %v1011 = vcombine.high %v1003, 0
        %v1012 = vcombine.high %v1010, 0
        %v1015 = vunpack.c.l.s4 1983009808
        %v1016 = vunpack.c.0.s8 %v1015
        %v1017 = vlaneseq
        %v1018 = vshrl.u32 %v1017, 7
        %v1019 = vsub.s32 %v1016, %v1018
        %v1020 = vrot.slane %v975, %v1019
        %v1023 = vunpack.c.l.s4 1983009808
        %v1024 = vunpack.c.0.s8 %v1023
        %v1025 = vlaneseq
        %v1026 = vshrl.u32 %v1025, 7
        %v1027 = vsub.s32 %v1024, %v1026
        %v1028 = vrot.slane %v979, %v1027
        %v1029 = vcombine.low %v1020, %v1028
        %v1030 = vcombine.high %v1020, %v1028
        %v1032 = vunpack.c.l.s4 1934713408
        %v1033 = vunpack.c.0.s8 %v1032
        %v1034 = vlaneseq
        %v1035 = vshrl.u32 %v1034, 7
        %v1036 = vsub.s32 %v1033, %v1035
        %v1037 = vrot.slane %v1029, %v1036
        %v1039 = vunpack.c.l.s4 1934713408
        %v1040 = vunpack.c.0.s8 %v1039
        %v1041 = vlaneseq
        %v1042 = vshrl.u32 %v1041, 7
        %v1043 = vsub.s32 %v1040, %v1042
        %v1044 = vrot.slane %v1030, %v1043
        %v1045 = vcombine.high %v1037, 0
        %v1046 = vcombine.high %v1044, 0
        %v1049 = vpack.i.b16 %v1037, %v1003
        %v1051 = vshrl.u32 %v1003, 16
        %v1052 = vshrl.u32 %v1037, 16
        %v1053 = vpack.i.b16 %v1052, %v1051
        %v1057 = vpack.i.b16 %v1045, %v1011
        %v1059 = vshrl.u32 %v1011, 16
        %v1060 = vshrl.u32 %v1045, 16
        %v1061 = vpack.i.b16 %v1060, %v1059
        %v1065 = vpack.i.b16 %v1044, %v1010
        %v1067 = vshrl.u32 %v1010, 16
        %v1068 = vshrl.u32 %v1044, 16
        %v1069 = vpack.i.b16 %v1068, %v1067
        %v1073 = vpack.i.b16 %v1046, %v1012
        %v1075 = vshrl.u32 %v1012, 16
        %v1076 = vshrl.u32 %v1046, 16
        %v1077 = vpack.i.b16 %v1076, %v1075
        %v1079 = vcombine.low %v1049, %v1065
        %v1081 = vunpack.c.l.s4 1983009808
        %v1082 = vunpack.c.0.s8 %v1081
        %v1083 = vlaneseq
        %v1084 = vshrl.u32 %v1083, 7
        %v1085 = vsub.s32 %v1082, %v1084
        %v1086 = vrot.slane %v1079, %v1085
        %v1087 = vcombine.low %v1057, %v1073
        %v1089 = vunpack.c.l.s4 1983009808
        %v1090 = vunpack.c.0.s8 %v1089
        %v1091 = vlaneseq
        %v1092 = vshrl.u32 %v1091, 7
        %v1093 = vsub.s32 %v1090, %v1092
        %v1094 = vrot.slane %v1087, %v1093
        %v1095 = vcombine.low %v1086, %v1094
        %v1097 = vunpack.c.l.s4 1934713408
        %v1098 = vunpack.c.0.s8 %v1097
        %v1099 = vlaneseq
        %v1100 = vshrl.u32 %v1099, 7
        %v1101 = vsub.s32 %v1098, %v1100
        %v1102 = vrot.slane %v1095, %v1101
        %v1103 = vcombine.high %v1102, 0
        %v1104 = vcombine.low %v1053, %v1069
        %v1106 = vunpack.c.l.s4 1983009808
        %v1107 = vunpack.c.0.s8 %v1106
        %v1108 = vlaneseq
        %v1109 = vshrl.u32 %v1108, 7
        %v1110 = vsub.s32 %v1107, %v1109
        %v1111 = vrot.slane %v1104, %v1110
        %v1112 = vcombine.low %v1061, %v1077
        %v1114 = vunpack.c.l.s4 1983009808
        %v1115 = vunpack.c.0.s8 %v1114
        %v1116 = vlaneseq
        %v1117 = vshrl.u32 %v1116, 7
        %v1118 = vsub.s32 %v1115, %v1117
        %v1119 = vrot.slane %v1112, %v1118
        %v1120 = vcombine.low %v1111, %v1119
        %v1122 = vunpack.c.l.s4 1934713408
        %v1123 = vunpack.c.0.s8 %v1122
        %v1124 = vlaneseq
        %v1125 = vshrl.u32 %v1124, 7
        %v1126 = vsub.s32 %v1123, %v1125
        %v1127 = vrot.slane %v1120, %v1126
        %v1128 = vcombine.high %v1127, 0
        %v1131 = vpack.i.b16 %v1127, %v1102
        %v1132 = vshrl.u32 %v1102, 16
        %v1133 = vshrl.u32 %v1127, 16
        %v1134 = vpack.i.b16 %v1133, %v1132
        %v1137 = vpack.i.b16 %v1128, %v1103
        %v1138 = vshrl.u32 %v1103, 16
        %v1139 = vshrl.u32 %v1128, 16
        %v1140 = vpack.i.b16 %v1139, %v1138
        %1141 = vrot.lane.b32.xlu0 %v972, 96
        %v1142 = vpop.permute.xlu0 %1141
        %1143 = vrot.lane.b32.xlu0 %v975, 96
        %v1144 = vpop.permute.xlu0 %1143
        %1145 = vrot.lane.b32.xlu0 %v977, 96
        %v1146 = vpop.permute.xlu0 %1145
        %1147 = vrot.lane.b32.xlu0 %v979, 96
        %v1148 = vpop.permute.xlu0 %1147
        %v1151 = vunpack.c.l.s4 1983009808
        %v1152 = vunpack.c.0.s8 %v1151
        %v1153 = vlaneseq
        %v1154 = vshrl.u32 %v1153, 7
        %v1155 = vsub.s32 %v1152, %v1154
        %v1156 = vrot.slane %v1142, %v1155
        %v1159 = vunpack.c.l.s4 1983009808
        %v1160 = vunpack.c.0.s8 %v1159
        %v1161 = vlaneseq
        %v1162 = vshrl.u32 %v1161, 7
        %v1163 = vsub.s32 %v1160, %v1162
        %v1164 = vrot.slane %v1146, %v1163
        %v1165 = vcombine.low %v1156, %v1164
        %v1166 = vcombine.high %v1156, %v1164
        %v1168 = vunpack.c.l.s4 1934713408
        %v1169 = vunpack.c.0.s8 %v1168
        %v1170 = vlaneseq
        %v1171 = vshrl.u32 %v1170, 7
        %v1172 = vsub.s32 %v1169, %v1171
        %v1173 = vrot.slane %v1165, %v1172
        %v1175 = vunpack.c.l.s4 1934713408
        %v1176 = vunpack.c.0.s8 %v1175
        %v1177 = vlaneseq
        %v1178 = vshrl.u32 %v1177, 7
        %v1179 = vsub.s32 %v1176, %v1178
        %v1180 = vrot.slane %v1166, %v1179
        %v1181 = vcombine.high %v1173, 0
        %v1182 = vcombine.high %v1180, 0
        %v1185 = vunpack.c.l.s4 1983009808
        %v1186 = vunpack.c.0.s8 %v1185
        %v1187 = vlaneseq
        %v1188 = vshrl.u32 %v1187, 7
        %v1189 = vsub.s32 %v1186, %v1188
        %v1190 = vrot.slane %v1144, %v1189
        %v1193 = vunpack.c.l.s4 1983009808
        %v1194 = vunpack.c.0.s8 %v1193
        %v1195 = vlaneseq
        %v1196 = vshrl.u32 %v1195, 7
        %v1197 = vsub.s32 %v1194, %v1196
        %v1198 = vrot.slane %v1148, %v1197
        %v1199 = vcombine.low %v1190, %v1198
        %v1200 = vcombine.high %v1190, %v1198
        %v1202 = vunpack.c.l.s4 1934713408
        %v1203 = vunpack.c.0.s8 %v1202
        %v1204 = vlaneseq
        %v1205 = vshrl.u32 %v1204, 7
        %v1206 = vsub.s32 %v1203, %v1205
        %v1207 = vrot.slane %v1199, %v1206
        %v1209 = vunpack.c.l.s4 1934713408
        %v1210 = vunpack.c.0.s8 %v1209
        %v1211 = vlaneseq
        %v1212 = vshrl.u32 %v1211, 7
        %v1213 = vsub.s32 %v1210, %v1212
        %v1214 = vrot.slane %v1200, %v1213
        %v1215 = vcombine.high %v1207, 0
        %v1216 = vcombine.high %v1214, 0
        %v1219 = vpack.i.b16 %v1207, %v1173
        %v1221 = vshrl.u32 %v1173, 16
        %v1222 = vshrl.u32 %v1207, 16
        %v1223 = vpack.i.b16 %v1222, %v1221
        %v1227 = vpack.i.b16 %v1215, %v1181
        %v1229 = vshrl.u32 %v1181, 16
        %v1230 = vshrl.u32 %v1215, 16
        %v1231 = vpack.i.b16 %v1230, %v1229
        %v1235 = vpack.i.b16 %v1214, %v1180
        %v1237 = vshrl.u32 %v1180, 16
        %v1238 = vshrl.u32 %v1214, 16
        %v1239 = vpack.i.b16 %v1238, %v1237
        %v1243 = vpack.i.b16 %v1216, %v1182
        %v1245 = vshrl.u32 %v1182, 16
        %v1246 = vshrl.u32 %v1216, 16
        %v1247 = vpack.i.b16 %v1246, %v1245
        %v1249 = vcombine.low %v1219, %v1235
        %v1251 = vunpack.c.l.s4 1983009808
        %v1252 = vunpack.c.0.s8 %v1251
        %v1253 = vlaneseq
        %v1254 = vshrl.u32 %v1253, 7
        %v1255 = vsub.s32 %v1252, %v1254
        %v1256 = vrot.slane %v1249, %v1255
        %v1257 = vcombine.low %v1227, %v1243
        %v1259 = vunpack.c.l.s4 1983009808
        %v1260 = vunpack.c.0.s8 %v1259
        %v1261 = vlaneseq
        %v1262 = vshrl.u32 %v1261, 7
        %v1263 = vsub.s32 %v1260, %v1262
        %v1264 = vrot.slane %v1257, %v1263
        %v1265 = vcombine.low %v1256, %v1264
        %v1267 = vunpack.c.l.s4 1934713408
        %v1268 = vunpack.c.0.s8 %v1267
        %v1269 = vlaneseq
        %v1270 = vshrl.u32 %v1269, 7
        %v1271 = vsub.s32 %v1268, %v1270
        %v1272 = vrot.slane %v1265, %v1271
        %v1273 = vcombine.high %v1272, 0
        %v1274 = vcombine.low %v1223, %v1239
        %v1276 = vunpack.c.l.s4 1983009808
        %v1277 = vunpack.c.0.s8 %v1276
        %v1278 = vlaneseq
        %v1279 = vshrl.u32 %v1278, 7
        %v1280 = vsub.s32 %v1277, %v1279
        %v1281 = vrot.slane %v1274, %v1280
        %v1282 = vcombine.low %v1231, %v1247
        %v1284 = vunpack.c.l.s4 1983009808
        %v1285 = vunpack.c.0.s8 %v1284
        %v1286 = vlaneseq
        %v1287 = vshrl.u32 %v1286, 7
        %v1288 = vsub.s32 %v1285, %v1287
        %v1289 = vrot.slane %v1282, %v1288
        %v1290 = vcombine.low %v1281, %v1289
        %v1292 = vunpack.c.l.s4 1934713408
        %v1293 = vunpack.c.0.s8 %v1292
        %v1294 = vlaneseq
        %v1295 = vshrl.u32 %v1294, 7
        %v1296 = vsub.s32 %v1293, %v1295
        %v1297 = vrot.slane %v1290, %v1296
        %v1298 = vcombine.high %v1297, 0
        %v1301 = vpack.i.b16 %v1297, %v1272
        %v1303 = vshrl.u32 %v1272, 16
        %v1304 = vshrl.u32 %v1297, 16
        %v1305 = vpack.i.b16 %v1304, %v1303
        %v1309 = vpack.i.b16 %v1298, %v1273
        %v1311 = vshrl.u32 %v1273, 16
        %v1312 = vshrl.u32 %v1298, 16
        %v1313 = vpack.i.b16 %v1312, %v1311
        %1315 = vrot.lane.b32.xlu0 %v972, 64
        %v1316 = vpop.permute.xlu0 %1315
        %1317 = vrot.lane.b32.xlu0 %v975, 64
        %v1318 = vpop.permute.xlu0 %1317
        %1319 = vrot.lane.b32.xlu0 %v977, 64
        %v1320 = vpop.permute.xlu0 %1319
        %1321 = vrot.lane.b32.xlu0 %v979, 64
        %v1322 = vpop.permute.xlu0 %1321
        %v1325 = vunpack.c.l.s4 1983009808
        %v1326 = vunpack.c.0.s8 %v1325
        %v1327 = vlaneseq
        %v1328 = vshrl.u32 %v1327, 7
        %v1329 = vsub.s32 %v1326, %v1328
        %v1330 = vrot.slane %v1316, %v1329
        %v1333 = vunpack.c.l.s4 1983009808
        %v1334 = vunpack.c.0.s8 %v1333
        %v1335 = vlaneseq
        %v1336 = vshrl.u32 %v1335, 7
        %v1337 = vsub.s32 %v1334, %v1336
        %v1338 = vrot.slane %v1320, %v1337
        %v1339 = vcombine.low %v1330, %v1338
        %v1340 = vcombine.high %v1330, %v1338
        %v1342 = vunpack.c.l.s4 1934713408
        %v1343 = vunpack.c.0.s8 %v1342
        %v1344 = vlaneseq
        %v1345 = vshrl.u32 %v1344, 7
        %v1346 = vsub.s32 %v1343, %v1345
        %v1347 = vrot.slane %v1339, %v1346
        %v1349 = vunpack.c.l.s4 1934713408
        %v1350 = vunpack.c.0.s8 %v1349
        %v1351 = vlaneseq
        %v1352 = vshrl.u32 %v1351, 7
        %v1353 = vsub.s32 %v1350, %v1352
        %v1354 = vrot.slane %v1340, %v1353
        %v1355 = vcombine.high %v1347, 0
        %v1356 = vcombine.high %v1354, 0
        %v1359 = vunpack.c.l.s4 1983009808
        %v1360 = vunpack.c.0.s8 %v1359
        %v1361 = vlaneseq
        %v1362 = vshrl.u32 %v1361, 7
        %v1363 = vsub.s32 %v1360, %v1362
        %v1364 = vrot.slane %v1318, %v1363
        %v1367 = vunpack.c.l.s4 1983009808
        %v1368 = vunpack.c.0.s8 %v1367
        %v1369 = vlaneseq
        %v1370 = vshrl.u32 %v1369, 7
        %v1371 = vsub.s32 %v1368, %v1370
        %v1372 = vrot.slane %v1322, %v1371
        %v1373 = vcombine.low %v1364, %v1372
        %v1374 = vcombine.high %v1364, %v1372
        %v1376 = vunpack.c.l.s4 1934713408
        %v1377 = vunpack.c.0.s8 %v1376
        %v1378 = vlaneseq
        %v1379 = vshrl.u32 %v1378, 7
        %v1380 = vsub.s32 %v1377, %v1379
        %v1381 = vrot.slane %v1373, %v1380
        %v1383 = vunpack.c.l.s4 1934713408
        %v1384 = vunpack.c.0.s8 %v1383
        %v1385 = vlaneseq
        %v1386 = vshrl.u32 %v1385, 7
        %v1387 = vsub.s32 %v1384, %v1386
        %v1388 = vrot.slane %v1374, %v1387
        %v1389 = vcombine.high %v1381, 0
        %v1390 = vcombine.high %v1388, 0
        %v1393 = vpack.i.b16 %v1381, %v1347
        %v1395 = vshrl.u32 %v1347, 16
        %v1396 = vshrl.u32 %v1381, 16
        %v1397 = vpack.i.b16 %v1396, %v1395
        %v1401 = vpack.i.b16 %v1389, %v1355
        %v1403 = vshrl.u32 %v1355, 16
        %v1404 = vshrl.u32 %v1389, 16
        %v1405 = vpack.i.b16 %v1404, %v1403
        %v1409 = vpack.i.b16 %v1388, %v1354
        %v1411 = vshrl.u32 %v1354, 16
        %v1412 = vshrl.u32 %v1388, 16
        %v1413 = vpack.i.b16 %v1412, %v1411
        %v1417 = vpack.i.b16 %v1390, %v1356
        %v1419 = vshrl.u32 %v1356, 16
        %v1420 = vshrl.u32 %v1390, 16
        %v1421 = vpack.i.b16 %v1420, %v1419
        %v1423 = vcombine.low %v1393, %v1409
        %v1425 = vunpack.c.l.s4 1983009808
        %v1426 = vunpack.c.0.s8 %v1425
        %v1427 = vlaneseq
        %v1428 = vshrl.u32 %v1427, 7
        %v1429 = vsub.s32 %v1426, %v1428
        %v1430 = vrot.slane %v1423, %v1429
        %v1431 = vcombine.low %v1401, %v1417
        %v1433 = vunpack.c.l.s4 1983009808
        %v1434 = vunpack.c.0.s8 %v1433
        %v1435 = vlaneseq
        %v1436 = vshrl.u32 %v1435, 7
        %v1437 = vsub.s32 %v1434, %v1436
        %v1438 = vrot.slane %v1431, %v1437
        %v1439 = vcombine.low %v1430, %v1438
        %v1441 = vunpack.c.l.s4 1934713408
        %v1442 = vunpack.c.0.s8 %v1441
        %v1443 = vlaneseq
        %v1444 = vshrl.u32 %v1443, 7
        %v1445 = vsub.s32 %v1442, %v1444
        %v1446 = vrot.slane %v1439, %v1445
        %v1447 = vcombine.high %v1446, 0
        %v1448 = vcombine.low %v1397, %v1413
        %v1450 = vunpack.c.l.s4 1983009808
        %v1451 = vunpack.c.0.s8 %v1450
        %v1452 = vlaneseq
        %v1453 = vshrl.u32 %v1452, 7
        %v1454 = vsub.s32 %v1451, %v1453
        %v1455 = vrot.slane %v1448, %v1454
        %v1456 = vcombine.low %v1405, %v1421
        %v1458 = vunpack.c.l.s4 1983009808
        %v1459 = vunpack.c.0.s8 %v1458
        %v1460 = vlaneseq
        %v1461 = vshrl.u32 %v1460, 7
        %v1462 = vsub.s32 %v1459, %v1461
        %v1463 = vrot.slane %v1456, %v1462
        %v1464 = vcombine.low %v1455, %v1463
        %v1466 = vunpack.c.l.s4 1934713408
        %v1467 = vunpack.c.0.s8 %v1466
        %v1468 = vlaneseq
        %v1469 = vshrl.u32 %v1468, 7
        %v1470 = vsub.s32 %v1467, %v1469
        %v1471 = vrot.slane %v1464, %v1470
        %v1472 = vcombine.high %v1471, 0
        %v1475 = vpack.i.b16 %v1471, %v1446
        %v1477 = vshrl.u32 %v1446, 16
        %v1478 = vshrl.u32 %v1471, 16
        %v1479 = vpack.i.b16 %v1478, %v1477
        %v1483 = vpack.i.b16 %v1472, %v1447
        %v1485 = vshrl.u32 %v1447, 16
        %v1486 = vshrl.u32 %v1472, 16
        %v1487 = vpack.i.b16 %v1486, %v1485
        %s1489 = smul.u32 %s47, 4
        %s1490 = smul.addr %s1489, 4
        %s1491 = scalar_lea.vmem [#allocation2], %s1490
        %vm1492 = vcmask 60416
        %1493 = vst.msk [vmem:[%s1491] sm:$0xf] %vm1492, %v1301
        %1494 = vst.msk [vmem:[%s1491 + $0x4] sm:$0xf] %vm1492, %v1305
        %1495 = vst.msk [vmem:[%s1491 + $0x8] sm:$0xf] %vm1492, %v1309
        %1496 = vst.msk [vmem:[%s1491 + $0xc] sm:$0xf] %vm1492, %v1313
        %s1497 = smul.addr %s1489, 4
        %s1498 = scalar_lea.vmem [#allocation3], %s1497
        %1499 = vst.msk [vmem:[%s1498] sm:$0xf] %vm1492, %v1475
        %1500 = vst.msk [vmem:[%s1498 + $0x4] sm:$0xf] %vm1492, %v1479
        %1501 = vst.msk [vmem:[%s1498 + $0x8] sm:$0xf] %vm1492, %v1483
        %1502 = vst.msk [vmem:[%s1498 + $0xc] sm:$0xf] %vm1492, %v1487
        %v1503 = vlaneseq
        %v1504 = vshrl.u32 %v1503, 7
        %v1505 = vlaneseq
        %v1506 = vand.u32 %v1505, 127
        %vm1507 = vcmp.gt.s32.totalorder %v1506, %v1504
        %v1508 = vsel %vm1507, 1, 0
        %v1509 = vcvt.s32.f32 %v1508
        %v1510 = vmul.f32 %v1509, -1e+30
        %vm1511 = vcmask 64512
        %v1513 = vsel %vm1511, %v1131, 0
        %v1516 = vsel %vm1511, %v1301, 0
        %1518 = vmatprep.subr.bf16.mxu0 0
        %1519 = vmatpush1.bf16.xpose.msra.mxu0 %v1516
        %1520 = vmatprep.subr.bf16.mxu0 0
        %1521 = vmatpush1.bf16.xpose.msra.mxu0 0
        %1522 = vmatprep.subr.bf16.mxu0 0
        %1523 = vmatpush1.bf16.xpose.msra.mxu0 0
        %1524 = vmatprep.subr.bf16.mxu0 0
        %1525 = vmatpush1.bf16.xpose.msra.mxu0 0
        %1526 = vmatprep.subr.bf16.mxu0 0
        %1527 = vmatpush1.bf16.xpose.msra.mxu0 0
        %1528 = vmatprep.subr.bf16.mxu0 0
        %1529 = vmatpush1.bf16.xpose.msra.mxu0 0
        %1530 = vmatprep.subr.bf16.mxu0 0
        %1531 = vmatpush1.bf16.xpose.msra.mxu0 0
        %1532 = vmatprep.subr.bf16.mxu0 0
        %1533 = vmatpush1.bf16.xpose.msra.mxu0 0
        %1534 = vmatprep.subr.bf16.mxu0 0
        %1535 = vmatpush1.bf16.xpose.msra.mxu0 0
        %1536 = vmatprep.subr.bf16.mxu0 0
        %1537 = vmatpush1.bf16.xpose.msra.mxu0 0
        %1538 = vmatprep.subr.bf16.mxu0 0
        %1539 = vmatpush1.bf16.xpose.msra.mxu0 0
        %1540 = vmatprep.subr.bf16.mxu0 0
        %1541 = vmatpush1.bf16.xpose.msra.mxu0 0
        %1542 = vmatprep.subr.bf16.mxu0 0
        %1543 = vmatpush1.bf16.xpose.msra.mxu0 0
        %1544 = vmatprep.subr.bf16.mxu0 0
        %1545 = vmatpush1.bf16.xpose.msra.mxu0 0
        %1546 = vmatprep.subr.bf16.mxu0 0
        %1547 = vmatpush1.bf16.xpose.msra.mxu0 0
        %1548 = vmatprep.subr.bf16.mxu0 0
        %1549 = vmatpush1.bf16.xpose.msra.mxu0 0
        %1550 = vmatprep.mubr.bf16.mxu0 0
        %1551 = vmatmul.mubr.bf16.gmra.mrb[0].mxu0 %v1513
        %v1552 = vpop.f32.mrb[0].mxu0
        %v1553 = vadd.f32 %v1510, %v1552
        %v1554 = vpop.f32.mrb[0].mxu0
        %v1555 = vpop.f32.mrb[0].mxu0
        %v1556 = vpop.f32.mrb[0].mxu0
        %1557 = vdwg.mxu0
        %v1559 = vsel %vm1511, %v1134, 0
        %v1562 = vsel %vm1511, %v1305, 0
        %1564 = vmatprep.subr.bf16.mxu0 0
        %1565 = vmatpush1.bf16.xpose.msra.mxu0 %v1562
        %1566 = vmatprep.subr.bf16.mxu0 0
        %1567 = vmatpush1.bf16.xpose.msra.mxu0 0
        %1568 = vmatprep.subr.bf16.mxu0 0
        %1569 = vmatpush1.bf16.xpose.msra.mxu0 0
        %1570 = vmatprep.subr.bf16.mxu0 0
        %1571 = vmatpush1.bf16.xpose.msra.mxu0 0
        %1572 = vmatprep.subr.bf16.mxu0 0
        %1573 = vmatpush1.bf16.xpose.msra.mxu0 0
        %1574 = vmatprep.subr.bf16.mxu0 0
        %1575 = vmatpush1.bf16.xpose.msra.mxu0 0
        %1576 = vmatprep.subr.bf16.mxu0 0
        %1577 = vmatpush1.bf16.xpose.msra.mxu0 0
        %1578 = vmatprep.subr.bf16.mxu0 0
        %1579 = vmatpush1.bf16.xpose.msra.mxu0 0
        %1580 = vmatprep.subr.bf16.mxu0 0
        %1581 = vmatpush1.bf16.xpose.msra.mxu0 0
        %1582 = vmatprep.subr.bf16.mxu0 0
        %1583 = vmatpush1.bf16.xpose.msra.mxu0 0
        %1584 = vmatprep.subr.bf16.mxu0 0
        %1585 = vmatpush1.bf16.xpose.msra.mxu0 0
        %1586 = vmatprep.subr.bf16.mxu0 0
        %1587 = vmatpush1.bf16.xpose.msra.mxu0 0
        %1588 = vmatprep.subr.bf16.mxu0 0
        %1589 = vmatpush1.bf16.xpose.msra.mxu0 0
        %1590 = vmatprep.subr.bf16.mxu0 0
        %1591 = vmatpush1.bf16.xpose.msra.mxu0 0
        %1592 = vmatprep.subr.bf16.mxu0 0
        %1593 = vmatpush1.bf16.xpose.msra.mxu0 0
        %1594 = vmatprep.subr.bf16.mxu0 0
        %1595 = vmatpush1.bf16.xpose.msra.mxu0 0
        %1596 = vmatprep.mubr.bf16.mxu0 0
        %1597 = vmatmul.mubr.bf16.gmra.mrb[0].mxu0 %v1559
        %v1598 = vpop.f32.mrb[0].mxu0
        %v1599 = vadd.f32 %v1510, %v1598
        %v1600 = vpop.f32.mrb[0].mxu0
        %v1601 = vpop.f32.mrb[0].mxu0
        %v1602 = vpop.f32.mrb[0].mxu0
        %1603 = vdwg.mxu0
        %v1605 = vsel %vm1511, %v1137, 0
        %v1608 = vsel %vm1511, %v1309, 0
        %1610 = vmatprep.subr.bf16.mxu0 0
        %1611 = vmatpush1.bf16.xpose.msra.mxu0 %v1608
        %1612 = vmatprep.subr.bf16.mxu0 0
        %1613 = vmatpush1.bf16.xpose.msra.mxu0 0
        %1614 = vmatprep.subr.bf16.mxu0 0
        %1615 = vmatpush1.bf16.xpose.msra.mxu0 0
        %1616 = vmatprep.subr.bf16.mxu0 0
        %1617 = vmatpush1.bf16.xpose.msra.mxu0 0
        %1618 = vmatprep.subr.bf16.mxu0 0
        %1619 = vmatpush1.bf16.xpose.msra.mxu0 0
        %1620 = vmatprep.subr.bf16.mxu0 0
        %1621 = vmatpush1.bf16.xpose.msra.mxu0 0
        %1622 = vmatprep.subr.bf16.mxu0 0
        %1623 = vmatpush1.bf16.xpose.msra.mxu0 0
        %1624 = vmatprep.subr.bf16.mxu0 0
        %1625 = vmatpush1.bf16.xpose.msra.mxu0 0
        %1626 = vmatprep.subr.bf16.mxu0 0
        %1627 = vmatpush1.bf16.xpose.msra.mxu0 0
        %1628 = vmatprep.subr.bf16.mxu0 0
        %1629 = vmatpush1.bf16.xpose.msra.mxu0 0
        %1630 = vmatprep.subr.bf16.mxu0 0
        %1631 = vmatpush1.bf16.xpose.msra.mxu0 0
        %1632 = vmatprep.subr.bf16.mxu0 0
        %1633 = vmatpush1.bf16.xpose.msra.mxu0 0
        %1634 = vmatprep.subr.bf16.mxu0 0
        %1635 = vmatpush1.bf16.xpose.msra.mxu0 0
        %1636 = vmatprep.subr.bf16.mxu0 0
        %1637 = vmatpush1.bf16.xpose.msra.mxu0 0
        %1638 = vmatprep.subr.bf16.mxu0 0
        %1639 = vmatpush1.bf16.xpose.msra.mxu0 0
        %1640 = vmatprep.subr.bf16.mxu0 0
        %1641 = vmatpush1.bf16.xpose.msra.mxu0 0
        %1642 = vmatprep.mubr.bf16.mxu0 0
        %1643 = vmatmul.mubr.bf16.gmra.mrb[0].mxu0 %v1605
        %v1644 = vpop.f32.mrb[0].mxu0
        %v1645 = vadd.f32 %v1510, %v1644
        %v1646 = vpop.f32.mrb[0].mxu0
        %v1647 = vpop.f32.mrb[0].mxu0
        %v1648 = vpop.f32.mrb[0].mxu0
        %1649 = vdwg.mxu0
        %v1651 = vsel %vm1511, %v1140, 0
        %v1654 = vsel %vm1511, %v1313, 0
        %1656 = vmatprep.subr.bf16.mxu0 0
        %1657 = vmatpush1.bf16.xpose.msra.mxu0 %v1654
        %1658 = vmatprep.subr.bf16.mxu0 0
        %1659 = vmatpush1.bf16.xpose.msra.mxu0 0
        %1660 = vmatprep.subr.bf16.mxu0 0
        %1661 = vmatpush1.bf16.xpose.msra.mxu0 0
        %1662 = vmatprep.subr.bf16.mxu0 0
        %1663 = vmatpush1.bf16.xpose.msra.mxu0 0
        %1664 = vmatprep.subr.bf16.mxu0 0
        %1665 = vmatpush1.bf16.xpose.msra.mxu0 0
        %1666 = vmatprep.subr.bf16.mxu0 0
        %1667 = vmatpush1.bf16.xpose.msra.mxu0 0
        %1668 = vmatprep.subr.bf16.mxu0 0
        %1669 = vmatpush1.bf16.xpose.msra.mxu0 0
        %1670 = vmatprep.subr.bf16.mxu0 0
        %1671 = vmatpush1.bf16.xpose.msra.mxu0 0
        %1672 = vmatprep.subr.bf16.mxu0 0
        %1673 = vmatpush1.bf16.xpose.msra.mxu0 0
        %1674 = vmatprep.subr.bf16.mxu0 0
        %1675 = vmatpush1.bf16.xpose.msra.mxu0 0
        %1676 = vmatprep.subr.bf16.mxu0 0
        %1677 = vmatpush1.bf16.xpose.msra.mxu0 0
        %1678 = vmatprep.subr.bf16.mxu0 0
        %1679 = vmatpush1.bf16.xpose.msra.mxu0 0
        %1680 = vmatprep.subr.bf16.mxu0 0
        %1681 = vmatpush1.bf16.xpose.msra.mxu0 0
        %1682 = vmatprep.subr.bf16.mxu0 0
        %1683 = vmatpush1.bf16.xpose.msra.mxu0 0
        %1684 = vmatprep.subr.bf16.mxu0 0
        %1685 = vmatpush1.bf16.xpose.msra.mxu0 0
        %1686 = vmatprep.subr.bf16.mxu0 0
        %1687 = vmatpush1.bf16.xpose.msra.mxu0 0
        %1688 = vmatprep.mubr.bf16.mxu0 0
        %1689 = vmatmul.mubr.bf16.gmra.mrb[0].mxu0 %v1651
        %v1690 = vpop.f32.mrb[0].mxu0
        %v1691 = vadd.f32 %v1510, %v1690
        %v1692 = vpop.f32.mrb[0].mxu0
        %v1693 = vpop.f32.mrb[0].mxu0
        %v1694 = vpop.f32.mrb[0].mxu0
        %1695 = vdwg.mxu0
        %v1696 = vsel %vm1511, %v1553, -inf
        %1697 = vmax.xlane.f32.xlu0 %v1696
        %v1698 = vpop.xlane.xlu0 %1697
        %v1699 = vsel %vm1511, %v1599, -inf
        %1700 = vmax.xlane.f32.xlu0 %v1699
        %v1701 = vpop.xlane.xlu0 %1700
        %v1702 = vsel %vm1511, %v1645, -inf
        %1703 = vmax.xlane.f32.xlu0 %v1702
        %v1704 = vpop.xlane.xlu0 %1703
        %v1705 = vsel %vm1511, %v1691, -inf
        %1706 = vmax.xlane.f32.xlu0 %v1705
        %v1707 = vpop.xlane.xlu0 %1706
        %v1708 = vsub.f32 %v1553, %v1698
        %v1709 = vsub.f32 %v1599, %v1701
        %v1710 = vsub.f32 %v1645, %v1704
        %v1711 = vsub.f32 %v1691, %v1707
        %v1712 = vmul.f32 %v1708, 1.442695
        %v1713 = vpow.pop %v1712
        %v1714 = vmul.f32 %v1709, 1.442695
        %v1715 = vpow.pop %v1714
        %v1716 = vmul.f32 %v1710, 1.442695
        %v1717 = vpow.pop %v1716
        %v1718 = vmul.f32 %v1711, 1.442695
        %v1719 = vpow.pop %v1718
        %v1720 = vsel %vm1511, %v1713, 0.0
        %1721 = vadd.xlane.f32.xlu0 %v1720
        %v1722 = vpop.xlane.xlu0 %1721
        %v1723 = vsel %vm1511, %v1715, 0.0
        %1724 = vadd.xlane.f32.xlu0 %v1723
        %v1725 = vpop.xlane.xlu0 %1724
        %v1726 = vsel %vm1511, %v1717, 0.0
        %1727 = vadd.xlane.f32.xlu0 %v1726
        %v1728 = vpop.xlane.xlu0 %1727
        %v1729 = vsel %vm1511, %v1719, 0.0
        %1730 = vadd.xlane.f32.xlu0 %v1729
        %v1731 = vpop.xlane.xlu0 %1730
        %v1732 = vpack.c.bf16 %v1713, %v1713
        %v1733 = vpack.c.bf16 %v1715, %v1715
        %v1734 = vpack.c.bf16 %v1717, %v1717
        %v1735 = vpack.c.bf16 %v1719, %v1719
        %v1737 = vsel %vm1511, %v1732, 0
        %vm1739 = vcmask 1043456
        %v1741 = vsel %vm1739, %v1475, 0
        %1743 = vmatprep.subr.bf16.mxu0 0
        %1744 = vmatpush1.bf16.msra.mxu0 %v1741
        %1745 = vmatprep.subr.bf16.mxu0 0
        %1746 = vmatpush1.bf16.msra.mxu0 0
        %1747 = vmatprep.subr.bf16.mxu0 0
        %1748 = vmatpush1.bf16.msra.mxu0 0
        %1749 = vmatprep.subr.bf16.mxu0 0
        %1750 = vmatpush1.bf16.msra.mxu0 0
        %1751 = vmatprep.subr.bf16.mxu0 0
        %1752 = vmatpush1.bf16.msra.mxu0 0
        %1753 = vmatprep.subr.bf16.mxu0 0
        %1754 = vmatpush1.bf16.msra.mxu0 0
        %1755 = vmatprep.subr.bf16.mxu0 0
        %1756 = vmatpush1.bf16.msra.mxu0 0
        %1757 = vmatprep.subr.bf16.mxu0 0
        %1758 = vmatpush1.bf16.msra.mxu0 0
        %1759 = vmatprep.subr.bf16.mxu0 0
        %1760 = vmatpush1.bf16.msra.mxu0 0
        %1761 = vmatprep.subr.bf16.mxu0 0
        %1762 = vmatpush1.bf16.msra.mxu0 0
        %1763 = vmatprep.subr.bf16.mxu0 0
        %1764 = vmatpush1.bf16.msra.mxu0 0
        %1765 = vmatprep.subr.bf16.mxu0 0
        %1766 = vmatpush1.bf16.msra.mxu0 0
        %1767 = vmatprep.subr.bf16.mxu0 0
        %1768 = vmatpush1.bf16.msra.mxu0 0
        %1769 = vmatprep.subr.bf16.mxu0 0
        %1770 = vmatpush1.bf16.msra.mxu0 0
        %1771 = vmatprep.subr.bf16.mxu0 0
        %1772 = vmatpush1.bf16.msra.mxu0 0
        %1773 = vmatprep.subr.bf16.mxu0 0
        %1774 = vmatpush1.bf16.msra.mxu0 0
        %1775 = vmatprep.mubr.bf16.mxu0 0
        %1776 = vmatmul.mubr.bf16.gmra.mrb[0].mxu0 %v1737
        %v1777 = vpop.f32.mrb[0].mxu0
        %v1778 = vadd.f32 0.0, %v1777
        %v1779 = vpop.f32.mrb[0].mxu0
        %v1780 = vpop.f32.mrb[0].mxu0
        %v1781 = vpop.f32.mrb[0].mxu0
        %1782 = vdwg.mxu0
        %v1784 = vsel %vm1511, %v1733, 0
        %v1787 = vsel %vm1739, %v1479, 0
        %1789 = vmatprep.subr.bf16.mxu0 0
        %1790 = vmatpush1.bf16.msra.mxu0 %v1787
        %1791 = vmatprep.subr.bf16.mxu0 0
        %1792 = vmatpush1.bf16.msra.mxu0 0
        %1793 = vmatprep.subr.bf16.mxu0 0
        %1794 = vmatpush1.bf16.msra.mxu0 0
        %1795 = vmatprep.subr.bf16.mxu0 0
        %1796 = vmatpush1.bf16.msra.mxu0 0
        %1797 = vmatprep.subr.bf16.mxu0 0
        %1798 = vmatpush1.bf16.msra.mxu0 0
        %1799 = vmatprep.subr.bf16.mxu0 0
        %1800 = vmatpush1.bf16.msra.mxu0 0
        %1801 = vmatprep.subr.bf16.mxu0 0
        %1802 = vmatpush1.bf16.msra.mxu0 0
        %1803 = vmatprep.subr.bf16.mxu0 0
        %1804 = vmatpush1.bf16.msra.mxu0 0
        %1805 = vmatprep.subr.bf16.mxu0 0
        %1806 = vmatpush1.bf16.msra.mxu0 0
        %1807 = vmatprep.subr.bf16.mxu0 0
        %1808 = vmatpush1.bf16.msra.mxu0 0
        %1809 = vmatprep.subr.bf16.mxu0 0
        %1810 = vmatpush1.bf16.msra.mxu0 0
        %1811 = vmatprep.subr.bf16.mxu0 0
        %1812 = vmatpush1.bf16.msra.mxu0 0
        %1813 = vmatprep.subr.bf16.mxu0 0
        %1814 = vmatpush1.bf16.msra.mxu0 0
        %1815 = vmatprep.subr.bf16.mxu0 0
        %1816 = vmatpush1.bf16.msra.mxu0 0
        %1817 = vmatprep.subr.bf16.mxu0 0
        %1818 = vmatpush1.bf16.msra.mxu0 0
        %1819 = vmatprep.subr.bf16.mxu0 0
        %1820 = vmatpush1.bf16.msra.mxu0 0
        %1821 = vmatprep.mubr.bf16.mxu0 0
        %1822 = vmatmul.mubr.bf16.gmra.mrb[0].mxu0 %v1784
        %v1823 = vpop.f32.mrb[0].mxu0
        %v1824 = vadd.f32 0.0, %v1823
        %v1825 = vpop.f32.mrb[0].mxu0
        %v1826 = vpop.f32.mrb[0].mxu0
        %v1827 = vpop.f32.mrb[0].mxu0
        %1828 = vdwg.mxu0
        %v1830 = vsel %vm1511, %v1734, 0
        %v1833 = vsel %vm1739, %v1483, 0
        %1835 = vmatprep.subr.bf16.mxu0 0
        %1836 = vmatpush1.bf16.msra.mxu0 %v1833
        %1837 = vmatprep.subr.bf16.mxu0 0
        %1838 = vmatpush1.bf16.msra.mxu0 0
        %1839 = vmatprep.subr.bf16.mxu0 0
        %1840 = vmatpush1.bf16.msra.mxu0 0
        %1841 = vmatprep.subr.bf16.mxu0 0
        %1842 = vmatpush1.bf16.msra.mxu0 0
        %1843 = vmatprep.subr.bf16.mxu0 0
        %1844 = vmatpush1.bf16.msra.mxu0 0
        %1845 = vmatprep.subr.bf16.mxu0 0
        %1846 = vmatpush1.bf16.msra.mxu0 0
        %1847 = vmatprep.subr.bf16.mxu0 0
        %1848 = vmatpush1.bf16.msra.mxu0 0
        %1849 = vmatprep.subr.bf16.mxu0 0
        %1850 = vmatpush1.bf16.msra.mxu0 0
        %1851 = vmatprep.subr.bf16.mxu0 0
        %1852 = vmatpush1.bf16.msra.mxu0 0
        %1853 = vmatprep.subr.bf16.mxu0 0
        %1854 = vmatpush1.bf16.msra.mxu0 0
        %1855 = vmatprep.subr.bf16.mxu0 0
        %1856 = vmatpush1.bf16.msra.mxu0 0
        %1857 = vmatprep.subr.bf16.mxu0 0
        %1858 = vmatpush1.bf16.msra.mxu0 0
        %1859 = vmatprep.subr.bf16.mxu0 0
        %1860 = vmatpush1.bf16.msra.mxu0 0
        %1861 = vmatprep.subr.bf16.mxu0 0
        %1862 = vmatpush1.bf16.msra.mxu0 0
        %1863 = vmatprep.subr.bf16.mxu0 0
        %1864 = vmatpush1.bf16.msra.mxu0 0
        %1865 = vmatprep.subr.bf16.mxu0 0
        %1866 = vmatpush1.bf16.msra.mxu0 0
        %1867 = vmatprep.mubr.bf16.mxu0 0
        %1868 = vmatmul.mubr.bf16.gmra.mrb[0].mxu0 %v1830
        %v1869 = vpop.f32.mrb[0].mxu0
        %v1870 = vadd.f32 0.0, %v1869
        %v1871 = vpop.f32.mrb[0].mxu0
        %v1872 = vpop.f32.mrb[0].mxu0
        %v1873 = vpop.f32.mrb[0].mxu0
        %1874 = vdwg.mxu0
        %v1876 = vsel %vm1511, %v1735, 0
        %v1879 = vsel %vm1739, %v1487, 0
        %1881 = vmatprep.subr.bf16.mxu0 0
        %1882 = vmatpush1.bf16.msra.mxu0 %v1879
        %1883 = vmatprep.subr.bf16.mxu0 0
        %1884 = vmatpush1.bf16.msra.mxu0 0
        %1885 = vmatprep.subr.bf16.mxu0 0
        %1886 = vmatpush1.bf16.msra.mxu0 0
        %1887 = vmatprep.subr.bf16.mxu0 0
        %1888 = vmatpush1.bf16.msra.mxu0 0
        %1889 = vmatprep.subr.bf16.mxu0 0
        %1890 = vmatpush1.bf16.msra.mxu0 0
        %1891 = vmatprep.subr.bf16.mxu0 0
        %1892 = vmatpush1.bf16.msra.mxu0 0
        %1893 = vmatprep.subr.bf16.mxu0 0
        %1894 = vmatpush1.bf16.msra.mxu0 0
        %1895 = vmatprep.subr.bf16.mxu0 0
        %1896 = vmatpush1.bf16.msra.mxu0 0
        %1897 = vmatprep.subr.bf16.mxu0 0
        %1898 = vmatpush1.bf16.msra.mxu0 0
        %1899 = vmatprep.subr.bf16.mxu0 0
        %1900 = vmatpush1.bf16.msra.mxu0 0
        %1901 = vmatprep.subr.bf16.mxu0 0
        %1902 = vmatpush1.bf16.msra.mxu0 0
        %1903 = vmatprep.subr.bf16.mxu0 0
        %1904 = vmatpush1.bf16.msra.mxu0 0
        %1905 = vmatprep.subr.bf16.mxu0 0
        %1906 = vmatpush1.bf16.msra.mxu0 0
        %1907 = vmatprep.subr.bf16.mxu0 0
        %1908 = vmatpush1.bf16.msra.mxu0 0
        %1909 = vmatprep.subr.bf16.mxu0 0
        %1910 = vmatpush1.bf16.msra.mxu0 0
        %1911 = vmatprep.subr.bf16.mxu0 0
        %1912 = vmatpush1.bf16.msra.mxu0 0
        %1913 = vmatprep.mubr.bf16.mxu0 0
        %1914 = vmatmul.mubr.bf16.gmra.mrb[0].mxu0 %v1876
        %v1915 = vpop.f32.mrb[0].mxu0
        %v1916 = vadd.f32 0.0, %v1915
        %v1917 = vpop.f32.mrb[0].mxu0
        %v1918 = vpop.f32.mrb[0].mxu0
        %v1919 = vpop.f32.mrb[0].mxu0
        %1920 = vdwg.mxu0
        // While loop
        $region153: #{tpu_custom_call.1} parent=103 // loop_pre_header
          _
        $region154: #{tpu_custom_call.1} parent=103 // loop_header
          %s1922 = sphi 0, %s1924
          %p1923 = scmp.ge.s32.totalorder %s1922, %s47
          %v1927 = vphi %v1698, %v2136
          %v1928 = vphi %v1701, %v2137
          %v1929 = vphi %v1704, %v2138
          %v1930 = vphi %v1707, %v2139
          %v1931 = vphi %v1722, %v2180
          %v1932 = vphi %v1725, %v2181
          %v1933 = vphi %v1728, %v2182
          %v1934 = vphi %v1731, %v2183
          %v1935 = vphi %v1778, %v2376
          %v1936 = vphi %v1824, %v2377
          %v1937 = vphi %v1870, %v2378
          %v1938 = vphi %v1916, %v2379
        $region155: #{tpu_custom_call.1} parent=103 // loop_header_branch
          %1926 = sbr.rel (%p1923) target = $region159
        $region156: #{tpu_custom_call.1} parent=103 // loop_body
          %s1939 = smul.u32 %s1922, 4
          %s1940 = smul.addr %s1939, 4
          %s1941 = scalar_lea.vmem [#allocation2], %s1940
          %v1942 = vld [vmem:[%s1941] sm:$0xf]
          %v1943 = vld [vmem:[%s1941 + $0x4] sm:$0xf]
          %v1944 = vld [vmem:[%s1941 + $0x8] sm:$0xf]
          %v1945 = vld [vmem:[%s1941 + $0xc] sm:$0xf]
          %s1946 = smul.addr %s1939, 4
          %s1947 = scalar_lea.vmem [#allocation3], %s1946
          %v1948 = vld [vmem:[%s1947] sm:$0xf]
          %v1949 = vld [vmem:[%s1947 + $0x4] sm:$0xf]
          %v1950 = vld [vmem:[%s1947 + $0x8] sm:$0xf]
          %v1951 = vld [vmem:[%s1947 + $0xc] sm:$0xf]
          %v1953 = vsel %vm1511, %v1942, 0
          %1955 = vmatprep.subr.bf16.mxu0 0
          %1956 = vmatpush1.bf16.xpose.msra.mxu0 %v1953
          %1957 = vmatprep.subr.bf16.mxu0 0
          %1958 = vmatpush1.bf16.xpose.msra.mxu0 0
          %1959 = vmatprep.subr.bf16.mxu0 0
          %1960 = vmatpush1.bf16.xpose.msra.mxu0 0
          %1961 = vmatprep.subr.bf16.mxu0 0
          %1962 = vmatpush1.bf16.xpose.msra.mxu0 0
          %1963 = vmatprep.subr.bf16.mxu0 0
          %1964 = vmatpush1.bf16.xpose.msra.mxu0 0
          %1965 = vmatprep.subr.bf16.mxu0 0
          %1966 = vmatpush1.bf16.xpose.msra.mxu0 0
          %1967 = vmatprep.subr.bf16.mxu0 0
          %1968 = vmatpush1.bf16.xpose.msra.mxu0 0
          %1969 = vmatprep.subr.bf16.mxu0 0
          %1970 = vmatpush1.bf16.xpose.msra.mxu0 0
          %1971 = vmatprep.subr.bf16.mxu0 0
          %1972 = vmatpush1.bf16.xpose.msra.mxu0 0
          %1973 = vmatprep.subr.bf16.mxu0 0
          %1974 = vmatpush1.bf16.xpose.msra.mxu0 0
          %1975 = vmatprep.subr.bf16.mxu0 0
          %1976 = vmatpush1.bf16.xpose.msra.mxu0 0
          %1977 = vmatprep.subr.bf16.mxu0 0
          %1978 = vmatpush1.bf16.xpose.msra.mxu0 0
          %1979 = vmatprep.subr.bf16.mxu0 0
          %1980 = vmatpush1.bf16.xpose.msra.mxu0 0
          %1981 = vmatprep.subr.bf16.mxu0 0
          %1982 = vmatpush1.bf16.xpose.msra.mxu0 0
          %1983 = vmatprep.subr.bf16.mxu0 0
          %1984 = vmatpush1.bf16.xpose.msra.mxu0 0
          %1985 = vmatprep.subr.bf16.mxu0 0
          %1986 = vmatpush1.bf16.xpose.msra.mxu0 0
          %1987 = vmatprep.mubr.bf16.mxu0 0
          %1988 = vmatmul.mubr.bf16.gmra.mrb[0].mxu0 %v1513
          %v1989 = vpop.f32.mrb[0].mxu0
          %v1990 = vadd.f32 0.0, %v1989
          %v1991 = vpop.f32.mrb[0].mxu0
          %v1992 = vpop.f32.mrb[0].mxu0
          %v1993 = vpop.f32.mrb[0].mxu0
          %1994 = vdwg.mxu0
          %v1996 = vsel %vm1511, %v1943, 0
          %1998 = vmatprep.subr.bf16.mxu0 0
          %1999 = vmatpush1.bf16.xpose.msra.mxu0 %v1996
          %2000 = vmatprep.subr.bf16.mxu0 0
          %2001 = vmatpush1.bf16.xpose.msra.mxu0 0
          %2002 = vmatprep.subr.bf16.mxu0 0
          %2003 = vmatpush1.bf16.xpose.msra.mxu0 0
          %2004 = vmatprep.subr.bf16.mxu0 0
          %2005 = vmatpush1.bf16.xpose.msra.mxu0 0
          %2006 = vmatprep.subr.bf16.mxu0 0
          %2007 = vmatpush1.bf16.xpose.msra.mxu0 0
          %2008 = vmatprep.subr.bf16.mxu0 0
          %2009 = vmatpush1.bf16.xpose.msra.mxu0 0
          %2010 = vmatprep.subr.bf16.mxu0 0
          %2011 = vmatpush1.bf16.xpose.msra.mxu0 0
          %2012 = vmatprep.subr.bf16.mxu0 0
          %2013 = vmatpush1.bf16.xpose.msra.mxu0 0
          %2014 = vmatprep.subr.bf16.mxu0 0
          %2015 = vmatpush1.bf16.xpose.msra.mxu0 0
          %2016 = vmatprep.subr.bf16.mxu0 0
          %2017 = vmatpush1.bf16.xpose.msra.mxu0 0
          %2018 = vmatprep.subr.bf16.mxu0 0
          %2019 = vmatpush1.bf16.xpose.msra.mxu0 0
          %2020 = vmatprep.subr.bf16.mxu0 0
          %2021 = vmatpush1.bf16.xpose.msra.mxu0 0
          %2022 = vmatprep.subr.bf16.mxu0 0
          %2023 = vmatpush1.bf16.xpose.msra.mxu0 0
          %2024 = vmatprep.subr.bf16.mxu0 0
          %2025 = vmatpush1.bf16.xpose.msra.mxu0 0
          %2026 = vmatprep.subr.bf16.mxu0 0
          %2027 = vmatpush1.bf16.xpose.msra.mxu0 0
          %2028 = vmatprep.subr.bf16.mxu0 0
          %2029 = vmatpush1.bf16.xpose.msra.mxu0 0
          %2030 = vmatprep.mubr.bf16.mxu0 0
          %2031 = vmatmul.mubr.bf16.gmra.mrb[0].mxu0 %v1559
          %v2032 = vpop.f32.mrb[0].mxu0
          %v2033 = vadd.f32 0.0, %v2032
          %v2034 = vpop.f32.mrb[0].mxu0
          %v2035 = vpop.f32.mrb[0].mxu0
          %v2036 = vpop.f32.mrb[0].mxu0
          %2037 = vdwg.mxu0
          %v2039 = vsel %vm1511, %v1944, 0
          %2041 = vmatprep.subr.bf16.mxu0 0
          %2042 = vmatpush1.bf16.xpose.msra.mxu0 %v2039
          %2043 = vmatprep.subr.bf16.mxu0 0
          %2044 = vmatpush1.bf16.xpose.msra.mxu0 0
          %2045 = vmatprep.subr.bf16.mxu0 0
          %2046 = vmatpush1.bf16.xpose.msra.mxu0 0
          %2047 = vmatprep.subr.bf16.mxu0 0
          %2048 = vmatpush1.bf16.xpose.msra.mxu0 0
          %2049 = vmatprep.subr.bf16.mxu0 0
          %2050 = vmatpush1.bf16.xpose.msra.mxu0 0
          %2051 = vmatprep.subr.bf16.mxu0 0
          %2052 = vmatpush1.bf16.xpose.msra.mxu0 0
          %2053 = vmatprep.subr.bf16.mxu0 0
          %2054 = vmatpush1.bf16.xpose.msra.mxu0 0
          %2055 = vmatprep.subr.bf16.mxu0 0
          %2056 = vmatpush1.bf16.xpose.msra.mxu0 0
          %2057 = vmatprep.subr.bf16.mxu0 0
          %2058 = vmatpush1.bf16.xpose.msra.mxu0 0
          %2059 = vmatprep.subr.bf16.mxu0 0
          %2060 = vmatpush1.bf16.xpose.msra.mxu0 0
          %2061 = vmatprep.subr.bf16.mxu0 0
          %2062 = vmatpush1.bf16.xpose.msra.mxu0 0
          %2063 = vmatprep.subr.bf16.mxu0 0
          %2064 = vmatpush1.bf16.xpose.msra.mxu0 0
          %2065 = vmatprep.subr.bf16.mxu0 0
          %2066 = vmatpush1.bf16.xpose.msra.mxu0 0
          %2067 = vmatprep.subr.bf16.mxu0 0
          %2068 = vmatpush1.bf16.xpose.msra.mxu0 0
          %2069 = vmatprep.subr.bf16.mxu0 0
          %2070 = vmatpush1.bf16.xpose.msra.mxu0 0
          %2071 = vmatprep.subr.bf16.mxu0 0
          %2072 = vmatpush1.bf16.xpose.msra.mxu0 0
          %2073 = vmatprep.mubr.bf16.mxu0 0
          %2074 = vmatmul.mubr.bf16.gmra.mrb[0].mxu0 %v1605
          %v2075 = vpop.f32.mrb[0].mxu0
          %v2076 = vadd.f32 0.0, %v2075
          %v2077 = vpop.f32.mrb[0].mxu0
          %v2078 = vpop.f32.mrb[0].mxu0
          %v2079 = vpop.f32.mrb[0].mxu0
          %2080 = vdwg.mxu0
          %v2082 = vsel %vm1511, %v1945, 0
          %2084 = vmatprep.subr.bf16.mxu0 0
          %2085 = vmatpush1.bf16.xpose.msra.mxu0 %v2082
          %2086 = vmatprep.subr.bf16.mxu0 0
          %2087 = vmatpush1.bf16.xpose.msra.mxu0 0
          %2088 = vmatprep.subr.bf16.mxu0 0
          %2089 = vmatpush1.bf16.xpose.msra.mxu0 0
          %2090 = vmatprep.subr.bf16.mxu0 0
          %2091 = vmatpush1.bf16.xpose.msra.mxu0 0
          %2092 = vmatprep.subr.bf16.mxu0 0
          %2093 = vmatpush1.bf16.xpose.msra.mxu0 0
          %2094 = vmatprep.subr.bf16.mxu0 0
          %2095 = vmatpush1.bf16.xpose.msra.mxu0 0
          %2096 = vmatprep.subr.bf16.mxu0 0
          %2097 = vmatpush1.bf16.xpose.msra.mxu0 0
          %2098 = vmatprep.subr.bf16.mxu0 0
          %2099 = vmatpush1.bf16.xpose.msra.mxu0 0
          %2100 = vmatprep.subr.bf16.mxu0 0
          %2101 = vmatpush1.bf16.xpose.msra.mxu0 0
          %2102 = vmatprep.subr.bf16.mxu0 0
          %2103 = vmatpush1.bf16.xpose.msra.mxu0 0
          %2104 = vmatprep.subr.bf16.mxu0 0
          %2105 = vmatpush1.bf16.xpose.msra.mxu0 0
          %2106 = vmatprep.subr.bf16.mxu0 0
          %2107 = vmatpush1.bf16.xpose.msra.mxu0 0
          %2108 = vmatprep.subr.bf16.mxu0 0
          %2109 = vmatpush1.bf16.xpose.msra.mxu0 0
          %2110 = vmatprep.subr.bf16.mxu0 0
          %2111 = vmatpush1.bf16.xpose.msra.mxu0 0
          %2112 = vmatprep.subr.bf16.mxu0 0
          %2113 = vmatpush1.bf16.xpose.msra.mxu0 0
          %2114 = vmatprep.subr.bf16.mxu0 0
          %2115 = vmatpush1.bf16.xpose.msra.mxu0 0
          %2116 = vmatprep.mubr.bf16.mxu0 0
          %2117 = vmatmul.mubr.bf16.gmra.mrb[0].mxu0 %v1651
          %v2118 = vpop.f32.mrb[0].mxu0
          %v2119 = vadd.f32 0.0, %v2118
          %v2120 = vpop.f32.mrb[0].mxu0
          %v2121 = vpop.f32.mrb[0].mxu0
          %v2122 = vpop.f32.mrb[0].mxu0
          %2123 = vdwg.mxu0
          %v2124 = vsel %vm1511, %v1990, -inf
          %2125 = vmax.xlane.f32.xlu0 %v2124
          %v2126 = vpop.xlane.xlu0 %2125
          %v2127 = vsel %vm1511, %v2033, -inf
          %2128 = vmax.xlane.f32.xlu0 %v2127
          %v2129 = vpop.xlane.xlu0 %2128
          %v2130 = vsel %vm1511, %v2076, -inf
          %2131 = vmax.xlane.f32.xlu0 %v2130
          %v2132 = vpop.xlane.xlu0 %2131
          %v2133 = vsel %vm1511, %v2119, -inf
          %2134 = vmax.xlane.f32.xlu0 %v2133
          %v2135 = vpop.xlane.xlu0 %2134
          %v2136 = vmax.f32 %v1927, %v2126
          %v2137 = vmax.f32 %v1928, %v2129
          %v2138 = vmax.f32 %v1929, %v2132
          %v2139 = vmax.f32 %v1930, %v2135
          %v2140 = vsub.f32 %v1927, %v2136
          %v2141 = vsub.f32 %v1928, %v2137
          %v2142 = vsub.f32 %v1929, %v2138
          %v2143 = vsub.f32 %v1930, %v2139
          %v2144 = vmul.f32 %v2140, 1.442695
          %v2145 = vpow.pop %v2144
          %v2146 = vmul.f32 %v2141, 1.442695
          %v2147 = vpow.pop %v2146
          %v2148 = vmul.f32 %v2142, 1.442695
          %v2149 = vpow.pop %v2148
          %v2150 = vmul.f32 %v2143, 1.442695
          %v2151 = vpow.pop %v2150
          %v2152 = vsub.f32 %v1990, %v2136
          %v2153 = vsub.f32 %v2033, %v2137
          %v2154 = vsub.f32 %v2076, %v2138
          %v2155 = vsub.f32 %v2119, %v2139
          %v2156 = vmul.f32 %v2152, 1.442695
          %v2157 = vpow.pop %v2156
          %v2158 = vmul.f32 %v2153, 1.442695
          %v2159 = vpow.pop %v2158
          %v2160 = vmul.f32 %v2154, 1.442695
          %v2161 = vpow.pop %v2160
          %v2162 = vmul.f32 %v2155, 1.442695
          %v2163 = vpow.pop %v2162
          %v2164 = vmul.f32 %v2145, %v1931
          %v2165 = vmul.f32 %v2147, %v1932
          %v2166 = vmul.f32 %v2149, %v1933
          %v2167 = vmul.f32 %v2151, %v1934
          %v2168 = vsel %vm1511, %v2157, 0.0
          %2169 = vadd.xlane.f32.xlu0 %v2168
          %v2170 = vpop.xlane.xlu0 %2169
          %v2171 = vsel %vm1511, %v2159, 0.0
          %2172 = vadd.xlane.f32.xlu0 %v2171
          %v2173 = vpop.xlane.xlu0 %2172
          %v2174 = vsel %vm1511, %v2161, 0.0
          %2175 = vadd.xlane.f32.xlu0 %v2174
          %v2176 = vpop.xlane.xlu0 %2175
          %v2177 = vsel %vm1511, %v2163, 0.0
          %2178 = vadd.xlane.f32.xlu0 %v2177
          %v2179 = vpop.xlane.xlu0 %2178
          %v2180 = vadd.f32 %v2164, %v2170
          %v2181 = vadd.f32 %v2165, %v2173
          %v2182 = vadd.f32 %v2166, %v2176
          %v2183 = vadd.f32 %v2167, %v2179
          %v2184 = vmul.f32 %v2145, %v1935
          %v2185 = vmul.f32 %v2147, %v1936
          %v2186 = vmul.f32 %v2149, %v1937
          %v2187 = vmul.f32 %v2151, %v1938
          %v2188 = vpack.c.bf16 %v2157, %v2157
          %v2189 = vpack.c.bf16 %v2159, %v2159
          %v2190 = vpack.c.bf16 %v2161, %v2161
          %v2191 = vpack.c.bf16 %v2163, %v2163
          %v2193 = vsel %vm1511, %v2188, 0
          %v2196 = vsel %vm1739, %v1948, 0
          %2198 = vmatprep.subr.bf16.mxu0 0
          %2199 = vmatpush1.bf16.msra.mxu0 %v2196
          %2200 = vmatprep.subr.bf16.mxu0 0
          %2201 = vmatpush1.bf16.msra.mxu0 0
          %2202 = vmatprep.subr.bf16.mxu0 0
          %2203 = vmatpush1.bf16.msra.mxu0 0
          %2204 = vmatprep.subr.bf16.mxu0 0
          %2205 = vmatpush1.bf16.msra.mxu0 0
          %2206 = vmatprep.subr.bf16.mxu0 0
          %2207 = vmatpush1.bf16.msra.mxu0 0
          %2208 = vmatprep.subr.bf16.mxu0 0
          %2209 = vmatpush1.bf16.msra.mxu0 0
          %2210 = vmatprep.subr.bf16.mxu0 0
          %2211 = vmatpush1.bf16.msra.mxu0 0
          %2212 = vmatprep.subr.bf16.mxu0 0
          %2213 = vmatpush1.bf16.msra.mxu0 0
          %2214 = vmatprep.subr.bf16.mxu0 0
          %2215 = vmatpush1.bf16.msra.mxu0 0
          %2216 = vmatprep.subr.bf16.mxu0 0
          %2217 = vmatpush1.bf16.msra.mxu0 0
          %2218 = vmatprep.subr.bf16.mxu0 0
          %2219 = vmatpush1.bf16.msra.mxu0 0
          %2220 = vmatprep.subr.bf16.mxu0 0
          %2221 = vmatpush1.bf16.msra.mxu0 0
          %2222 = vmatprep.subr.bf16.mxu0 0
          %2223 = vmatpush1.bf16.msra.mxu0 0
          %2224 = vmatprep.subr.bf16.mxu0 0
          %2225 = vmatpush1.bf16.msra.mxu0 0
          %2226 = vmatprep.subr.bf16.mxu0 0
          %2227 = vmatpush1.bf16.msra.mxu0 0
          %2228 = vmatprep.subr.bf16.mxu0 0
          %2229 = vmatpush1.bf16.msra.mxu0 0
          %2230 = vmatprep.mubr.bf16.mxu0 0
          %2231 = vmatmul.mubr.bf16.gmra.mrb[0].mxu0 %v2193
          %v2232 = vpop.f32.mrb[0].mxu0
          %v2233 = vadd.f32 0.0, %v2232
          %v2234 = vpop.f32.mrb[0].mxu0
          %v2235 = vpop.f32.mrb[0].mxu0
          %v2236 = vpop.f32.mrb[0].mxu0
          %2237 = vdwg.mxu0
          %v2239 = vsel %vm1511, %v2189, 0
          %v2242 = vsel %vm1739, %v1949, 0
          %2244 = vmatprep.subr.bf16.mxu0 0
          %2245 = vmatpush1.bf16.msra.mxu0 %v2242
          %2246 = vmatprep.subr.bf16.mxu0 0
          %2247 = vmatpush1.bf16.msra.mxu0 0
          %2248 = vmatprep.subr.bf16.mxu0 0
          %2249 = vmatpush1.bf16.msra.mxu0 0
          %2250 = vmatprep.subr.bf16.mxu0 0
          %2251 = vmatpush1.bf16.msra.mxu0 0
          %2252 = vmatprep.subr.bf16.mxu0 0
          %2253 = vmatpush1.bf16.msra.mxu0 0
          %2254 = vmatprep.subr.bf16.mxu0 0
          %2255 = vmatpush1.bf16.msra.mxu0 0
          %2256 = vmatprep.subr.bf16.mxu0 0
          %2257 = vmatpush1.bf16.msra.mxu0 0
          %2258 = vmatprep.subr.bf16.mxu0 0
          %2259 = vmatpush1.bf16.msra.mxu0 0
          %2260 = vmatprep.subr.bf16.mxu0 0
          %2261 = vmatpush1.bf16.msra.mxu0 0
          %2262 = vmatprep.subr.bf16.mxu0 0
          %2263 = vmatpush1.bf16.msra.mxu0 0
          %2264 = vmatprep.subr.bf16.mxu0 0
          %2265 = vmatpush1.bf16.msra.mxu0 0
          %2266 = vmatprep.subr.bf16.mxu0 0
          %2267 = vmatpush1.bf16.msra.mxu0 0
          %2268 = vmatprep.subr.bf16.mxu0 0
          %2269 = vmatpush1.bf16.msra.mxu0 0
          %2270 = vmatprep.subr.bf16.mxu0 0
          %2271 = vmatpush1.bf16.msra.mxu0 0
          %2272 = vmatprep.subr.bf16.mxu0 0
          %2273 = vmatpush1.bf16.msra.mxu0 0
          %2274 = vmatprep.subr.bf16.mxu0 0
          %2275 = vmatpush1.bf16.msra.mxu0 0
          %2276 = vmatprep.mubr.bf16.mxu0 0
          %2277 = vmatmul.mubr.bf16.gmra.mrb[0].mxu0 %v2239
          %v2278 = vpop.f32.mrb[0].mxu0
          %v2279 = vadd.f32 0.0, %v2278
          %v2280 = vpop.f32.mrb[0].mxu0
          %v2281 = vpop.f32.mrb[0].mxu0
          %v2282 = vpop.f32.mrb[0].mxu0
          %2283 = vdwg.mxu0
          %v2285 = vsel %vm1511, %v2190, 0
          %v2288 = vsel %vm1739, %v1950, 0
          %2290 = vmatprep.subr.bf16.mxu0 0
          %2291 = vmatpush1.bf16.msra.mxu0 %v2288
          %2292 = vmatprep.subr.bf16.mxu0 0
          %2293 = vmatpush1.bf16.msra.mxu0 0
          %2294 = vmatprep.subr.bf16.mxu0 0
          %2295 = vmatpush1.bf16.msra.mxu0 0
          %2296 = vmatprep.subr.bf16.mxu0 0
          %2297 = vmatpush1.bf16.msra.mxu0 0
          %2298 = vmatprep.subr.bf16.mxu0 0
          %2299 = vmatpush1.bf16.msra.mxu0 0
          %2300 = vmatprep.subr.bf16.mxu0 0
          %2301 = vmatpush1.bf16.msra.mxu0 0
          %2302 = vmatprep.subr.bf16.mxu0 0
          %2303 = vmatpush1.bf16.msra.mxu0 0
          %2304 = vmatprep.subr.bf16.mxu0 0
          %2305 = vmatpush1.bf16.msra.mxu0 0
          %2306 = vmatprep.subr.bf16.mxu0 0
          %2307 = vmatpush1.bf16.msra.mxu0 0
          %2308 = vmatprep.subr.bf16.mxu0 0
          %2309 = vmatpush1.bf16.msra.mxu0 0
          %2310 = vmatprep.subr.bf16.mxu0 0
          %2311 = vmatpush1.bf16.msra.mxu0 0
          %2312 = vmatprep.subr.bf16.mxu0 0
          %2313 = vmatpush1.bf16.msra.mxu0 0
          %2314 = vmatprep.subr.bf16.mxu0 0
          %2315 = vmatpush1.bf16.msra.mxu0 0
          %2316 = vmatprep.subr.bf16.mxu0 0
          %2317 = vmatpush1.bf16.msra.mxu0 0
          %2318 = vmatprep.subr.bf16.mxu0 0
          %2319 = vmatpush1.bf16.msra.mxu0 0
          %2320 = vmatprep.subr.bf16.mxu0 0
          %2321 = vmatpush1.bf16.msra.mxu0 0
          %2322 = vmatprep.mubr.bf16.mxu0 0
          %2323 = vmatmul.mubr.bf16.gmra.mrb[0].mxu0 %v2285
          %v2324 = vpop.f32.mrb[0].mxu0
          %v2325 = vadd.f32 0.0, %v2324
          %v2326 = vpop.f32.mrb[0].mxu0
          %v2327 = vpop.f32.mrb[0].mxu0
          %v2328 = vpop.f32.mrb[0].mxu0
          %2329 = vdwg.mxu0
          %v2331 = vsel %vm1511, %v2191, 0
          %v2334 = vsel %vm1739, %v1951, 0
          %2336 = vmatprep.subr.bf16.mxu0 0
          %2337 = vmatpush1.bf16.msra.mxu0 %v2334
          %2338 = vmatprep.subr.bf16.mxu0 0
          %2339 = vmatpush1.bf16.msra.mxu0 0
          %2340 = vmatprep.subr.bf16.mxu0 0
          %2341 = vmatpush1.bf16.msra.mxu0 0
          %2342 = vmatprep.subr.bf16.mxu0 0
          %2343 = vmatpush1.bf16.msra.mxu0 0
          %2344 = vmatprep.subr.bf16.mxu0 0
          %2345 = vmatpush1.bf16.msra.mxu0 0
          %2346 = vmatprep.subr.bf16.mxu0 0
          %2347 = vmatpush1.bf16.msra.mxu0 0
          %2348 = vmatprep.subr.bf16.mxu0 0
          %2349 = vmatpush1.bf16.msra.mxu0 0
          %2350 = vmatprep.subr.bf16.mxu0 0
          %2351 = vmatpush1.bf16.msra.mxu0 0
          %2352 = vmatprep.subr.bf16.mxu0 0
          %2353 = vmatpush1.bf16.msra.mxu0 0
          %2354 = vmatprep.subr.bf16.mxu0 0
          %2355 = vmatpush1.bf16.msra.mxu0 0
          %2356 = vmatprep.subr.bf16.mxu0 0
          %2357 = vmatpush1.bf16.msra.mxu0 0
          %2358 = vmatprep.subr.bf16.mxu0 0
          %2359 = vmatpush1.bf16.msra.mxu0 0
          %2360 = vmatprep.subr.bf16.mxu0 0
          %2361 = vmatpush1.bf16.msra.mxu0 0
          %2362 = vmatprep.subr.bf16.mxu0 0
          %2363 = vmatpush1.bf16.msra.mxu0 0
          %2364 = vmatprep.subr.bf16.mxu0 0
          %2365 = vmatpush1.bf16.msra.mxu0 0
          %2366 = vmatprep.subr.bf16.mxu0 0
          %2367 = vmatpush1.bf16.msra.mxu0 0
          %2368 = vmatprep.mubr.bf16.mxu0 0
          %2369 = vmatmul.mubr.bf16.gmra.mrb[0].mxu0 %v2331
          %v2370 = vpop.f32.mrb[0].mxu0
          %v2371 = vadd.f32 0.0, %v2370
          %v2372 = vpop.f32.mrb[0].mxu0
          %v2373 = vpop.f32.mrb[0].mxu0
          %v2374 = vpop.f32.mrb[0].mxu0
          %2375 = vdwg.mxu0
          %v2376 = vadd.f32 %v2184, %v2233
          %v2377 = vadd.f32 %v2185, %v2279
          %v2378 = vadd.f32 %v2186, %v2325
          %v2379 = vadd.f32 %v2187, %v2371
        $region157: #{tpu_custom_call.1} parent=103 // loop_footer
          %s1924 = sadd.s32 %s1922, 1
        $region158: #{tpu_custom_call.1} parent=103 // loop_footer_branch
          %1921 = sbr.rel target = $region154
        $region159: #{tpu_custom_call.1} parent=103 // loop_exit
          _
        %v2380 = vrcp.pop %v1931
        %v2381 = vmul.f32 %v1935, %v2380
        %v2382 = vrcp.pop %v1932
        %v2383 = vmul.f32 %v1936, %v2382
        %v2384 = vrcp.pop %v1933
        %v2385 = vmul.f32 %v1937, %v2384
        %v2386 = vrcp.pop %v1934
        %v2387 = vmul.f32 %v1938, %v2386
        %v2388 = vpack.c.bf16 %v2381, %v2381
        %v2389 = vpack.c.bf16 %v2383, %v2383
        %v2390 = vpack.c.bf16 %v2385, %v2385
        %v2391 = vpack.c.bf16 %v2387, %v2387
        %v2392 = vld [vmem:[#allocation16] sm:$0xf]
        %v2393 = vld [vmem:[#allocation16 + $0x4] sm:$0xf]
        %v2394 = vld [vmem:[#allocation16 + $0x8] sm:$0xf]
        %v2395 = vld [vmem:[#allocation16 + $0xc] sm:$0xf]
        %v2397 = vsel %vm1511, %v2388, 0
        %v2400 = vsel %vm1739, %v2392, 0
        %2402 = vmatprep.subr.bf16.mxu0 0
        %2403 = vmatpush1.bf16.msra.mxu0 %v2400
        %2404 = vmatprep.subr.bf16.mxu0 0
        %2405 = vmatpush1.bf16.msra.mxu0 0
        %2406 = vmatprep.subr.bf16.mxu0 0
        %2407 = vmatpush1.bf16.msra.mxu0 0
        %2408 = vmatprep.subr.bf16.mxu0 0
        %2409 = vmatpush1.bf16.msra.mxu0 0
        %2410 = vmatprep.subr.bf16.mxu0 0
        %2411 = vmatpush1.bf16.msra.mxu0 0
        %2412 = vmatprep.subr.bf16.mxu0 0
        %2413 = vmatpush1.bf16.msra.mxu0 0
        %2414 = vmatprep.subr.bf16.mxu0 0
        %2415 = vmatpush1.bf16.msra.mxu0 0
        %2416 = vmatprep.subr.bf16.mxu0 0
        %2417 = vmatpush1.bf16.msra.mxu0 0
        %2418 = vmatprep.subr.bf16.mxu0 0
        %2419 = vmatpush1.bf16.msra.mxu0 0
        %2420 = vmatprep.subr.bf16.mxu0 0
        %2421 = vmatpush1.bf16.msra.mxu0 0
        %2422 = vmatprep.subr.bf16.mxu0 0
        %2423 = vmatpush1.bf16.msra.mxu0 0
        %2424 = vmatprep.subr.bf16.mxu0 0
        %2425 = vmatpush1.bf16.msra.mxu0 0
        %2426 = vmatprep.subr.bf16.mxu0 0
        %2427 = vmatpush1.bf16.msra.mxu0 0
        %2428 = vmatprep.subr.bf16.mxu0 0
        %2429 = vmatpush1.bf16.msra.mxu0 0
        %2430 = vmatprep.subr.bf16.mxu0 0
        %2431 = vmatpush1.bf16.msra.mxu0 0
        %2432 = vmatprep.subr.bf16.mxu0 0
        %2433 = vmatpush1.bf16.msra.mxu0 0
        %2434 = vmatprep.mubr.bf16.mxu0 0
        %2435 = vmatmul.mubr.bf16.gmra.mrb[0].mxu0 %v2397
        %v2436 = vpop.f32.mrb[0].mxu0
        %v2437 = vadd.f32 0.0, %v2436
        %v2438 = vpop.f32.mrb[0].mxu0
        %v2439 = vpop.f32.mrb[0].mxu0
        %v2440 = vpop.f32.mrb[0].mxu0
        %2441 = vdwg.mxu0
        %v2443 = vsel %vm1511, %v2389, 0
        %v2446 = vsel %vm1739, %v2393, 0
        %2448 = vmatprep.subr.bf16.mxu0 0
        %2449 = vmatpush1.bf16.msra.mxu0 %v2446
        %2450 = vmatprep.subr.bf16.mxu0 0
        %2451 = vmatpush1.bf16.msra.mxu0 0
        %2452 = vmatprep.subr.bf16.mxu0 0
        %2453 = vmatpush1.bf16.msra.mxu0 0
        %2454 = vmatprep.subr.bf16.mxu0 0
        %2455 = vmatpush1.bf16.msra.mxu0 0
        %2456 = vmatprep.subr.bf16.mxu0 0
        %2457 = vmatpush1.bf16.msra.mxu0 0
        %2458 = vmatprep.subr.bf16.mxu0 0
        %2459 = vmatpush1.bf16.msra.mxu0 0
        %2460 = vmatprep.subr.bf16.mxu0 0
        %2461 = vmatpush1.bf16.msra.mxu0 0
        %2462 = vmatprep.subr.bf16.mxu0 0
        %2463 = vmatpush1.bf16.msra.mxu0 0
        %2464 = vmatprep.subr.bf16.mxu0 0
        %2465 = vmatpush1.bf16.msra.mxu0 0
        %2466 = vmatprep.subr.bf16.mxu0 0
        %2467 = vmatpush1.bf16.msra.mxu0 0
        %2468 = vmatprep.subr.bf16.mxu0 0
        %2469 = vmatpush1.bf16.msra.mxu0 0
        %2470 = vmatprep.subr.bf16.mxu0 0
        %2471 = vmatpush1.bf16.msra.mxu0 0
        %2472 = vmatprep.subr.bf16.mxu0 0
        %2473 = vmatpush1.bf16.msra.mxu0 0
        %2474 = vmatprep.subr.bf16.mxu0 0
        %2475 = vmatpush1.bf16.msra.mxu0 0
        %2476 = vmatprep.subr.bf16.mxu0 0
        %2477 = vmatpush1.bf16.msra.mxu0 0
        %2478 = vmatprep.subr.bf16.mxu0 0
        %2479 = vmatpush1.bf16.msra.mxu0 0
        %2480 = vmatprep.mubr.bf16.mxu0 0
        %2481 = vmatmul.mubr.bf16.gmra.mrb[0].mxu0 %v2443
        %v2482 = vpop.f32.mrb[0].mxu0
        %v2483 = vadd.f32 0.0, %v2482
        %v2484 = vpop.f32.mrb[0].mxu0
        %v2485 = vpop.f32.mrb[0].mxu0
        %v2486 = vpop.f32.mrb[0].mxu0
        %2487 = vdwg.mxu0
        %v2489 = vsel %vm1511, %v2390, 0
        %v2492 = vsel %vm1739, %v2394, 0
        %2494 = vmatprep.subr.bf16.mxu0 0
        %2495 = vmatpush1.bf16.msra.mxu0 %v2492
        %2496 = vmatprep.subr.bf16.mxu0 0
        %2497 = vmatpush1.bf16.msra.mxu0 0
        %2498 = vmatprep.subr.bf16.mxu0 0
        %2499 = vmatpush1.bf16.msra.mxu0 0
        %2500 = vmatprep.subr.bf16.mxu0 0
        %2501 = vmatpush1.bf16.msra.mxu0 0
        %2502 = vmatprep.subr.bf16.mxu0 0
        %2503 = vmatpush1.bf16.msra.mxu0 0
        %2504 = vmatprep.subr.bf16.mxu0 0
        %2505 = vmatpush1.bf16.msra.mxu0 0
        %2506 = vmatprep.subr.bf16.mxu0 0
        %2507 = vmatpush1.bf16.msra.mxu0 0
        %2508 = vmatprep.subr.bf16.mxu0 0
        %2509 = vmatpush1.bf16.msra.mxu0 0
        %2510 = vmatprep.subr.bf16.mxu0 0
        %2511 = vmatpush1.bf16.msra.mxu0 0
        %2512 = vmatprep.subr.bf16.mxu0 0
        %2513 = vmatpush1.bf16.msra.mxu0 0
        %2514 = vmatprep.subr.bf16.mxu0 0
        %2515 = vmatpush1.bf16.msra.mxu0 0
        %2516 = vmatprep.subr.bf16.mxu0 0
        %2517 = vmatpush1.bf16.msra.mxu0 0
        %2518 = vmatprep.subr.bf16.mxu0 0
        %2519 = vmatpush1.bf16.msra.mxu0 0
        %2520 = vmatprep.subr.bf16.mxu0 0
        %2521 = vmatpush1.bf16.msra.mxu0 0
        %2522 = vmatprep.subr.bf16.mxu0 0
        %2523 = vmatpush1.bf16.msra.mxu0 0
        %2524 = vmatprep.subr.bf16.mxu0 0
        %2525 = vmatpush1.bf16.msra.mxu0 0
        %2526 = vmatprep.mubr.bf16.mxu0 0
        %2527 = vmatmul.mubr.bf16.gmra.mrb[0].mxu0 %v2489
        %v2528 = vpop.f32.mrb[0].mxu0
        %v2529 = vadd.f32 0.0, %v2528
        %v2530 = vpop.f32.mrb[0].mxu0
        %v2531 = vpop.f32.mrb[0].mxu0
        %v2532 = vpop.f32.mrb[0].mxu0
        %2533 = vdwg.mxu0
        %v2535 = vsel %vm1511, %v2391, 0
        %v2538 = vsel %vm1739, %v2395, 0
        %2540 = vmatprep.subr.bf16.mxu0 0
        %2541 = vmatpush1.bf16.msra.mxu0 %v2538
        %2542 = vmatprep.subr.bf16.mxu0 0
        %2543 = vmatpush1.bf16.msra.mxu0 0
        %2544 = vmatprep.subr.bf16.mxu0 0
        %2545 = vmatpush1.bf16.msra.mxu0 0
        %2546 = vmatprep.subr.bf16.mxu0 0
        %2547 = vmatpush1.bf16.msra.mxu0 0
        %2548 = vmatprep.subr.bf16.mxu0 0
        %2549 = vmatpush1.bf16.msra.mxu0 0
        %2550 = vmatprep.subr.bf16.mxu0 0
        %2551 = vmatpush1.bf16.msra.mxu0 0
        %2552 = vmatprep.subr.bf16.mxu0 0
        %2553 = vmatpush1.bf16.msra.mxu0 0
        %2554 = vmatprep.subr.bf16.mxu0 0
        %2555 = vmatpush1.bf16.msra.mxu0 0
        %2556 = vmatprep.subr.bf16.mxu0 0
        %2557 = vmatpush1.bf16.msra.mxu0 0
        %2558 = vmatprep.subr.bf16.mxu0 0
        %2559 = vmatpush1.bf16.msra.mxu0 0
        %2560 = vmatprep.subr.bf16.mxu0 0
        %2561 = vmatpush1.bf16.msra.mxu0 0
        %2562 = vmatprep.subr.bf16.mxu0 0
        %2563 = vmatpush1.bf16.msra.mxu0 0
        %2564 = vmatprep.subr.bf16.mxu0 0
        %2565 = vmatpush1.bf16.msra.mxu0 0
        %2566 = vmatprep.subr.bf16.mxu0 0
        %2567 = vmatpush1.bf16.msra.mxu0 0
        %2568 = vmatprep.subr.bf16.mxu0 0
        %2569 = vmatpush1.bf16.msra.mxu0 0
        %2570 = vmatprep.subr.bf16.mxu0 0
        %2571 = vmatpush1.bf16.msra.mxu0 0
        %2572 = vmatprep.mubr.bf16.mxu0 0
        %2573 = vmatmul.mubr.bf16.gmra.mrb[0].mxu0 %v2535
        %v2574 = vpop.f32.mrb[0].mxu0
        %v2575 = vadd.f32 0.0, %v2574
        %v2576 = vpop.f32.mrb[0].mxu0
        %v2577 = vpop.f32.mrb[0].mxu0
        %v2578 = vpop.f32.mrb[0].mxu0
        %2579 = vdwg.mxu0
        %v2580 = vsel %vm876, %v2437, 0.0
        %v2581 = vsel %vm876, %v2483, 0.0
        %v2582 = vadd.f32 %v2580, %v2581
        %v2583 = vsel %vm876, %v2529, 0.0
        %v2584 = vadd.f32 %v2582, %v2583
        %v2585 = vsel %vm876, %v2575, 0.0
        %v2586 = vadd.f32 %v2584, %v2585
        %v2587 = vld [vmem:[#allocation18] sm:$0x1]
        %v2589 = vlaneseq
        %v2590 = vshrl.u32 %v2589, 7
        %v2591 = vsub.s32 0, %v2590
        %v2592 = vrot.slane %v2587, %v2591
        %v2594 = vadd.f32 %v2586, %v2592
        %v2595 = vadd.f32 %v873, %v2594
        %v2596 = vld [vmem:[#allocation9] sm:$0x1]
        %v2597 = vld [vmem:[#allocation10] sm:$0x1]
        %v2598 = vsel %vm876, %v2595, 0.0
        %2599 = vadd.xlane.f32.xlu0 %v2598
        %v2600 = vpop.xlane.xlu0 %2599
        %v2601 = vmul.f32 %v2600, %v880
        %v2602 = vsub.f32 %v2595, %v2601
        %v2603 = vmul.f32 %v2602, %v2602
        %v2604 = vsel %vm876, %v2603, 0.0
        %2605 = vadd.xlane.f32.xlu0 %v2604
        %v2606 = vpop.xlane.xlu0 %2605
        %v2607 = vmul.f32 %v2606, %v880
        %v2608 = vadd.f32 %v2607, 1e-05
        %v2609 = vrsqrt.pop %v2608
        %v2610 = vmul.f32 %v2602, %v2609
        %v2612 = vlaneseq
        %v2613 = vshrl.u32 %v2612, 7
        %v2614 = vsub.s32 0, %v2613
        %v2615 = vrot.slane %v2596, %v2614
        %v2617 = vmul.f32 %v2610, %v2615
        %v2619 = vlaneseq
        %v2620 = vshrl.u32 %v2619, 7
        %v2621 = vsub.s32 0, %v2620
        %v2622 = vrot.slane %v2597, %v2621
        %v2624 = vadd.f32 %v2617, %v2622
        %v2625 = vpack.c.bf16 %v2624, %v2624
        %v2626 = vld [vmem:[%s13] sm:$0xf]
        %v2627 = vld [vmem:[%s13 + $0x4] sm:$0xf]
        %v2628 = vld [vmem:[%s13 + $0x8] sm:$0xf]
        %v2629 = vld [vmem:[%s13 + $0xc] sm:$0xf]
        %v2630 = vld [vmem:[#allocation19] sm:$0x1]
        %v2632 = vlaneseq
        %v2633 = vshrl.u32 %v2632, 7
        %v2634 = vsub.s32 0, %v2633
        %v2635 = vrot.slane %v2630, %v2634
        %v2641 = vunpack.c.l.b16 %v2626
        %v2642 = vunpack.c.l.b16 %v2627
        %v2643 = vunpack.c.l.b16 %v2628
        %v2644 = vunpack.c.l.b16 %v2629
        %v2645 = vpack.c.b16 %v2642, %v2641
        %v2646 = vpack.c.b16 %v2644, %v2643
        %v2650 = vsel %vm876, %v2625, 0
        %2652 = vmatprep.subr.bf16.mxu0 0
        %2653 = vmatpush1.bf16.msra.mxu0 %v2645
        %2654 = vmatprep.subr.bf16.mxu0 0
        %2655 = vmatpush1.bf16.msra.mxu0 %v2646
        %2656 = vmatprep.subr.bf16.mxu0 0
        %2657 = vmatpush1.bf16.msra.mxu0 0
        %2658 = vmatprep.subr.bf16.mxu0 0
        %2659 = vmatpush1.bf16.msra.mxu0 0
        %2660 = vmatprep.subr.bf16.mxu0 0
        %2661 = vmatpush1.bf16.msra.mxu0 0
        %2662 = vmatprep.subr.bf16.mxu0 0
        %2663 = vmatpush1.bf16.msra.mxu0 0
        %2664 = vmatprep.subr.bf16.mxu0 0
        %2665 = vmatpush1.bf16.msra.mxu0 0
        %2666 = vmatprep.subr.bf16.mxu0 0
        %2667 = vmatpush1.bf16.msra.mxu0 0
        %2668 = vmatprep.subr.bf16.mxu0 0
        %2669 = vmatpush1.bf16.msra.mxu0 0
        %2670 = vmatprep.subr.bf16.mxu0 0
        %2671 = vmatpush1.bf16.msra.mxu0 0
        %2672 = vmatprep.subr.bf16.mxu0 0
        %2673 = vmatpush1.bf16.msra.mxu0 0
        %2674 = vmatprep.subr.bf16.mxu0 0
        %2675 = vmatpush1.bf16.msra.mxu0 0
        %2676 = vmatprep.subr.bf16.mxu0 0
        %2677 = vmatpush1.bf16.msra.mxu0 0
        %2678 = vmatprep.subr.bf16.mxu0 0
        %2679 = vmatpush1.bf16.msra.mxu0 0
        %2680 = vmatprep.subr.bf16.mxu0 0
        %2681 = vmatpush1.bf16.msra.mxu0 0
        %2682 = vmatprep.subr.bf16.mxu0 0
        %2683 = vmatpush1.bf16.msra.mxu0 0
        %2684 = vmatprep.mubr.bf16.mxu0 0
        %2685 = vmatmul.mubr.bf16.gmra.mrb[0].mxu0 %v2650
        %v2686 = vpop.f32.mrb[0].mxu0
        %v2687 = vadd.f32 %v2635, %v2686
        %v2688 = vpop.f32.mrb[0].mxu0
        %v2689 = vpop.f32.mrb[0].mxu0
        %v2690 = vpop.f32.mrb[0].mxu0
        %2691 = vdwg.mxu0
        %v2692 = vpack.c.bf16 %v2687, %v2687
        %2694 = vrot.lane.b32.xlu0 %v2692, 120
        %v2695 = vpop.permute.xlu0 %2694
        %2696 = vrot.lane.b32.xlu0 %v2692, 112
        %v2697 = vpop.permute.xlu0 %2696
        %2698 = vrot.lane.b32.xlu0 %v2692, 104
        %v2699 = vpop.permute.xlu0 %2698
        %v2701 = vunpack.c.l.s4 1983009808
        %v2702 = vunpack.c.0.s8 %v2701
        %v2703 = vlaneseq
        %v2704 = vshrl.u32 %v2703, 7
        %v2705 = vsub.s32 %v2702, %v2704
        %v2706 = vrot.slane %v2692, %v2705
        %v2709 = vunpack.c.l.s4 1983009808
        %v2710 = vunpack.c.0.s8 %v2709
        %v2711 = vlaneseq
        %v2712 = vshrl.u32 %v2711, 7
        %v2713 = vsub.s32 %v2710, %v2712
        %v2714 = vrot.slane %v2697, %v2713
        %v2715 = vcombine.low %v2706, %v2714
        %v2716 = vcombine.high %v2706, %v2714
        %v2718 = vunpack.c.l.s4 1934713408
        %v2719 = vunpack.c.0.s8 %v2718
        %v2720 = vlaneseq
        %v2721 = vshrl.u32 %v2720, 7
        %v2722 = vsub.s32 %v2719, %v2721
        %v2723 = vrot.slane %v2715, %v2722
        %v2725 = vunpack.c.l.s4 1934713408
        %v2726 = vunpack.c.0.s8 %v2725
        %v2727 = vlaneseq
        %v2728 = vshrl.u32 %v2727, 7
        %v2729 = vsub.s32 %v2726, %v2728
        %v2730 = vrot.slane %v2716, %v2729
        %v2731 = vcombine.high %v2723, 0
        %v2732 = vcombine.high %v2730, 0
        %v2735 = vunpack.c.l.s4 1983009808
        %v2736 = vunpack.c.0.s8 %v2735
        %v2737 = vlaneseq
        %v2738 = vshrl.u32 %v2737, 7
        %v2739 = vsub.s32 %v2736, %v2738
        %v2740 = vrot.slane %v2695, %v2739
        %v2743 = vunpack.c.l.s4 1983009808
        %v2744 = vunpack.c.0.s8 %v2743
        %v2745 = vlaneseq
        %v2746 = vshrl.u32 %v2745, 7
        %v2747 = vsub.s32 %v2744, %v2746
        %v2748 = vrot.slane %v2699, %v2747
        %v2749 = vcombine.low %v2740, %v2748
        %v2750 = vcombine.high %v2740, %v2748
        %v2752 = vunpack.c.l.s4 1934713408
        %v2753 = vunpack.c.0.s8 %v2752
        %v2754 = vlaneseq
        %v2755 = vshrl.u32 %v2754, 7
        %v2756 = vsub.s32 %v2753, %v2755
        %v2757 = vrot.slane %v2749, %v2756
        %v2759 = vunpack.c.l.s4 1934713408
        %v2760 = vunpack.c.0.s8 %v2759
        %v2761 = vlaneseq
        %v2762 = vshrl.u32 %v2761, 7
        %v2763 = vsub.s32 %v2760, %v2762
        %v2764 = vrot.slane %v2750, %v2763
        %v2765 = vcombine.high %v2757, 0
        %v2766 = vcombine.high %v2764, 0
        %v2769 = vpack.i.b16 %v2757, %v2723
        %v2771 = vshrl.u32 %v2723, 16
        %v2772 = vshrl.u32 %v2757, 16
        %v2773 = vpack.i.b16 %v2772, %v2771
        %v2777 = vpack.i.b16 %v2765, %v2731
        %v2779 = vshrl.u32 %v2731, 16
        %v2780 = vshrl.u32 %v2765, 16
        %v2781 = vpack.i.b16 %v2780, %v2779
        %v2785 = vpack.i.b16 %v2764, %v2730
        %v2787 = vshrl.u32 %v2730, 16
        %v2788 = vshrl.u32 %v2764, 16
        %v2789 = vpack.i.b16 %v2788, %v2787
        %v2793 = vpack.i.b16 %v2766, %v2732
        %v2795 = vshrl.u32 %v2732, 16
        %v2796 = vshrl.u32 %v2766, 16
        %v2797 = vpack.i.b16 %v2796, %v2795
        %v2799 = vcombine.low %v2769, %v2785
        %v2801 = vunpack.c.l.s4 1983009808
        %v2802 = vunpack.c.0.s8 %v2801
        %v2803 = vlaneseq
        %v2804 = vshrl.u32 %v2803, 7
        %v2805 = vsub.s32 %v2802, %v2804
        %v2806 = vrot.slane %v2799, %v2805
        %v2807 = vcombine.low %v2777, %v2793
        %v2809 = vunpack.c.l.s4 1983009808
        %v2810 = vunpack.c.0.s8 %v2809
        %v2811 = vlaneseq
        %v2812 = vshrl.u32 %v2811, 7
        %v2813 = vsub.s32 %v2810, %v2812
        %v2814 = vrot.slane %v2807, %v2813
        %v2815 = vcombine.low %v2806, %v2814
        %v2817 = vunpack.c.l.s4 1934713408
        %v2818 = vunpack.c.0.s8 %v2817
        %v2819 = vlaneseq
        %v2820 = vshrl.u32 %v2819, 7
        %v2821 = vsub.s32 %v2818, %v2820
        %v2822 = vrot.slane %v2815, %v2821
        %v2823 = vcombine.high %v2822, 0
        %v2824 = vcombine.low %v2773, %v2789
        %v2826 = vunpack.c.l.s4 1983009808
        %v2827 = vunpack.c.0.s8 %v2826
        %v2828 = vlaneseq
        %v2829 = vshrl.u32 %v2828, 7
        %v2830 = vsub.s32 %v2827, %v2829
        %v2831 = vrot.slane %v2824, %v2830
        %v2832 = vcombine.low %v2781, %v2797
        %v2834 = vunpack.c.l.s4 1983009808
        %v2835 = vunpack.c.0.s8 %v2834
        %v2836 = vlaneseq
        %v2837 = vshrl.u32 %v2836, 7
        %v2838 = vsub.s32 %v2835, %v2837
        %v2839 = vrot.slane %v2832, %v2838
        %v2840 = vcombine.low %v2831, %v2839
        %v2842 = vunpack.c.l.s4 1934713408
        %v2843 = vunpack.c.0.s8 %v2842
        %v2844 = vlaneseq
        %v2845 = vshrl.u32 %v2844, 7
        %v2846 = vsub.s32 %v2843, %v2845
        %v2847 = vrot.slane %v2840, %v2846
        %v2848 = vcombine.high %v2847, 0
        %v2851 = vpack.i.b16 %v2847, %v2822
        %v2852 = vshrl.u32 %v2822, 16
        %v2853 = vshrl.u32 %v2847, 16
        %v2854 = vpack.i.b16 %v2853, %v2852
        %v2857 = vpack.i.b16 %v2848, %v2823
        %v2858 = vshrl.u32 %v2823, 16
        %v2859 = vshrl.u32 %v2848, 16
        %v2860 = vpack.i.b16 %v2859, %v2858
        %v2861 = vld [vmem:[%s866] sm:$0xf]
        %v2862 = vld [vmem:[%s866 + $0x4] sm:$0xf]
        %v2863 = vld [vmem:[%s866 + $0x8] sm:$0xf]
        %v2864 = vld [vmem:[%s866 + $0xc] sm:$0xf]
        %v2865 = vld [vmem:[%s871] sm:$0xf]
        %v2866 = vld [vmem:[%s871 + $0x4] sm:$0xf]
        %v2867 = vld [vmem:[%s871 + $0x8] sm:$0xf]
        %v2868 = vld [vmem:[%s871 + $0xc] sm:$0xf]
        %v2870 = vsel %vm1511, %v2851, 0
        %v2873 = vsel %vm1511, %v2861, 0
        %2875 = vmatprep.subr.bf16.mxu0 0
        %2876 = vmatpush1.bf16.xpose.msra.mxu0 %v2873
        %2877 = vmatprep.subr.bf16.mxu0 0
        %2878 = vmatpush1.bf16.xpose.msra.mxu0 0
        %2879 = vmatprep.subr.bf16.mxu0 0
        %2880 = vmatpush1.bf16.xpose.msra.mxu0 0
        %2881 = vmatprep.subr.bf16.mxu0 0
        %2882 = vmatpush1.bf16.xpose.msra.mxu0 0
        %2883 = vmatprep.subr.bf16.mxu0 0
        %2884 = vmatpush1.bf16.xpose.msra.mxu0 0
        %2885 = vmatprep.subr.bf16.mxu0 0
        %2886 = vmatpush1.bf16.xpose.msra.mxu0 0
        %2887 = vmatprep.subr.bf16.mxu0 0
        %2888 = vmatpush1.bf16.xpose.msra.mxu0 0
        %2889 = vmatprep.subr.bf16.mxu0 0
        %2890 = vmatpush1.bf16.xpose.msra.mxu0 0
        %2891 = vmatprep.subr.bf16.mxu0 0
        %2892 = vmatpush1.bf16.xpose.msra.mxu0 0
        %2893 = vmatprep.subr.bf16.mxu0 0
        %2894 = vmatpush1.bf16.xpose.msra.mxu0 0
        %2895 = vmatprep.subr.bf16.mxu0 0
        %2896 = vmatpush1.bf16.xpose.msra.mxu0 0
        %2897 = vmatprep.subr.bf16.mxu0 0
        %2898 = vmatpush1.bf16.xpose.msra.mxu0 0
        %2899 = vmatprep.subr.bf16.mxu0 0
        %2900 = vmatpush1.bf16.xpose.msra.mxu0 0
        %2901 = vmatprep.subr.bf16.mxu0 0
        %2902 = vmatpush1.bf16.xpose.msra.mxu0 0
        %2903 = vmatprep.subr.bf16.mxu0 0
        %2904 = vmatpush1.bf16.xpose.msra.mxu0 0
        %2905 = vmatprep.subr.bf16.mxu0 0
        %2906 = vmatpush1.bf16.xpose.msra.mxu0 0
        %2907 = vmatprep.mubr.bf16.mxu0 0
        %2908 = vmatmul.mubr.bf16.gmra.mrb[0].mxu0 %v2870
        %v2909 = vpop.f32.mrb[0].mxu0
        %v2910 = vadd.f32 0.0, %v2909
        %v2911 = vpop.f32.mrb[0].mxu0
        %v2912 = vpop.f32.mrb[0].mxu0
        %v2913 = vpop.f32.mrb[0].mxu0
        %2914 = vdwg.mxu0
        %v2916 = vsel %vm1511, %v2854, 0
        %v2919 = vsel %vm1511, %v2862, 0
        %2921 = vmatprep.subr.bf16.mxu0 0
        %2922 = vmatpush1.bf16.xpose.msra.mxu0 %v2919
        %2923 = vmatprep.subr.bf16.mxu0 0
        %2924 = vmatpush1.bf16.xpose.msra.mxu0 0
        %2925 = vmatprep.subr.bf16.mxu0 0
        %2926 = vmatpush1.bf16.xpose.msra.mxu0 0
        %2927 = vmatprep.subr.bf16.mxu0 0
        %2928 = vmatpush1.bf16.xpose.msra.mxu0 0
        %2929 = vmatprep.subr.bf16.mxu0 0
        %2930 = vmatpush1.bf16.xpose.msra.mxu0 0
        %2931 = vmatprep.subr.bf16.mxu0 0
        %2932 = vmatpush1.bf16.xpose.msra.mxu0 0
        %2933 = vmatprep.subr.bf16.mxu0 0
        %2934 = vmatpush1.bf16.xpose.msra.mxu0 0
        %2935 = vmatprep.subr.bf16.mxu0 0
        %2936 = vmatpush1.bf16.xpose.msra.mxu0 0
        %2937 = vmatprep.subr.bf16.mxu0 0
        %2938 = vmatpush1.bf16.xpose.msra.mxu0 0
        %2939 = vmatprep.subr.bf16.mxu0 0
        %2940 = vmatpush1.bf16.xpose.msra.mxu0 0
        %2941 = vmatprep.subr.bf16.mxu0 0
        %2942 = vmatpush1.bf16.xpose.msra.mxu0 0
        %2943 = vmatprep.subr.bf16.mxu0 0
        %2944 = vmatpush1.bf16.xpose.msra.mxu0 0
        %2945 = vmatprep.subr.bf16.mxu0 0
        %2946 = vmatpush1.bf16.xpose.msra.mxu0 0
        %2947 = vmatprep.subr.bf16.mxu0 0
        %2948 = vmatpush1.bf16.xpose.msra.mxu0 0
        %2949 = vmatprep.subr.bf16.mxu0 0
        %2950 = vmatpush1.bf16.xpose.msra.mxu0 0
        %2951 = vmatprep.subr.bf16.mxu0 0
        %2952 = vmatpush1.bf16.xpose.msra.mxu0 0
        %2953 = vmatprep.mubr.bf16.mxu0 0
        %2954 = vmatmul.mubr.bf16.gmra.mrb[0].mxu0 %v2916
        %v2955 = vpop.f32.mrb[0].mxu0
        %v2956 = vadd.f32 0.0, %v2955
        %v2957 = vpop.f32.mrb[0].mxu0
        %v2958 = vpop.f32.mrb[0].mxu0
        %v2959 = vpop.f32.mrb[0].mxu0
        %2960 = vdwg.mxu0
        %v2962 = vsel %vm1511, %v2857, 0
        %v2965 = vsel %vm1511, %v2863, 0
        %2967 = vmatprep.subr.bf16.mxu0 0
        %2968 = vmatpush1.bf16.xpose.msra.mxu0 %v2965
        %2969 = vmatprep.subr.bf16.mxu0 0
        %2970 = vmatpush1.bf16.xpose.msra.mxu0 0
        %2971 = vmatprep.subr.bf16.mxu0 0
        %2972 = vmatpush1.bf16.xpose.msra.mxu0 0
        %2973 = vmatprep.subr.bf16.mxu0 0
        %2974 = vmatpush1.bf16.xpose.msra.mxu0 0
        %2975 = vmatprep.subr.bf16.mxu0 0
        %2976 = vmatpush1.bf16.xpose.msra.mxu0 0
        %2977 = vmatprep.subr.bf16.mxu0 0
        %2978 = vmatpush1.bf16.xpose.msra.mxu0 0
        %2979 = vmatprep.subr.bf16.mxu0 0
        %2980 = vmatpush1.bf16.xpose.msra.mxu0 0
        %2981 = vmatprep.subr.bf16.mxu0 0
        %2982 = vmatpush1.bf16.xpose.msra.mxu0 0
        %2983 = vmatprep.subr.bf16.mxu0 0
        %2984 = vmatpush1.bf16.xpose.msra.mxu0 0
        %2985 = vmatprep.subr.bf16.mxu0 0
        %2986 = vmatpush1.bf16.xpose.msra.mxu0 0
        %2987 = vmatprep.subr.bf16.mxu0 0
        %2988 = vmatpush1.bf16.xpose.msra.mxu0 0
        %2989 = vmatprep.subr.bf16.mxu0 0
        %2990 = vmatpush1.bf16.xpose.msra.mxu0 0
        %2991 = vmatprep.subr.bf16.mxu0 0
        %2992 = vmatpush1.bf16.xpose.msra.mxu0 0
        %2993 = vmatprep.subr.bf16.mxu0 0
        %2994 = vmatpush1.bf16.xpose.msra.mxu0 0
        %2995 = vmatprep.subr.bf16.mxu0 0
        %2996 = vmatpush1.bf16.xpose.msra.mxu0 0
        %2997 = vmatprep.subr.bf16.mxu0 0
        %2998 = vmatpush1.bf16.xpose.msra.mxu0 0
        %2999 = vmatprep.mubr.bf16.mxu0 0
        %3000 = vmatmul.mubr.bf16.gmra.mrb[0].mxu0 %v2962
        %v3001 = vpop.f32.mrb[0].mxu0
        %v3002 = vadd.f32 0.0, %v3001
        %v3003 = vpop.f32.mrb[0].mxu0
        %v3004 = vpop.f32.mrb[0].mxu0
        %v3005 = vpop.f32.mrb[0].mxu0
        %3006 = vdwg.mxu0
        %v3008 = vsel %vm1511, %v2860, 0
        %v3011 = vsel %vm1511, %v2864, 0
        %3013 = vmatprep.subr.bf16.mxu0 0
        %3014 = vmatpush1.bf16.xpose.msra.mxu0 %v3011
        %3015 = vmatprep.subr.bf16.mxu0 0
        %3016 = vmatpush1.bf16.xpose.msra.mxu0 0
        %3017 = vmatprep.subr.bf16.mxu0 0
        %3018 = vmatpush1.bf16.xpose.msra.mxu0 0
        %3019 = vmatprep.subr.bf16.mxu0 0
        %3020 = vmatpush1.bf16.xpose.msra.mxu0 0
        %3021 = vmatprep.subr.bf16.mxu0 0
        %3022 = vmatpush1.bf16.xpose.msra.mxu0 0
        %3023 = vmatprep.subr.bf16.mxu0 0
        %3024 = vmatpush1.bf16.xpose.msra.mxu0 0
        %3025 = vmatprep.subr.bf16.mxu0 0
        %3026 = vmatpush1.bf16.xpose.msra.mxu0 0
        %3027 = vmatprep.subr.bf16.mxu0 0
        %3028 = vmatpush1.bf16.xpose.msra.mxu0 0
        %3029 = vmatprep.subr.bf16.mxu0 0
        %3030 = vmatpush1.bf16.xpose.msra.mxu0 0
        %3031 = vmatprep.subr.bf16.mxu0 0
        %3032 = vmatpush1.bf16.xpose.msra.mxu0 0
        %3033 = vmatprep.subr.bf16.mxu0 0
        %3034 = vmatpush1.bf16.xpose.msra.mxu0 0
        %3035 = vmatprep.subr.bf16.mxu0 0
        %3036 = vmatpush1.bf16.xpose.msra.mxu0 0
        %3037 = vmatprep.subr.bf16.mxu0 0
        %3038 = vmatpush1.bf16.xpose.msra.mxu0 0
        %3039 = vmatprep.subr.bf16.mxu0 0
        %3040 = vmatpush1.bf16.xpose.msra.mxu0 0
        %3041 = vmatprep.subr.bf16.mxu0 0
        %3042 = vmatpush1.bf16.xpose.msra.mxu0 0
        %3043 = vmatprep.subr.bf16.mxu0 0
        %3044 = vmatpush1.bf16.xpose.msra.mxu0 0
        %3045 = vmatprep.mubr.bf16.mxu0 0
        %3046 = vmatmul.mubr.bf16.gmra.mrb[0].mxu0 %v3008
        %v3047 = vpop.f32.mrb[0].mxu0
        %v3048 = vadd.f32 0.0, %v3047
        %v3049 = vpop.f32.mrb[0].mxu0
        %v3050 = vpop.f32.mrb[0].mxu0
        %v3051 = vpop.f32.mrb[0].mxu0
        %3052 = vdwg.mxu0
        %v3053 = vsel %vm1511, %v2910, -inf
        %3054 = vmax.xlane.f32.xlu0 %v3053
        %v3055 = vpop.xlane.xlu0 %3054
        %v3056 = vsel %vm1511, %v2956, -inf
        %3057 = vmax.xlane.f32.xlu0 %v3056
        %v3058 = vpop.xlane.xlu0 %3057
        %v3059 = vsel %vm1511, %v3002, -inf
        %3060 = vmax.xlane.f32.xlu0 %v3059
        %v3061 = vpop.xlane.xlu0 %3060
        %v3062 = vsel %vm1511, %v3048, -inf
        %3063 = vmax.xlane.f32.xlu0 %v3062
        %v3064 = vpop.xlane.xlu0 %3063
        %v3065 = vsub.f32 %v2910, %v3055
        %v3066 = vsub.f32 %v2956, %v3058
        %v3067 = vsub.f32 %v3002, %v3061
        %v3068 = vsub.f32 %v3048, %v3064
        %v3069 = vmul.f32 %v3065, 1.442695
        %v3070 = vpow.pop %v3069
        %v3071 = vmul.f32 %v3066, 1.442695
        %v3072 = vpow.pop %v3071
        %v3073 = vmul.f32 %v3067, 1.442695
        %v3074 = vpow.pop %v3073
        %v3075 = vmul.f32 %v3068, 1.442695
        %v3076 = vpow.pop %v3075
        %v3077 = vsel %vm1511, %v3070, 0.0
        %3078 = vadd.xlane.f32.xlu0 %v3077
        %v3079 = vpop.xlane.xlu0 %3078
        %v3080 = vsel %vm1511, %v3072, 0.0
        %3081 = vadd.xlane.f32.xlu0 %v3080
        %v3082 = vpop.xlane.xlu0 %3081
        %v3083 = vsel %vm1511, %v3074, 0.0
        %3084 = vadd.xlane.f32.xlu0 %v3083
        %v3085 = vpop.xlane.xlu0 %3084
        %v3086 = vsel %vm1511, %v3076, 0.0
        %3087 = vadd.xlane.f32.xlu0 %v3086
        %v3088 = vpop.xlane.xlu0 %3087
        %v3089 = vrcp.pop %v3079
        %v3090 = vmul.f32 %v3070, %v3089
        %v3091 = vrcp.pop %v3082
        %v3092 = vmul.f32 %v3072, %v3091
        %v3093 = vrcp.pop %v3085
        %v3094 = vmul.f32 %v3074, %v3093
        %v3095 = vrcp.pop %v3088
        %v3096 = vmul.f32 %v3076, %v3095
        %v3097 = vpack.c.bf16 %v3090, %v3090
        %v3098 = vpack.c.bf16 %v3092, %v3092
        %v3099 = vpack.c.bf16 %v3094, %v3094
        %v3100 = vpack.c.bf16 %v3096, %v3096
        %v3102 = vsel %vm1511, %v3097, 0
        %v3105 = vsel %vm1739, %v2865, 0
        %3107 = vmatprep.subr.bf16.mxu0 0
        %3108 = vmatpush1.bf16.msra.mxu0 %v3105
        %3109 = vmatprep.subr.bf16.mxu0 0
        %3110 = vmatpush1.bf16.msra.mxu0 0
        %3111 = vmatprep.subr.bf16.mxu0 0
        %3112 = vmatpush1.bf16.msra.mxu0 0
        %3113 = vmatprep.subr.bf16.mxu0 0
        %3114 = vmatpush1.bf16.msra.mxu0 0
        %3115 = vmatprep.subr.bf16.mxu0 0
        %3116 = vmatpush1.bf16.msra.mxu0 0
        %3117 = vmatprep.subr.bf16.mxu0 0
        %3118 = vmatpush1.bf16.msra.mxu0 0
        %3119 = vmatprep.subr.bf16.mxu0 0
        %3120 = vmatpush1.bf16.msra.mxu0 0
        %3121 = vmatprep.subr.bf16.mxu0 0
        %3122 = vmatpush1.bf16.msra.mxu0 0
        %3123 = vmatprep.subr.bf16.mxu0 0
        %3124 = vmatpush1.bf16.msra.mxu0 0
        %3125 = vmatprep.subr.bf16.mxu0 0
        %3126 = vmatpush1.bf16.msra.mxu0 0
        %3127 = vmatprep.subr.bf16.mxu0 0
        %3128 = vmatpush1.bf16.msra.mxu0 0
        %3129 = vmatprep.subr.bf16.mxu0 0
        %3130 = vmatpush1.bf16.msra.mxu0 0
        %3131 = vmatprep.subr.bf16.mxu0 0
        %3132 = vmatpush1.bf16.msra.mxu0 0
        %3133 = vmatprep.subr.bf16.mxu0 0
        %3134 = vmatpush1.bf16.msra.mxu0 0
        %3135 = vmatprep.subr.bf16.mxu0 0
        %3136 = vmatpush1.bf16.msra.mxu0 0
        %3137 = vmatprep.subr.bf16.mxu0 0
        %3138 = vmatpush1.bf16.msra.mxu0 0
        %3139 = vmatprep.mubr.bf16.mxu0 0
        %3140 = vmatmul.mubr.bf16.gmra.mrb[0].mxu0 %v3102
        %v3141 = vpop.f32.mrb[0].mxu0
        %v3142 = vadd.f32 0.0, %v3141
        %v3143 = vpop.f32.mrb[0].mxu0
        %v3144 = vpop.f32.mrb[0].mxu0
        %v3145 = vpop.f32.mrb[0].mxu0
        %3146 = vdwg.mxu0
        %v3148 = vsel %vm1511, %v3098, 0
        %v3151 = vsel %vm1739, %v2866, 0
        %3153 = vmatprep.subr.bf16.mxu0 0
        %3154 = vmatpush1.bf16.msra.mxu0 %v3151
        %3155 = vmatprep.subr.bf16.mxu0 0
        %3156 = vmatpush1.bf16.msra.mxu0 0
        %3157 = vmatprep.subr.bf16.mxu0 0
        %3158 = vmatpush1.bf16.msra.mxu0 0
        %3159 = vmatprep.subr.bf16.mxu0 0
        %3160 = vmatpush1.bf16.msra.mxu0 0
        %3161 = vmatprep.subr.bf16.mxu0 0
        %3162 = vmatpush1.bf16.msra.mxu0 0
        %3163 = vmatprep.subr.bf16.mxu0 0
        %3164 = vmatpush1.bf16.msra.mxu0 0
        %3165 = vmatprep.subr.bf16.mxu0 0
        %3166 = vmatpush1.bf16.msra.mxu0 0
        %3167 = vmatprep.subr.bf16.mxu0 0
        %3168 = vmatpush1.bf16.msra.mxu0 0
        %3169 = vmatprep.subr.bf16.mxu0 0
        %3170 = vmatpush1.bf16.msra.mxu0 0
        %3171 = vmatprep.subr.bf16.mxu0 0
        %3172 = vmatpush1.bf16.msra.mxu0 0
        %3173 = vmatprep.subr.bf16.mxu0 0
        %3174 = vmatpush1.bf16.msra.mxu0 0
        %3175 = vmatprep.subr.bf16.mxu0 0
        %3176 = vmatpush1.bf16.msra.mxu0 0
        %3177 = vmatprep.subr.bf16.mxu0 0
        %3178 = vmatpush1.bf16.msra.mxu0 0
        %3179 = vmatprep.subr.bf16.mxu0 0
        %3180 = vmatpush1.bf16.msra.mxu0 0
        %3181 = vmatprep.subr.bf16.mxu0 0
        %3182 = vmatpush1.bf16.msra.mxu0 0
        %3183 = vmatprep.subr.bf16.mxu0 0
        %3184 = vmatpush1.bf16.msra.mxu0 0
        %3185 = vmatprep.mubr.bf16.mxu0 0
        %3186 = vmatmul.mubr.bf16.gmra.mrb[0].mxu0 %v3148
        %v3187 = vpop.f32.mrb[0].mxu0
        %v3188 = vadd.f32 0.0, %v3187
        %v3189 = vpop.f32.mrb[0].mxu0
        %v3190 = vpop.f32.mrb[0].mxu0
        %v3191 = vpop.f32.mrb[0].mxu0
        %3192 = vdwg.mxu0
        %v3194 = vsel %vm1511, %v3099, 0
        %v3197 = vsel %vm1739, %v2867, 0
        %3199 = vmatprep.subr.bf16.mxu0 0
        %3200 = vmatpush1.bf16.msra.mxu0 %v3197
        %3201 = vmatprep.subr.bf16.mxu0 0
        %3202 = vmatpush1.bf16.msra.mxu0 0
        %3203 = vmatprep.subr.bf16.mxu0 0
        %3204 = vmatpush1.bf16.msra.mxu0 0
        %3205 = vmatprep.subr.bf16.mxu0 0
        %3206 = vmatpush1.bf16.msra.mxu0 0
        %3207 = vmatprep.subr.bf16.mxu0 0
        %3208 = vmatpush1.bf16.msra.mxu0 0
        %3209 = vmatprep.subr.bf16.mxu0 0
        %3210 = vmatpush1.bf16.msra.mxu0 0
        %3211 = vmatprep.subr.bf16.mxu0 0
        %3212 = vmatpush1.bf16.msra.mxu0 0
        %3213 = vmatprep.subr.bf16.mxu0 0
        %3214 = vmatpush1.bf16.msra.mxu0 0
        %3215 = vmatprep.subr.bf16.mxu0 0
        %3216 = vmatpush1.bf16.msra.mxu0 0
        %3217 = vmatprep.subr.bf16.mxu0 0
        %3218 = vmatpush1.bf16.msra.mxu0 0
        %3219 = vmatprep.subr.bf16.mxu0 0
        %3220 = vmatpush1.bf16.msra.mxu0 0
        %3221 = vmatprep.subr.bf16.mxu0 0
        %3222 = vmatpush1.bf16.msra.mxu0 0
        %3223 = vmatprep.subr.bf16.mxu0 0
        %3224 = vmatpush1.bf16.msra.mxu0 0
        %3225 = vmatprep.subr.bf16.mxu0 0
        %3226 = vmatpush1.bf16.msra.mxu0 0
        %3227 = vmatprep.subr.bf16.mxu0 0
        %3228 = vmatpush1.bf16.msra.mxu0 0
        %3229 = vmatprep.subr.bf16.mxu0 0
        %3230 = vmatpush1.bf16.msra.mxu0 0
        %3231 = vmatprep.mubr.bf16.mxu0 0
        %3232 = vmatmul.mubr.bf16.gmra.mrb[0].mxu0 %v3194
        %v3233 = vpop.f32.mrb[0].mxu0
        %v3234 = vadd.f32 0.0, %v3233
        %v3235 = vpop.f32.mrb[0].mxu0
        %v3236 = vpop.f32.mrb[0].mxu0
        %v3237 = vpop.f32.mrb[0].mxu0
        %3238 = vdwg.mxu0
        %v3240 = vsel %vm1511, %v3100, 0
        %v3243 = vsel %vm1739, %v2868, 0
        %3245 = vmatprep.subr.bf16.mxu0 0
        %3246 = vmatpush1.bf16.msra.mxu0 %v3243
        %3247 = vmatprep.subr.bf16.mxu0 0
        %3248 = vmatpush1.bf16.msra.mxu0 0
        %3249 = vmatprep.subr.bf16.mxu0 0
        %3250 = vmatpush1.bf16.msra.mxu0 0
        %3251 = vmatprep.subr.bf16.mxu0 0
        %3252 = vmatpush1.bf16.msra.mxu0 0
        %3253 = vmatprep.subr.bf16.mxu0 0
        %3254 = vmatpush1.bf16.msra.mxu0 0
        %3255 = vmatprep.subr.bf16.mxu0 0
        %3256 = vmatpush1.bf16.msra.mxu0 0
        %3257 = vmatprep.subr.bf16.mxu0 0
        %3258 = vmatpush1.bf16.msra.mxu0 0
        %3259 = vmatprep.subr.bf16.mxu0 0
        %3260 = vmatpush1.bf16.msra.mxu0 0
        %3261 = vmatprep.subr.bf16.mxu0 0
        %3262 = vmatpush1.bf16.msra.mxu0 0
        %3263 = vmatprep.subr.bf16.mxu0 0
        %3264 = vmatpush1.bf16.msra.mxu0 0
        %3265 = vmatprep.subr.bf16.mxu0 0
        %3266 = vmatpush1.bf16.msra.mxu0 0
        %3267 = vmatprep.subr.bf16.mxu0 0
        %3268 = vmatpush1.bf16.msra.mxu0 0
        %3269 = vmatprep.subr.bf16.mxu0 0
        %3270 = vmatpush1.bf16.msra.mxu0 0
        %3271 = vmatprep.subr.bf16.mxu0 0
        %3272 = vmatpush1.bf16.msra.mxu0 0
        %3273 = vmatprep.subr.bf16.mxu0 0
        %3274 = vmatpush1.bf16.msra.mxu0 0
        %3275 = vmatprep.subr.bf16.mxu0 0
        %3276 = vmatpush1.bf16.msra.mxu0 0
        %3277 = vmatprep.mubr.bf16.mxu0 0
        %3278 = vmatmul.mubr.bf16.gmra.mrb[0].mxu0 %v3240
        %v3279 = vpop.f32.mrb[0].mxu0
        %v3280 = vadd.f32 0.0, %v3279
        %v3281 = vpop.f32.mrb[0].mxu0
        %v3282 = vpop.f32.mrb[0].mxu0
        %v3283 = vpop.f32.mrb[0].mxu0
        %3284 = vdwg.mxu0
        %v3285 = vpack.c.bf16 %v3142, %v3142
        %v3286 = vpack.c.bf16 %v3188, %v3188
        %v3287 = vpack.c.bf16 %v3234, %v3234
        %v3288 = vpack.c.bf16 %v3280, %v3280
        %v3289 = vld [vmem:[#allocation21] sm:$0xf]
        %v3290 = vld [vmem:[#allocation21 + $0x4] sm:$0xf]
        %v3291 = vld [vmem:[#allocation21 + $0x8] sm:$0xf]
        %v3292 = vld [vmem:[#allocation21 + $0xc] sm:$0xf]
        %v3294 = vsel %vm1511, %v3285, 0
        %v3297 = vsel %vm1739, %v3289, 0
        %3299 = vmatprep.subr.bf16.mxu0 0
        %3300 = vmatpush1.bf16.msra.mxu0 %v3297
        %3301 = vmatprep.subr.bf16.mxu0 0
        %3302 = vmatpush1.bf16.msra.mxu0 0
        %3303 = vmatprep.subr.bf16.mxu0 0
        %3304 = vmatpush1.bf16.msra.mxu0 0
        %3305 = vmatprep.subr.bf16.mxu0 0
        %3306 = vmatpush1.bf16.msra.mxu0 0
        %3307 = vmatprep.subr.bf16.mxu0 0
        %3308 = vmatpush1.bf16.msra.mxu0 0
        %3309 = vmatprep.subr.bf16.mxu0 0
        %3310 = vmatpush1.bf16.msra.mxu0 0
        %3311 = vmatprep.subr.bf16.mxu0 0
        %3312 = vmatpush1.bf16.msra.mxu0 0
        %3313 = vmatprep.subr.bf16.mxu0 0
        %3314 = vmatpush1.bf16.msra.mxu0 0
        %3315 = vmatprep.subr.bf16.mxu0 0
        %3316 = vmatpush1.bf16.msra.mxu0 0
        %3317 = vmatprep.subr.bf16.mxu0 0
        %3318 = vmatpush1.bf16.msra.mxu0 0
        %3319 = vmatprep.subr.bf16.mxu0 0
        %3320 = vmatpush1.bf16.msra.mxu0 0
        %3321 = vmatprep.subr.bf16.mxu0 0
        %3322 = vmatpush1.bf16.msra.mxu0 0
        %3323 = vmatprep.subr.bf16.mxu0 0
        %3324 = vmatpush1.bf16.msra.mxu0 0
        %3325 = vmatprep.subr.bf16.mxu0 0
        %3326 = vmatpush1.bf16.msra.mxu0 0
        %3327 = vmatprep.subr.bf16.mxu0 0
        %3328 = vmatpush1.bf16.msra.mxu0 0
        %3329 = vmatprep.subr.bf16.mxu0 0
        %3330 = vmatpush1.bf16.msra.mxu0 0
        %3331 = vmatprep.mubr.bf16.mxu0 0
        %3332 = vmatmul.mubr.bf16.gmra.mrb[0].mxu0 %v3294
        %v3333 = vpop.f32.mrb[0].mxu0
        %v3334 = vadd.f32 0.0, %v3333
        %v3335 = vpop.f32.mrb[0].mxu0
        %v3336 = vpop.f32.mrb[0].mxu0
        %v3337 = vpop.f32.mrb[0].mxu0
        %3338 = vdwg.mxu0
        %v3340 = vsel %vm1511, %v3286, 0
        %v3343 = vsel %vm1739, %v3290, 0
        %3345 = vmatprep.subr.bf16.mxu0 0
        %3346 = vmatpush1.bf16.msra.mxu0 %v3343
        %3347 = vmatprep.subr.bf16.mxu0 0
        %3348 = vmatpush1.bf16.msra.mxu0 0
        %3349 = vmatprep.subr.bf16.mxu0 0
        %3350 = vmatpush1.bf16.msra.mxu0 0
        %3351 = vmatprep.subr.bf16.mxu0 0
        %3352 = vmatpush1.bf16.msra.mxu0 0
        %3353 = vmatprep.subr.bf16.mxu0 0
        %3354 = vmatpush1.bf16.msra.mxu0 0
        %3355 = vmatprep.subr.bf16.mxu0 0
        %3356 = vmatpush1.bf16.msra.mxu0 0
        %3357 = vmatprep.subr.bf16.mxu0 0
        %3358 = vmatpush1.bf16.msra.mxu0 0
        %3359 = vmatprep.subr.bf16.mxu0 0
        %3360 = vmatpush1.bf16.msra.mxu0 0
        %3361 = vmatprep.subr.bf16.mxu0 0
        %3362 = vmatpush1.bf16.msra.mxu0 0
        %3363 = vmatprep.subr.bf16.mxu0 0
        %3364 = vmatpush1.bf16.msra.mxu0 0
        %3365 = vmatprep.subr.bf16.mxu0 0
        %3366 = vmatpush1.bf16.msra.mxu0 0
        %3367 = vmatprep.subr.bf16.mxu0 0
        %3368 = vmatpush1.bf16.msra.mxu0 0
        %3369 = vmatprep.subr.bf16.mxu0 0
        %3370 = vmatpush1.bf16.msra.mxu0 0
        %3371 = vmatprep.subr.bf16.mxu0 0
        %3372 = vmatpush1.bf16.msra.mxu0 0
        %3373 = vmatprep.subr.bf16.mxu0 0
        %3374 = vmatpush1.bf16.msra.mxu0 0
        %3375 = vmatprep.subr.bf16.mxu0 0
        %3376 = vmatpush1.bf16.msra.mxu0 0
        %3377 = vmatprep.mubr.bf16.mxu0 0
        %3378 = vmatmul.mubr.bf16.gmra.mrb[0].mxu0 %v3340
        %v3379 = vpop.f32.mrb[0].mxu0
        %v3380 = vadd.f32 0.0, %v3379
        %v3381 = vpop.f32.mrb[0].mxu0
        %v3382 = vpop.f32.mrb[0].mxu0
        %v3383 = vpop.f32.mrb[0].mxu0
        %3384 = vdwg.mxu0
        %v3386 = vsel %vm1511, %v3287, 0
        %v3389 = vsel %vm1739, %v3291, 0
        %3391 = vmatprep.subr.bf16.mxu0 0
        %3392 = vmatpush1.bf16.msra.mxu0 %v3389
        %3393 = vmatprep.subr.bf16.mxu0 0
        %3394 = vmatpush1.bf16.msra.mxu0 0
        %3395 = vmatprep.subr.bf16.mxu0 0
        %3396 = vmatpush1.bf16.msra.mxu0 0
        %3397 = vmatprep.subr.bf16.mxu0 0
        %3398 = vmatpush1.bf16.msra.mxu0 0
        %3399 = vmatprep.subr.bf16.mxu0 0
        %3400 = vmatpush1.bf16.msra.mxu0 0
        %3401 = vmatprep.subr.bf16.mxu0 0
        %3402 = vmatpush1.bf16.msra.mxu0 0
        %3403 = vmatprep.subr.bf16.mxu0 0
        %3404 = vmatpush1.bf16.msra.mxu0 0
        %3405 = vmatprep.subr.bf16.mxu0 0
        %3406 = vmatpush1.bf16.msra.mxu0 0
        %3407 = vmatprep.subr.bf16.mxu0 0
        %3408 = vmatpush1.bf16.msra.mxu0 0
        %3409 = vmatprep.subr.bf16.mxu0 0
        %3410 = vmatpush1.bf16.msra.mxu0 0
        %3411 = vmatprep.subr.bf16.mxu0 0
        %3412 = vmatpush1.bf16.msra.mxu0 0
        %3413 = vmatprep.subr.bf16.mxu0 0
        %3414 = vmatpush1.bf16.msra.mxu0 0
        %3415 = vmatprep.subr.bf16.mxu0 0
        %3416 = vmatpush1.bf16.msra.mxu0 0
        %3417 = vmatprep.subr.bf16.mxu0 0
        %3418 = vmatpush1.bf16.msra.mxu0 0
        %3419 = vmatprep.subr.bf16.mxu0 0
        %3420 = vmatpush1.bf16.msra.mxu0 0
        %3421 = vmatprep.subr.bf16.mxu0 0
        %3422 = vmatpush1.bf16.msra.mxu0 0
        %3423 = vmatprep.mubr.bf16.mxu0 0
        %3424 = vmatmul.mubr.bf16.gmra.mrb[0].mxu0 %v3386
        %v3425 = vpop.f32.mrb[0].mxu0
        %v3426 = vadd.f32 0.0, %v3425
        %v3427 = vpop.f32.mrb[0].mxu0
        %v3428 = vpop.f32.mrb[0].mxu0
        %v3429 = vpop.f32.mrb[0].mxu0
        %3430 = vdwg.mxu0
        %v3432 = vsel %vm1511, %v3288, 0
        %v3435 = vsel %vm1739, %v3292, 0
        %3437 = vmatprep.subr.bf16.mxu0 0
        %3438 = vmatpush1.bf16.msra.mxu0 %v3435
        %3439 = vmatprep.subr.bf16.mxu0 0
        %3440 = vmatpush1.bf16.msra.mxu0 0
        %3441 = vmatprep.subr.bf16.mxu0 0
        %3442 = vmatpush1.bf16.msra.mxu0 0
        %3443 = vmatprep.subr.bf16.mxu0 0
        %3444 = vmatpush1.bf16.msra.mxu0 0
        %3445 = vmatprep.subr.bf16.mxu0 0
        %3446 = vmatpush1.bf16.msra.mxu0 0
        %3447 = vmatprep.subr.bf16.mxu0 0
        %3448 = vmatpush1.bf16.msra.mxu0 0
        %3449 = vmatprep.subr.bf16.mxu0 0
        %3450 = vmatpush1.bf16.msra.mxu0 0
        %3451 = vmatprep.subr.bf16.mxu0 0
        %3452 = vmatpush1.bf16.msra.mxu0 0
        %3453 = vmatprep.subr.bf16.mxu0 0
        %3454 = vmatpush1.bf16.msra.mxu0 0
        %3455 = vmatprep.subr.bf16.mxu0 0
        %3456 = vmatpush1.bf16.msra.mxu0 0
        %3457 = vmatprep.subr.bf16.mxu0 0
        %3458 = vmatpush1.bf16.msra.mxu0 0
        %3459 = vmatprep.subr.bf16.mxu0 0
        %3460 = vmatpush1.bf16.msra.mxu0 0
        %3461 = vmatprep.subr.bf16.mxu0 0
        %3462 = vmatpush1.bf16.msra.mxu0 0
        %3463 = vmatprep.subr.bf16.mxu0 0
        %3464 = vmatpush1.bf16.msra.mxu0 0
        %3465 = vmatprep.subr.bf16.mxu0 0
        %3466 = vmatpush1.bf16.msra.mxu0 0
        %3467 = vmatprep.subr.bf16.mxu0 0
        %3468 = vmatpush1.bf16.msra.mxu0 0
        %3469 = vmatprep.mubr.bf16.mxu0 0
        %3470 = vmatmul.mubr.bf16.gmra.mrb[0].mxu0 %v3432
        %v3471 = vpop.f32.mrb[0].mxu0
        %v3472 = vadd.f32 0.0, %v3471
        %v3473 = vpop.f32.mrb[0].mxu0
        %v3474 = vpop.f32.mrb[0].mxu0
        %v3475 = vpop.f32.mrb[0].mxu0
        %3476 = vdwg.mxu0
        %v3477 = vsel %vm876, %v3334, 0.0
        %v3478 = vsel %vm876, %v3380, 0.0
        %v3479 = vadd.f32 %v3477, %v3478
        %v3480 = vsel %vm876, %v3426, 0.0
        %v3481 = vadd.f32 %v3479, %v3480
        %v3482 = vsel %vm876, %v3472, 0.0
        %v3483 = vadd.f32 %v3481, %v3482
        %v3484 = vld [vmem:[#allocation22] sm:$0x1]
        %v3486 = vlaneseq
        %v3487 = vshrl.u32 %v3486, 7
        %v3488 = vsub.s32 0, %v3487
        %v3489 = vrot.slane %v3484, %v3488
        %v3491 = vadd.f32 %v3483, %v3489
        %v3492 = vadd.f32 %v2595, %v3491
        %v3493 = vld [vmem:[#allocation12] sm:$0x1]
        %v3494 = vld [vmem:[#allocation13] sm:$0x1]
        %v3495 = vsel %vm876, %v3492, 0.0
        %3496 = vadd.xlane.f32.xlu0 %v3495
        %v3497 = vpop.xlane.xlu0 %3496
        %v3498 = vmul.f32 %v3497, %v880
        %v3499 = vsub.f32 %v3492, %v3498
        %v3500 = vmul.f32 %v3499, %v3499
        %v3501 = vsel %vm876, %v3500, 0.0
        %3502 = vadd.xlane.f32.xlu0 %v3501
        %v3503 = vpop.xlane.xlu0 %3502
        %v3504 = vmul.f32 %v3503, %v880
        %v3505 = vadd.f32 %v3504, 1e-05
        %v3506 = vrsqrt.pop %v3505
        %v3507 = vmul.f32 %v3499, %v3506
        %v3509 = vlaneseq
        %v3510 = vshrl.u32 %v3509, 7
        %v3511 = vsub.s32 0, %v3510
        %v3512 = vrot.slane %v3493, %v3511
        %v3514 = vmul.f32 %v3507, %v3512
        %v3516 = vlaneseq
        %v3517 = vshrl.u32 %v3516, 7
        %v3518 = vsub.s32 0, %v3517
        %v3519 = vrot.slane %v3494, %v3518
        %v3521 = vadd.f32 %v3514, %v3519
        %v3522 = vpack.c.bf16 %v3521, %v3521
        %v3523 = vld [vmem:[%s17] sm:$0xf]
        %v3524 = vld [vmem:[%s17 + $0x4] sm:$0xf]
        %v3525 = vld [vmem:[%s17 + $0x8] sm:$0xf]
        %v3526 = vld [vmem:[%s17 + $0xc] sm:$0xf]
        %v3527 = vld [vmem:[%s18] sm:$0x1]
        %v3529 = vlaneseq
        %v3530 = vshrl.u32 %v3529, 7
        %v3531 = vsub.s32 0, %v3530
        %v3532 = vrot.slane %v3527, %v3531
        %v3538 = vunpack.c.l.b16 %v3523
        %v3539 = vunpack.c.l.b16 %v3524
        %v3540 = vunpack.c.l.b16 %v3525
        %v3541 = vunpack.c.l.b16 %v3526
        %v3542 = vpack.c.b16 %v3539, %v3538
        %v3543 = vpack.c.b16 %v3541, %v3540
        %v3547 = vsel %vm876, %v3522, 0
        %3549 = vmatprep.subr.bf16.mxu0 0
        %3550 = vmatpush1.bf16.msra.mxu0 %v3542
        %3551 = vmatprep.subr.bf16.mxu0 0
        %3552 = vmatpush1.bf16.msra.mxu0 %v3543
        %3553 = vmatprep.subr.bf16.mxu0 0
        %3554 = vmatpush1.bf16.msra.mxu0 0
        %3555 = vmatprep.subr.bf16.mxu0 0
        %3556 = vmatpush1.bf16.msra.mxu0 0
        %3557 = vmatprep.subr.bf16.mxu0 0
        %3558 = vmatpush1.bf16.msra.mxu0 0
        %3559 = vmatprep.subr.bf16.mxu0 0
        %3560 = vmatpush1.bf16.msra.mxu0 0
        %3561 = vmatprep.subr.bf16.mxu0 0
        %3562 = vmatpush1.bf16.msra.mxu0 0
        %3563 = vmatprep.subr.bf16.mxu0 0
        %3564 = vmatpush1.bf16.msra.mxu0 0
        %3565 = vmatprep.subr.bf16.mxu0 0
        %3566 = vmatpush1.bf16.msra.mxu0 0
        %3567 = vmatprep.subr.bf16.mxu0 0
        %3568 = vmatpush1.bf16.msra.mxu0 0
        %3569 = vmatprep.subr.bf16.mxu0 0
        %3570 = vmatpush1.bf16.msra.mxu0 0
        %3571 = vmatprep.subr.bf16.mxu0 0
        %3572 = vmatpush1.bf16.msra.mxu0 0
        %3573 = vmatprep.subr.bf16.mxu0 0
        %3574 = vmatpush1.bf16.msra.mxu0 0
        %3575 = vmatprep.subr.bf16.mxu0 0
        %3576 = vmatpush1.bf16.msra.mxu0 0
        %3577 = vmatprep.subr.bf16.mxu0 0
        %3578 = vmatpush1.bf16.msra.mxu0 0
        %3579 = vmatprep.subr.bf16.mxu0 0
        %3580 = vmatpush1.bf16.msra.mxu0 0
        %3581 = vmatprep.mubr.bf16.mxu0 0
        %3582 = vmatmul.mubr.bf16.gmra.mrb[0].mxu0 %v3547
        %v3583 = vpop.f32.mrb[0].mxu0
        %v3584 = vadd.f32 %v3532, %v3583
        %v3585 = vpop.f32.mrb[0].mxu0
        %v3586 = vpop.f32.mrb[0].mxu0
        %v3587 = vpop.f32.mrb[0].mxu0
        %3588 = vdwg.mxu0
        %v3589 = vmul.f32 %v3584, 0.5
        %v3590 = vmul.f32 %v3584, 0.044715
        %v3591 = vmul.f32 %v3590, %v3584
        %v3592 = vmul.f32 %v3591, %v3584
        %v3593 = vadd.f32 %v3584, %v3592
        %v3594 = vmul.f32 %v3593, 0.7978846
        %v3595 = vtanh.pop %v3594
        %v3596 = vadd.f32 %v3595, 1.0
        %v3597 = vmul.f32 %v3589, %v3596
        %v3598 = vpack.c.bf16 %v3597, %v3597
        %v3599 = vld [vmem:[%s19] sm:$0xf]
        %v3600 = vld [vmem:[%s19 + $0x4] sm:$0xf]
        %v3601 = vld [vmem:[%s19 + $0x8] sm:$0xf]
        %v3602 = vld [vmem:[%s19 + $0xc] sm:$0xf]
        %v3603 = vld [vmem:[%s19 + $0x10] sm:$0xf]
        %v3604 = vld [vmem:[%s19 + $0x14] sm:$0xf]
        %v3605 = vld [vmem:[%s19 + $0x18] sm:$0xf]
        %v3606 = vld [vmem:[%s19 + $0x1c] sm:$0xf]
        %v3607 = vld [vmem:[%s19 + $0x20] sm:$0xf]
        %v3608 = vld [vmem:[%s19 + $0x24] sm:$0xf]
        %v3609 = vld [vmem:[%s19 + $0x28] sm:$0xf]
        %v3610 = vld [vmem:[%s19 + $0x2c] sm:$0xf]
        %v3611 = vld [vmem:[%s19 + $0x30] sm:$0xf]
        %v3612 = vld [vmem:[%s19 + $0x34] sm:$0xf]
        %v3613 = vld [vmem:[%s19 + $0x38] sm:$0xf]
        %v3614 = vld [vmem:[%s19 + $0x3c] sm:$0xf]
        %v3615 = vld [vmem:[%s20] sm:$0x1]
        %v3617 = vlaneseq
        %v3618 = vshrl.u32 %v3617, 7
        %v3619 = vsub.s32 0, %v3618
        %v3620 = vrot.slane %v3615, %v3619
        %v3638 = vunpack.c.l.b16 %v3599
        %v3639 = vunpack.c.l.b16 %v3600
        %v3640 = vunpack.c.l.b16 %v3601
        %v3641 = vunpack.c.l.b16 %v3602
        %v3642 = vunpack.c.l.b16 %v3603
        %v3643 = vunpack.c.l.b16 %v3604
        %v3644 = vunpack.c.l.b16 %v3605
        %v3645 = vunpack.c.l.b16 %v3606
        %v3646 = vunpack.c.l.b16 %v3607
        %v3647 = vunpack.c.l.b16 %v3608
        %v3648 = vunpack.c.l.b16 %v3609
        %v3649 = vunpack.c.l.b16 %v3610
        %v3650 = vunpack.c.l.b16 %v3611
        %v3651 = vunpack.c.l.b16 %v3612
        %v3652 = vunpack.c.l.b16 %v3613
        %v3653 = vunpack.c.l.b16 %v3614
        %v3654 = vpack.c.b16 %v3639, %v3638
        %v3655 = vpack.c.b16 %v3641, %v3640
        %v3656 = vpack.c.b16 %v3643, %v3642
        %v3657 = vpack.c.b16 %v3645, %v3644
        %v3658 = vpack.c.b16 %v3647, %v3646
        %v3659 = vpack.c.b16 %v3649, %v3648
        %v3660 = vpack.c.b16 %v3651, %v3650
        %v3661 = vpack.c.b16 %v3653, %v3652
        %3670 = vmatprep.subr.bf16.mxu0 0
        %3671 = vmatpush1.bf16.msra.mxu0 %v3654
        %3672 = vmatprep.subr.bf16.mxu0 0
        %3673 = vmatpush1.bf16.msra.mxu0 %v3655
        %3674 = vmatprep.subr.bf16.mxu0 0
        %3675 = vmatpush1.bf16.msra.mxu0 %v3656
        %3676 = vmatprep.subr.bf16.mxu0 0
        %3677 = vmatpush1.bf16.msra.mxu0 %v3657
        %3678 = vmatprep.subr.bf16.mxu0 0
        %3679 = vmatpush1.bf16.msra.mxu0 %v3658
        %3680 = vmatprep.subr.bf16.mxu0 0
        %3681 = vmatpush1.bf16.msra.mxu0 %v3659
        %3682 = vmatprep.subr.bf16.mxu0 0
        %3683 = vmatpush1.bf16.msra.mxu0 %v3660
        %3684 = vmatprep.subr.bf16.mxu0 0
        %3685 = vmatpush1.bf16.msra.mxu0 %v3661
        %3686 = vmatprep.subr.bf16.mxu0 0
        %3687 = vmatpush1.bf16.msra.mxu0 0
        %3688 = vmatprep.subr.bf16.mxu0 0
        %3689 = vmatpush1.bf16.msra.mxu0 0
        %3690 = vmatprep.subr.bf16.mxu0 0
        %3691 = vmatpush1.bf16.msra.mxu0 0
        %3692 = vmatprep.subr.bf16.mxu0 0
        %3693 = vmatpush1.bf16.msra.mxu0 0
        %3694 = vmatprep.subr.bf16.mxu0 0
        %3695 = vmatpush1.bf16.msra.mxu0 0
        %3696 = vmatprep.subr.bf16.mxu0 0
        %3697 = vmatpush1.bf16.msra.mxu0 0
        %3698 = vmatprep.subr.bf16.mxu0 0
        %3699 = vmatpush1.bf16.msra.mxu0 0
        %3700 = vmatprep.subr.bf16.mxu0 0
        %3701 = vmatpush1.bf16.msra.mxu0 0
        %3702 = vmatprep.mubr.bf16.mxu0 0
        %3703 = vmatmul.mubr.bf16.gmra.mrb[0].mxu0 %v3598
        %v3704 = vpop.f32.mrb[0].mxu0
        %v3705 = vadd.f32 %v3620, %v3704
        %v3706 = vpop.f32.mrb[0].mxu0
        %v3707 = vpop.f32.mrb[0].mxu0
        %v3708 = vpop.f32.mrb[0].mxu0
        %3709 = vdwg.mxu0
        %v3710 = vadd.f32 %v3492, %v3705
        %3711 = vst.msk [vmem:[%s854] sm:$0xff] %vm876, %v3710
        %s3712 = sand.u32 %s522, 1
        %s3713 = scalar_lea.sflag [#allocation6], %s3712
        %s3714 = sand.u32 %s522, 1
        %s3715 = smul.addr %s3714, 8
        %s3716 = scalar_lea.vmem [#allocation24], %s3715
        // Predicated region
        $region160: #{tpu_custom_call.1} parent=103 // pred_check
          %p3717 = pneg %p532
        $region161: #{tpu_custom_call.1} parent=103 // pred_check_branch
          %3719 = sbr.rel (%p3717) target = $region163
        $region162: #{tpu_custom_call.1} parent=103 // pred_region
          %s3721 = ssub.s32 128, 128
          %3722 = vsyncadd %s3713, %s3721
          %s3723 = sadd.s32 %s47, %s46
          %s3724 = smul.addr %s3723, 128
          %s3725 = scalar_lea.hbm %s21, %s3724
          %s3727 = sshll.u32 %s3716, 4
          %s3728 = int_to_ptr.vmem [resolvable:$true] %s3727
          %3730 = dma.vmem_to_hbm [thread:$0]  %s3728, 128, %s3725, %s3713
        $region163: #{tpu_custom_call.1} parent=103 // pred_fallthru
          _
      $region104: #{tpu_custom_call.1} parent=5 // pred_fallthru
        _
      %p3731 = scmp.le.s32.totalorder 2, %s37
      // Predicated region
      $region164: #{tpu_custom_call.1} parent=5 // pred_check
        %p3732 = pneg %p3731
      $region165: #{tpu_custom_call.1} parent=5 // pred_check_branch
        %3734 = sbr.rel (%p3732) target = $region167
      $region166: #{tpu_custom_call.1} parent=5 // pred_region
        %s3735 = ssub.s32 %s37, 2
        // Predicated region
        $region168: #{tpu_custom_call.1} parent=166 // pred_check
          %p3736 = pneg %p538
        $region169: #{tpu_custom_call.1} parent=166 // pred_check_branch
          %3738 = sbr.rel (%p3736) target = $region171
        $region170: #{tpu_custom_call.1} parent=166 // pred_region
          %s3739 = sand.u32 %s523, 1
          %s3740 = scalar_lea.sflag [#allocation6], %s3739
          %s3741 = sand.u32 %s523, 1
          %s3742 = smul.addr %s3741, 8
          %s3743 = scalar_lea.vmem [#allocation24], %s3742
          %3744 = dma.done %s3740, 128
        $region171: #{tpu_custom_call.1} parent=166 // pred_fallthru
          _
      $region167: #{tpu_custom_call.1} parent=5 // pred_fallthru
        _
    $region6: #{tpu_custom_call.1} parent=1 // loop_footer
      %s41 = sadd.s32 1, %s37
    $region7: #{tpu_custom_call.1} parent=1 // loop_footer_branch
      %36 = sbr.rel target = $region3
    $region8: #{tpu_custom_call.1} parent=1 // loop_exit
      _
    %3745 = vsyncpa [#allocation5], 1
    %s3746 = scalar_lea.sflag [#allocation5], 1
    %3747 = vsyncpa %s3746, 1
    %3748 = vsyncpa [#allocation8], 1
    %3749 = vsyncpa [#allocation11], 1
    %3750 = vsyncpa [#allocation14], 1
    %3751 = vsyncpa [#allocation17], 1
    %3752 = vsyncpa [#allocation20], 1
    %3753 = vsyncpa [#allocation23], 1
    %3754 = vsyncpa [#allocation6], 1
    %s3755 = scalar_lea.sflag [#allocation6], 1
    %3756 = vsyncpa %s3755, 1

</llo_original>
